<compile_context>
chip_gen: v5e
topology: v5e:2x2
jax: 0.10.0
libtpu: 0.0.40
codegen_flags: <defaults>
</compile_context>

<pallas_src>
import math

import jax
import jax.numpy as jnp
from jax import lax
from jax.experimental import pallas as pl
from jax.experimental.pallas import tpu as pltpu


def _round_up(x, m):
    return (x + m - 1) // m * m


# ----------------------------------------------------------------------------
# Pallas kernel: whole BasicBlock, one batch image per grid step
# ----------------------------------------------------------------------------
def _make_basic_block_kernel(H, W, Cp, P, MB):
    HW = H * W
    HWp = HW + 2 * P            # vertically zero-padded flat length
    LW = MB + 2 * W + 16        # window rows covering all 9 taps of one chunk
    n_chunks = HW // MB

    def conv_chunk(win, w_ref, mask_l, mask_r):
        """3x3 conv of one MB-row chunk.

        win    : (LW, Cp) f32   aligned window of the row-padded source,
                                starting at flat row m0 - W - 8.
        w_ref  : (3, 3*Cp, Cp)  bf16 packed weights (dj concatenated along K).
        returns: (MB, Cp) f32   accumulated in registers.
        """
        acc = None
        for di in range(3):
            taps = []
            for dj in range(3):
                off = di * W + dj + 7           # static; aligned for dj == 1
                tap = win[off:off + MB, :]
                if dj == 0:                     # left tap invalid at column 0
                    tap = jnp.where(mask_l, tap, 0.0)
                elif dj == 2:                   # right tap invalid at column W-1
                    tap = jnp.where(mask_r, tap, 0.0)
                taps.append(tap.astype(jnp.bfloat16))
            lhs = jnp.concatenate(taps, axis=1)              # (MB, 3*Cp) bf16
            part = jnp.dot(lhs, w_ref[di],                   # K = 3*Cp matmul
                           preferred_element_type=jnp.float32)
            acc = part if acc is None else acc + part
        return acc

    def kernel(x_ref, w1_ref, b1_ref, w2_ref, b2_ref, o_ref, h_ref):
        # Column masks for the horizontal edge taps. Output row t of a chunk is
        # image column t % W (MB is a multiple of W), identical for every chunk.
        col = lax.broadcasted_iota(jnp.int32, (MB, Cp), 0) % W
        mask_l = col != 0
        mask_r = col != (W - 1)

        # Zero only the vertical padding strips of the h scratch (2*P rows).
        # Done every step: with a "parallel" batch grid a core may start at
        # program_id != 0 and scratch memory is uninitialised.
        h_ref[0:P, :] = jnp.zeros((P, Cp), jnp.bfloat16)
        h_ref[P + HW:HWp, :] = jnp.zeros((P, Cp), jnp.bfloat16)

        b1 = b1_ref[...]                       # (1, Cp) f32 folded BN biases
        b2 = b2_ref[...]

        # ---- conv1 + folded bn1 + relu6 -> row-padded bf16 VMEM scratch ----
        for c in range(n_chunks):
            m0 = c * MB
            win = x_ref[m0:m0 + LW, :].astype(jnp.float32)
            acc = conv_chunk(win, w1_ref, mask_l, mask_r)
            h = jnp.clip(acc + b1, 0.0, 6.0)
            h_ref[P + m0:P + m0 + MB, :] = h.astype(jnp.bfloat16)

        # ---- conv2 + folded bn2 + residual add + relu6 -> bf16 output ----
        for c in range(n_chunks):
            m0 = c * MB
            win = h_ref[m0:m0 + LW, :].astype(jnp.float32)
            acc = conv_chunk(win, w2_ref, mask_l, mask_r)
            res = x_ref[P + m0:P + m0 + MB, :].astype(jnp.float32)
            out = jnp.clip(acc + b2 + res, 0.0, 6.0)
            o_ref[m0:m0 + MB, :] = out.astype(jnp.bfloat16)

    return kernel


# ----------------------------------------------------------------------------
# pallas_call wrapper
# ----------------------------------------------------------------------------
def _fused_basic_block(x_flat, w1, b1, w2, b2, H, W, Cp, P, MB):
    N, HWp, _ = x_flat.shape
    HW = H * W

    flops = 4 * N * HW * 9 * Cp * Cp           # two 3x3 convs, 2 flops / MAC
    bytes_accessed = (x_flat.size * 2 + w1.size * 2 + w2.size * 2 +
                      b1.size * 4 + b2.size * 4 + N * HW * Cp * 2)

    return pl.pallas_call(
        _make_basic_block_kernel(H, W, Cp, P, MB),
        out_shape=jax.ShapeDtypeStruct((N, HW, Cp), jnp.bfloat16),
        grid_spec=pltpu.PrefetchScalarGridSpec(
            num_scalar_prefetch=0,
            grid=(N,),
            in_specs=[
                pl.BlockSpec((None, HWp, Cp), lambda b: (b, 0, 0)),   # x (bf16, padded)
                pl.BlockSpec((3, 3 * Cp, Cp), lambda b: (0, 0, 0)),   # packed w1 (bf16)
                pl.BlockSpec((1, Cp), lambda b: (0, 0)),              # folded bias1 (f32)
                pl.BlockSpec((3, 3 * Cp, Cp), lambda b: (0, 0, 0)),   # packed w2 (bf16)
                pl.BlockSpec((1, Cp), lambda b: (0, 0)),              # folded bias2 (f32)
            ],
            out_specs=pl.BlockSpec((None, HW, Cp), lambda b: (b, 0, 0)),
            scratch_shapes=[pltpu.VMEM((HW + 2 * P, Cp), jnp.bfloat16)],   # padded h
        ),
        compiler_params=pltpu.CompilerParams(
            dimension_semantics=("parallel",),     # batch shards across TensorCores
            vmem_limit_bytes=48 * 1024 * 1024,     # sweep per generation with row tiling
        ),
        cost_estimate=pl.CostEstimate(flops=flops, transcendentals=0,
                                      bytes_accessed=bytes_accessed),
    )(x_flat, w1, b1, w2, b2)


# ----------------------------------------------------------------------------
# Glue: BN folding, weight packing, padding / layout
# ----------------------------------------------------------------------------
def _fold_bn(gamma, beta, mean, var, eps):
    scale = gamma / jnp.sqrt(var + eps)
    bias = beta - mean * scale
    return scale, bias


def _prep_conv_bn(w_oihw, gamma, beta, mean, var, Cp, eps):
    """(Cout,Cin,3,3)+BN -> packed bf16 (3, 3*Cp, Cp) weights (K index = dj*Cp+cin)
    and f32 (1, Cp) folded bias."""
    scale, bias = _fold_bn(gamma, beta, mean, var, eps)
    cout, cin = w_oihw.shape[0], w_oihw.shape[1]
    w = jnp.transpose(w_oihw, (2, 3, 1, 0)) * scale           # (3,3,Cin,Cout), scaled
    w = jnp.pad(w, ((0, 0), (0, 0), (0, Cp - cin), (0, Cp - cout)))
    w = w.reshape(3, 3 * Cp, Cp).astype(jnp.bfloat16)
    b = jnp.pad(bias, (0, Cp - cout)).reshape(1, Cp).astype(jnp.float32)
    return w, b


def basic_block_forward(x_nchw, params, eps=1e-5):
    """BasicBlock forward (stride=1, downsample=None). x: (N, C, H, W) float32."""
    N, C, H, W = x_nchw.shape
    planes, inplanes = params["conv1_w"].shape[0], params["conv1_w"].shape[1]
    assert inplanes == C and planes == C, "stride=1/no-downsample requires inplanes==planes==C"
    assert params["conv2_w"].shape[:2] == (planes, planes)
    assert W % 8 == 0, "W must be a multiple of 8 (sublane alignment)"

    HW = H * W
    Cp = _round_up(max(C, planes), 128)        # lane-dense channel padding
    P = W + 8                                  # vertical zero pad (>= W+1, 8-aligned)
    k = max(1, min(64 // W, H)) if W <= 64 else 1
    k = math.gcd(k, H)
    MB = W * k                                 # rows per chunk (multiple of W and of 8)
    assert HW % MB == 0 and MB % 8 == 0

    # NCHW -> flat (N, H*W, C); pad P zero rows top/bottom and channels -> Cp; bf16.
    x_flat = jnp.transpose(x_nchw, (0, 2, 3, 1)).reshape(N, HW, C)
    x_flat = jnp.pad(x_flat, ((0, 0), (P, P), (0, Cp - C))).astype(jnp.bfloat16)

    w1, b1 = _prep_conv_bn(params["conv1_w"], params["bn1_gamma"], params["bn1_beta"],
                           params["bn1_mean"], params["bn1_var"], Cp, eps)
    w2, b2 = _prep_conv_bn(params["conv2_w"], params["bn2_gamma"], params["bn2_beta"],
                           params["bn2_mean"], params["bn2_var"], Cp, eps)

    out = _fused_basic_block(x_flat, w1, b1, w2, b2, H, W, Cp, P, MB)   # (N, HW, Cp) bf16
    out = out[..., :planes].reshape(N, H, W, planes)
    return jnp.transpose(out, (0, 3, 1, 2)).astype(jnp.float32)


# ----------------------------------------------------------------------------
# References
# ----------------------------------------------------------------------------
def _ref_forward_f32(x, params, eps=1e-5):
    """Exact PyTorch eval-mode semantics, f32 everywhere (loose sanity check)."""
    def conv(x, w):
        return lax.conv_general_dilated(
            x, w, window_strides=(1, 1), padding="SAME",
            dimension_numbers=("NCHW", "OIHW", "NCHW"))

    def bn(y, g, b, m, v):
        g = g.reshape(1, -1, 1, 1); b = b.reshape(1, -1, 1, 1)
        m = m.reshape(1, -1, 1, 1); v = v.reshape(1, -1, 1, 1)
        return (y - m) / jnp.sqrt(v + eps) * g + b

    relu6 = lambda y: jnp.clip(y, 0.0, 6.0)
    out = relu6(bn(conv(x, params["conv1_w"]), params["bn1_gamma"],
                   params["bn1_beta"], params["bn1_mean"], params["bn1_var"]))
    out = bn(conv(out, params["conv2_w"]), params["bn2_gamma"],
             params["bn2_beta"], params["bn2_mean"], params["bn2_var"])
    return relu6(out + x)


def _ref_forward_bf16(x_nchw, params, eps=1e-5):
    """Mirrors the kernel numerics: folded BN, bf16 operands, f32 accumulation,
    bf16 residual, bf16 output rounding."""
    def conv_bn(x_nhwc, w_oihw, gamma, beta, mean, var):
        scale = gamma / jnp.sqrt(var + eps)
        bias = beta - mean * scale
        w = (jnp.transpose(w_oihw, (2, 3, 1, 0)) * scale).astype(jnp.bfloat16)
        y = lax.conv_general_dilated(
            x_nhwc, w, (1, 1), "SAME",
            dimension_numbers=("NHWC", "HWIO", "NHWC"),
            preferred_element_type=jnp.float32)
        return y + bias

    x = jnp.transpose(x_nchw, (0, 2, 3, 1)).astype(jnp.bfloat16)
    h = jnp.clip(conv_bn(x, params["conv1_w"], params["bn1_gamma"], params["bn1_beta"],
                         params["bn1_mean"], params["bn1_var"]), 0.0, 6.0)
    h = h.astype(jnp.bfloat16)
    out = conv_bn(h, params["conv2_w"], params["bn2_gamma"], params["bn2_beta"],
                  params["bn2_mean"], params["bn2_var"]) + x.astype(jnp.float32)
    out = jnp.clip(out, 0.0, 6.0).astype(jnp.bfloat16).astype(jnp.float32)
    return jnp.transpose(out, (0, 3, 1, 2))


# ----------------------------------------------------------------------------
# Main
# ----------------------------------------------------------------------------
if __name__ == "__main__":
    key = jax.random.PRNGKey(0)
    N, C, H, W = 2, 4, 16, 16        # inplanes == planes (stride=1, downsample=None)
    planes = C

    ks = jax.random.split(key, 9)
    params = {
        "conv1_w": jax.random.normal(ks[0], (planes, C, 3, 3), jnp.float32) * 0.1,
        "conv2_w": jax.random.normal(ks[1], (planes, planes, 3, 3), jnp.float32) * 0.1,
        "bn1_gamma": 1.0 + 0.1 * jax.random.normal(ks[2], (planes,), jnp.float32),
        "bn1_beta": 0.1 * jax.random.normal(ks[3], (planes,), jnp.float32),
        "bn1_mean": 0.05 * jax.random.normal(ks[4], (planes,), jnp.float32),
        "bn1_var": jnp.abs(1.0 + 0.1 * jax.random.normal(ks[5], (planes,), jnp.float32)),
        "bn2_gamma": 1.0 + 0.1 * jax.random.normal(ks[6], (planes,), jnp.float32),
        "bn2_beta": 0.1 * jax.random.normal(ks[7], (planes,), jnp.float32),
        "bn2_mean": jnp.zeros((planes,), jnp.float32),
        "bn2_var": jnp.ones((planes,), jnp.float32),
    }

    x = jax.random.normal(ks[8], (N, C, H, W), jnp.float32)

    out = jax.block_until_ready(jax.jit(basic_block_forward)(x, params))
    ref_bf16 = jax.block_until_ready(_ref_forward_bf16(x, params))
    ref_f32 = jax.block_until_ready(_ref_forward_f32(x, params))

    assert out.shape == (N, planes, H, W)
    err_bf16 = float(jnp.max(jnp.abs(out - ref_bf16)))
    err_f32 = float(jnp.max(jnp.abs(out - ref_f32)))
    # Tight check vs numerics-matched (bf16 operands, f32 accumulation, bf16 out) reference.
    assert err_bf16 < 5e-2, f"mismatch vs bf16-matched reference: {err_bf16}"
    # Loose sanity check vs exact f32 PyTorch eval-mode semantics.
    assert err_f32 < 2e-1, f"mismatch vs f32 reference: {err_f32}"
    print("KERNEL_OK")
</pallas_src>

<mosaic_0001>
module attributes {stable_mosaic.version = 11 : i64} {
  func.func @kernel(%arg0: i32, %arg1: memref<1x304x128xbf16, #tpu.memory_space<vmem>>, %arg2: memref<3x384x128xbf16, #tpu.memory_space<vmem>>, %arg3: memref<1x128xf32, #tpu.memory_space<vmem>>, %arg4: memref<3x384x128xbf16, #tpu.memory_space<vmem>>, %arg5: memref<1x128xf32, #tpu.memory_space<vmem>>, %arg6: memref<1x256x128xbf16, #tpu.memory_space<vmem>>, %arg7: memref<304x128xbf16, #tpu.memory_space<vmem>>) attributes {dimension_semantics = [#tpu.dimension_semantics<parallel>], iteration_bounds = array<i64: 2>, scalar_prefetch = 0 : i64, scratch_operands = 1 : i64, tpu.core_type = #tpu.core_type<tc>, window_params = [{transform_indices = @transform_0, window_bounds = array<i64: 1, 304, 128>}, {pipeline_mode = #tpu.pipeline_mode<synchronous>, transform_indices = @transform_1, window_bounds = array<i64: 3, 384, 128>}, {pipeline_mode = #tpu.pipeline_mode<synchronous>, transform_indices = @transform_2, window_bounds = array<i64: 1, 128>}, {pipeline_mode = #tpu.pipeline_mode<synchronous>, transform_indices = @transform_3, window_bounds = array<i64: 3, 384, 128>}, {pipeline_mode = #tpu.pipeline_mode<synchronous>, transform_indices = @transform_4, window_bounds = array<i64: 1, 128>}, {transform_indices = @transform_5, window_bounds = array<i64: 1, 256, 128>}]} {
    %0 = tpu.iota {dimensions = array<i32: 0>} : vector<64x128xi32>
    %c16_i32 = arith.constant 16 : i32
    %c0_i32 = arith.constant 0 : i32
    %1 = arith.cmpi eq, %c16_i32, %c0_i32 : i32
    %c1_i32 = arith.constant 1 : i32
    %2 = arith.select %1, %c1_i32, %c16_i32 : i32
    %3 = vector.broadcast %2 : i32 to vector<64x128xi32>
    %4 = arith.remsi %0, %3 : vector<64x128xi32>
    %c0_i32_0 = arith.constant 0 : i32
    %5 = vector.broadcast %c0_i32_0 : i32 to vector<64x128xi32>
    %6 = arith.cmpi ne, %4, %5 : vector<64x128xi32>
    %c0_i32_1 = arith.constant 0 : i32
    %7 = vector.broadcast %c0_i32_1 : i32 to vector<64x128xi32>
    %8 = arith.cmpi slt, %4, %7 : vector<64x128xi32>
    %c0_i32_2 = arith.constant 0 : i32
    %9 = arith.cmpi slt, %2, %c0_i32_2 : i32
    %10 = vector.broadcast %9 : i1 to vector<64x128xi1>
    %11 = vector.broadcast %10 : vector<64x128xi1> to vector<64x128xi1>
    %12 = arith.xori %8, %11 : vector<64x128xi1>
    %13 = arith.andi %12, %6 : vector<64x128xi1>
    %14 = vector.broadcast %2 : i32 to vector<64x128xi32>
    %15 = arith.addi %4, %14 : vector<64x128xi32>
    %16 = arith.select %13, %15, %4 : vector<64x128xi1>, vector<64x128xi32>
    %c0_i32_3 = arith.constant 0 : i32
    %17 = vector.broadcast %c0_i32_3 : i32 to vector<64x128xi32>
    %18 = arith.cmpi ne, %16, %17 : vector<64x128xi32>
    %c15_i32 = arith.constant 15 : i32
    %19 = vector.broadcast %c15_i32 : i32 to vector<64x128xi32>
    %20 = arith.cmpi ne, %16, %19 : vector<64x128xi32>
    %cst = arith.constant 0.000000e+00 : bf16
    %21 = vector.broadcast %cst : bf16 to vector<24x128xbf16>
    %c0 = arith.constant 0 : index
    %c0_4 = arith.constant 0 : index
    %22 = vector.load %arg7[%c0, %c0_4] : memref<304x128xbf16, #tpu.memory_space<vmem>>, vector<24x128xbf16>
    tpu.vector_store %arg7[%c0, %c0_4], %21 {strides = array<i32>} : memref<304x128xbf16, #tpu.memory_space<vmem>>, vector<24x128xbf16>,
    %cst_5 = arith.constant 0.000000e+00 : bf16
    %23 = vector.broadcast %cst_5 : bf16 to vector<24x128xbf16>
    %c280 = arith.constant 280 : index
    %c0_6 = arith.constant 0 : index
    %24 = vector.load %arg7[%c280, %c0_6] : memref<304x128xbf16, #tpu.memory_space<vmem>>, vector<24x128xbf16>
    tpu.vector_store %arg7[%c280, %c0_6], %23 {strides = array<i32>} : memref<304x128xbf16, #tpu.memory_space<vmem>>, vector<24x128xbf16>,
    %c0_7 = arith.constant 0 : index
    %c0_8 = arith.constant 0 : index
    %25 = vector.load %arg3[%c0_7, %c0_8] : memref<1x128xf32, #tpu.memory_space<vmem>>, vector<1x128xf32>
    %c0_9 = arith.constant 0 : index
    %c0_10 = arith.constant 0 : index
    %26 = vector.load %arg5[%c0_9, %c0_10] : memref<1x128xf32, #tpu.memory_space<vmem>>, vector<1x128xf32>
    %c0_11 = arith.constant 0 : index
    %c0_12 = arith.constant 0 : index
    %c0_13 = arith.constant 0 : index
    %27 = vector.load %arg1[%c0_11, %c0_12, %c0_13] : memref<1x304x128xbf16, #tpu.memory_space<vmem>>, vector<1x112x128xbf16>
    %28 = vector.shape_cast %27 : vector<1x112x128xbf16> to vector<112x128xbf16>
    %29 = arith.extf %28 : vector<112x128xbf16> to vector<112x128xf32>
    %30 = vector.extract_strided_slice %29 {offsets = [7, 0], sizes = [64, 128], strides = [1, 1]} : vector<112x128xf32> to vector<64x128xf32>
    %cst_14 = arith.constant 0.000000e+00 : f32
    %31 = vector.broadcast %cst_14 : f32 to vector<64x128xf32>
    %32 = arith.select %18, %30, %31 : vector<64x128xi1>, vector<64x128xf32>
    %33 = arith.truncf %32 : vector<64x128xf32> to vector<64x128xbf16>
    %34 = vector.extract_strided_slice %29 {offsets = [8, 0], sizes = [64, 128], strides = [1, 1]} : vector<112x128xf32> to vector<64x128xf32>
    %35 = arith.truncf %34 : vector<64x128xf32> to vector<64x128xbf16>
    %36 = vector.extract_strided_slice %29 {offsets = [9, 0], sizes = [64, 128], strides = [1, 1]} : vector<112x128xf32> to vector<64x128xf32>
    %cst_15 = arith.constant 0.000000e+00 : f32
    %37 = vector.broadcast %cst_15 : f32 to vector<64x128xf32>
    %38 = arith.select %20, %36, %37 : vector<64x128xi1>, vector<64x128xf32>
    %39 = arith.truncf %38 : vector<64x128xf32> to vector<64x128xbf16>
    %40 = tpu.concatenate %33, %35, %39 in 1 : vector<64x128xbf16>, vector<64x128xbf16>, vector<64x128xbf16> -> vector<64x384xbf16>
    %c0_16 = arith.constant 0 : index
    %c0_17 = arith.constant 0 : index
    %c0_18 = arith.constant 0 : index
    %41 = vector.load %arg2[%c0_16, %c0_17, %c0_18] : memref<3x384x128xbf16, #tpu.memory_space<vmem>>, vector<1x384x128xbf16>
    %42 = vector.shape_cast %41 : vector<1x384x128xbf16> to vector<384x128xbf16>
    %cst_19 = arith.constant dense<0.000000e+00> : vector<64x128xf32>
    %43 = tpu.matmul %40, %42, %cst_19 {dimension_numbers = #tpu.dot_dimension_numbers<[1], [0], [0], [1], [0, 0, 1, 1], [], []>} : vector<64x384xbf16>, vector<384x128xbf16>, vector<64x128xf32> -> vector<64x128xf32>
    %44 = vector.extract_strided_slice %29 {offsets = [23, 0], sizes = [64, 128], strides = [1, 1]} : vector<112x128xf32> to vector<64x128xf32>
    %cst_20 = arith.constant 0.000000e+00 : f32
    %45 = vector.broadcast %cst_20 : f32 to vector<64x128xf32>
    %46 = arith.select %18, %44, %45 : vector<64x128xi1>, vector<64x128xf32>
    %47 = arith.truncf %46 : vector<64x128xf32> to vector<64x128xbf16>
    %48 = vector.extract_strided_slice %29 {offsets = [24, 0], sizes = [64, 128], strides = [1, 1]} : vector<112x128xf32> to vector<64x128xf32>
    %49 = arith.truncf %48 : vector<64x128xf32> to vector<64x128xbf16>
    %50 = vector.extract_strided_slice %29 {offsets = [25, 0], sizes = [64, 128], strides = [1, 1]} : vector<112x128xf32> to vector<64x128xf32>
    %cst_21 = arith.constant 0.000000e+00 : f32
    %51 = vector.broadcast %cst_21 : f32 to vector<64x128xf32>
    %52 = arith.select %20, %50, %51 : vector<64x128xi1>, vector<64x128xf32>
    %53 = arith.truncf %52 : vector<64x128xf32> to vector<64x128xbf16>
    %54 = tpu.concatenate %47, %49, %53 in 1 : vector<64x128xbf16>, vector<64x128xbf16>, vector<64x128xbf16> -> vector<64x384xbf16>
    %c1 = arith.constant 1 : index
    %c0_22 = arith.constant 0 : index
    %c0_23 = arith.constant 0 : index
    %55 = vector.load %arg2[%c1, %c0_22, %c0_23] : memref<3x384x128xbf16, #tpu.memory_space<vmem>>, vector<1x384x128xbf16>
    %56 = vector.shape_cast %55 : vector<1x384x128xbf16> to vector<384x128xbf16>
    %cst_24 = arith.constant dense<0.000000e+00> : vector<64x128xf32>
    %57 = tpu.matmul %54, %56, %cst_24 {dimension_numbers = #tpu.dot_dimension_numbers<[1], [0], [0], [1], [0, 0, 1, 1], [], []>} : vector<64x384xbf16>, vector<384x128xbf16>, vector<64x128xf32> -> vector<64x128xf32>
    %58 = arith.addf %43, %57 : vector<64x128xf32>
    %59 = vector.extract_strided_slice %29 {offsets = [39, 0], sizes = [64, 128], strides = [1, 1]} : vector<112x128xf32> to vector<64x128xf32>
    %cst_25 = arith.constant 0.000000e+00 : f32
    %60 = vector.broadcast %cst_25 : f32 to vector<64x128xf32>
    %61 = arith.select %18, %59, %60 : vector<64x128xi1>, vector<64x128xf32>
    %62 = arith.truncf %61 : vector<64x128xf32> to vector<64x128xbf16>
    %63 = vector.extract_strided_slice %29 {offsets = [40, 0], sizes = [64, 128], strides = [1, 1]} : vector<112x128xf32> to vector<64x128xf32>
    %64 = arith.truncf %63 : vector<64x128xf32> to vector<64x128xbf16>
    %65 = vector.extract_strided_slice %29 {offsets = [41, 0], sizes = [64, 128], strides = [1, 1]} : vector<112x128xf32> to vector<64x128xf32>
    %cst_26 = arith.constant 0.000000e+00 : f32
    %66 = vector.broadcast %cst_26 : f32 to vector<64x128xf32>
    %67 = arith.select %20, %65, %66 : vector<64x128xi1>, vector<64x128xf32>
    %68 = arith.truncf %67 : vector<64x128xf32> to vector<64x128xbf16>
    %69 = tpu.concatenate %62, %64, %68 in 1 : vector<64x128xbf16>, vector<64x128xbf16>, vector<64x128xbf16> -> vector<64x384xbf16>
    %c2 = arith.constant 2 : index
    %c0_27 = arith.constant 0 : index
    %c0_28 = arith.constant 0 : index
    %70 = vector.load %arg2[%c2, %c0_27, %c0_28] : memref<3x384x128xbf16, #tpu.memory_space<vmem>>, vector<1x384x128xbf16>
    %71 = vector.shape_cast %70 : vector<1x384x128xbf16> to vector<384x128xbf16>
    %cst_29 = arith.constant dense<0.000000e+00> : vector<64x128xf32>
    %72 = tpu.matmul %69, %71, %cst_29 {dimension_numbers = #tpu.dot_dimension_numbers<[1], [0], [0], [1], [0, 0, 1, 1], [], []>} : vector<64x384xbf16>, vector<384x128xbf16>, vector<64x128xf32> -> vector<64x128xf32>
    %73 = arith.addf %58, %72 : vector<64x128xf32>
    %74 = vector.broadcast %25 : vector<1x128xf32> to vector<64x128xf32>
    %75 = arith.addf %73, %74 : vector<64x128xf32>
    %cst_30 = arith.constant 0.000000e+00 : f32
    %cst_31 = arith.constant 6.000000e+00 : f32
    %76 = vector.broadcast %cst_30 : f32 to vector<64x128xf32>
    %77 = arith.maximumf %76, %75 : vector<64x128xf32>
    %78 = vector.broadcast %cst_31 : f32 to vector<64x128xf32>
    %79 = arith.minimumf %78, %77 : vector<64x128xf32>
    %80 = arith.truncf %79 : vector<64x128xf32> to vector<64x128xbf16>
    %c24 = arith.constant 24 : index
    %c0_32 = arith.constant 0 : index
    %81 = vector.load %arg7[%c24, %c0_32] : memref<304x128xbf16, #tpu.memory_space<vmem>>, vector<64x128xbf16>
    tpu.vector_store %arg7[%c24, %c0_32], %80 {strides = array<i32>} : memref<304x128xbf16, #tpu.memory_space<vmem>>, vector<64x128xbf16>,
    %c0_33 = arith.constant 0 : index
    %c64 = arith.constant 64 : index
    %c0_34 = arith.constant 0 : index
    %82 = vector.load %arg1[%c0_33, %c64, %c0_34] : memref<1x304x128xbf16, #tpu.memory_space<vmem>>, vector<1x112x128xbf16>
    %83 = vector.shape_cast %82 : vector<1x112x128xbf16> to vector<112x128xbf16>
    %84 = arith.extf %83 : vector<112x128xbf16> to vector<112x128xf32>
    %85 = vector.extract_strided_slice %84 {offsets = [7, 0], sizes = [64, 128], strides = [1, 1]} : vector<112x128xf32> to vector<64x128xf32>
    %cst_35 = arith.constant 0.000000e+00 : f32
    %86 = vector.broadcast %cst_35 : f32 to vector<64x128xf32>
    %87 = arith.select %18, %85, %86 : vector<64x128xi1>, vector<64x128xf32>
    %88 = arith.truncf %87 : vector<64x128xf32> to vector<64x128xbf16>
    %89 = vector.extract_strided_slice %84 {offsets = [8, 0], sizes = [64, 128], strides = [1, 1]} : vector<112x128xf32> to vector<64x128xf32>
    %90 = arith.truncf %89 : vector<64x128xf32> to vector<64x128xbf16>
    %91 = vector.extract_strided_slice %84 {offsets = [9, 0], sizes = [64, 128], strides = [1, 1]} : vector<112x128xf32> to vector<64x128xf32>
    %cst_36 = arith.constant 0.000000e+00 : f32
    %92 = vector.broadcast %cst_36 : f32 to vector<64x128xf32>
    %93 = arith.select %20, %91, %92 : vector<64x128xi1>, vector<64x128xf32>
    %94 = arith.truncf %93 : vector<64x128xf32> to vector<64x128xbf16>
    %95 = tpu.concatenate %88, %90, %94 in 1 : vector<64x128xbf16>, vector<64x128xbf16>, vector<64x128xbf16> -> vector<64x384xbf16>
    %c0_37 = arith.constant 0 : index
    %c0_38 = arith.constant 0 : index
    %c0_39 = arith.constant 0 : index
    %96 = vector.load %arg2[%c0_37, %c0_38, %c0_39] : memref<3x384x128xbf16, #tpu.memory_space<vmem>>, vector<1x384x128xbf16>
    %97 = vector.shape_cast %96 : vector<1x384x128xbf16> to vector<384x128xbf16>
    %cst_40 = arith.constant dense<0.000000e+00> : vector<64x128xf32>
    %98 = tpu.matmul %95, %97, %cst_40 {dimension_numbers = #tpu.dot_dimension_numbers<[1], [0], [0], [1], [0, 0, 1, 1], [], []>} : vector<64x384xbf16>, vector<384x128xbf16>, vector<64x128xf32> -> vector<64x128xf32>
    %99 = vector.extract_strided_slice %84 {offsets = [23, 0], sizes = [64, 128], strides = [1, 1]} : vector<112x128xf32> to vector<64x128xf32>
    %cst_41 = arith.constant 0.000000e+00 : f32
    %100 = vector.broadcast %cst_41 : f32 to vector<64x128xf32>
    %101 = arith.select %18, %99, %100 : vector<64x128xi1>, vector<64x128xf32>
    %102 = arith.truncf %101 : vector<64x128xf32> to vector<64x128xbf16>
    %103 = vector.extract_strided_slice %84 {offsets = [24, 0], sizes = [64, 128], strides = [1, 1]} : vector<112x128xf32> to vector<64x128xf32>
    %104 = arith.truncf %103 : vector<64x128xf32> to vector<64x128xbf16>
    %105 = vector.extract_strided_slice %84 {offsets = [25, 0], sizes = [64, 128], strides = [1, 1]} : vector<112x128xf32> to vector<64x128xf32>
    %cst_42 = arith.constant 0.000000e+00 : f32
    %106 = vector.broadcast %cst_42 : f32 to vector<64x128xf32>
    %107 = arith.select %20, %105, %106 : vector<64x128xi1>, vector<64x128xf32>
    %108 = arith.truncf %107 : vector<64x128xf32> to vector<64x128xbf16>
    %109 = tpu.concatenate %102, %104, %108 in 1 : vector<64x128xbf16>, vector<64x128xbf16>, vector<64x128xbf16> -> vector<64x384xbf16>
    %c1_43 = arith.constant 1 : index
    %c0_44 = arith.constant 0 : index
    %c0_45 = arith.constant 0 : index
    %110 = vector.load %arg2[%c1_43, %c0_44, %c0_45] : memref<3x384x128xbf16, #tpu.memory_space<vmem>>, vector<1x384x128xbf16>
    %111 = vector.shape_cast %110 : vector<1x384x128xbf16> to vector<384x128xbf16>
    %cst_46 = arith.constant dense<0.000000e+00> : vector<64x128xf32>
    %112 = tpu.matmul %109, %111, %cst_46 {dimension_numbers = #tpu.dot_dimension_numbers<[1], [0], [0], [1], [0, 0, 1, 1], [], []>} : vector<64x384xbf16>, vector<384x128xbf16>, vector<64x128xf32> -> vector<64x128xf32>
    %113 = arith.addf %98, %112 : vector<64x128xf32>
    %114 = vector.extract_strided_slice %84 {offsets = [39, 0], sizes = [64, 128], strides = [1, 1]} : vector<112x128xf32> to vector<64x128xf32>
    %cst_47 = arith.constant 0.000000e+00 : f32
    %115 = vector.broadcast %cst_47 : f32 to vector<64x128xf32>
    %116 = arith.select %18, %114, %115 : vector<64x128xi1>, vector<64x128xf32>
    %117 = arith.truncf %116 : vector<64x128xf32> to vector<64x128xbf16>
    %118 = vector.extract_strided_slice %84 {offsets = [40, 0], sizes = [64, 128], strides = [1, 1]} : vector<112x128xf32> to vector<64x128xf32>
    %119 = arith.truncf %118 : vector<64x128xf32> to vector<64x128xbf16>
    %120 = vector.extract_strided_slice %84 {offsets = [41, 0], sizes = [64, 128], strides = [1, 1]} : vector<112x128xf32> to vector<64x128xf32>
    %cst_48 = arith.constant 0.000000e+00 : f32
    %121 = vector.broadcast %cst_48 : f32 to vector<64x128xf32>
    %122 = arith.select %20, %120, %121 : vector<64x128xi1>, vector<64x128xf32>
    %123 = arith.truncf %122 : vector<64x128xf32> to vector<64x128xbf16>
    %124 = tpu.concatenate %117, %119, %123 in 1 : vector<64x128xbf16>, vector<64x128xbf16>, vector<64x128xbf16> -> vector<64x384xbf16>
    %c2_49 = arith.constant 2 : index
    %c0_50 = arith.constant 0 : index
    %c0_51 = arith.constant 0 : index
    %125 = vector.load %arg2[%c2_49, %c0_50, %c0_51] : memref<3x384x128xbf16, #tpu.memory_space<vmem>>, vector<1x384x128xbf16>
    %126 = vector.shape_cast %125 : vector<1x384x128xbf16> to vector<384x128xbf16>
    %cst_52 = arith.constant dense<0.000000e+00> : vector<64x128xf32>
    %127 = tpu.matmul %124, %126, %cst_52 {dimension_numbers = #tpu.dot_dimension_numbers<[1], [0], [0], [1], [0, 0, 1, 1], [], []>} : vector<64x384xbf16>, vector<384x128xbf16>, vector<64x128xf32> -> vector<64x128xf32>
    %128 = arith.addf %113, %127 : vector<64x128xf32>
    %129 = vector.broadcast %25 : vector<1x128xf32> to vector<64x128xf32>
    %130 = arith.addf %128, %129 : vector<64x128xf32>
    %cst_53 = arith.constant 0.000000e+00 : f32
    %cst_54 = arith.constant 6.000000e+00 : f32
    %131 = vector.broadcast %cst_53 : f32 to vector<64x128xf32>
    %132 = arith.maximumf %131, %130 : vector<64x128xf32>
    %133 = vector.broadcast %cst_54 : f32 to vector<64x128xf32>
    %134 = arith.minimumf %133, %132 : vector<64x128xf32>
    %135 = arith.truncf %134 : vector<64x128xf32> to vector<64x128xbf16>
    %c88 = arith.constant 88 : index
    %c0_55 = arith.constant 0 : index
    %136 = vector.load %arg7[%c88, %c0_55] : memref<304x128xbf16, #tpu.memory_space<vmem>>, vector<64x128xbf16>
    tpu.vector_store %arg7[%c88, %c0_55], %135 {strides = array<i32>} : memref<304x128xbf16, #tpu.memory_space<vmem>>, vector<64x128xbf16>,
    %c0_56 = arith.constant 0 : index
    %c128 = arith.constant 128 : index
    %c0_57 = arith.constant 0 : index
    %137 = vector.load %arg1[%c0_56, %c128, %c0_57] : memref<1x304x128xbf16, #tpu.memory_space<vmem>>, vector<1x112x128xbf16>
    %138 = vector.shape_cast %137 : vector<1x112x128xbf16> to vector<112x128xbf16>
    %139 = arith.extf %138 : vector<112x128xbf16> to vector<112x128xf32>
    %140 = vector.extract_strided_slice %139 {offsets = [7, 0], sizes = [64, 128], strides = [1, 1]} : vector<112x128xf32> to vector<64x128xf32>
    %cst_58 = arith.constant 0.000000e+00 : f32
    %141 = vector.broadcast %cst_58 : f32 to vector<64x128xf32>
    %142 = arith.select %18, %140, %141 : vector<64x128xi1>, vector<64x128xf32>
    %143 = arith.truncf %142 : vector<64x128xf32> to vector<64x128xbf16>
    %144 = vector.extract_strided_slice %139 {offsets = [8, 0], sizes = [64, 128], strides = [1, 1]} : vector<112x128xf32> to vector<64x128xf32>
    %145 = arith.truncf %144 : vector<64x128xf32> to vector<64x128xbf16>
    %146 = vector.extract_strided_slice %139 {offsets = [9, 0], sizes = [64, 128], strides = [1, 1]} : vector<112x128xf32> to vector<64x128xf32>
    %cst_59 = arith.constant 0.000000e+00 : f32
    %147 = vector.broadcast %cst_59 : f32 to vector<64x128xf32>
    %148 = arith.select %20, %146, %147 : vector<64x128xi1>, vector<64x128xf32>
    %149 = arith.truncf %148 : vector<64x128xf32> to vector<64x128xbf16>
    %150 = tpu.concatenate %143, %145, %149 in 1 : vector<64x128xbf16>, vector<64x128xbf16>, vector<64x128xbf16> -> vector<64x384xbf16>
    %c0_60 = arith.constant 0 : index
    %c0_61 = arith.constant 0 : index
    %c0_62 = arith.constant 0 : index
    %151 = vector.load %arg2[%c0_60, %c0_61, %c0_62] : memref<3x384x128xbf16, #tpu.memory_space<vmem>>, vector<1x384x128xbf16>
    %152 = vector.shape_cast %151 : vector<1x384x128xbf16> to vector<384x128xbf16>
    %cst_63 = arith.constant dense<0.000000e+00> : vector<64x128xf32>
    %153 = tpu.matmul %150, %152, %cst_63 {dimension_numbers = #tpu.dot_dimension_numbers<[1], [0], [0], [1], [0, 0, 1, 1], [], []>} : vector<64x384xbf16>, vector<384x128xbf16>, vector<64x128xf32> -> vector<64x128xf32>
    %154 = vector.extract_strided_slice %139 {offsets = [23, 0], sizes = [64, 128], strides = [1, 1]} : vector<112x128xf32> to vector<64x128xf32>
    %cst_64 = arith.constant 0.000000e+00 : f32
    %155 = vector.broadcast %cst_64 : f32 to vector<64x128xf32>
    %156 = arith.select %18, %154, %155 : vector<64x128xi1>, vector<64x128xf32>
    %157 = arith.truncf %156 : vector<64x128xf32> to vector<64x128xbf16>
    %158 = vector.extract_strided_slice %139 {offsets = [24, 0], sizes = [64, 128], strides = [1, 1]} : vector<112x128xf32> to vector<64x128xf32>
    %159 = arith.truncf %158 : vector<64x128xf32> to vector<64x128xbf16>
    %160 = vector.extract_strided_slice %139 {offsets = [25, 0], sizes = [64, 128], strides = [1, 1]} : vector<112x128xf32> to vector<64x128xf32>
    %cst_65 = arith.constant 0.000000e+00 : f32
    %161 = vector.broadcast %cst_65 : f32 to vector<64x128xf32>
    %162 = arith.select %20, %160, %161 : vector<64x128xi1>, vector<64x128xf32>
    %163 = arith.truncf %162 : vector<64x128xf32> to vector<64x128xbf16>
    %164 = tpu.concatenate %157, %159, %163 in 1 : vector<64x128xbf16>, vector<64x128xbf16>, vector<64x128xbf16> -> vector<64x384xbf16>
    %c1_66 = arith.constant 1 : index
    %c0_67 = arith.constant 0 : index
    %c0_68 = arith.constant 0 : index
    %165 = vector.load %arg2[%c1_66, %c0_67, %c0_68] : memref<3x384x128xbf16, #tpu.memory_space<vmem>>, vector<1x384x128xbf16>
    %166 = vector.shape_cast %165 : vector<1x384x128xbf16> to vector<384x128xbf16>
    %cst_69 = arith.constant dense<0.000000e+00> : vector<64x128xf32>
    %167 = tpu.matmul %164, %166, %cst_69 {dimension_numbers = #tpu.dot_dimension_numbers<[1], [0], [0], [1], [0, 0, 1, 1], [], []>} : vector<64x384xbf16>, vector<384x128xbf16>, vector<64x128xf32> -> vector<64x128xf32>
    %168 = arith.addf %153, %167 : vector<64x128xf32>
    %169 = vector.extract_strided_slice %139 {offsets = [39, 0], sizes = [64, 128], strides = [1, 1]} : vector<112x128xf32> to vector<64x128xf32>
    %cst_70 = arith.constant 0.000000e+00 : f32
    %170 = vector.broadcast %cst_70 : f32 to vector<64x128xf32>
    %171 = arith.select %18, %169, %170 : vector<64x128xi1>, vector<64x128xf32>
    %172 = arith.truncf %171 : vector<64x128xf32> to vector<64x128xbf16>
    %173 = vector.extract_strided_slice %139 {offsets = [40, 0], sizes = [64, 128], strides = [1, 1]} : vector<112x128xf32> to vector<64x128xf32>
    %174 = arith.truncf %173 : vector<64x128xf32> to vector<64x128xbf16>
    %175 = vector.extract_strided_slice %139 {offsets = [41, 0], sizes = [64, 128], strides = [1, 1]} : vector<112x128xf32> to vector<64x128xf32>
    %cst_71 = arith.constant 0.000000e+00 : f32
    %176 = vector.broadcast %cst_71 : f32 to vector<64x128xf32>
    %177 = arith.select %20, %175, %176 : vector<64x128xi1>, vector<64x128xf32>
    %178 = arith.truncf %177 : vector<64x128xf32> to vector<64x128xbf16>
    %179 = tpu.concatenate %172, %174, %178 in 1 : vector<64x128xbf16>, vector<64x128xbf16>, vector<64x128xbf16> -> vector<64x384xbf16>
    %c2_72 = arith.constant 2 : index
    %c0_73 = arith.constant 0 : index
    %c0_74 = arith.constant 0 : index
    %180 = vector.load %arg2[%c2_72, %c0_73, %c0_74] : memref<3x384x128xbf16, #tpu.memory_space<vmem>>, vector<1x384x128xbf16>
    %181 = vector.shape_cast %180 : vector<1x384x128xbf16> to vector<384x128xbf16>
    %cst_75 = arith.constant dense<0.000000e+00> : vector<64x128xf32>
    %182 = tpu.matmul %179, %181, %cst_75 {dimension_numbers = #tpu.dot_dimension_numbers<[1], [0], [0], [1], [0, 0, 1, 1], [], []>} : vector<64x384xbf16>, vector<384x128xbf16>, vector<64x128xf32> -> vector<64x128xf32>
    %183 = arith.addf %168, %182 : vector<64x128xf32>
    %184 = vector.broadcast %25 : vector<1x128xf32> to vector<64x128xf32>
    %185 = arith.addf %183, %184 : vector<64x128xf32>
    %cst_76 = arith.constant 0.000000e+00 : f32
    %cst_77 = arith.constant 6.000000e+00 : f32
    %186 = vector.broadcast %cst_76 : f32 to vector<64x128xf32>
    %187 = arith.maximumf %186, %185 : vector<64x128xf32>
    %188 = vector.broadcast %cst_77 : f32 to vector<64x128xf32>
    %189 = arith.minimumf %188, %187 : vector<64x128xf32>
    %190 = arith.truncf %189 : vector<64x128xf32> to vector<64x128xbf16>
    %c152 = arith.constant 152 : index
    %c0_78 = arith.constant 0 : index
    %191 = vector.load %arg7[%c152, %c0_78] : memref<304x128xbf16, #tpu.memory_space<vmem>>, vector<64x128xbf16>
    tpu.vector_store %arg7[%c152, %c0_78], %190 {strides = array<i32>} : memref<304x128xbf16, #tpu.memory_space<vmem>>, vector<64x128xbf16>,
    %c0_79 = arith.constant 0 : index
    %c192 = arith.constant 192 : index
    %c0_80 = arith.constant 0 : index
    %192 = vector.load %arg1[%c0_79, %c192, %c0_80] : memref<1x304x128xbf16, #tpu.memory_space<vmem>>, vector<1x112x128xbf16>
    %193 = vector.shape_cast %192 : vector<1x112x128xbf16> to vector<112x128xbf16>
    %194 = arith.extf %193 : vector<112x128xbf16> to vector<112x128xf32>
    %195 = vector.extract_strided_slice %194 {offsets = [7, 0], sizes = [64, 128], strides = [1, 1]} : vector<112x128xf32> to vector<64x128xf32>
    %cst_81 = arith.constant 0.000000e+00 : f32
    %196 = vector.broadcast %cst_81 : f32 to vector<64x128xf32>
    %197 = arith.select %18, %195, %196 : vector<64x128xi1>, vector<64x128xf32>
    %198 = arith.truncf %197 : vector<64x128xf32> to vector<64x128xbf16>
    %199 = vector.extract_strided_slice %194 {offsets = [8, 0], sizes = [64, 128], strides = [1, 1]} : vector<112x128xf32> to vector<64x128xf32>
    %200 = arith.truncf %199 : vector<64x128xf32> to vector<64x128xbf16>
    %201 = vector.extract_strided_slice %194 {offsets = [9, 0], sizes = [64, 128], strides = [1, 1]} : vector<112x128xf32> to vector<64x128xf32>
    %cst_82 = arith.constant 0.000000e+00 : f32
    %202 = vector.broadcast %cst_82 : f32 to vector<64x128xf32>
    %203 = arith.select %20, %201, %202 : vector<64x128xi1>, vector<64x128xf32>
    %204 = arith.truncf %203 : vector<64x128xf32> to vector<64x128xbf16>
    %205 = tpu.concatenate %198, %200, %204 in 1 : vector<64x128xbf16>, vector<64x128xbf16>, vector<64x128xbf16> -> vector<64x384xbf16>
    %c0_83 = arith.constant 0 : index
    %c0_84 = arith.constant 0 : index
    %c0_85 = arith.constant 0 : index
    %206 = vector.load %arg2[%c0_83, %c0_84, %c0_85] : memref<3x384x128xbf16, #tpu.memory_space<vmem>>, vector<1x384x128xbf16>
    %207 = vector.shape_cast %206 : vector<1x384x128xbf16> to vector<384x128xbf16>
    %cst_86 = arith.constant dense<0.000000e+00> : vector<64x128xf32>
    %208 = tpu.matmul %205, %207, %cst_86 {dimension_numbers = #tpu.dot_dimension_numbers<[1], [0], [0], [1], [0, 0, 1, 1], [], []>} : vector<64x384xbf16>, vector<384x128xbf16>, vector<64x128xf32> -> vector<64x128xf32>
    %209 = vector.extract_strided_slice %194 {offsets = [23, 0], sizes = [64, 128], strides = [1, 1]} : vector<112x128xf32> to vector<64x128xf32>
    %cst_87 = arith.constant 0.000000e+00 : f32
    %210 = vector.broadcast %cst_87 : f32 to vector<64x128xf32>
    %211 = arith.select %18, %209, %210 : vector<64x128xi1>, vector<64x128xf32>
    %212 = arith.truncf %211 : vector<64x128xf32> to vector<64x128xbf16>
    %213 = vector.extract_strided_slice %194 {offsets = [24, 0], sizes = [64, 128], strides = [1, 1]} : vector<112x128xf32> to vector<64x128xf32>
    %214 = arith.truncf %213 : vector<64x128xf32> to vector<64x128xbf16>
    %215 = vector.extract_strided_slice %194 {offsets = [25, 0], sizes = [64, 128], strides = [1, 1]} : vector<112x128xf32> to vector<64x128xf32>
    %cst_88 = arith.constant 0.000000e+00 : f32
    %216 = vector.broadcast %cst_88 : f32 to vector<64x128xf32>
    %217 = arith.select %20, %215, %216 : vector<64x128xi1>, vector<64x128xf32>
    %218 = arith.truncf %217 : vector<64x128xf32> to vector<64x128xbf16>
    %219 = tpu.concatenate %212, %214, %218 in 1 : vector<64x128xbf16>, vector<64x128xbf16>, vector<64x128xbf16> -> vector<64x384xbf16>
    %c1_89 = arith.constant 1 : index
    %c0_90 = arith.constant 0 : index
    %c0_91 = arith.constant 0 : index
    %220 = vector.load %arg2[%c1_89, %c0_90, %c0_91] : memref<3x384x128xbf16, #tpu.memory_space<vmem>>, vector<1x384x128xbf16>
    %221 = vector.shape_cast %220 : vector<1x384x128xbf16> to vector<384x128xbf16>
    %cst_92 = arith.constant dense<0.000000e+00> : vector<64x128xf32>
    %222 = tpu.matmul %219, %221, %cst_92 {dimension_numbers = #tpu.dot_dimension_numbers<[1], [0], [0], [1], [0, 0, 1, 1], [], []>} : vector<64x384xbf16>, vector<384x128xbf16>, vector<64x128xf32> -> vector<64x128xf32>
    %223 = arith.addf %208, %222 : vector<64x128xf32>
    %224 = vector.extract_strided_slice %194 {offsets = [39, 0], sizes = [64, 128], strides = [1, 1]} : vector<112x128xf32> to vector<64x128xf32>
    %cst_93 = arith.constant 0.000000e+00 : f32
    %225 = vector.broadcast %cst_93 : f32 to vector<64x128xf32>
    %226 = arith.select %18, %224, %225 : vector<64x128xi1>, vector<64x128xf32>
    %227 = arith.truncf %226 : vector<64x128xf32> to vector<64x128xbf16>
    %228 = vector.extract_strided_slice %194 {offsets = [40, 0], sizes = [64, 128], strides = [1, 1]} : vector<112x128xf32> to vector<64x128xf32>
    %229 = arith.truncf %228 : vector<64x128xf32> to vector<64x128xbf16>
    %230 = vector.extract_strided_slice %194 {offsets = [41, 0], sizes = [64, 128], strides = [1, 1]} : vector<112x128xf32> to vector<64x128xf32>
    %cst_94 = arith.constant 0.000000e+00 : f32
    %231 = vector.broadcast %cst_94 : f32 to vector<64x128xf32>
    %232 = arith.select %20, %230, %231 : vector<64x128xi1>, vector<64x128xf32>
    %233 = arith.truncf %232 : vector<64x128xf32> to vector<64x128xbf16>
    %234 = tpu.concatenate %227, %229, %233 in 1 : vector<64x128xbf16>, vector<64x128xbf16>, vector<64x128xbf16> -> vector<64x384xbf16>
    %c2_95 = arith.constant 2 : index
    %c0_96 = arith.constant 0 : index
    %c0_97 = arith.constant 0 : index
    %235 = vector.load %arg2[%c2_95, %c0_96, %c0_97] : memref<3x384x128xbf16, #tpu.memory_space<vmem>>, vector<1x384x128xbf16>
    %236 = vector.shape_cast %235 : vector<1x384x128xbf16> to vector<384x128xbf16>
    %cst_98 = arith.constant dense<0.000000e+00> : vector<64x128xf32>
    %237 = tpu.matmul %234, %236, %cst_98 {dimension_numbers = #tpu.dot_dimension_numbers<[1], [0], [0], [1], [0, 0, 1, 1], [], []>} : vector<64x384xbf16>, vector<384x128xbf16>, vector<64x128xf32> -> vector<64x128xf32>
    %238 = arith.addf %223, %237 : vector<64x128xf32>
    %239 = vector.broadcast %25 : vector<1x128xf32> to vector<64x128xf32>
    %240 = arith.addf %238, %239 : vector<64x128xf32>
    %cst_99 = arith.constant 0.000000e+00 : f32
    %cst_100 = arith.constant 6.000000e+00 : f32
    %241 = vector.broadcast %cst_99 : f32 to vector<64x128xf32>
    %242 = arith.maximumf %241, %240 : vector<64x128xf32>
    %243 = vector.broadcast %cst_100 : f32 to vector<64x128xf32>
    %244 = arith.minimumf %243, %242 : vector<64x128xf32>
    %245 = arith.truncf %244 : vector<64x128xf32> to vector<64x128xbf16>
    %c216 = arith.constant 216 : index
    %c0_101 = arith.constant 0 : index
    %246 = vector.load %arg7[%c216, %c0_101] : memref<304x128xbf16, #tpu.memory_space<vmem>>, vector<64x128xbf16>
    tpu.vector_store %arg7[%c216, %c0_101], %245 {strides = array<i32>} : memref<304x128xbf16, #tpu.memory_space<vmem>>, vector<64x128xbf16>,
    %c0_102 = arith.constant 0 : index
    %c0_103 = arith.constant 0 : index
    %247 = vector.load %arg7[%c0_102, %c0_103] : memref<304x128xbf16, #tpu.memory_space<vmem>>, vector<112x128xbf16>
    %248 = arith.extf %247 : vector<112x128xbf16> to vector<112x128xf32>
    %249 = vector.extract_strided_slice %248 {offsets = [7, 0], sizes = [64, 128], strides = [1, 1]} : vector<112x128xf32> to vector<64x128xf32>
    %cst_104 = arith.constant 0.000000e+00 : f32
    %250 = vector.broadcast %cst_104 : f32 to vector<64x128xf32>
    %251 = arith.select %18, %249, %250 : vector<64x128xi1>, vector<64x128xf32>
    %252 = arith.truncf %251 : vector<64x128xf32> to vector<64x128xbf16>
    %253 = vector.extract_strided_slice %248 {offsets = [8, 0], sizes = [64, 128], strides = [1, 1]} : vector<112x128xf32> to vector<64x128xf32>
    %254 = arith.truncf %253 : vector<64x128xf32> to vector<64x128xbf16>
    %255 = vector.extract_strided_slice %248 {offsets = [9, 0], sizes = [64, 128], strides = [1, 1]} : vector<112x128xf32> to vector<64x128xf32>
    %cst_105 = arith.constant 0.000000e+00 : f32
    %256 = vector.broadcast %cst_105 : f32 to vector<64x128xf32>
    %257 = arith.select %20, %255, %256 : vector<64x128xi1>, vector<64x128xf32>
    %258 = arith.truncf %257 : vector<64x128xf32> to vector<64x128xbf16>
    %259 = tpu.concatenate %252, %254, %258 in 1 : vector<64x128xbf16>, vector<64x128xbf16>, vector<64x128xbf16> -> vector<64x384xbf16>
    %c0_106 = arith.constant 0 : index
    %c0_107 = arith.constant 0 : index
    %c0_108 = arith.constant 0 : index
    %260 = vector.load %arg4[%c0_106, %c0_107, %c0_108] : memref<3x384x128xbf16, #tpu.memory_space<vmem>>, vector<1x384x128xbf16>
    %261 = vector.shape_cast %260 : vector<1x384x128xbf16> to vector<384x128xbf16>
    %cst_109 = arith.constant dense<0.000000e+00> : vector<64x128xf32>
    %262 = tpu.matmul %259, %261, %cst_109 {dimension_numbers = #tpu.dot_dimension_numbers<[1], [0], [0], [1], [0, 0, 1, 1], [], []>} : vector<64x384xbf16>, vector<384x128xbf16>, vector<64x128xf32> -> vector<64x128xf32>
    %263 = vector.extract_strided_slice %248 {offsets = [23, 0], sizes = [64, 128], strides = [1, 1]} : vector<112x128xf32> to vector<64x128xf32>
    %cst_110 = arith.constant 0.000000e+00 : f32
    %264 = vector.broadcast %cst_110 : f32 to vector<64x128xf32>
    %265 = arith.select %18, %263, %264 : vector<64x128xi1>, vector<64x128xf32>
    %266 = arith.truncf %265 : vector<64x128xf32> to vector<64x128xbf16>
    %267 = vector.extract_strided_slice %248 {offsets = [24, 0], sizes = [64, 128], strides = [1, 1]} : vector<112x128xf32> to vector<64x128xf32>
    %268 = arith.truncf %267 : vector<64x128xf32> to vector<64x128xbf16>
    %269 = vector.extract_strided_slice %248 {offsets = [25, 0], sizes = [64, 128], strides = [1, 1]} : vector<112x128xf32> to vector<64x128xf32>
    %cst_111 = arith.constant 0.000000e+00 : f32
    %270 = vector.broadcast %cst_111 : f32 to vector<64x128xf32>
    %271 = arith.select %20, %269, %270 : vector<64x128xi1>, vector<64x128xf32>
    %272 = arith.truncf %271 : vector<64x128xf32> to vector<64x128xbf16>
    %273 = tpu.concatenate %266, %268, %272 in 1 : vector<64x128xbf16>, vector<64x128xbf16>, vector<64x128xbf16> -> vector<64x384xbf16>
    %c1_112 = arith.constant 1 : index
    %c0_113 = arith.constant 0 : index
    %c0_114 = arith.constant 0 : index
    %274 = vector.load %arg4[%c1_112, %c0_113, %c0_114] : memref<3x384x128xbf16, #tpu.memory_space<vmem>>, vector<1x384x128xbf16>
    %275 = vector.shape_cast %274 : vector<1x384x128xbf16> to vector<384x128xbf16>
    %cst_115 = arith.constant dense<0.000000e+00> : vector<64x128xf32>
    %276 = tpu.matmul %273, %275, %cst_115 {dimension_numbers = #tpu.dot_dimension_numbers<[1], [0], [0], [1], [0, 0, 1, 1], [], []>} : vector<64x384xbf16>, vector<384x128xbf16>, vector<64x128xf32> -> vector<64x128xf32>
    %277 = arith.addf %262, %276 : vector<64x128xf32>
    %278 = vector.extract_strided_slice %248 {offsets = [39, 0], sizes = [64, 128], strides = [1, 1]} : vector<112x128xf32> to vector<64x128xf32>
    %cst_116 = arith.constant 0.000000e+00 : f32
    %279 = vector.broadcast %cst_116 : f32 to vector<64x128xf32>
    %280 = arith.select %18, %278, %279 : vector<64x128xi1>, vector<64x128xf32>
    %281 = arith.truncf %280 : vector<64x128xf32> to vector<64x128xbf16>
    %282 = vector.extract_strided_slice %248 {offsets = [40, 0], sizes = [64, 128], strides = [1, 1]} : vector<112x128xf32> to vector<64x128xf32>
    %283 = arith.truncf %282 : vector<64x128xf32> to vector<64x128xbf16>
    %284 = vector.extract_strided_slice %248 {offsets = [41, 0], sizes = [64, 128], strides = [1, 1]} : vector<112x128xf32> to vector<64x128xf32>
    %cst_117 = arith.constant 0.000000e+00 : f32
    %285 = vector.broadcast %cst_117 : f32 to vector<64x128xf32>
    %286 = arith.select %20, %284, %285 : vector<64x128xi1>, vector<64x128xf32>
    %287 = arith.truncf %286 : vector<64x128xf32> to vector<64x128xbf16>
    %288 = tpu.concatenate %281, %283, %287 in 1 : vector<64x128xbf16>, vector<64x128xbf16>, vector<64x128xbf16> -> vector<64x384xbf16>
    %c2_118 = arith.constant 2 : index
    %c0_119 = arith.constant 0 : index
    %c0_120 = arith.constant 0 : index
    %289 = vector.load %arg4[%c2_118, %c0_119, %c0_120] : memref<3x384x128xbf16, #tpu.memory_space<vmem>>, vector<1x384x128xbf16>
    %290 = vector.shape_cast %289 : vector<1x384x128xbf16> to vector<384x128xbf16>
    %cst_121 = arith.constant dense<0.000000e+00> : vector<64x128xf32>
    %291 = tpu.matmul %288, %290, %cst_121 {dimension_numbers = #tpu.dot_dimension_numbers<[1], [0], [0], [1], [0, 0, 1, 1], [], []>} : vector<64x384xbf16>, vector<384x128xbf16>, vector<64x128xf32> -> vector<64x128xf32>
    %292 = arith.addf %277, %291 : vector<64x128xf32>
    %c0_122 = arith.constant 0 : index
    %c24_123 = arith.constant 24 : index
    %c0_124 = arith.constant 0 : index
    %293 = vector.load %arg1[%c0_122, %c24_123, %c0_124] : memref<1x304x128xbf16, #tpu.memory_space<vmem>>, vector<1x64x128xbf16>
    %294 = vector.shape_cast %293 : vector<1x64x128xbf16> to vector<64x128xbf16>
    %295 = arith.extf %294 : vector<64x128xbf16> to vector<64x128xf32>
    %296 = vector.broadcast %26 : vector<1x128xf32> to vector<64x128xf32>
    %297 = arith.addf %292, %296 : vector<64x128xf32>
    %298 = arith.addf %297, %295 : vector<64x128xf32>
    %cst_125 = arith.constant 0.000000e+00 : f32
    %cst_126 = arith.constant 6.000000e+00 : f32
    %299 = vector.broadcast %cst_125 : f32 to vector<64x128xf32>
    %300 = arith.maximumf %299, %298 : vector<64x128xf32>
    %301 = vector.broadcast %cst_126 : f32 to vector<64x128xf32>
    %302 = arith.minimumf %301, %300 : vector<64x128xf32>
    %303 = arith.truncf %302 : vector<64x128xf32> to vector<64x128xbf16>
    %c0_127 = arith.constant 0 : index
    %c0_128 = arith.constant 0 : index
    %c0_129 = arith.constant 0 : index
    %304 = vector.load %arg6[%c0_127, %c0_128, %c0_129] : memref<1x256x128xbf16, #tpu.memory_space<vmem>>, vector<1x64x128xbf16>
    %305 = vector.shape_cast %304 : vector<1x64x128xbf16> to vector<64x128xbf16>
    %306 = vector.shape_cast %303 : vector<64x128xbf16> to vector<1x64x128xbf16>
    tpu.vector_store %arg6[%c0_127, %c0_128, %c0_129], %306 {strides = array<i32>} : memref<1x256x128xbf16, #tpu.memory_space<vmem>>, vector<1x64x128xbf16>,
    %c64_130 = arith.constant 64 : index
    %c0_131 = arith.constant 0 : index
    %307 = vector.load %arg7[%c64_130, %c0_131] : memref<304x128xbf16, #tpu.memory_space<vmem>>, vector<112x128xbf16>
    %308 = arith.extf %307 : vector<112x128xbf16> to vector<112x128xf32>
    %309 = vector.extract_strided_slice %308 {offsets = [7, 0], sizes = [64, 128], strides = [1, 1]} : vector<112x128xf32> to vector<64x128xf32>
    %cst_132 = arith.constant 0.000000e+00 : f32
    %310 = vector.broadcast %cst_132 : f32 to vector<64x128xf32>
    %311 = arith.select %18, %309, %310 : vector<64x128xi1>, vector<64x128xf32>
    %312 = arith.truncf %311 : vector<64x128xf32> to vector<64x128xbf16>
    %313 = vector.extract_strided_slice %308 {offsets = [8, 0], sizes = [64, 128], strides = [1, 1]} : vector<112x128xf32> to vector<64x128xf32>
    %314 = arith.truncf %313 : vector<64x128xf32> to vector<64x128xbf16>
    %315 = vector.extract_strided_slice %308 {offsets = [9, 0], sizes = [64, 128], strides = [1, 1]} : vector<112x128xf32> to vector<64x128xf32>
    %cst_133 = arith.constant 0.000000e+00 : f32
    %316 = vector.broadcast %cst_133 : f32 to vector<64x128xf32>
    %317 = arith.select %20, %315, %316 : vector<64x128xi1>, vector<64x128xf32>
    %318 = arith.truncf %317 : vector<64x128xf32> to vector<64x128xbf16>
    %319 = tpu.concatenate %312, %314, %318 in 1 : vector<64x128xbf16>, vector<64x128xbf16>, vector<64x128xbf16> -> vector<64x384xbf16>
    %c0_134 = arith.constant 0 : index
    %c0_135 = arith.constant 0 : index
    %c0_136 = arith.constant 0 : index
    %320 = vector.load %arg4[%c0_134, %c0_135, %c0_136] : memref<3x384x128xbf16, #tpu.memory_space<vmem>>, vector<1x384x128xbf16>
    %321 = vector.shape_cast %320 : vector<1x384x128xbf16> to vector<384x128xbf16>
    %cst_137 = arith.constant dense<0.000000e+00> : vector<64x128xf32>
    %322 = tpu.matmul %319, %321, %cst_137 {dimension_numbers = #tpu.dot_dimension_numbers<[1], [0], [0], [1], [0, 0, 1, 1], [], []>} : vector<64x384xbf16>, vector<384x128xbf16>, vector<64x128xf32> -> vector<64x128xf32>
    %323 = vector.extract_strided_slice %308 {offsets = [23, 0], sizes = [64, 128], strides = [1, 1]} : vector<112x128xf32> to vector<64x128xf32>
    %cst_138 = arith.constant 0.000000e+00 : f32
    %324 = vector.broadcast %cst_138 : f32 to vector<64x128xf32>
    %325 = arith.select %18, %323, %324 : vector<64x128xi1>, vector<64x128xf32>
    %326 = arith.truncf %325 : vector<64x128xf32> to vector<64x128xbf16>
    %327 = vector.extract_strided_slice %308 {offsets = [24, 0], sizes = [64, 128], strides = [1, 1]} : vector<112x128xf32> to vector<64x128xf32>
    %328 = arith.truncf %327 : vector<64x128xf32> to vector<64x128xbf16>
    %329 = vector.extract_strided_slice %308 {offsets = [25, 0], sizes = [64, 128], strides = [1, 1]} : vector<112x128xf32> to vector<64x128xf32>
    %cst_139 = arith.constant 0.000000e+00 : f32
    %330 = vector.broadcast %cst_139 : f32 to vector<64x128xf32>
    %331 = arith.select %20, %329, %330 : vector<64x128xi1>, vector<64x128xf32>
    %332 = arith.truncf %331 : vector<64x128xf32> to vector<64x128xbf16>
    %333 = tpu.concatenate %326, %328, %332 in 1 : vector<64x128xbf16>, vector<64x128xbf16>, vector<64x128xbf16> -> vector<64x384xbf16>
    %c1_140 = arith.constant 1 : index
    %c0_141 = arith.constant 0 : index
    %c0_142 = arith.constant 0 : index
    %334 = vector.load %arg4[%c1_140, %c0_141, %c0_142] : memref<3x384x128xbf16, #tpu.memory_space<vmem>>, vector<1x384x128xbf16>
    %335 = vector.shape_cast %334 : vector<1x384x128xbf16> to vector<384x128xbf16>
    %cst_143 = arith.constant dense<0.000000e+00> : vector<64x128xf32>
    %336 = tpu.matmul %333, %335, %cst_143 {dimension_numbers = #tpu.dot_dimension_numbers<[1], [0], [0], [1], [0, 0, 1, 1], [], []>} : vector<64x384xbf16>, vector<384x128xbf16>, vector<64x128xf32> -> vector<64x128xf32>
    %337 = arith.addf %322, %336 : vector<64x128xf32>
    %338 = vector.extract_strided_slice %308 {offsets = [39, 0], sizes = [64, 128], strides = [1, 1]} : vector<112x128xf32> to vector<64x128xf32>
    %cst_144 = arith.constant 0.000000e+00 : f32
    %339 = vector.broadcast %cst_144 : f32 to vector<64x128xf32>
    %340 = arith.select %18, %338, %339 : vector<64x128xi1>, vector<64x128xf32>
    %341 = arith.truncf %340 : vector<64x128xf32> to vector<64x128xbf16>
    %342 = vector.extract_strided_slice %308 {offsets = [40, 0], sizes = [64, 128], strides = [1, 1]} : vector<112x128xf32> to vector<64x128xf32>
    %343 = arith.truncf %342 : vector<64x128xf32> to vector<64x128xbf16>
    %344 = vector.extract_strided_slice %308 {offsets = [41, 0], sizes = [64, 128], strides = [1, 1]} : vector<112x128xf32> to vector<64x128xf32>
    %cst_145 = arith.constant 0.000000e+00 : f32
    %345 = vector.broadcast %cst_145 : f32 to vector<64x128xf32>
    %346 = arith.select %20, %344, %345 : vector<64x128xi1>, vector<64x128xf32>
    %347 = arith.truncf %346 : vector<64x128xf32> to vector<64x128xbf16>
    %348 = tpu.concatenate %341, %343, %347 in 1 : vector<64x128xbf16>, vector<64x128xbf16>, vector<64x128xbf16> -> vector<64x384xbf16>
    %c2_146 = arith.constant 2 : index
    %c0_147 = arith.constant 0 : index
    %c0_148 = arith.constant 0 : index
    %349 = vector.load %arg4[%c2_146, %c0_147, %c0_148] : memref<3x384x128xbf16, #tpu.memory_space<vmem>>, vector<1x384x128xbf16>
    %350 = vector.shape_cast %349 : vector<1x384x128xbf16> to vector<384x128xbf16>
    %cst_149 = arith.constant dense<0.000000e+00> : vector<64x128xf32>
    %351 = tpu.matmul %348, %350, %cst_149 {dimension_numbers = #tpu.dot_dimension_numbers<[1], [0], [0], [1], [0, 0, 1, 1], [], []>} : vector<64x384xbf16>, vector<384x128xbf16>, vector<64x128xf32> -> vector<64x128xf32>
    %352 = arith.addf %337, %351 : vector<64x128xf32>
    %c0_150 = arith.constant 0 : index
    %c88_151 = arith.constant 88 : index
    %c0_152 = arith.constant 0 : index
    %353 = vector.load %arg1[%c0_150, %c88_151, %c0_152] : memref<1x304x128xbf16, #tpu.memory_space<vmem>>, vector<1x64x128xbf16>
    %354 = vector.shape_cast %353 : vector<1x64x128xbf16> to vector<64x128xbf16>
    %355 = arith.extf %354 : vector<64x128xbf16> to vector<64x128xf32>
    %356 = vector.broadcast %26 : vector<1x128xf32> to vector<64x128xf32>
    %357 = arith.addf %352, %356 : vector<64x128xf32>
    %358 = arith.addf %357, %355 : vector<64x128xf32>
    %cst_153 = arith.constant 0.000000e+00 : f32
    %cst_154 = arith.constant 6.000000e+00 : f32
    %359 = vector.broadcast %cst_153 : f32 to vector<64x128xf32>
    %360 = arith.maximumf %359, %358 : vector<64x128xf32>
    %361 = vector.broadcast %cst_154 : f32 to vector<64x128xf32>
    %362 = arith.minimumf %361, %360 : vector<64x128xf32>
    %363 = arith.truncf %362 : vector<64x128xf32> to vector<64x128xbf16>
    %c0_155 = arith.constant 0 : index
    %c64_156 = arith.constant 64 : index
    %c0_157 = arith.constant 0 : index
    %364 = vector.load %arg6[%c0_155, %c64_156, %c0_157] : memref<1x256x128xbf16, #tpu.memory_space<vmem>>, vector<1x64x128xbf16>
    %365 = vector.shape_cast %364 : vector<1x64x128xbf16> to vector<64x128xbf16>
    %366 = vector.shape_cast %363 : vector<64x128xbf16> to vector<1x64x128xbf16>
    tpu.vector_store %arg6[%c0_155, %c64_156, %c0_157], %366 {strides = array<i32>} : memref<1x256x128xbf16, #tpu.memory_space<vmem>>, vector<1x64x128xbf16>,
    %c128_158 = arith.constant 128 : index
    %c0_159 = arith.constant 0 : index
    %367 = vector.load %arg7[%c128_158, %c0_159] : memref<304x128xbf16, #tpu.memory_space<vmem>>, vector<112x128xbf16>
    %368 = arith.extf %367 : vector<112x128xbf16> to vector<112x128xf32>
    %369 = vector.extract_strided_slice %368 {offsets = [7, 0], sizes = [64, 128], strides = [1, 1]} : vector<112x128xf32> to vector<64x128xf32>
    %cst_160 = arith.constant 0.000000e+00 : f32
    %370 = vector.broadcast %cst_160 : f32 to vector<64x128xf32>
    %371 = arith.select %18, %369, %370 : vector<64x128xi1>, vector<64x128xf32>
    %372 = arith.truncf %371 : vector<64x128xf32> to vector<64x128xbf16>
    %373 = vector.extract_strided_slice %368 {offsets = [8, 0], sizes = [64, 128], strides = [1, 1]} : vector<112x128xf32> to vector<64x128xf32>
    %374 = arith.truncf %373 : vector<64x128xf32> to vector<64x128xbf16>
    %375 = vector.extract_strided_slice %368 {offsets = [9, 0], sizes = [64, 128], strides = [1, 1]} : vector<112x128xf32> to vector<64x128xf32>
    %cst_161 = arith.constant 0.000000e+00 : f32
    %376 = vector.broadcast %cst_161 : f32 to vector<64x128xf32>
    %377 = arith.select %20, %375, %376 : vector<64x128xi1>, vector<64x128xf32>
    %378 = arith.truncf %377 : vector<64x128xf32> to vector<64x128xbf16>
    %379 = tpu.concatenate %372, %374, %378 in 1 : vector<64x128xbf16>, vector<64x128xbf16>, vector<64x128xbf16> -> vector<64x384xbf16>
    %c0_162 = arith.constant 0 : index
    %c0_163 = arith.constant 0 : index
    %c0_164 = arith.constant 0 : index
    %380 = vector.load %arg4[%c0_162, %c0_163, %c0_164] : memref<3x384x128xbf16, #tpu.memory_space<vmem>>, vector<1x384x128xbf16>
    %381 = vector.shape_cast %380 : vector<1x384x128xbf16> to vector<384x128xbf16>
    %cst_165 = arith.constant dense<0.000000e+00> : vector<64x128xf32>
    %382 = tpu.matmul %379, %381, %cst_165 {dimension_numbers = #tpu.dot_dimension_numbers<[1], [0], [0], [1], [0, 0, 1, 1], [], []>} : vector<64x384xbf16>, vector<384x128xbf16>, vector<64x128xf32> -> vector<64x128xf32>
    %383 = vector.extract_strided_slice %368 {offsets = [23, 0], sizes = [64, 128], strides = [1, 1]} : vector<112x128xf32> to vector<64x128xf32>
    %cst_166 = arith.constant 0.000000e+00 : f32
    %384 = vector.broadcast %cst_166 : f32 to vector<64x128xf32>
    %385 = arith.select %18, %383, %384 : vector<64x128xi1>, vector<64x128xf32>
    %386 = arith.truncf %385 : vector<64x128xf32> to vector<64x128xbf16>
    %387 = vector.extract_strided_slice %368 {offsets = [24, 0], sizes = [64, 128], strides = [1, 1]} : vector<112x128xf32> to vector<64x128xf32>
    %388 = arith.truncf %387 : vector<64x128xf32> to vector<64x128xbf16>
    %389 = vector.extract_strided_slice %368 {offsets = [25, 0], sizes = [64, 128], strides = [1, 1]} : vector<112x128xf32> to vector<64x128xf32>
    %cst_167 = arith.constant 0.000000e+00 : f32
    %390 = vector.broadcast %cst_167 : f32 to vector<64x128xf32>
    %391 = arith.select %20, %389, %390 : vector<64x128xi1>, vector<64x128xf32>
    %392 = arith.truncf %391 : vector<64x128xf32> to vector<64x128xbf16>
    %393 = tpu.concatenate %386, %388, %392 in 1 : vector<64x128xbf16>, vector<64x128xbf16>, vector<64x128xbf16> -> vector<64x384xbf16>
    %c1_168 = arith.constant 1 : index
    %c0_169 = arith.constant 0 : index
    %c0_170 = arith.constant 0 : index
    %394 = vector.load %arg4[%c1_168, %c0_169, %c0_170] : memref<3x384x128xbf16, #tpu.memory_space<vmem>>, vector<1x384x128xbf16>
    %395 = vector.shape_cast %394 : vector<1x384x128xbf16> to vector<384x128xbf16>
    %cst_171 = arith.constant dense<0.000000e+00> : vector<64x128xf32>
    %396 = tpu.matmul %393, %395, %cst_171 {dimension_numbers = #tpu.dot_dimension_numbers<[1], [0], [0], [1], [0, 0, 1, 1], [], []>} : vector<64x384xbf16>, vector<384x128xbf16>, vector<64x128xf32> -> vector<64x128xf32>
    %397 = arith.addf %382, %396 : vector<64x128xf32>
    %398 = vector.extract_strided_slice %368 {offsets = [39, 0], sizes = [64, 128], strides = [1, 1]} : vector<112x128xf32> to vector<64x128xf32>
    %cst_172 = arith.constant 0.000000e+00 : f32
    %399 = vector.broadcast %cst_172 : f32 to vector<64x128xf32>
    %400 = arith.select %18, %398, %399 : vector<64x128xi1>, vector<64x128xf32>
    %401 = arith.truncf %400 : vector<64x128xf32> to vector<64x128xbf16>
    %402 = vector.extract_strided_slice %368 {offsets = [40, 0], sizes = [64, 128], strides = [1, 1]} : vector<112x128xf32> to vector<64x128xf32>
    %403 = arith.truncf %402 : vector<64x128xf32> to vector<64x128xbf16>
    %404 = vector.extract_strided_slice %368 {offsets = [41, 0], sizes = [64, 128], strides = [1, 1]} : vector<112x128xf32> to vector<64x128xf32>
    %cst_173 = arith.constant 0.000000e+00 : f32
    %405 = vector.broadcast %cst_173 : f32 to vector<64x128xf32>
    %406 = arith.select %20, %404, %405 : vector<64x128xi1>, vector<64x128xf32>
    %407 = arith.truncf %406 : vector<64x128xf32> to vector<64x128xbf16>
    %408 = tpu.concatenate %401, %403, %407 in 1 : vector<64x128xbf16>, vector<64x128xbf16>, vector<64x128xbf16> -> vector<64x384xbf16>
    %c2_174 = arith.constant 2 : index
    %c0_175 = arith.constant 0 : index
    %c0_176 = arith.constant 0 : index
    %409 = vector.load %arg4[%c2_174, %c0_175, %c0_176] : memref<3x384x128xbf16, #tpu.memory_space<vmem>>, vector<1x384x128xbf16>
    %410 = vector.shape_cast %409 : vector<1x384x128xbf16> to vector<384x128xbf16>
    %cst_177 = arith.constant dense<0.000000e+00> : vector<64x128xf32>
    %411 = tpu.matmul %408, %410, %cst_177 {dimension_numbers = #tpu.dot_dimension_numbers<[1], [0], [0], [1], [0, 0, 1, 1], [], []>} : vector<64x384xbf16>, vector<384x128xbf16>, vector<64x128xf32> -> vector<64x128xf32>
    %412 = arith.addf %397, %411 : vector<64x128xf32>
    %c0_178 = arith.constant 0 : index
    %c152_179 = arith.constant 152 : index
    %c0_180 = arith.constant 0 : index
    %413 = vector.load %arg1[%c0_178, %c152_179, %c0_180] : memref<1x304x128xbf16, #tpu.memory_space<vmem>>, vector<1x64x128xbf16>
    %414 = vector.shape_cast %413 : vector<1x64x128xbf16> to vector<64x128xbf16>
    %415 = arith.extf %414 : vector<64x128xbf16> to vector<64x128xf32>
    %416 = vector.broadcast %26 : vector<1x128xf32> to vector<64x128xf32>
    %417 = arith.addf %412, %416 : vector<64x128xf32>
    %418 = arith.addf %417, %415 : vector<64x128xf32>
    %cst_181 = arith.constant 0.000000e+00 : f32
    %cst_182 = arith.constant 6.000000e+00 : f32
    %419 = vector.broadcast %cst_181 : f32 to vector<64x128xf32>
    %420 = arith.maximumf %419, %418 : vector<64x128xf32>
    %421 = vector.broadcast %cst_182 : f32 to vector<64x128xf32>
    %422 = arith.minimumf %421, %420 : vector<64x128xf32>
    %423 = arith.truncf %422 : vector<64x128xf32> to vector<64x128xbf16>
    %c0_183 = arith.constant 0 : index
    %c128_184 = arith.constant 128 : index
    %c0_185 = arith.constant 0 : index
    %424 = vector.load %arg6[%c0_183, %c128_184, %c0_185] : memref<1x256x128xbf16, #tpu.memory_space<vmem>>, vector<1x64x128xbf16>
    %425 = vector.shape_cast %424 : vector<1x64x128xbf16> to vector<64x128xbf16>
    %426 = vector.shape_cast %423 : vector<64x128xbf16> to vector<1x64x128xbf16>
    tpu.vector_store %arg6[%c0_183, %c128_184, %c0_185], %426 {strides = array<i32>} : memref<1x256x128xbf16, #tpu.memory_space<vmem>>, vector<1x64x128xbf16>,
    %c192_186 = arith.constant 192 : index
    %c0_187 = arith.constant 0 : index
    %427 = vector.load %arg7[%c192_186, %c0_187] : memref<304x128xbf16, #tpu.memory_space<vmem>>, vector<112x128xbf16>
    %428 = arith.extf %427 : vector<112x128xbf16> to vector<112x128xf32>
    %429 = vector.extract_strided_slice %428 {offsets = [7, 0], sizes = [64, 128], strides = [1, 1]} : vector<112x128xf32> to vector<64x128xf32>
    %cst_188 = arith.constant 0.000000e+00 : f32
    %430 = vector.broadcast %cst_188 : f32 to vector<64x128xf32>
    %431 = arith.select %18, %429, %430 : vector<64x128xi1>, vector<64x128xf32>
    %432 = arith.truncf %431 : vector<64x128xf32> to vector<64x128xbf16>
    %433 = vector.extract_strided_slice %428 {offsets = [8, 0], sizes = [64, 128], strides = [1, 1]} : vector<112x128xf32> to vector<64x128xf32>
    %434 = arith.truncf %433 : vector<64x128xf32> to vector<64x128xbf16>
    %435 = vector.extract_strided_slice %428 {offsets = [9, 0], sizes = [64, 128], strides = [1, 1]} : vector<112x128xf32> to vector<64x128xf32>
    %cst_189 = arith.constant 0.000000e+00 : f32
    %436 = vector.broadcast %cst_189 : f32 to vector<64x128xf32>
    %437 = arith.select %20, %435, %436 : vector<64x128xi1>, vector<64x128xf32>
    %438 = arith.truncf %437 : vector<64x128xf32> to vector<64x128xbf16>
    %439 = tpu.concatenate %432, %434, %438 in 1 : vector<64x128xbf16>, vector<64x128xbf16>, vector<64x128xbf16> -> vector<64x384xbf16>
    %c0_190 = arith.constant 0 : index
    %c0_191 = arith.constant 0 : index
    %c0_192 = arith.constant 0 : index
    %440 = vector.load %arg4[%c0_190, %c0_191, %c0_192] : memref<3x384x128xbf16, #tpu.memory_space<vmem>>, vector<1x384x128xbf16>
    %441 = vector.shape_cast %440 : vector<1x384x128xbf16> to vector<384x128xbf16>
    %cst_193 = arith.constant dense<0.000000e+00> : vector<64x128xf32>
    %442 = tpu.matmul %439, %441, %cst_193 {dimension_numbers = #tpu.dot_dimension_numbers<[1], [0], [0], [1], [0, 0, 1, 1], [], []>} : vector<64x384xbf16>, vector<384x128xbf16>, vector<64x128xf32> -> vector<64x128xf32>
    %443 = vector.extract_strided_slice %428 {offsets = [23, 0], sizes = [64, 128], strides = [1, 1]} : vector<112x128xf32> to vector<64x128xf32>
    %cst_194 = arith.constant 0.000000e+00 : f32
    %444 = vector.broadcast %cst_194 : f32 to vector<64x128xf32>
    %445 = arith.select %18, %443, %444 : vector<64x128xi1>, vector<64x128xf32>
    %446 = arith.truncf %445 : vector<64x128xf32> to vector<64x128xbf16>
    %447 = vector.extract_strided_slice %428 {offsets = [24, 0], sizes = [64, 128], strides = [1, 1]} : vector<112x128xf32> to vector<64x128xf32>
    %448 = arith.truncf %447 : vector<64x128xf32> to vector<64x128xbf16>
    %449 = vector.extract_strided_slice %428 {offsets = [25, 0], sizes = [64, 128], strides = [1, 1]} : vector<112x128xf32> to vector<64x128xf32>
    %cst_195 = arith.constant 0.000000e+00 : f32
    %450 = vector.broadcast %cst_195 : f32 to vector<64x128xf32>
    %451 = arith.select %20, %449, %450 : vector<64x128xi1>, vector<64x128xf32>
    %452 = arith.truncf %451 : vector<64x128xf32> to vector<64x128xbf16>
    %453 = tpu.concatenate %446, %448, %452 in 1 : vector<64x128xbf16>, vector<64x128xbf16>, vector<64x128xbf16> -> vector<64x384xbf16>
    %c1_196 = arith.constant 1 : index
    %c0_197 = arith.constant 0 : index
    %c0_198 = arith.constant 0 : index
    %454 = vector.load %arg4[%c1_196, %c0_197, %c0_198] : memref<3x384x128xbf16, #tpu.memory_space<vmem>>, vector<1x384x128xbf16>
    %455 = vector.shape_cast %454 : vector<1x384x128xbf16> to vector<384x128xbf16>
    %cst_199 = arith.constant dense<0.000000e+00> : vector<64x128xf32>
    %456 = tpu.matmul %453, %455, %cst_199 {dimension_numbers = #tpu.dot_dimension_numbers<[1], [0], [0], [1], [0, 0, 1, 1], [], []>} : vector<64x384xbf16>, vector<384x128xbf16>, vector<64x128xf32> -> vector<64x128xf32>
    %457 = arith.addf %442, %456 : vector<64x128xf32>
    %458 = vector.extract_strided_slice %428 {offsets = [39, 0], sizes = [64, 128], strides = [1, 1]} : vector<112x128xf32> to vector<64x128xf32>
    %cst_200 = arith.constant 0.000000e+00 : f32
    %459 = vector.broadcast %cst_200 : f32 to vector<64x128xf32>
    %460 = arith.select %18, %458, %459 : vector<64x128xi1>, vector<64x128xf32>
    %461 = arith.truncf %460 : vector<64x128xf32> to vector<64x128xbf16>
    %462 = vector.extract_strided_slice %428 {offsets = [40, 0], sizes = [64, 128], strides = [1, 1]} : vector<112x128xf32> to vector<64x128xf32>
    %463 = arith.truncf %462 : vector<64x128xf32> to vector<64x128xbf16>
    %464 = vector.extract_strided_slice %428 {offsets = [41, 0], sizes = [64, 128], strides = [1, 1]} : vector<112x128xf32> to vector<64x128xf32>
    %cst_201 = arith.constant 0.000000e+00 : f32
    %465 = vector.broadcast %cst_201 : f32 to vector<64x128xf32>
    %466 = arith.select %20, %464, %465 : vector<64x128xi1>, vector<64x128xf32>
    %467 = arith.truncf %466 : vector<64x128xf32> to vector<64x128xbf16>
    %468 = tpu.concatenate %461, %463, %467 in 1 : vector<64x128xbf16>, vector<64x128xbf16>, vector<64x128xbf16> -> vector<64x384xbf16>
    %c2_202 = arith.constant 2 : index
    %c0_203 = arith.constant 0 : index
    %c0_204 = arith.constant 0 : index
    %469 = vector.load %arg4[%c2_202, %c0_203, %c0_204] : memref<3x384x128xbf16, #tpu.memory_space<vmem>>, vector<1x384x128xbf16>
    %470 = vector.shape_cast %469 : vector<1x384x128xbf16> to vector<384x128xbf16>
    %cst_205 = arith.constant dense<0.000000e+00> : vector<64x128xf32>
    %471 = tpu.matmul %468, %470, %cst_205 {dimension_numbers = #tpu.dot_dimension_numbers<[1], [0], [0], [1], [0, 0, 1, 1], [], []>} : vector<64x384xbf16>, vector<384x128xbf16>, vector<64x128xf32> -> vector<64x128xf32>
    %472 = arith.addf %457, %471 : vector<64x128xf32>
    %c0_206 = arith.constant 0 : index
    %c216_207 = arith.constant 216 : index
    %c0_208 = arith.constant 0 : index
    %473 = vector.load %arg1[%c0_206, %c216_207, %c0_208] : memref<1x304x128xbf16, #tpu.memory_space<vmem>>, vector<1x64x128xbf16>
    %474 = vector.shape_cast %473 : vector<1x64x128xbf16> to vector<64x128xbf16>
    %475 = arith.extf %474 : vector<64x128xbf16> to vector<64x128xf32>
    %476 = vector.broadcast %26 : vector<1x128xf32> to vector<64x128xf32>
    %477 = arith.addf %472, %476 : vector<64x128xf32>
    %478 = arith.addf %477, %475 : vector<64x128xf32>
    %cst_209 = arith.constant 0.000000e+00 : f32
    %cst_210 = arith.constant 6.000000e+00 : f32
    %479 = vector.broadcast %cst_209 : f32 to vector<64x128xf32>
    %480 = arith.maximumf %479, %478 : vector<64x128xf32>
    %481 = vector.broadcast %cst_210 : f32 to vector<64x128xf32>
    %482 = arith.minimumf %481, %480 : vector<64x128xf32>
    %483 = arith.truncf %482 : vector<64x128xf32> to vector<64x128xbf16>
    %c0_211 = arith.constant 0 : index
    %c192_212 = arith.constant 192 : index
    %c0_213 = arith.constant 0 : index
    %484 = vector.load %arg6[%c0_211, %c192_212, %c0_213] : memref<1x256x128xbf16, #tpu.memory_space<vmem>>, vector<1x64x128xbf16>
    %485 = vector.shape_cast %484 : vector<1x64x128xbf16> to vector<64x128xbf16>
    %486 = vector.shape_cast %483 : vector<64x128xbf16> to vector<1x64x128xbf16>
    tpu.vector_store %arg6[%c0_211, %c192_212, %c0_213], %486 {strides = array<i32>} : memref<1x256x128xbf16, #tpu.memory_space<vmem>>, vector<1x64x128xbf16>,
    return
  }
  func.func @transform_0(%arg0: i32) -> (i32, i32, i32) {
    %c0_i32 = arith.constant 0 : i32
    %c0_i32_0 = arith.constant 0 : i32
    %c0_i32_1 = arith.constant 0 : i32
    return %arg0, %c0_i32, %c0_i32_0 : i32, i32, i32
  }
  func.func @transform_1(%arg0: i32) -> (i32, i32, i32) {
    %c0_i32 = arith.constant 0 : i32
    %c0_i32_0 = arith.constant 0 : i32
    %c0_i32_1 = arith.constant 0 : i32
    %c0_i32_2 = arith.constant 0 : i32
    return %c0_i32, %c0_i32_0, %c0_i32_1 : i32, i32, i32
  }
  func.func @transform_2(%arg0: i32) -> (i32, i32) {
    %c0_i32 = arith.constant 0 : i32
    %c0_i32_0 = arith.constant 0 : i32
    %c0_i32_1 = arith.constant 0 : i32
    return %c0_i32, %c0_i32_0 : i32, i32
  }
  func.func @transform_3(%arg0: i32) -> (i32, i32, i32) {
    %c0_i32 = arith.constant 0 : i32
    %c0_i32_0 = arith.constant 0 : i32
    %c0_i32_1 = arith.constant 0 : i32
    %c0_i32_2 = arith.constant 0 : i32
    return %c0_i32, %c0_i32_0, %c0_i32_1 : i32, i32, i32
  }
  func.func @transform_4(%arg0: i32) -> (i32, i32) {
    %c0_i32 = arith.constant 0 : i32
    %c0_i32_0 = arith.constant 0 : i32
    %c0_i32_1 = arith.constant 0 : i32
    return %c0_i32, %c0_i32_0 : i32, i32
  }
  func.func @transform_5(%arg0: i32) -> (i32, i32, i32) {
    %c0_i32 = arith.constant 0 : i32
    %c0_i32_0 = arith.constant 0 : i32
    %c0_i32_1 = arith.constant 0 : i32
    return %arg0, %c0_i32, %c0_i32_0 : i32, i32, i32
  }
}

</mosaic_0001>

<llo_original>
// kernel: basic_block_forward.1
$region0: #{basic_block_forward.1}
  #allocation0 [shape = 'u32[]', space=smem, size = 0x4, offset = 0x4, fixed_abs, tag = 'smem constant byte address 0x4 - core index']
  #allocation1 [shape = 'u32[72,128]{1,0:T(1,128)}', space=vmem, size = 0x9000, scoped, tag = 'internal scratch']
  #allocation2 [shape = 'bf16[304,128]{1,0:T(8,128)(2,1)}', space=vmem, size = 0x13000, scoped, tag = 'scratch operand']
  %s0 = inlined_call_operand.vmem [shape: bf16[2,304,128], index: 0, kind: input, shape index: {}]
  %s1 = inlined_call_operand.vmem [shape: bf16[3,384,128], index: 1, kind: input, shape index: {}]
  %s2 = inlined_call_operand.vmem [shape: f32[1,128], index: 2, kind: input, shape index: {}]
  %s3 = inlined_call_operand.vmem [shape: bf16[3,384,128], index: 3, kind: input, shape index: {}]
  %s4 = inlined_call_operand.vmem [shape: f32[1,128], index: 4, kind: input, shape index: {}]
  %s5 = inlined_call_operand.vmem [shape: bf16[2,256,128], index: 5, kind: output, shape index: {}]
  %s6 = sld [smem:[#allocation0]]
  $region53: #{basic_block_forward.1} parent=0
    _
  %s8 = ssub.s32 1, %s6
  %s9 = scalar_select 0, %s8, %s6
  loop: start=0, step=1, limit=4
  $region2: #{basic_block_forward.1} parent=0 // loop_pre_header
    _
  $region3: #{basic_block_forward.1} parent=0 // loop_header
    %s11 = sphi 0, %s15
    %p12 = scmp.ge.s32.totalorder %s11, 4
    %s21 = sphi 0, %s23
    %s24 = sphi 0, %s21
    %s25 = sphi 0, %s24
    %s41 = sphi 0, %s25
    %s45 = sphi 0, %s45
    %s47 = sphi 0, %s45
    %s48 = sphi 0, %s47
    %s62 = sphi 0, %s48
    %s66 = sphi 0, %s66
    %s68 = sphi 0, %s66
    %s69 = sphi 0, %s68
    %s83 = sphi 0, %s69
    %s87 = sphi 0, %s87
    %s89 = sphi 0, %s87
    %s90 = sphi 0, %s89
    %s104 = sphi 0, %s90
    %s108 = sphi 0, %s108
    %s110 = sphi 0, %s108
    %s111 = sphi 0, %s110
    %s125 = sphi 0, %s111
    %s131 = sphi 0, %s133
    %s134 = sphi 0, %s131
    %s135 = sphi 0, %s134
    %s151 = sphi 0, %s135
  $region4: #{basic_block_forward.1} parent=0 // loop_header_branch
    %14 = sbr.rel (%p12) target = $region8
  $region5: #{basic_block_forward.1} parent=0 // loop_body
    %s16 = ssub.s32 %s11, 1
    %s17 = ssub.s32 %s11, 2
    %s18 = sadd.s32 %s11, 1
    %s19 = ssub.s32 %s11, %s18
    %p20 = scmp.eq.s32.totalorder %s19, 0
    %s22 = sadd.s32 %s21, 1
    %s23 = scalar_select %p20, %s21, %s22
    %p26 = pneg %p20
    %p27 = scmp.eq.s32.totalorder %s11, 1
    %p28 = por %p26, %p27
    %p29 = scmp.ne.s32.totalorder %s21, %s24
    %p30 = scmp.eq.s32.totalorder %s11, 0
    %p31 = por %p29, %p30
    %p32 = scmp.ne.s32.totalorder %s21, %s24
    %p33 = scmp.eq.s32.totalorder %s16, 1
    %p34 = por %p32, %p33
    %p35 = scmp.ne.s32.totalorder %s24, %s25
    %p36 = scmp.eq.s32.totalorder %s16, 0
    %p37 = por %p35, %p36
    %p38 = scmp.ne.s32.totalorder %s24, %s25
    %p39 = scmp.eq.s32.totalorder %s17, 1
    %p40 = por %p38, %p39
    %p42 = scmp.ne.s32.totalorder %s25, %s41
    %p43 = scmp.eq.s32.totalorder %s17, 0
    %p44 = por %p42, %p43
    %s46 = sadd.s32 %s45, 1
    %p49 = scmp.eq.s32.totalorder %s11, 1
    %p50 = scmp.ne.s32.totalorder %s45, %s47
    %p51 = scmp.eq.s32.totalorder %s11, 0
    %p52 = por %p50, %p51
    %p53 = scmp.ne.s32.totalorder %s45, %s47
    %p54 = scmp.eq.s32.totalorder %s16, 1
    %p55 = por %p53, %p54
    %p56 = scmp.ne.s32.totalorder %s47, %s48
    %p57 = scmp.eq.s32.totalorder %s16, 0
    %p58 = por %p56, %p57
    %p59 = scmp.ne.s32.totalorder %s47, %s48
    %p60 = scmp.eq.s32.totalorder %s17, 1
    %p61 = por %p59, %p60
    %p63 = scmp.ne.s32.totalorder %s48, %s62
    %p64 = scmp.eq.s32.totalorder %s17, 0
    %p65 = por %p63, %p64
    %s67 = sadd.s32 %s66, 1
    %p70 = scmp.eq.s32.totalorder %s11, 1
    %p71 = scmp.ne.s32.totalorder %s66, %s68
    %p72 = scmp.eq.s32.totalorder %s11, 0
    %p73 = por %p71, %p72
    %p74 = scmp.ne.s32.totalorder %s66, %s68
    %p75 = scmp.eq.s32.totalorder %s16, 1
    %p76 = por %p74, %p75
    %p77 = scmp.ne.s32.totalorder %s68, %s69
    %p78 = scmp.eq.s32.totalorder %s16, 0
    %p79 = por %p77, %p78
    %p80 = scmp.ne.s32.totalorder %s68, %s69
    %p81 = scmp.eq.s32.totalorder %s17, 1
    %p82 = por %p80, %p81
    %p84 = scmp.ne.s32.totalorder %s69, %s83
    %p85 = scmp.eq.s32.totalorder %s17, 0
    %p86 = por %p84, %p85
    %s88 = sadd.s32 %s87, 1
    %p91 = scmp.eq.s32.totalorder %s11, 1
    %p92 = scmp.ne.s32.totalorder %s87, %s89
    %p93 = scmp.eq.s32.totalorder %s11, 0
    %p94 = por %p92, %p93
    %p95 = scmp.ne.s32.totalorder %s87, %s89
    %p96 = scmp.eq.s32.totalorder %s16, 1
    %p97 = por %p95, %p96
    %p98 = scmp.ne.s32.totalorder %s89, %s90
    %p99 = scmp.eq.s32.totalorder %s16, 0
    %p100 = por %p98, %p99
    %p101 = scmp.ne.s32.totalorder %s89, %s90
    %p102 = scmp.eq.s32.totalorder %s17, 1
    %p103 = por %p101, %p102
    %p105 = scmp.ne.s32.totalorder %s90, %s104
    %p106 = scmp.eq.s32.totalorder %s17, 0
    %p107 = por %p105, %p106
    %s109 = sadd.s32 %s108, 1
    %p112 = scmp.eq.s32.totalorder %s11, 1
    %p113 = scmp.ne.s32.totalorder %s108, %s110
    %p114 = scmp.eq.s32.totalorder %s11, 0
    %p115 = por %p113, %p114
    %p116 = scmp.ne.s32.totalorder %s108, %s110
    %p117 = scmp.eq.s32.totalorder %s16, 1
    %p118 = por %p116, %p117
    %p119 = scmp.ne.s32.totalorder %s110, %s111
    %p120 = scmp.eq.s32.totalorder %s16, 0
    %p121 = por %p119, %p120
    %p122 = scmp.ne.s32.totalorder %s110, %s111
    %p123 = scmp.eq.s32.totalorder %s17, 1
    %p124 = por %p122, %p123
    %p126 = scmp.ne.s32.totalorder %s111, %s125
    %p127 = scmp.eq.s32.totalorder %s17, 0
    %p128 = por %p126, %p127
    %s129 = ssub.s32 %s11, %s18
    %p130 = scmp.eq.s32.totalorder %s129, 0
    %s132 = sadd.s32 %s131, 1
    %s133 = scalar_select %p130, %s131, %s132
    %p136 = pneg %p130
    %p137 = scmp.eq.s32.totalorder %s11, 1
    %p138 = por %p136, %p137
    %p139 = scmp.ne.s32.totalorder %s131, %s134
    %p140 = scmp.eq.s32.totalorder %s11, 0
    %p141 = por %p139, %p140
    %p142 = scmp.ne.s32.totalorder %s131, %s134
    %p143 = scmp.eq.s32.totalorder %s16, 1
    %p144 = por %p142, %p143
    %p145 = scmp.ne.s32.totalorder %s134, %s135
    %p146 = scmp.eq.s32.totalorder %s16, 0
    %p147 = por %p145, %p146
    %p148 = scmp.ne.s32.totalorder %s134, %s135
    %p149 = scmp.eq.s32.totalorder %s17, 1
    %p150 = por %p148, %p149
    %p152 = scmp.ne.s32.totalorder %s135, %s151
    %p153 = scmp.eq.s32.totalorder %s17, 0
    %p154 = por %p152, %p153
    %p155 = scmp.le.s32.totalorder 1, %s11
    %p156 = scmp.lt.s32.totalorder %s11, 3
    %p157 = pnand %p155, %p156
    %p158 = pneg %p157
    // Predicated region
    $region9: #{basic_block_forward.1} parent=5 // pred_check
      _
    $region10: #{basic_block_forward.1} parent=5 // pred_check_branch
      %160 = sbr.rel (%p157) target = $region12
    $region11: #{basic_block_forward.1} parent=5 // pred_region
      %s161 = ssub.s32 %s11, 1
      // Predicated region
      $region13: #{basic_block_forward.1} parent=11 // pred_check
        %p162 = pneg %p58
      $region14: #{basic_block_forward.1} parent=11 // pred_check_branch
        %164 = sbr.rel (%p162) target = $region16
      $region15: #{basic_block_forward.1} parent=11 // pred_region
        _
      $region16: #{basic_block_forward.1} parent=11 // pred_fallthru
        _
      // Predicated region
      $region17: #{basic_block_forward.1} parent=11 // pred_check
        %p165 = pneg %p79
      $region18: #{basic_block_forward.1} parent=11 // pred_check_branch
        %167 = sbr.rel (%p165) target = $region20
      $region19: #{basic_block_forward.1} parent=11 // pred_region
        _
      $region20: #{basic_block_forward.1} parent=11 // pred_fallthru
        _
      // Predicated region
      $region21: #{basic_block_forward.1} parent=11 // pred_check
        %p168 = pneg %p100
      $region22: #{basic_block_forward.1} parent=11 // pred_check_branch
        %170 = sbr.rel (%p168) target = $region24
      $region23: #{basic_block_forward.1} parent=11 // pred_region
        _
      $region24: #{basic_block_forward.1} parent=11 // pred_fallthru
        _
      // Predicated region
      $region25: #{basic_block_forward.1} parent=11 // pred_check
        %p171 = pneg %p121
      $region26: #{basic_block_forward.1} parent=11 // pred_check_branch
        %173 = sbr.rel (%p171) target = $region28
      $region27: #{basic_block_forward.1} parent=11 // pred_region
        _
      $region28: #{basic_block_forward.1} parent=11 // pred_fallthru
        _
    $region12: #{basic_block_forward.1} parent=5 // pred_fallthru
      _
    %p174 = scmp.lt.s32.totalorder %s11, 2
    // Predicated region
    $region29: #{basic_block_forward.1} parent=5 // pred_check
      %p175 = pneg %p174
    $region30: #{basic_block_forward.1} parent=5 // pred_check_branch
      %177 = sbr.rel (%p175) target = $region32
    $region31: #{basic_block_forward.1} parent=5 // pred_region
      // Predicated region
      $region33: #{basic_block_forward.1} parent=31 // pred_check
        %p178 = pneg %p31
      $region34: #{basic_block_forward.1} parent=31 // pred_check_branch
        %180 = sbr.rel (%p178) target = $region36
      $region35: #{basic_block_forward.1} parent=31 // pred_region
        %p181 = scmp.lt.s32.totalorder %s11, 1
        %s182 = scalar_select %p181, %s11, 1
        %s183 = smul.addr %s182, 38
        %s184 = smul.addr %s183, 4
        %s185 = scalar_lea.vmem %s0, %s184
      $region36: #{basic_block_forward.1} parent=31 // pred_fallthru
        _
    $region32: #{basic_block_forward.1} parent=5 // pred_fallthru
      _
    %p186 = scmp.le.s32.totalorder 1, %s11
    %p187 = scmp.lt.s32.totalorder %s11, 3
    %p188 = pnand %p186, %p187
    %p189 = pneg %p188
    // Predicated region
    $region37: #{basic_block_forward.1} parent=5 // pred_check
      _
    $region38: #{basic_block_forward.1} parent=5 // pred_check_branch
      %191 = sbr.rel (%p188) target = $region40
    $region39: #{basic_block_forward.1} parent=5 // pred_region
      %s192 = ssub.s32 %s11, 1
      %p193 = scmp.lt.s32.totalorder %s16, 1
      %s194 = scalar_select %p193, %s16, 1
      %s195 = smul.addr %s194, 38
      %s196 = smul.addr %s195, 4
      %s197 = scalar_lea.vmem %s0, %s196
      %p198 = pneg %p37
      %p199 = pneg %p34
      %p200 = pneg %p58
      %p201 = pneg %p55
      %p202 = pneg %p79
      %p203 = pneg %p76
      %p204 = pneg %p100
      %p205 = pneg %p97
      %p206 = pneg %p121
      %p207 = pneg %p118
      %p208 = pneg %p147
      %p209 = pneg %p144
      %p210 = scmp.lt.s32.totalorder %s16, 1
      %s211 = scalar_select %p210, %s16, 1
      %s212 = smul.addr %s211, 32
      %s213 = smul.addr %s212, 4
      %s214 = scalar_lea.vmem %s5, %s213
      %p215 = scmp.lt.s32.totalorder %s16, 1
      %s216 = scalar_select %p215, %s16, 1
      %s217 = smul.addr %s216, 38
      %s218 = smul.addr %s217, 4
      %s219 = scalar_lea.vmem %s0, %s218
      %p220 = scmp.lt.s32.totalorder %s16, 1
      %s221 = scalar_select %p220, %s16, 1
      %s222 = smul.addr %s221, 32
      %s223 = smul.addr %s222, 4
      %s224 = scalar_lea.vmem %s5, %s223
      %v226 = vlaneseq
      %v227 = vshrl.u32 %v226, 7
      %v228 = vadd.s32 %v227, 8
      %v229 = vadd.s32 %v227, 16
      %v230 = vadd.s32 %v227, 24
      %v231 = vadd.s32 %v227, 32
      %v232 = vadd.s32 %v227, 40
      %v233 = vadd.s32 %v227, 48
      %v234 = vadd.s32 %v227, 56
      %vm235 = vcmp.lt.s32.totalorder %v227, 0
      %v236 = vsub.s32 0, %v227
      %v237 = vsel %vm235, %v236, %v227
      %v238 = vshrl.u32 %v237, 4
      %v239 = vand.u32 %v237, 15
      %v240 = vsub.s32 0, %v239
      %v241 = vsel %vm235, %v240, %v239
      %vm242 = vcmp.lt.s32.totalorder %v228, 0
      %v243 = vsub.s32 0, %v228
      %v244 = vsel %vm242, %v243, %v228
      %v245 = vshrl.u32 %v244, 4
      %v246 = vand.u32 %v244, 15
      %v247 = vsub.s32 0, %v246
      %v248 = vsel %vm242, %v247, %v246
      %vm249 = vcmp.lt.s32.totalorder %v229, 0
      %v250 = vsub.s32 0, %v229
      %v251 = vsel %vm249, %v250, %v229
      %v252 = vshrl.u32 %v251, 4
      %v253 = vand.u32 %v251, 15
      %v254 = vsub.s32 0, %v253
      %v255 = vsel %vm249, %v254, %v253
      %vm256 = vcmp.lt.s32.totalorder %v230, 0
      %v257 = vsub.s32 0, %v230
      %v258 = vsel %vm256, %v257, %v230
      %v259 = vshrl.u32 %v258, 4
      %v260 = vand.u32 %v258, 15
      %v261 = vsub.s32 0, %v260
      %v262 = vsel %vm256, %v261, %v260
      %vm263 = vcmp.lt.s32.totalorder %v231, 0
      %v264 = vsub.s32 0, %v231
      %v265 = vsel %vm263, %v264, %v231
      %v266 = vshrl.u32 %v265, 4
      %v267 = vand.u32 %v265, 15
      %v268 = vsub.s32 0, %v267
      %v269 = vsel %vm263, %v268, %v267
      %vm270 = vcmp.lt.s32.totalorder %v232, 0
      %v271 = vsub.s32 0, %v232
      %v272 = vsel %vm270, %v271, %v232
      %v273 = vshrl.u32 %v272, 4
      %v274 = vand.u32 %v272, 15
      %v275 = vsub.s32 0, %v274
      %v276 = vsel %vm270, %v275, %v274
      %vm277 = vcmp.lt.s32.totalorder %v233, 0
      %v278 = vsub.s32 0, %v233
      %v279 = vsel %vm277, %v278, %v233
      %v280 = vshrl.u32 %v279, 4
      %v281 = vand.u32 %v279, 15
      %v282 = vsub.s32 0, %v281
      %v283 = vsel %vm277, %v282, %v281
      %vm284 = vcmp.lt.s32.totalorder %v234, 0
      %v285 = vsub.s32 0, %v234
      %v286 = vsel %vm284, %v285, %v234
      %v287 = vshrl.u32 %v286, 4
      %v288 = vand.u32 %v286, 15
      %v289 = vsub.s32 0, %v288
      %v290 = vsel %vm284, %v289, %v288
      %vm291 = vcmp.ne.s32.totalorder %v241, 0
      %vm292 = vcmp.ne.s32.totalorder %v248, 0
      %vm293 = vcmp.ne.s32.totalorder %v255, 0
      %vm294 = vcmp.ne.s32.totalorder %v262, 0
      %vm295 = vcmp.ne.s32.totalorder %v269, 0
      %vm296 = vcmp.ne.s32.totalorder %v276, 0
      %vm297 = vcmp.ne.s32.totalorder %v283, 0
      %vm298 = vcmp.ne.s32.totalorder %v290, 0
      %vm299 = vcmp.lt.s32.totalorder %v241, 0
      %vm300 = vcmp.lt.s32.totalorder %v248, 0
      %vm301 = vcmp.lt.s32.totalorder %v255, 0
      %vm302 = vcmp.lt.s32.totalorder %v262, 0
      %vm303 = vcmp.lt.s32.totalorder %v269, 0
      %vm304 = vcmp.lt.s32.totalorder %v276, 0
      %vm305 = vcmp.lt.s32.totalorder %v283, 0
      %vm306 = vcmp.lt.s32.totalorder %v290, 0
      %vm307 = vmand %vm299, %vm291
      %vm308 = vmand %vm300, %vm292
      %vm309 = vmand %vm301, %vm293
      %vm310 = vmand %vm302, %vm294
      %vm311 = vmand %vm303, %vm295
      %vm312 = vmand %vm304, %vm296
      %vm313 = vmand %vm305, %vm297
      %vm314 = vmand %vm306, %vm298
      %v315 = vadd.s32 %v241, 16
      %v316 = vadd.s32 %v248, 16
      %v317 = vadd.s32 %v255, 16
      %v318 = vadd.s32 %v262, 16
      %v319 = vadd.s32 %v269, 16
      %v320 = vadd.s32 %v276, 16
      %v321 = vadd.s32 %v283, 16
      %v322 = vadd.s32 %v290, 16
      %v323 = vsel %vm307, %v315, %v241
      %v324 = vsel %vm308, %v316, %v248
      %v325 = vsel %vm309, %v317, %v255
      %v326 = vsel %vm310, %v318, %v262
      %v327 = vsel %vm311, %v319, %v269
      %v328 = vsel %vm312, %v320, %v276
      %v329 = vsel %vm313, %v321, %v283
      %v330 = vsel %vm314, %v322, %v290
      %vm331 = vcmp.ne.s32.totalorder %v323, 0
      %vm332 = vcmp.ne.s32.totalorder %v324, 0
      %vm333 = vcmp.ne.s32.totalorder %v325, 0
      %vm334 = vcmp.ne.s32.totalorder %v326, 0
      %vm335 = vcmp.ne.s32.totalorder %v327, 0
      %vm336 = vcmp.ne.s32.totalorder %v328, 0
      %vm337 = vcmp.ne.s32.totalorder %v329, 0
      %vm338 = vcmp.ne.s32.totalorder %v330, 0
      %vm339 = vcmp.ne.s32.totalorder %v323, 15
      %vm340 = vcmp.ne.s32.totalorder %v324, 15
      %vm341 = vcmp.ne.s32.totalorder %v325, 15
      %vm342 = vcmp.ne.s32.totalorder %v326, 15
      %vm343 = vcmp.ne.s32.totalorder %v327, 15
      %vm344 = vcmp.ne.s32.totalorder %v328, 15
      %vm345 = vcmp.ne.s32.totalorder %v329, 15
      %vm346 = vcmp.ne.s32.totalorder %v330, 15
      %347 = vst [vmem:[#allocation2] sm:$0xf] 0
      %348 = vst [vmem:[#allocation2 + $0x4] sm:$0xf] 0
      %349 = vst [vmem:[#allocation2 + $0x8] sm:$0xf] 0
      %350 = vst [vmem:[#allocation2 + $0x8c] sm:$0xf] 0
      %351 = vst [vmem:[#allocation2 + $0x90] sm:$0xf] 0
      %352 = vst [vmem:[#allocation2 + $0x94] sm:$0xf] 0
      %v353 = vld [vmem:[%s2] sm:$0x1]
      %v354 = vld [vmem:[%s4] sm:$0x1]
      %v355 = vld [vmem:[%s219] sm:$0xf]
      %v356 = vld [vmem:[%s219 + $0x4] sm:$0xf]
      %v357 = vld [vmem:[%s219 + $0x8] sm:$0xf]
      %v358 = vld [vmem:[%s219 + $0xc] sm:$0xf]
      %v359 = vld [vmem:[%s219 + $0x10] sm:$0xf]
      %v360 = vld [vmem:[%s219 + $0x14] sm:$0xf]
      %v361 = vld [vmem:[%s219 + $0x18] sm:$0xf]
      %v362 = vld [vmem:[%s219 + $0x1c] sm:$0xf]
      %v363 = vld [vmem:[%s219 + $0x20] sm:$0xf]
      %v364 = vld [vmem:[%s219 + $0x24] sm:$0xf]
      %v365 = vld [vmem:[%s219 + $0x28] sm:$0xf]
      %v366 = vld [vmem:[%s219 + $0x2c] sm:$0xf]
      %v367 = vld [vmem:[%s219 + $0x30] sm:$0xf]
      %v368 = vld [vmem:[%s219 + $0x34] sm:$0xf]
      %v369 = vunpack.c.l.bf16 %v355
      %v370 = vunpack.c.l.bf16 %v356
      %v371 = vunpack.c.l.bf16 %v357
      %v372 = vunpack.c.l.bf16 %v358
      %v373 = vunpack.c.l.bf16 %v359
      %v374 = vunpack.c.l.bf16 %v360
      %v375 = vunpack.c.l.bf16 %v361
      %v376 = vunpack.c.l.bf16 %v362
      %v377 = vunpack.c.l.bf16 %v363
      %v378 = vunpack.c.l.bf16 %v364
      %v379 = vunpack.c.l.bf16 %v365
      %v380 = vunpack.c.l.bf16 %v366
      %v381 = vunpack.c.l.bf16 %v367
      %v382 = vunpack.c.l.bf16 %v368
      %vm392 = vcmask 1040384
      %v393 = vrot.slane %v369, 7
      %v394 = vrot.slane %v370, 7
      %v395 = vsel %vm392, %v393, %v394
      %v396 = vrot.slane %v371, 7
      %v397 = vsel %vm392, %v394, %v396
      %v398 = vrot.slane %v372, 7
      %v399 = vsel %vm392, %v396, %v398
      %v400 = vrot.slane %v373, 7
      %v401 = vsel %vm392, %v398, %v400
      %v402 = vrot.slane %v374, 7
      %v403 = vsel %vm392, %v400, %v402
      %v404 = vrot.slane %v375, 7
      %v405 = vsel %vm392, %v402, %v404
      %v406 = vrot.slane %v376, 7
      %v407 = vsel %vm392, %v404, %v406
      %v408 = vrot.slane %v377, 7
      %v409 = vsel %vm392, %v406, %v408
      %v418 = vsel %vm331, %v395, 0.0
      %v419 = vsel %vm332, %v397, 0.0
      %v420 = vsel %vm333, %v399, 0.0
      %v421 = vsel %vm334, %v401, 0.0
      %v422 = vsel %vm335, %v403, 0.0
      %v423 = vsel %vm336, %v405, 0.0
      %v424 = vsel %vm337, %v407, 0.0
      %v425 = vsel %vm338, %v409, 0.0
      %v426 = vpack.c.bf16 %v418, %v418
      %v427 = vpack.c.bf16 %v419, %v419
      %v428 = vpack.c.bf16 %v420, %v420
      %v429 = vpack.c.bf16 %v421, %v421
      %v430 = vpack.c.bf16 %v422, %v422
      %v431 = vpack.c.bf16 %v423, %v423
      %v432 = vpack.c.bf16 %v424, %v424
      %v433 = vpack.c.bf16 %v425, %v425
      %v434 = vpack.c.bf16 %v370, %v370
      %v435 = vpack.c.bf16 %v371, %v371
      %v436 = vpack.c.bf16 %v372, %v372
      %v437 = vpack.c.bf16 %v373, %v373
      %v438 = vpack.c.bf16 %v374, %v374
      %v439 = vpack.c.bf16 %v375, %v375
      %v440 = vpack.c.bf16 %v376, %v376
      %v441 = vpack.c.bf16 %v377, %v377
      %vm443 = vcmask 1046528
      %v444 = vrot.slane %v370, 1
      %v445 = vrot.slane %v371, 1
      %v446 = vsel %vm443, %v444, %v445
      %v447 = vrot.slane %v372, 1
      %v448 = vsel %vm443, %v445, %v447
      %v449 = vrot.slane %v373, 1
      %v450 = vsel %vm443, %v447, %v449
      %v451 = vrot.slane %v374, 1
      %v452 = vsel %vm443, %v449, %v451
      %v453 = vrot.slane %v375, 1
      %v454 = vsel %vm443, %v451, %v453
      %v455 = vrot.slane %v376, 1
      %v456 = vsel %vm443, %v453, %v455
      %v457 = vrot.slane %v377, 1
      %v458 = vsel %vm443, %v455, %v457
      %v459 = vrot.slane %v378, 1
      %v460 = vsel %vm443, %v457, %v459
      %v469 = vsel %vm339, %v446, 0.0
      %v470 = vsel %vm340, %v448, 0.0
      %v471 = vsel %vm341, %v450, 0.0
      %v472 = vsel %vm342, %v452, 0.0
      %v473 = vsel %vm343, %v454, 0.0
      %v474 = vsel %vm344, %v456, 0.0
      %v475 = vsel %vm345, %v458, 0.0
      %v476 = vsel %vm346, %v460, 0.0
      %v477 = vpack.c.bf16 %v469, %v469
      %v478 = vpack.c.bf16 %v470, %v470
      %v479 = vpack.c.bf16 %v471, %v471
      %v480 = vpack.c.bf16 %v472, %v472
      %v481 = vpack.c.bf16 %v473, %v473
      %v482 = vpack.c.bf16 %v474, %v474
      %v483 = vpack.c.bf16 %v475, %v475
      %v484 = vpack.c.bf16 %v476, %v476
      %v493 = vunpack.c.l.b16 %v426
      %v494 = vunpack.c.l.b16 %v427
      %v495 = vunpack.c.l.b16 %v428
      %v496 = vunpack.c.l.b16 %v429
      %v497 = vunpack.c.l.b16 %v430
      %v498 = vunpack.c.l.b16 %v431
      %v499 = vunpack.c.l.b16 %v432
      %v500 = vunpack.c.l.b16 %v433
      %v501 = vpack.c.b16 %v494, %v493
      %v502 = vpack.c.b16 %v496, %v495
      %v503 = vpack.c.b16 %v498, %v497
      %v504 = vpack.c.b16 %v500, %v499
      %v517 = vunpack.c.l.b16 %v434
      %v518 = vunpack.c.l.b16 %v435
      %v519 = vunpack.c.l.b16 %v436
      %v520 = vunpack.c.l.b16 %v437
      %v521 = vunpack.c.l.b16 %v438
      %v522 = vunpack.c.l.b16 %v439
      %v523 = vunpack.c.l.b16 %v440
      %v524 = vunpack.c.l.b16 %v441
      %v525 = vpack.c.b16 %v518, %v517
      %v526 = vpack.c.b16 %v520, %v519
      %v527 = vpack.c.b16 %v522, %v521
      %v528 = vpack.c.b16 %v524, %v523
      %v541 = vunpack.c.l.b16 %v477
      %v542 = vunpack.c.l.b16 %v478
      %v543 = vunpack.c.l.b16 %v479
      %v544 = vunpack.c.l.b16 %v480
      %v545 = vunpack.c.l.b16 %v481
      %v546 = vunpack.c.l.b16 %v482
      %v547 = vunpack.c.l.b16 %v483
      %v548 = vunpack.c.l.b16 %v484
      %v549 = vpack.c.b16 %v542, %v541
      %v550 = vpack.c.b16 %v544, %v543
      %v551 = vpack.c.b16 %v546, %v545
      %v552 = vpack.c.b16 %v548, %v547
      %v557 = vld [vmem:[%s1] sm:$0xf]
      %v558 = vld [vmem:[%s1 + $0x4] sm:$0xf]
      %v559 = vld [vmem:[%s1 + $0x8] sm:$0xf]
      %v560 = vld [vmem:[%s1 + $0xc] sm:$0xf]
      %v561 = vld [vmem:[%s1 + $0x10] sm:$0xf]
      %v562 = vld [vmem:[%s1 + $0x14] sm:$0xf]
      %v563 = vld [vmem:[%s1 + $0x18] sm:$0xf]
      %v564 = vld [vmem:[%s1 + $0x1c] sm:$0xf]
      %v565 = vld [vmem:[%s1 + $0x20] sm:$0xf]
      %v566 = vld [vmem:[%s1 + $0x24] sm:$0xf]
      %v567 = vld [vmem:[%s1 + $0x28] sm:$0xf]
      %v568 = vld [vmem:[%s1 + $0x2c] sm:$0xf]
      %v569 = vld [vmem:[%s1 + $0x30] sm:$0xf]
      %v570 = vld [vmem:[%s1 + $0x34] sm:$0xf]
      %v571 = vld [vmem:[%s1 + $0x38] sm:$0xf]
      %v572 = vld [vmem:[%s1 + $0x3c] sm:$0xf]
      %v573 = vld [vmem:[%s1 + $0x40] sm:$0xf]
      %v574 = vld [vmem:[%s1 + $0x44] sm:$0xf]
      %v575 = vld [vmem:[%s1 + $0x48] sm:$0xf]
      %v576 = vld [vmem:[%s1 + $0x4c] sm:$0xf]
      %v577 = vld [vmem:[%s1 + $0x50] sm:$0xf]
      %v578 = vld [vmem:[%s1 + $0x54] sm:$0xf]
      %v579 = vld [vmem:[%s1 + $0x58] sm:$0xf]
      %v580 = vld [vmem:[%s1 + $0x5c] sm:$0xf]
      %v581 = vld [vmem:[%s1 + $0x60] sm:$0xf]
      %v582 = vld [vmem:[%s1 + $0x64] sm:$0xf]
      %v583 = vld [vmem:[%s1 + $0x68] sm:$0xf]
      %v584 = vld [vmem:[%s1 + $0x6c] sm:$0xf]
      %v585 = vld [vmem:[%s1 + $0x70] sm:$0xf]
      %v586 = vld [vmem:[%s1 + $0x74] sm:$0xf]
      %v587 = vld [vmem:[%s1 + $0x78] sm:$0xf]
      %v588 = vld [vmem:[%s1 + $0x7c] sm:$0xf]
      %v589 = vld [vmem:[%s1 + $0x80] sm:$0xf]
      %v590 = vld [vmem:[%s1 + $0x84] sm:$0xf]
      %v591 = vld [vmem:[%s1 + $0x88] sm:$0xf]
      %v592 = vld [vmem:[%s1 + $0x8c] sm:$0xf]
      %v593 = vld [vmem:[%s1 + $0x90] sm:$0xf]
      %v594 = vld [vmem:[%s1 + $0x94] sm:$0xf]
      %v595 = vld [vmem:[%s1 + $0x98] sm:$0xf]
      %v596 = vld [vmem:[%s1 + $0x9c] sm:$0xf]
      %v597 = vld [vmem:[%s1 + $0xa0] sm:$0xf]
      %v598 = vld [vmem:[%s1 + $0xa4] sm:$0xf]
      %v599 = vld [vmem:[%s1 + $0xa8] sm:$0xf]
      %v600 = vld [vmem:[%s1 + $0xac] sm:$0xf]
      %v601 = vld [vmem:[%s1 + $0xb0] sm:$0xf]
      %v602 = vld [vmem:[%s1 + $0xb4] sm:$0xf]
      %v603 = vld [vmem:[%s1 + $0xb8] sm:$0xf]
      %v604 = vld [vmem:[%s1 + $0xbc] sm:$0xf]
      %v606 = vrot.slane %v378, 7
      %v607 = vsel %vm392, %v408, %v606
      %v608 = vrot.slane %v379, 7
      %v609 = vsel %vm392, %v606, %v608
      %v612 = vsel %vm331, %v399, 0.0
      %v613 = vsel %vm332, %v401, 0.0
      %v614 = vsel %vm333, %v403, 0.0
      %v615 = vsel %vm334, %v405, 0.0
      %v616 = vsel %vm335, %v407, 0.0
      %v617 = vsel %vm336, %v409, 0.0
      %v618 = vsel %vm337, %v607, 0.0
      %v619 = vsel %vm338, %v609, 0.0
      %v620 = vpack.c.bf16 %v612, %v612
      %v621 = vpack.c.bf16 %v613, %v613
      %v622 = vpack.c.bf16 %v614, %v614
      %v623 = vpack.c.bf16 %v615, %v615
      %v624 = vpack.c.bf16 %v616, %v616
      %v625 = vpack.c.bf16 %v617, %v617
      %v626 = vpack.c.bf16 %v618, %v618
      %v627 = vpack.c.bf16 %v619, %v619
      %v628 = vpack.c.bf16 %v378, %v378
      %v629 = vpack.c.bf16 %v379, %v379
      %v631 = vrot.slane %v379, 1
      %v632 = vsel %vm443, %v459, %v631
      %v633 = vrot.slane %v380, 1
      %v634 = vsel %vm443, %v631, %v633
      %v637 = vsel %vm339, %v450, 0.0
      %v638 = vsel %vm340, %v452, 0.0
      %v639 = vsel %vm341, %v454, 0.0
      %v640 = vsel %vm342, %v456, 0.0
      %v641 = vsel %vm343, %v458, 0.0
      %v642 = vsel %vm344, %v460, 0.0
      %v643 = vsel %vm345, %v632, 0.0
      %v644 = vsel %vm346, %v634, 0.0
      %v645 = vpack.c.bf16 %v637, %v637
      %v646 = vpack.c.bf16 %v638, %v638
      %v647 = vpack.c.bf16 %v639, %v639
      %v648 = vpack.c.bf16 %v640, %v640
      %v649 = vpack.c.bf16 %v641, %v641
      %v650 = vpack.c.bf16 %v642, %v642
      %v651 = vpack.c.bf16 %v643, %v643
      %v652 = vpack.c.bf16 %v644, %v644
      %v661 = vunpack.c.l.b16 %v620
      %v662 = vunpack.c.l.b16 %v621
      %v663 = vunpack.c.l.b16 %v622
      %v664 = vunpack.c.l.b16 %v623
      %v665 = vunpack.c.l.b16 %v624
      %v666 = vunpack.c.l.b16 %v625
      %v667 = vunpack.c.l.b16 %v626
      %v668 = vunpack.c.l.b16 %v627
      %v669 = vpack.c.b16 %v662, %v661
      %v670 = vpack.c.b16 %v664, %v663
      %v671 = vpack.c.b16 %v666, %v665
      %v672 = vpack.c.b16 %v668, %v667
      %v679 = vunpack.c.l.b16 %v628
      %v680 = vunpack.c.l.b16 %v629
      %v681 = vpack.c.b16 %v680, %v679
      %v691 = vunpack.c.l.b16 %v645
      %v692 = vunpack.c.l.b16 %v646
      %v693 = vunpack.c.l.b16 %v647
      %v694 = vunpack.c.l.b16 %v648
      %v695 = vunpack.c.l.b16 %v649
      %v696 = vunpack.c.l.b16 %v650
      %v697 = vunpack.c.l.b16 %v651
      %v698 = vunpack.c.l.b16 %v652
      %v699 = vpack.c.b16 %v692, %v691
      %v700 = vpack.c.b16 %v694, %v693
      %v701 = vpack.c.b16 %v696, %v695
      %v702 = vpack.c.b16 %v698, %v697
      %s707 = scalar_lea.vmem %s1, 192
      %v708 = vld [vmem:[%s707] sm:$0xf]
      %v709 = vld [vmem:[%s707 + $0x4] sm:$0xf]
      %v710 = vld [vmem:[%s707 + $0x8] sm:$0xf]
      %v711 = vld [vmem:[%s707 + $0xc] sm:$0xf]
      %v712 = vld [vmem:[%s707 + $0x10] sm:$0xf]
      %v713 = vld [vmem:[%s707 + $0x14] sm:$0xf]
      %v714 = vld [vmem:[%s707 + $0x18] sm:$0xf]
      %v715 = vld [vmem:[%s707 + $0x1c] sm:$0xf]
      %v716 = vld [vmem:[%s707 + $0x20] sm:$0xf]
      %v717 = vld [vmem:[%s707 + $0x24] sm:$0xf]
      %v718 = vld [vmem:[%s707 + $0x28] sm:$0xf]
      %v719 = vld [vmem:[%s707 + $0x2c] sm:$0xf]
      %v720 = vld [vmem:[%s707 + $0x30] sm:$0xf]
      %v721 = vld [vmem:[%s707 + $0x34] sm:$0xf]
      %v722 = vld [vmem:[%s707 + $0x38] sm:$0xf]
      %v723 = vld [vmem:[%s707 + $0x3c] sm:$0xf]
      %v724 = vld [vmem:[%s707 + $0x40] sm:$0xf]
      %v725 = vld [vmem:[%s707 + $0x44] sm:$0xf]
      %v726 = vld [vmem:[%s707 + $0x48] sm:$0xf]
      %v727 = vld [vmem:[%s707 + $0x4c] sm:$0xf]
      %v728 = vld [vmem:[%s707 + $0x50] sm:$0xf]
      %v729 = vld [vmem:[%s707 + $0x54] sm:$0xf]
      %v730 = vld [vmem:[%s707 + $0x58] sm:$0xf]
      %v731 = vld [vmem:[%s707 + $0x5c] sm:$0xf]
      %v732 = vld [vmem:[%s707 + $0x60] sm:$0xf]
      %v733 = vld [vmem:[%s707 + $0x64] sm:$0xf]
      %v734 = vld [vmem:[%s707 + $0x68] sm:$0xf]
      %v735 = vld [vmem:[%s707 + $0x6c] sm:$0xf]
      %v736 = vld [vmem:[%s707 + $0x70] sm:$0xf]
      %v737 = vld [vmem:[%s707 + $0x74] sm:$0xf]
      %v738 = vld [vmem:[%s707 + $0x78] sm:$0xf]
      %v739 = vld [vmem:[%s707 + $0x7c] sm:$0xf]
      %v740 = vld [vmem:[%s707 + $0x80] sm:$0xf]
      %v741 = vld [vmem:[%s707 + $0x84] sm:$0xf]
      %v742 = vld [vmem:[%s707 + $0x88] sm:$0xf]
      %v743 = vld [vmem:[%s707 + $0x8c] sm:$0xf]
      %v744 = vld [vmem:[%s707 + $0x90] sm:$0xf]
      %v745 = vld [vmem:[%s707 + $0x94] sm:$0xf]
      %v746 = vld [vmem:[%s707 + $0x98] sm:$0xf]
      %v747 = vld [vmem:[%s707 + $0x9c] sm:$0xf]
      %v748 = vld [vmem:[%s707 + $0xa0] sm:$0xf]
      %v749 = vld [vmem:[%s707 + $0xa4] sm:$0xf]
      %v750 = vld [vmem:[%s707 + $0xa8] sm:$0xf]
      %v751 = vld [vmem:[%s707 + $0xac] sm:$0xf]
      %v752 = vld [vmem:[%s707 + $0xb0] sm:$0xf]
      %v753 = vld [vmem:[%s707 + $0xb4] sm:$0xf]
      %v754 = vld [vmem:[%s707 + $0xb8] sm:$0xf]
      %v755 = vld [vmem:[%s707 + $0xbc] sm:$0xf]
      %v804 = vunpack.c.l.b16 %v708
      %v805 = vunpack.c.l.b16 %v709
      %v806 = vunpack.c.l.b16 %v710
      %v807 = vunpack.c.l.b16 %v711
      %v808 = vunpack.c.l.b16 %v712
      %v809 = vunpack.c.l.b16 %v713
      %v810 = vunpack.c.l.b16 %v714
      %v811 = vunpack.c.l.b16 %v715
      %v812 = vunpack.c.l.b16 %v716
      %v813 = vunpack.c.l.b16 %v717
      %v814 = vunpack.c.l.b16 %v718
      %v815 = vunpack.c.l.b16 %v719
      %v816 = vunpack.c.l.b16 %v720
      %v817 = vunpack.c.l.b16 %v721
      %v818 = vunpack.c.l.b16 %v722
      %v819 = vunpack.c.l.b16 %v723
      %v820 = vunpack.c.l.b16 %v724
      %v821 = vunpack.c.l.b16 %v725
      %v822 = vunpack.c.l.b16 %v726
      %v823 = vunpack.c.l.b16 %v727
      %v824 = vunpack.c.l.b16 %v728
      %v825 = vunpack.c.l.b16 %v729
      %v826 = vunpack.c.l.b16 %v730
      %v827 = vunpack.c.l.b16 %v731
      %v828 = vunpack.c.l.b16 %v732
      %v829 = vunpack.c.l.b16 %v733
      %v830 = vunpack.c.l.b16 %v734
      %v831 = vunpack.c.l.b16 %v735
      %v832 = vunpack.c.l.b16 %v736
      %v833 = vunpack.c.l.b16 %v737
      %v834 = vunpack.c.l.b16 %v738
      %v835 = vunpack.c.l.b16 %v739
      %v836 = vunpack.c.l.b16 %v740
      %v837 = vunpack.c.l.b16 %v741
      %v838 = vunpack.c.l.b16 %v742
      %v839 = vunpack.c.l.b16 %v743
      %v840 = vunpack.c.l.b16 %v744
      %v841 = vunpack.c.l.b16 %v745
      %v842 = vunpack.c.l.b16 %v746
      %v843 = vunpack.c.l.b16 %v747
      %v844 = vunpack.c.l.b16 %v748
      %v845 = vunpack.c.l.b16 %v749
      %v846 = vunpack.c.l.b16 %v750
      %v847 = vunpack.c.l.b16 %v751
      %v848 = vunpack.c.l.b16 %v752
      %v849 = vunpack.c.l.b16 %v753
      %v850 = vunpack.c.l.b16 %v754
      %v851 = vunpack.c.l.b16 %v755
      %v852 = vpack.c.b16 %v805, %v804
      %v853 = vpack.c.b16 %v807, %v806
      %v854 = vpack.c.b16 %v809, %v808
      %v855 = vpack.c.b16 %v811, %v810
      %v856 = vpack.c.b16 %v813, %v812
      %v857 = vpack.c.b16 %v815, %v814
      %v858 = vpack.c.b16 %v817, %v816
      %v859 = vpack.c.b16 %v819, %v818
      %v860 = vpack.c.b16 %v821, %v820
      %v861 = vpack.c.b16 %v823, %v822
      %v862 = vpack.c.b16 %v825, %v824
      %v863 = vpack.c.b16 %v827, %v826
      %v864 = vpack.c.b16 %v829, %v828
      %v865 = vpack.c.b16 %v831, %v830
      %v866 = vpack.c.b16 %v833, %v832
      %v867 = vpack.c.b16 %v835, %v834
      %v868 = vpack.c.b16 %v837, %v836
      %v869 = vpack.c.b16 %v839, %v838
      %v870 = vpack.c.b16 %v841, %v840
      %v871 = vpack.c.b16 %v843, %v842
      %v872 = vpack.c.b16 %v845, %v844
      %v873 = vpack.c.b16 %v847, %v846
      %v874 = vpack.c.b16 %v849, %v848
      %v875 = vpack.c.b16 %v851, %v850
      %900 = vmatpush.bf16.msra.mxu0 %v859
      %901 = vmatpush.bf16.msra.mxu0 %v858
      %902 = vmatpush.bf16.msra.mxu0 %v857
      %903 = vmatpush.bf16.msra.mxu0 %v856
      %904 = vmatpush.bf16.msra.mxu0 %v855
      %905 = vmatpush.bf16.msra.mxu0 %v854
      %906 = vmatpush.bf16.msra.mxu0 %v853
      %907 = vmatpush.bf16.msra.mxu0 %v852
      %908 = vmatmul.bf16.gmra.mxu0 %v669
      %v909 = vpop.f32.mrf.mxu0
      %v910 = vadd.f32 0.0, %v909
      %v911 = vpop.f32.mrf.mxu0
      %v912 = vadd.f32 0.0, %v911
      %913 = vmatmul.bf16.gmra.mxu0 %v670
      %v914 = vpop.f32.mrf.mxu0
      %v915 = vadd.f32 0.0, %v914
      %v916 = vpop.f32.mrf.mxu0
      %v917 = vadd.f32 0.0, %v916
      %918 = vmatmul.bf16.gmra.mxu0 %v671
      %v919 = vpop.f32.mrf.mxu0
      %v920 = vadd.f32 0.0, %v919
      %v921 = vpop.f32.mrf.mxu0
      %v922 = vadd.f32 0.0, %v921
      %923 = vmatmul.bf16.gmra.mxu0 %v672
      %v924 = vpop.f32.mrf.mxu0
      %v925 = vadd.f32 0.0, %v924
      %v926 = vpop.f32.mrf.mxu0
      %v927 = vadd.f32 0.0, %v926
      %928 = vdwg.mxu0
      %929 = vmatpush.bf16.msra.mxu0 %v867
      %930 = vmatpush.bf16.msra.mxu0 %v866
      %931 = vmatpush.bf16.msra.mxu0 %v865
      %932 = vmatpush.bf16.msra.mxu0 %v864
      %933 = vmatpush.bf16.msra.mxu0 %v863
      %934 = vmatpush.bf16.msra.mxu0 %v862
      %935 = vmatpush.bf16.msra.mxu0 %v861
      %936 = vmatpush.bf16.msra.mxu0 %v860
      %937 = vmatmul.bf16.gmra.mxu0 %v526
      %v938 = vpop.f32.mrf.mxu0
      %v939 = vadd.f32 %v910, %v938
      %v940 = vpop.f32.mrf.mxu0
      %v941 = vadd.f32 %v912, %v940
      %942 = vmatmul.bf16.gmra.mxu0 %v527
      %v943 = vpop.f32.mrf.mxu0
      %v944 = vadd.f32 %v915, %v943
      %v945 = vpop.f32.mrf.mxu0
      %v946 = vadd.f32 %v917, %v945
      %947 = vmatmul.bf16.gmra.mxu0 %v528
      %v948 = vpop.f32.mrf.mxu0
      %v949 = vadd.f32 %v920, %v948
      %v950 = vpop.f32.mrf.mxu0
      %v951 = vadd.f32 %v922, %v950
      %952 = vmatmul.bf16.gmra.mxu0 %v681
      %v953 = vpop.f32.mrf.mxu0
      %v954 = vadd.f32 %v925, %v953
      %v955 = vpop.f32.mrf.mxu0
      %v956 = vadd.f32 %v927, %v955
      %957 = vdwg.mxu0
      %958 = vmatpush.bf16.msra.mxu0 %v875
      %959 = vmatpush.bf16.msra.mxu0 %v874
      %960 = vmatpush.bf16.msra.mxu0 %v873
      %961 = vmatpush.bf16.msra.mxu0 %v872
      %962 = vmatpush.bf16.msra.mxu0 %v871
      %963 = vmatpush.bf16.msra.mxu0 %v870
      %964 = vmatpush.bf16.msra.mxu0 %v869
      %965 = vmatpush.bf16.msra.mxu0 %v868
      %966 = vmatmul.bf16.gmra.mxu0 %v699
      %v967 = vpop.f32.mrf.mxu0
      %v968 = vadd.f32 %v939, %v967
      %v969 = vpop.f32.mrf.mxu0
      %v970 = vadd.f32 %v941, %v969
      %971 = vmatmul.bf16.gmra.mxu0 %v700
      %v972 = vpop.f32.mrf.mxu0
      %v973 = vadd.f32 %v944, %v972
      %v974 = vpop.f32.mrf.mxu0
      %v975 = vadd.f32 %v946, %v974
      %976 = vmatmul.bf16.gmra.mxu0 %v701
      %v977 = vpop.f32.mrf.mxu0
      %v978 = vadd.f32 %v949, %v977
      %v979 = vpop.f32.mrf.mxu0
      %v980 = vadd.f32 %v951, %v979
      %981 = vmatmul.bf16.gmra.mxu0 %v702
      %v982 = vpop.f32.mrf.mxu0
      %v983 = vadd.f32 %v954, %v982
      %v984 = vpop.f32.mrf.mxu0
      %v985 = vadd.f32 %v956, %v984
      %986 = vdwg.mxu0
      %v1035 = vunpack.c.l.b16 %v557
      %v1036 = vunpack.c.l.b16 %v558
      %v1037 = vunpack.c.l.b16 %v559
      %v1038 = vunpack.c.l.b16 %v560
      %v1039 = vunpack.c.l.b16 %v561
      %v1040 = vunpack.c.l.b16 %v562
      %v1041 = vunpack.c.l.b16 %v563
      %v1042 = vunpack.c.l.b16 %v564
      %v1043 = vunpack.c.l.b16 %v565
      %v1044 = vunpack.c.l.b16 %v566
      %v1045 = vunpack.c.l.b16 %v567
      %v1046 = vunpack.c.l.b16 %v568
      %v1047 = vunpack.c.l.b16 %v569
      %v1048 = vunpack.c.l.b16 %v570
      %v1049 = vunpack.c.l.b16 %v571
      %v1050 = vunpack.c.l.b16 %v572
      %v1051 = vunpack.c.l.b16 %v573
      %v1052 = vunpack.c.l.b16 %v574
      %v1053 = vunpack.c.l.b16 %v575
      %v1054 = vunpack.c.l.b16 %v576
      %v1055 = vunpack.c.l.b16 %v577
      %v1056 = vunpack.c.l.b16 %v578
      %v1057 = vunpack.c.l.b16 %v579
      %v1058 = vunpack.c.l.b16 %v580
      %v1059 = vunpack.c.l.b16 %v581
      %v1060 = vunpack.c.l.b16 %v582
      %v1061 = vunpack.c.l.b16 %v583
      %v1062 = vunpack.c.l.b16 %v584
      %v1063 = vunpack.c.l.b16 %v585
      %v1064 = vunpack.c.l.b16 %v586
      %v1065 = vunpack.c.l.b16 %v587
      %v1066 = vunpack.c.l.b16 %v588
      %v1067 = vunpack.c.l.b16 %v589
      %v1068 = vunpack.c.l.b16 %v590
      %v1069 = vunpack.c.l.b16 %v591
      %v1070 = vunpack.c.l.b16 %v592
      %v1071 = vunpack.c.l.b16 %v593
      %v1072 = vunpack.c.l.b16 %v594
      %v1073 = vunpack.c.l.b16 %v595
      %v1074 = vunpack.c.l.b16 %v596
      %v1075 = vunpack.c.l.b16 %v597
      %v1076 = vunpack.c.l.b16 %v598
      %v1077 = vunpack.c.l.b16 %v599
      %v1078 = vunpack.c.l.b16 %v600
      %v1079 = vunpack.c.l.b16 %v601
      %v1080 = vunpack.c.l.b16 %v602
      %v1081 = vunpack.c.l.b16 %v603
      %v1082 = vunpack.c.l.b16 %v604
      %v1083 = vpack.c.b16 %v1036, %v1035
      %v1084 = vpack.c.b16 %v1038, %v1037
      %v1085 = vpack.c.b16 %v1040, %v1039
      %v1086 = vpack.c.b16 %v1042, %v1041
      %v1087 = vpack.c.b16 %v1044, %v1043
      %v1088 = vpack.c.b16 %v1046, %v1045
      %v1089 = vpack.c.b16 %v1048, %v1047
      %v1090 = vpack.c.b16 %v1050, %v1049
      %v1091 = vpack.c.b16 %v1052, %v1051
      %v1092 = vpack.c.b16 %v1054, %v1053
      %v1093 = vpack.c.b16 %v1056, %v1055
      %v1094 = vpack.c.b16 %v1058, %v1057
      %v1095 = vpack.c.b16 %v1060, %v1059
      %v1096 = vpack.c.b16 %v1062, %v1061
      %v1097 = vpack.c.b16 %v1064, %v1063
      %v1098 = vpack.c.b16 %v1066, %v1065
      %v1099 = vpack.c.b16 %v1068, %v1067
      %v1100 = vpack.c.b16 %v1070, %v1069
      %v1101 = vpack.c.b16 %v1072, %v1071
      %v1102 = vpack.c.b16 %v1074, %v1073
      %v1103 = vpack.c.b16 %v1076, %v1075
      %v1104 = vpack.c.b16 %v1078, %v1077
      %v1105 = vpack.c.b16 %v1080, %v1079
      %v1106 = vpack.c.b16 %v1082, %v1081
      %1131 = vmatpush.bf16.msra.mxu0 %v1090
      %1132 = vmatpush.bf16.msra.mxu0 %v1089
      %1133 = vmatpush.bf16.msra.mxu0 %v1088
      %1134 = vmatpush.bf16.msra.mxu0 %v1087
      %1135 = vmatpush.bf16.msra.mxu0 %v1086
      %1136 = vmatpush.bf16.msra.mxu0 %v1085
      %1137 = vmatpush.bf16.msra.mxu0 %v1084
      %1138 = vmatpush.bf16.msra.mxu0 %v1083
      %1139 = vmatmul.bf16.gmra.mxu0 %v501
      %v1140 = vpop.f32.mrf.mxu0
      %v1141 = vadd.f32 %v968, %v1140
      %v1142 = vpop.f32.mrf.mxu0
      %v1143 = vadd.f32 %v970, %v1142
      %1144 = vmatmul.bf16.gmra.mxu0 %v502
      %v1145 = vpop.f32.mrf.mxu0
      %v1146 = vadd.f32 %v973, %v1145
      %v1147 = vpop.f32.mrf.mxu0
      %v1148 = vadd.f32 %v975, %v1147
      %1149 = vmatmul.bf16.gmra.mxu0 %v503
      %v1150 = vpop.f32.mrf.mxu0
      %v1151 = vadd.f32 %v978, %v1150
      %v1152 = vpop.f32.mrf.mxu0
      %v1153 = vadd.f32 %v980, %v1152
      %1154 = vmatmul.bf16.gmra.mxu0 %v504
      %v1155 = vpop.f32.mrf.mxu0
      %v1156 = vadd.f32 %v983, %v1155
      %v1157 = vpop.f32.mrf.mxu0
      %v1158 = vadd.f32 %v985, %v1157
      %1159 = vdwg.mxu0
      %1160 = vmatpush.bf16.msra.mxu0 %v1098
      %1161 = vmatpush.bf16.msra.mxu0 %v1097
      %1162 = vmatpush.bf16.msra.mxu0 %v1096
      %1163 = vmatpush.bf16.msra.mxu0 %v1095
      %1164 = vmatpush.bf16.msra.mxu0 %v1094
      %1165 = vmatpush.bf16.msra.mxu0 %v1093
      %1166 = vmatpush.bf16.msra.mxu0 %v1092
      %1167 = vmatpush.bf16.msra.mxu0 %v1091
      %1168 = vmatmul.bf16.gmra.mxu0 %v525
      %v1169 = vpop.f32.mrf.mxu0
      %v1170 = vadd.f32 %v1141, %v1169
      %v1171 = vpop.f32.mrf.mxu0
      %v1172 = vadd.f32 %v1143, %v1171
      %1173 = vmatmul.bf16.gmra.mxu0 %v526
      %v1174 = vpop.f32.mrf.mxu0
      %v1175 = vadd.f32 %v1146, %v1174
      %v1176 = vpop.f32.mrf.mxu0
      %v1177 = vadd.f32 %v1148, %v1176
      %1178 = vmatmul.bf16.gmra.mxu0 %v527
      %v1179 = vpop.f32.mrf.mxu0
      %v1180 = vadd.f32 %v1151, %v1179
      %v1181 = vpop.f32.mrf.mxu0
      %v1182 = vadd.f32 %v1153, %v1181
      %1183 = vmatmul.bf16.gmra.mxu0 %v528
      %v1184 = vpop.f32.mrf.mxu0
      %v1185 = vadd.f32 %v1156, %v1184
      %v1186 = vpop.f32.mrf.mxu0
      %v1187 = vadd.f32 %v1158, %v1186
      %1188 = vdwg.mxu0
      %1189 = vmatpush.bf16.msra.mxu0 %v1106
      %1190 = vmatpush.bf16.msra.mxu0 %v1105
      %1191 = vmatpush.bf16.msra.mxu0 %v1104
      %1192 = vmatpush.bf16.msra.mxu0 %v1103
      %1193 = vmatpush.bf16.msra.mxu0 %v1102
      %1194 = vmatpush.bf16.msra.mxu0 %v1101
      %1195 = vmatpush.bf16.msra.mxu0 %v1100
      %1196 = vmatpush.bf16.msra.mxu0 %v1099
      %1197 = vmatmul.bf16.gmra.mxu0 %v549
      %v1198 = vpop.f32.mrf.mxu0
      %v1199 = vadd.f32 %v1170, %v1198
      %v1200 = vpop.f32.mrf.mxu0
      %v1201 = vadd.f32 %v1172, %v1200
      %1202 = vmatmul.bf16.gmra.mxu0 %v550
      %v1203 = vpop.f32.mrf.mxu0
      %v1204 = vadd.f32 %v1175, %v1203
      %v1205 = vpop.f32.mrf.mxu0
      %v1206 = vadd.f32 %v1177, %v1205
      %1207 = vmatmul.bf16.gmra.mxu0 %v551
      %v1208 = vpop.f32.mrf.mxu0
      %v1209 = vadd.f32 %v1180, %v1208
      %v1210 = vpop.f32.mrf.mxu0
      %v1211 = vadd.f32 %v1182, %v1210
      %1212 = vmatmul.bf16.gmra.mxu0 %v552
      %v1213 = vpop.f32.mrf.mxu0
      %v1214 = vadd.f32 %v1185, %v1213
      %v1215 = vpop.f32.mrf.mxu0
      %v1216 = vadd.f32 %v1187, %v1215
      %1217 = vdwg.mxu0
      %v1219 = vrot.slane %v380, 7
      %v1220 = vsel %vm392, %v608, %v1219
      %v1221 = vrot.slane %v381, 7
      %v1222 = vsel %vm392, %v1219, %v1221
      %v1225 = vsel %vm331, %v403, 0.0
      %v1226 = vsel %vm332, %v405, 0.0
      %v1227 = vsel %vm333, %v407, 0.0
      %v1228 = vsel %vm334, %v409, 0.0
      %v1229 = vsel %vm335, %v607, 0.0
      %v1230 = vsel %vm336, %v609, 0.0
      %v1231 = vsel %vm337, %v1220, 0.0
      %v1232 = vsel %vm338, %v1222, 0.0
      %v1233 = vpack.c.bf16 %v1225, %v1225
      %v1234 = vpack.c.bf16 %v1226, %v1226
      %v1235 = vpack.c.bf16 %v1227, %v1227
      %v1236 = vpack.c.bf16 %v1228, %v1228
      %v1237 = vpack.c.bf16 %v1229, %v1229
      %v1238 = vpack.c.bf16 %v1230, %v1230
      %v1239 = vpack.c.bf16 %v1231, %v1231
      %v1240 = vpack.c.bf16 %v1232, %v1232
      %v1241 = vpack.c.bf16 %v380, %v380
      %v1242 = vpack.c.bf16 %v381, %v381
      %v1244 = vrot.slane %v381, 1
      %v1245 = vsel %vm443, %v633, %v1244
      %v1246 = vrot.slane %v382, 1
      %v1247 = vsel %vm443, %v1244, %v1246
      %v1250 = vsel %vm339, %v454, 0.0
      %v1251 = vsel %vm340, %v456, 0.0
      %v1252 = vsel %vm341, %v458, 0.0
      %v1253 = vsel %vm342, %v460, 0.0
      %v1254 = vsel %vm343, %v632, 0.0
      %v1255 = vsel %vm344, %v634, 0.0
      %v1256 = vsel %vm345, %v1245, 0.0
      %v1257 = vsel %vm346, %v1247, 0.0
      %v1258 = vpack.c.bf16 %v1250, %v1250
      %v1259 = vpack.c.bf16 %v1251, %v1251
      %v1260 = vpack.c.bf16 %v1252, %v1252
      %v1261 = vpack.c.bf16 %v1253, %v1253
      %v1262 = vpack.c.bf16 %v1254, %v1254
      %v1263 = vpack.c.bf16 %v1255, %v1255
      %v1264 = vpack.c.bf16 %v1256, %v1256
      %v1265 = vpack.c.bf16 %v1257, %v1257
      %v1274 = vunpack.c.l.b16 %v1233
      %v1275 = vunpack.c.l.b16 %v1234
      %v1276 = vunpack.c.l.b16 %v1235
      %v1277 = vunpack.c.l.b16 %v1236
      %v1278 = vunpack.c.l.b16 %v1237
      %v1279 = vunpack.c.l.b16 %v1238
      %v1280 = vunpack.c.l.b16 %v1239
      %v1281 = vunpack.c.l.b16 %v1240
      %v1282 = vpack.c.b16 %v1275, %v1274
      %v1283 = vpack.c.b16 %v1277, %v1276
      %v1284 = vpack.c.b16 %v1279, %v1278
      %v1285 = vpack.c.b16 %v1281, %v1280
      %v1292 = vunpack.c.l.b16 %v1241
      %v1293 = vunpack.c.l.b16 %v1242
      %v1294 = vpack.c.b16 %v1293, %v1292
      %v1304 = vunpack.c.l.b16 %v1258
      %v1305 = vunpack.c.l.b16 %v1259
      %v1306 = vunpack.c.l.b16 %v1260
      %v1307 = vunpack.c.l.b16 %v1261
      %v1308 = vunpack.c.l.b16 %v1262
      %v1309 = vunpack.c.l.b16 %v1263
      %v1310 = vunpack.c.l.b16 %v1264
      %v1311 = vunpack.c.l.b16 %v1265
      %v1312 = vpack.c.b16 %v1305, %v1304
      %v1313 = vpack.c.b16 %v1307, %v1306
      %v1314 = vpack.c.b16 %v1309, %v1308
      %v1315 = vpack.c.b16 %v1311, %v1310
      %s1320 = scalar_lea.vmem %s1, 384
      %v1321 = vld [vmem:[%s1320] sm:$0xf]
      %v1322 = vld [vmem:[%s1320 + $0x4] sm:$0xf]
      %v1323 = vld [vmem:[%s1320 + $0x8] sm:$0xf]
      %v1324 = vld [vmem:[%s1320 + $0xc] sm:$0xf]
      %v1325 = vld [vmem:[%s1320 + $0x10] sm:$0xf]
      %v1326 = vld [vmem:[%s1320 + $0x14] sm:$0xf]
      %v1327 = vld [vmem:[%s1320 + $0x18] sm:$0xf]
      %v1328 = vld [vmem:[%s1320 + $0x1c] sm:$0xf]
      %v1329 = vld [vmem:[%s1320 + $0x20] sm:$0xf]
      %v1330 = vld [vmem:[%s1320 + $0x24] sm:$0xf]
      %v1331 = vld [vmem:[%s1320 + $0x28] sm:$0xf]
      %v1332 = vld [vmem:[%s1320 + $0x2c] sm:$0xf]
      %v1333 = vld [vmem:[%s1320 + $0x30] sm:$0xf]
      %v1334 = vld [vmem:[%s1320 + $0x34] sm:$0xf]
      %v1335 = vld [vmem:[%s1320 + $0x38] sm:$0xf]
      %v1336 = vld [vmem:[%s1320 + $0x3c] sm:$0xf]
      %v1337 = vld [vmem:[%s1320 + $0x40] sm:$0xf]
      %v1338 = vld [vmem:[%s1320 + $0x44] sm:$0xf]
      %v1339 = vld [vmem:[%s1320 + $0x48] sm:$0xf]
      %v1340 = vld [vmem:[%s1320 + $0x4c] sm:$0xf]
      %v1341 = vld [vmem:[%s1320 + $0x50] sm:$0xf]
      %v1342 = vld [vmem:[%s1320 + $0x54] sm:$0xf]
      %v1343 = vld [vmem:[%s1320 + $0x58] sm:$0xf]
      %v1344 = vld [vmem:[%s1320 + $0x5c] sm:$0xf]
      %v1345 = vld [vmem:[%s1320 + $0x60] sm:$0xf]
      %v1346 = vld [vmem:[%s1320 + $0x64] sm:$0xf]
      %v1347 = vld [vmem:[%s1320 + $0x68] sm:$0xf]
      %v1348 = vld [vmem:[%s1320 + $0x6c] sm:$0xf]
      %v1349 = vld [vmem:[%s1320 + $0x70] sm:$0xf]
      %v1350 = vld [vmem:[%s1320 + $0x74] sm:$0xf]
      %v1351 = vld [vmem:[%s1320 + $0x78] sm:$0xf]
      %v1352 = vld [vmem:[%s1320 + $0x7c] sm:$0xf]
      %v1353 = vld [vmem:[%s1320 + $0x80] sm:$0xf]
      %v1354 = vld [vmem:[%s1320 + $0x84] sm:$0xf]
      %v1355 = vld [vmem:[%s1320 + $0x88] sm:$0xf]
      %v1356 = vld [vmem:[%s1320 + $0x8c] sm:$0xf]
      %v1357 = vld [vmem:[%s1320 + $0x90] sm:$0xf]
      %v1358 = vld [vmem:[%s1320 + $0x94] sm:$0xf]
      %v1359 = vld [vmem:[%s1320 + $0x98] sm:$0xf]
      %v1360 = vld [vmem:[%s1320 + $0x9c] sm:$0xf]
      %v1361 = vld [vmem:[%s1320 + $0xa0] sm:$0xf]
      %v1362 = vld [vmem:[%s1320 + $0xa4] sm:$0xf]
      %v1363 = vld [vmem:[%s1320 + $0xa8] sm:$0xf]
      %v1364 = vld [vmem:[%s1320 + $0xac] sm:$0xf]
      %v1365 = vld [vmem:[%s1320 + $0xb0] sm:$0xf]
      %v1366 = vld [vmem:[%s1320 + $0xb4] sm:$0xf]
      %v1367 = vld [vmem:[%s1320 + $0xb8] sm:$0xf]
      %v1368 = vld [vmem:[%s1320 + $0xbc] sm:$0xf]
      %v1417 = vunpack.c.l.b16 %v1321
      %v1418 = vunpack.c.l.b16 %v1322
      %v1419 = vunpack.c.l.b16 %v1323
      %v1420 = vunpack.c.l.b16 %v1324
      %v1421 = vunpack.c.l.b16 %v1325
      %v1422 = vunpack.c.l.b16 %v1326
      %v1423 = vunpack.c.l.b16 %v1327
      %v1424 = vunpack.c.l.b16 %v1328
      %v1425 = vunpack.c.l.b16 %v1329
      %v1426 = vunpack.c.l.b16 %v1330
      %v1427 = vunpack.c.l.b16 %v1331
      %v1428 = vunpack.c.l.b16 %v1332
      %v1429 = vunpack.c.l.b16 %v1333
      %v1430 = vunpack.c.l.b16 %v1334
      %v1431 = vunpack.c.l.b16 %v1335
      %v1432 = vunpack.c.l.b16 %v1336
      %v1433 = vunpack.c.l.b16 %v1337
      %v1434 = vunpack.c.l.b16 %v1338
      %v1435 = vunpack.c.l.b16 %v1339
      %v1436 = vunpack.c.l.b16 %v1340
      %v1437 = vunpack.c.l.b16 %v1341
      %v1438 = vunpack.c.l.b16 %v1342
      %v1439 = vunpack.c.l.b16 %v1343
      %v1440 = vunpack.c.l.b16 %v1344
      %v1441 = vunpack.c.l.b16 %v1345
      %v1442 = vunpack.c.l.b16 %v1346
      %v1443 = vunpack.c.l.b16 %v1347
      %v1444 = vunpack.c.l.b16 %v1348
      %v1445 = vunpack.c.l.b16 %v1349
      %v1446 = vunpack.c.l.b16 %v1350
      %v1447 = vunpack.c.l.b16 %v1351
      %v1448 = vunpack.c.l.b16 %v1352
      %v1449 = vunpack.c.l.b16 %v1353
      %v1450 = vunpack.c.l.b16 %v1354
      %v1451 = vunpack.c.l.b16 %v1355
      %v1452 = vunpack.c.l.b16 %v1356
      %v1453 = vunpack.c.l.b16 %v1357
      %v1454 = vunpack.c.l.b16 %v1358
      %v1455 = vunpack.c.l.b16 %v1359
      %v1456 = vunpack.c.l.b16 %v1360
      %v1457 = vunpack.c.l.b16 %v1361
      %v1458 = vunpack.c.l.b16 %v1362
      %v1459 = vunpack.c.l.b16 %v1363
      %v1460 = vunpack.c.l.b16 %v1364
      %v1461 = vunpack.c.l.b16 %v1365
      %v1462 = vunpack.c.l.b16 %v1366
      %v1463 = vunpack.c.l.b16 %v1367
      %v1464 = vunpack.c.l.b16 %v1368
      %v1465 = vpack.c.b16 %v1418, %v1417
      %v1466 = vpack.c.b16 %v1420, %v1419
      %v1467 = vpack.c.b16 %v1422, %v1421
      %v1468 = vpack.c.b16 %v1424, %v1423
      %v1469 = vpack.c.b16 %v1426, %v1425
      %v1470 = vpack.c.b16 %v1428, %v1427
      %v1471 = vpack.c.b16 %v1430, %v1429
      %v1472 = vpack.c.b16 %v1432, %v1431
      %v1473 = vpack.c.b16 %v1434, %v1433
      %v1474 = vpack.c.b16 %v1436, %v1435
      %v1475 = vpack.c.b16 %v1438, %v1437
      %v1476 = vpack.c.b16 %v1440, %v1439
      %v1477 = vpack.c.b16 %v1442, %v1441
      %v1478 = vpack.c.b16 %v1444, %v1443
      %v1479 = vpack.c.b16 %v1446, %v1445
      %v1480 = vpack.c.b16 %v1448, %v1447
      %v1481 = vpack.c.b16 %v1450, %v1449
      %v1482 = vpack.c.b16 %v1452, %v1451
      %v1483 = vpack.c.b16 %v1454, %v1453
      %v1484 = vpack.c.b16 %v1456, %v1455
      %v1485 = vpack.c.b16 %v1458, %v1457
      %v1486 = vpack.c.b16 %v1460, %v1459
      %v1487 = vpack.c.b16 %v1462, %v1461
      %v1488 = vpack.c.b16 %v1464, %v1463
      %1513 = vmatpush.bf16.msra.mxu0 %v1472
      %1514 = vmatpush.bf16.msra.mxu0 %v1471
      %1515 = vmatpush.bf16.msra.mxu0 %v1470
      %1516 = vmatpush.bf16.msra.mxu0 %v1469
      %1517 = vmatpush.bf16.msra.mxu0 %v1468
      %1518 = vmatpush.bf16.msra.mxu0 %v1467
      %1519 = vmatpush.bf16.msra.mxu0 %v1466
      %1520 = vmatpush.bf16.msra.mxu0 %v1465
      %1521 = vmatmul.bf16.gmra.mxu0 %v1282
      %v1522 = vpop.f32.mrf.mxu0
      %v1523 = vadd.f32 0.0, %v1522
      %v1524 = vpop.f32.mrf.mxu0
      %v1525 = vadd.f32 0.0, %v1524
      %1526 = vmatmul.bf16.gmra.mxu0 %v1283
      %v1527 = vpop.f32.mrf.mxu0
      %v1528 = vadd.f32 0.0, %v1527
      %v1529 = vpop.f32.mrf.mxu0
      %v1530 = vadd.f32 0.0, %v1529
      %1531 = vmatmul.bf16.gmra.mxu0 %v1284
      %v1532 = vpop.f32.mrf.mxu0
      %v1533 = vadd.f32 0.0, %v1532
      %v1534 = vpop.f32.mrf.mxu0
      %v1535 = vadd.f32 0.0, %v1534
      %1536 = vmatmul.bf16.gmra.mxu0 %v1285
      %v1537 = vpop.f32.mrf.mxu0
      %v1538 = vadd.f32 0.0, %v1537
      %v1539 = vpop.f32.mrf.mxu0
      %v1540 = vadd.f32 0.0, %v1539
      %1541 = vdwg.mxu0
      %1542 = vmatpush.bf16.msra.mxu0 %v1480
      %1543 = vmatpush.bf16.msra.mxu0 %v1479
      %1544 = vmatpush.bf16.msra.mxu0 %v1478
      %1545 = vmatpush.bf16.msra.mxu0 %v1477
      %1546 = vmatpush.bf16.msra.mxu0 %v1476
      %1547 = vmatpush.bf16.msra.mxu0 %v1475
      %1548 = vmatpush.bf16.msra.mxu0 %v1474
      %1549 = vmatpush.bf16.msra.mxu0 %v1473
      %1550 = vmatmul.bf16.gmra.mxu0 %v527
      %v1551 = vpop.f32.mrf.mxu0
      %v1552 = vadd.f32 %v1523, %v1551
      %v1553 = vpop.f32.mrf.mxu0
      %v1554 = vadd.f32 %v1525, %v1553
      %1555 = vmatmul.bf16.gmra.mxu0 %v528
      %v1556 = vpop.f32.mrf.mxu0
      %v1557 = vadd.f32 %v1528, %v1556
      %v1558 = vpop.f32.mrf.mxu0
      %v1559 = vadd.f32 %v1530, %v1558
      %1560 = vmatmul.bf16.gmra.mxu0 %v681
      %v1561 = vpop.f32.mrf.mxu0
      %v1562 = vadd.f32 %v1533, %v1561
      %v1563 = vpop.f32.mrf.mxu0
      %v1564 = vadd.f32 %v1535, %v1563
      %1565 = vmatmul.bf16.gmra.mxu0 %v1294
      %v1566 = vpop.f32.mrf.mxu0
      %v1567 = vadd.f32 %v1538, %v1566
      %v1568 = vpop.f32.mrf.mxu0
      %v1569 = vadd.f32 %v1540, %v1568
      %1570 = vdwg.mxu0
      %1571 = vmatpush.bf16.msra.mxu0 %v1488
      %1572 = vmatpush.bf16.msra.mxu0 %v1487
      %1573 = vmatpush.bf16.msra.mxu0 %v1486
      %1574 = vmatpush.bf16.msra.mxu0 %v1485
      %1575 = vmatpush.bf16.msra.mxu0 %v1484
      %1576 = vmatpush.bf16.msra.mxu0 %v1483
      %1577 = vmatpush.bf16.msra.mxu0 %v1482
      %1578 = vmatpush.bf16.msra.mxu0 %v1481
      %1579 = vmatmul.bf16.gmra.mxu0 %v1312
      %v1580 = vpop.f32.mrf.mxu0
      %v1581 = vadd.f32 %v1552, %v1580
      %v1582 = vpop.f32.mrf.mxu0
      %v1583 = vadd.f32 %v1554, %v1582
      %1584 = vmatmul.bf16.gmra.mxu0 %v1313
      %v1585 = vpop.f32.mrf.mxu0
      %v1586 = vadd.f32 %v1557, %v1585
      %v1587 = vpop.f32.mrf.mxu0
      %v1588 = vadd.f32 %v1559, %v1587
      %1589 = vmatmul.bf16.gmra.mxu0 %v1314
      %v1590 = vpop.f32.mrf.mxu0
      %v1591 = vadd.f32 %v1562, %v1590
      %v1592 = vpop.f32.mrf.mxu0
      %v1593 = vadd.f32 %v1564, %v1592
      %1594 = vmatmul.bf16.gmra.mxu0 %v1315
      %v1595 = vpop.f32.mrf.mxu0
      %v1596 = vadd.f32 %v1567, %v1595
      %v1597 = vpop.f32.mrf.mxu0
      %v1598 = vadd.f32 %v1569, %v1597
      %1599 = vdwg.mxu0
      %v1600 = vadd.f32 %v1199, %v1581
      %v1601 = vadd.f32 %v1201, %v1583
      %v1602 = vadd.f32 %v1204, %v1586
      %v1603 = vadd.f32 %v1206, %v1588
      %v1604 = vadd.f32 %v1209, %v1591
      %v1605 = vadd.f32 %v1211, %v1593
      %v1606 = vadd.f32 %v1214, %v1596
      %v1607 = vadd.f32 %v1216, %v1598
      %v1609 = vperm.slane %v353, 0
      %v1611 = vadd.f32 %v1600, %v1609
      %v1612 = vadd.f32 %v1601, %v1609
      %v1613 = vadd.f32 %v1602, %v1609
      %v1614 = vadd.f32 %v1603, %v1609
      %v1615 = vadd.f32 %v1604, %v1609
      %v1616 = vadd.f32 %v1605, %v1609
      %v1617 = vadd.f32 %v1606, %v1609
      %v1618 = vadd.f32 %v1607, %v1609
      %v1619 = vmax.f32 %v1611, 0.0
      %v1620 = vmax.f32 %v1612, 0.0
      %v1621 = vmax.f32 %v1613, 0.0
      %v1622 = vmax.f32 %v1614, 0.0
      %v1623 = vmax.f32 %v1615, 0.0
      %v1624 = vmax.f32 %v1616, 0.0
      %v1625 = vmax.f32 %v1617, 0.0
      %v1626 = vmax.f32 %v1618, 0.0
      %v1627 = vmin.f32 %v1619, 6.0
      %v1628 = vmin.f32 %v1620, 6.0
      %v1629 = vmin.f32 %v1621, 6.0
      %v1630 = vmin.f32 %v1622, 6.0
      %v1631 = vmin.f32 %v1623, 6.0
      %v1632 = vmin.f32 %v1624, 6.0
      %v1633 = vmin.f32 %v1625, 6.0
      %v1634 = vmin.f32 %v1626, 6.0
      %v1635 = vpack.c.bf16 %v1627, %v1627
      %v1636 = vpack.c.bf16 %v1628, %v1628
      %v1637 = vpack.c.bf16 %v1629, %v1629
      %v1638 = vpack.c.bf16 %v1630, %v1630
      %v1639 = vpack.c.bf16 %v1631, %v1631
      %v1640 = vpack.c.bf16 %v1632, %v1632
      %v1641 = vpack.c.bf16 %v1633, %v1633
      %v1642 = vpack.c.bf16 %v1634, %v1634
      %1643 = vst [vmem:[#allocation2 + $0xc] sm:$0xf] %v1635
      %1644 = vst [vmem:[#allocation2 + $0x10] sm:$0xf] %v1636
      %1645 = vst [vmem:[#allocation2 + $0x14] sm:$0xf] %v1637
      %1646 = vst [vmem:[#allocation2 + $0x18] sm:$0xf] %v1638
      %1647 = vst [vmem:[#allocation2 + $0x1c] sm:$0xf] %v1639
      %1648 = vst [vmem:[#allocation2 + $0x20] sm:$0xf] %v1640
      %1649 = vst [vmem:[#allocation2 + $0x24] sm:$0xf] %v1641
      %1650 = vst [vmem:[#allocation2 + $0x28] sm:$0xf] %v1642
      %v1651 = vld [vmem:[%s219 + $0x20] sm:$0xf]
      %v1652 = vld [vmem:[%s219 + $0x24] sm:$0xf]
      %v1653 = vld [vmem:[%s219 + $0x28] sm:$0xf]
      %v1654 = vld [vmem:[%s219 + $0x2c] sm:$0xf]
      %v1655 = vld [vmem:[%s219 + $0x30] sm:$0xf]
      %v1656 = vld [vmem:[%s219 + $0x34] sm:$0xf]
      %v1657 = vld [vmem:[%s219 + $0x38] sm:$0xf]
      %v1658 = vld [vmem:[%s219 + $0x3c] sm:$0xf]
      %v1659 = vld [vmem:[%s219 + $0x40] sm:$0xf]
      %v1660 = vld [vmem:[%s219 + $0x44] sm:$0xf]
      %v1661 = vld [vmem:[%s219 + $0x48] sm:$0xf]
      %v1662 = vld [vmem:[%s219 + $0x4c] sm:$0xf]
      %v1663 = vld [vmem:[%s219 + $0x50] sm:$0xf]
      %v1664 = vld [vmem:[%s219 + $0x54] sm:$0xf]
      %v1665 = vunpack.c.l.bf16 %v1651
      %v1666 = vunpack.c.l.bf16 %v1652
      %v1667 = vunpack.c.l.bf16 %v1653
      %v1668 = vunpack.c.l.bf16 %v1654
      %v1669 = vunpack.c.l.bf16 %v1655
      %v1670 = vunpack.c.l.bf16 %v1656
      %v1671 = vunpack.c.l.bf16 %v1657
      %v1672 = vunpack.c.l.bf16 %v1658
      %v1673 = vunpack.c.l.bf16 %v1659
      %v1674 = vunpack.c.l.bf16 %v1660
      %v1675 = vunpack.c.l.bf16 %v1661
      %v1676 = vunpack.c.l.bf16 %v1662
      %v1677 = vunpack.c.l.bf16 %v1663
      %v1678 = vunpack.c.l.bf16 %v1664
      %v1688 = vrot.slane %v1665, 7
      %v1689 = vrot.slane %v1666, 7
      %v1690 = vsel %vm392, %v1688, %v1689
      %v1691 = vrot.slane %v1667, 7
      %v1692 = vsel %vm392, %v1689, %v1691
      %v1693 = vrot.slane %v1668, 7
      %v1694 = vsel %vm392, %v1691, %v1693
      %v1695 = vrot.slane %v1669, 7
      %v1696 = vsel %vm392, %v1693, %v1695
      %v1697 = vrot.slane %v1670, 7
      %v1698 = vsel %vm392, %v1695, %v1697
      %v1699 = vrot.slane %v1671, 7
      %v1700 = vsel %vm392, %v1697, %v1699
      %v1701 = vrot.slane %v1672, 7
      %v1702 = vsel %vm392, %v1699, %v1701
      %v1703 = vrot.slane %v1673, 7
      %v1704 = vsel %vm392, %v1701, %v1703
      %v1713 = vsel %vm331, %v1690, 0.0
      %v1714 = vsel %vm332, %v1692, 0.0
      %v1715 = vsel %vm333, %v1694, 0.0
      %v1716 = vsel %vm334, %v1696, 0.0
      %v1717 = vsel %vm335, %v1698, 0.0
      %v1718 = vsel %vm336, %v1700, 0.0
      %v1719 = vsel %vm337, %v1702, 0.0
      %v1720 = vsel %vm338, %v1704, 0.0
      %v1721 = vpack.c.bf16 %v1713, %v1713
      %v1722 = vpack.c.bf16 %v1714, %v1714
      %v1723 = vpack.c.bf16 %v1715, %v1715
      %v1724 = vpack.c.bf16 %v1716, %v1716
      %v1725 = vpack.c.bf16 %v1717, %v1717
      %v1726 = vpack.c.bf16 %v1718, %v1718
      %v1727 = vpack.c.bf16 %v1719, %v1719
      %v1728 = vpack.c.bf16 %v1720, %v1720
      %v1729 = vpack.c.bf16 %v1666, %v1666
      %v1730 = vpack.c.bf16 %v1667, %v1667
      %v1731 = vpack.c.bf16 %v1668, %v1668
      %v1732 = vpack.c.bf16 %v1669, %v1669
      %v1733 = vpack.c.bf16 %v1670, %v1670
      %v1734 = vpack.c.bf16 %v1671, %v1671
      %v1735 = vpack.c.bf16 %v1672, %v1672
      %v1736 = vpack.c.bf16 %v1673, %v1673
      %v1738 = vrot.slane %v1666, 1
      %v1739 = vrot.slane %v1667, 1
      %v1740 = vsel %vm443, %v1738, %v1739
      %v1741 = vrot.slane %v1668, 1
      %v1742 = vsel %vm443, %v1739, %v1741
      %v1743 = vrot.slane %v1669, 1
      %v1744 = vsel %vm443, %v1741, %v1743
      %v1745 = vrot.slane %v1670, 1
      %v1746 = vsel %vm443, %v1743, %v1745
      %v1747 = vrot.slane %v1671, 1
      %v1748 = vsel %vm443, %v1745, %v1747
      %v1749 = vrot.slane %v1672, 1
      %v1750 = vsel %vm443, %v1747, %v1749
      %v1751 = vrot.slane %v1673, 1
      %v1752 = vsel %vm443, %v1749, %v1751
      %v1753 = vrot.slane %v1674, 1
      %v1754 = vsel %vm443, %v1751, %v1753
      %v1763 = vsel %vm339, %v1740, 0.0
      %v1764 = vsel %vm340, %v1742, 0.0
      %v1765 = vsel %vm341, %v1744, 0.0
      %v1766 = vsel %vm342, %v1746, 0.0
      %v1767 = vsel %vm343, %v1748, 0.0
      %v1768 = vsel %vm344, %v1750, 0.0
      %v1769 = vsel %vm345, %v1752, 0.0
      %v1770 = vsel %vm346, %v1754, 0.0
      %v1771 = vpack.c.bf16 %v1763, %v1763
      %v1772 = vpack.c.bf16 %v1764, %v1764
      %v1773 = vpack.c.bf16 %v1765, %v1765
      %v1774 = vpack.c.bf16 %v1766, %v1766
      %v1775 = vpack.c.bf16 %v1767, %v1767
      %v1776 = vpack.c.bf16 %v1768, %v1768
      %v1777 = vpack.c.bf16 %v1769, %v1769
      %v1778 = vpack.c.bf16 %v1770, %v1770
      %v1787 = vunpack.c.l.b16 %v1721
      %v1788 = vunpack.c.l.b16 %v1722
      %v1789 = vunpack.c.l.b16 %v1723
      %v1790 = vunpack.c.l.b16 %v1724
      %v1791 = vunpack.c.l.b16 %v1725
      %v1792 = vunpack.c.l.b16 %v1726
      %v1793 = vunpack.c.l.b16 %v1727
      %v1794 = vunpack.c.l.b16 %v1728
      %v1795 = vpack.c.b16 %v1788, %v1787
      %v1796 = vpack.c.b16 %v1790, %v1789
      %v1797 = vpack.c.b16 %v1792, %v1791
      %v1798 = vpack.c.b16 %v1794, %v1793
      %v1811 = vunpack.c.l.b16 %v1729
      %v1812 = vunpack.c.l.b16 %v1730
      %v1813 = vunpack.c.l.b16 %v1731
      %v1814 = vunpack.c.l.b16 %v1732
      %v1815 = vunpack.c.l.b16 %v1733
      %v1816 = vunpack.c.l.b16 %v1734
      %v1817 = vunpack.c.l.b16 %v1735
      %v1818 = vunpack.c.l.b16 %v1736
      %v1819 = vpack.c.b16 %v1812, %v1811
      %v1820 = vpack.c.b16 %v1814, %v1813
      %v1821 = vpack.c.b16 %v1816, %v1815
      %v1822 = vpack.c.b16 %v1818, %v1817
      %v1835 = vunpack.c.l.b16 %v1771
      %v1836 = vunpack.c.l.b16 %v1772
      %v1837 = vunpack.c.l.b16 %v1773
      %v1838 = vunpack.c.l.b16 %v1774
      %v1839 = vunpack.c.l.b16 %v1775
      %v1840 = vunpack.c.l.b16 %v1776
      %v1841 = vunpack.c.l.b16 %v1777
      %v1842 = vunpack.c.l.b16 %v1778
      %v1843 = vpack.c.b16 %v1836, %v1835
      %v1844 = vpack.c.b16 %v1838, %v1837
      %v1845 = vpack.c.b16 %v1840, %v1839
      %v1846 = vpack.c.b16 %v1842, %v1841
      %v1851 = vld [vmem:[%s1] sm:$0xf]
      %v1852 = vld [vmem:[%s1 + $0x4] sm:$0xf]
      %v1853 = vld [vmem:[%s1 + $0x8] sm:$0xf]
      %v1854 = vld [vmem:[%s1 + $0xc] sm:$0xf]
      %v1855 = vld [vmem:[%s1 + $0x10] sm:$0xf]
      %v1856 = vld [vmem:[%s1 + $0x14] sm:$0xf]
      %v1857 = vld [vmem:[%s1 + $0x18] sm:$0xf]
      %v1858 = vld [vmem:[%s1 + $0x1c] sm:$0xf]
      %v1859 = vld [vmem:[%s1 + $0x20] sm:$0xf]
      %v1860 = vld [vmem:[%s1 + $0x24] sm:$0xf]
      %v1861 = vld [vmem:[%s1 + $0x28] sm:$0xf]
      %v1862 = vld [vmem:[%s1 + $0x2c] sm:$0xf]
      %v1863 = vld [vmem:[%s1 + $0x30] sm:$0xf]
      %v1864 = vld [vmem:[%s1 + $0x34] sm:$0xf]
      %v1865 = vld [vmem:[%s1 + $0x38] sm:$0xf]
      %v1866 = vld [vmem:[%s1 + $0x3c] sm:$0xf]
      %v1867 = vld [vmem:[%s1 + $0x40] sm:$0xf]
      %v1868 = vld [vmem:[%s1 + $0x44] sm:$0xf]
      %v1869 = vld [vmem:[%s1 + $0x48] sm:$0xf]
      %v1870 = vld [vmem:[%s1 + $0x4c] sm:$0xf]
      %v1871 = vld [vmem:[%s1 + $0x50] sm:$0xf]
      %v1872 = vld [vmem:[%s1 + $0x54] sm:$0xf]
      %v1873 = vld [vmem:[%s1 + $0x58] sm:$0xf]
      %v1874 = vld [vmem:[%s1 + $0x5c] sm:$0xf]
      %v1875 = vld [vmem:[%s1 + $0x60] sm:$0xf]
      %v1876 = vld [vmem:[%s1 + $0x64] sm:$0xf]
      %v1877 = vld [vmem:[%s1 + $0x68] sm:$0xf]
      %v1878 = vld [vmem:[%s1 + $0x6c] sm:$0xf]
      %v1879 = vld [vmem:[%s1 + $0x70] sm:$0xf]
      %v1880 = vld [vmem:[%s1 + $0x74] sm:$0xf]
      %v1881 = vld [vmem:[%s1 + $0x78] sm:$0xf]
      %v1882 = vld [vmem:[%s1 + $0x7c] sm:$0xf]
      %v1883 = vld [vmem:[%s1 + $0x80] sm:$0xf]
      %v1884 = vld [vmem:[%s1 + $0x84] sm:$0xf]
      %v1885 = vld [vmem:[%s1 + $0x88] sm:$0xf]
      %v1886 = vld [vmem:[%s1 + $0x8c] sm:$0xf]
      %v1887 = vld [vmem:[%s1 + $0x90] sm:$0xf]
      %v1888 = vld [vmem:[%s1 + $0x94] sm:$0xf]
      %v1889 = vld [vmem:[%s1 + $0x98] sm:$0xf]
      %v1890 = vld [vmem:[%s1 + $0x9c] sm:$0xf]
      %v1891 = vld [vmem:[%s1 + $0xa0] sm:$0xf]
      %v1892 = vld [vmem:[%s1 + $0xa4] sm:$0xf]
      %v1893 = vld [vmem:[%s1 + $0xa8] sm:$0xf]
      %v1894 = vld [vmem:[%s1 + $0xac] sm:$0xf]
      %v1895 = vld [vmem:[%s1 + $0xb0] sm:$0xf]
      %v1896 = vld [vmem:[%s1 + $0xb4] sm:$0xf]
      %v1897 = vld [vmem:[%s1 + $0xb8] sm:$0xf]
      %v1898 = vld [vmem:[%s1 + $0xbc] sm:$0xf]
      %v1900 = vrot.slane %v1674, 7
      %v1901 = vsel %vm392, %v1703, %v1900
      %v1902 = vrot.slane %v1675, 7
      %v1903 = vsel %vm392, %v1900, %v1902
      %v1906 = vsel %vm331, %v1694, 0.0
      %v1907 = vsel %vm332, %v1696, 0.0
      %v1908 = vsel %vm333, %v1698, 0.0
      %v1909 = vsel %vm334, %v1700, 0.0
      %v1910 = vsel %vm335, %v1702, 0.0
      %v1911 = vsel %vm336, %v1704, 0.0
      %v1912 = vsel %vm337, %v1901, 0.0
      %v1913 = vsel %vm338, %v1903, 0.0
      %v1914 = vpack.c.bf16 %v1906, %v1906
      %v1915 = vpack.c.bf16 %v1907, %v1907
      %v1916 = vpack.c.bf16 %v1908, %v1908
      %v1917 = vpack.c.bf16 %v1909, %v1909
      %v1918 = vpack.c.bf16 %v1910, %v1910
      %v1919 = vpack.c.bf16 %v1911, %v1911
      %v1920 = vpack.c.bf16 %v1912, %v1912
      %v1921 = vpack.c.bf16 %v1913, %v1913
      %v1922 = vpack.c.bf16 %v1674, %v1674
      %v1923 = vpack.c.bf16 %v1675, %v1675
      %v1925 = vrot.slane %v1675, 1
      %v1926 = vsel %vm443, %v1753, %v1925
      %v1927 = vrot.slane %v1676, 1
      %v1928 = vsel %vm443, %v1925, %v1927
      %v1931 = vsel %vm339, %v1744, 0.0
      %v1932 = vsel %vm340, %v1746, 0.0
      %v1933 = vsel %vm341, %v1748, 0.0
      %v1934 = vsel %vm342, %v1750, 0.0
      %v1935 = vsel %vm343, %v1752, 0.0
      %v1936 = vsel %vm344, %v1754, 0.0
      %v1937 = vsel %vm345, %v1926, 0.0
      %v1938 = vsel %vm346, %v1928, 0.0
      %v1939 = vpack.c.bf16 %v1931, %v1931
      %v1940 = vpack.c.bf16 %v1932, %v1932
      %v1941 = vpack.c.bf16 %v1933, %v1933
      %v1942 = vpack.c.bf16 %v1934, %v1934
      %v1943 = vpack.c.bf16 %v1935, %v1935
      %v1944 = vpack.c.bf16 %v1936, %v1936
      %v1945 = vpack.c.bf16 %v1937, %v1937
      %v1946 = vpack.c.bf16 %v1938, %v1938
      %v1955 = vunpack.c.l.b16 %v1914
      %v1956 = vunpack.c.l.b16 %v1915
      %v1957 = vunpack.c.l.b16 %v1916
      %v1958 = vunpack.c.l.b16 %v1917
      %v1959 = vunpack.c.l.b16 %v1918
      %v1960 = vunpack.c.l.b16 %v1919
      %v1961 = vunpack.c.l.b16 %v1920
      %v1962 = vunpack.c.l.b16 %v1921
      %v1963 = vpack.c.b16 %v1956, %v1955
      %v1964 = vpack.c.b16 %v1958, %v1957
      %v1965 = vpack.c.b16 %v1960, %v1959
      %v1966 = vpack.c.b16 %v1962, %v1961
      %v1973 = vunpack.c.l.b16 %v1922
      %v1974 = vunpack.c.l.b16 %v1923
      %v1975 = vpack.c.b16 %v1974, %v1973
      %v1985 = vunpack.c.l.b16 %v1939
      %v1986 = vunpack.c.l.b16 %v1940
      %v1987 = vunpack.c.l.b16 %v1941
      %v1988 = vunpack.c.l.b16 %v1942
      %v1989 = vunpack.c.l.b16 %v1943
      %v1990 = vunpack.c.l.b16 %v1944
      %v1991 = vunpack.c.l.b16 %v1945
      %v1992 = vunpack.c.l.b16 %v1946
      %v1993 = vpack.c.b16 %v1986, %v1985
      %v1994 = vpack.c.b16 %v1988, %v1987
      %v1995 = vpack.c.b16 %v1990, %v1989
      %v1996 = vpack.c.b16 %v1992, %v1991
      %v2001 = vld [vmem:[%s707] sm:$0xf]
      %v2002 = vld [vmem:[%s707 + $0x4] sm:$0xf]
      %v2003 = vld [vmem:[%s707 + $0x8] sm:$0xf]
      %v2004 = vld [vmem:[%s707 + $0xc] sm:$0xf]
      %v2005 = vld [vmem:[%s707 + $0x10] sm:$0xf]
      %v2006 = vld [vmem:[%s707 + $0x14] sm:$0xf]
      %v2007 = vld [vmem:[%s707 + $0x18] sm:$0xf]
      %v2008 = vld [vmem:[%s707 + $0x1c] sm:$0xf]
      %v2009 = vld [vmem:[%s707 + $0x20] sm:$0xf]
      %v2010 = vld [vmem:[%s707 + $0x24] sm:$0xf]
      %v2011 = vld [vmem:[%s707 + $0x28] sm:$0xf]
      %v2012 = vld [vmem:[%s707 + $0x2c] sm:$0xf]
      %v2013 = vld [vmem:[%s707 + $0x30] sm:$0xf]
      %v2014 = vld [vmem:[%s707 + $0x34] sm:$0xf]
      %v2015 = vld [vmem:[%s707 + $0x38] sm:$0xf]
      %v2016 = vld [vmem:[%s707 + $0x3c] sm:$0xf]
      %v2017 = vld [vmem:[%s707 + $0x40] sm:$0xf]
      %v2018 = vld [vmem:[%s707 + $0x44] sm:$0xf]
      %v2019 = vld [vmem:[%s707 + $0x48] sm:$0xf]
      %v2020 = vld [vmem:[%s707 + $0x4c] sm:$0xf]
      %v2021 = vld [vmem:[%s707 + $0x50] sm:$0xf]
      %v2022 = vld [vmem:[%s707 + $0x54] sm:$0xf]
      %v2023 = vld [vmem:[%s707 + $0x58] sm:$0xf]
      %v2024 = vld [vmem:[%s707 + $0x5c] sm:$0xf]
      %v2025 = vld [vmem:[%s707 + $0x60] sm:$0xf]
      %v2026 = vld [vmem:[%s707 + $0x64] sm:$0xf]
      %v2027 = vld [vmem:[%s707 + $0x68] sm:$0xf]
      %v2028 = vld [vmem:[%s707 + $0x6c] sm:$0xf]
      %v2029 = vld [vmem:[%s707 + $0x70] sm:$0xf]
      %v2030 = vld [vmem:[%s707 + $0x74] sm:$0xf]
      %v2031 = vld [vmem:[%s707 + $0x78] sm:$0xf]
      %v2032 = vld [vmem:[%s707 + $0x7c] sm:$0xf]
      %v2033 = vld [vmem:[%s707 + $0x80] sm:$0xf]
      %v2034 = vld [vmem:[%s707 + $0x84] sm:$0xf]
      %v2035 = vld [vmem:[%s707 + $0x88] sm:$0xf]
      %v2036 = vld [vmem:[%s707 + $0x8c] sm:$0xf]
      %v2037 = vld [vmem:[%s707 + $0x90] sm:$0xf]
      %v2038 = vld [vmem:[%s707 + $0x94] sm:$0xf]
      %v2039 = vld [vmem:[%s707 + $0x98] sm:$0xf]
      %v2040 = vld [vmem:[%s707 + $0x9c] sm:$0xf]
      %v2041 = vld [vmem:[%s707 + $0xa0] sm:$0xf]
      %v2042 = vld [vmem:[%s707 + $0xa4] sm:$0xf]
      %v2043 = vld [vmem:[%s707 + $0xa8] sm:$0xf]
      %v2044 = vld [vmem:[%s707 + $0xac] sm:$0xf]
      %v2045 = vld [vmem:[%s707 + $0xb0] sm:$0xf]
      %v2046 = vld [vmem:[%s707 + $0xb4] sm:$0xf]
      %v2047 = vld [vmem:[%s707 + $0xb8] sm:$0xf]
      %v2048 = vld [vmem:[%s707 + $0xbc] sm:$0xf]
      %v2097 = vunpack.c.l.b16 %v2001
      %v2098 = vunpack.c.l.b16 %v2002
      %v2099 = vunpack.c.l.b16 %v2003
      %v2100 = vunpack.c.l.b16 %v2004
      %v2101 = vunpack.c.l.b16 %v2005
      %v2102 = vunpack.c.l.b16 %v2006
      %v2103 = vunpack.c.l.b16 %v2007
      %v2104 = vunpack.c.l.b16 %v2008
      %v2105 = vunpack.c.l.b16 %v2009
      %v2106 = vunpack.c.l.b16 %v2010
      %v2107 = vunpack.c.l.b16 %v2011
      %v2108 = vunpack.c.l.b16 %v2012
      %v2109 = vunpack.c.l.b16 %v2013
      %v2110 = vunpack.c.l.b16 %v2014
      %v2111 = vunpack.c.l.b16 %v2015
      %v2112 = vunpack.c.l.b16 %v2016
      %v2113 = vunpack.c.l.b16 %v2017
      %v2114 = vunpack.c.l.b16 %v2018
      %v2115 = vunpack.c.l.b16 %v2019
      %v2116 = vunpack.c.l.b16 %v2020
      %v2117 = vunpack.c.l.b16 %v2021
      %v2118 = vunpack.c.l.b16 %v2022
      %v2119 = vunpack.c.l.b16 %v2023
      %v2120 = vunpack.c.l.b16 %v2024
      %v2121 = vunpack.c.l.b16 %v2025
      %v2122 = vunpack.c.l.b16 %v2026
      %v2123 = vunpack.c.l.b16 %v2027
      %v2124 = vunpack.c.l.b16 %v2028
      %v2125 = vunpack.c.l.b16 %v2029
      %v2126 = vunpack.c.l.b16 %v2030
      %v2127 = vunpack.c.l.b16 %v2031
      %v2128 = vunpack.c.l.b16 %v2032
      %v2129 = vunpack.c.l.b16 %v2033
      %v2130 = vunpack.c.l.b16 %v2034
      %v2131 = vunpack.c.l.b16 %v2035
      %v2132 = vunpack.c.l.b16 %v2036
      %v2133 = vunpack.c.l.b16 %v2037
      %v2134 = vunpack.c.l.b16 %v2038
      %v2135 = vunpack.c.l.b16 %v2039
      %v2136 = vunpack.c.l.b16 %v2040
      %v2137 = vunpack.c.l.b16 %v2041
      %v2138 = vunpack.c.l.b16 %v2042
      %v2139 = vunpack.c.l.b16 %v2043
      %v2140 = vunpack.c.l.b16 %v2044
      %v2141 = vunpack.c.l.b16 %v2045
      %v2142 = vunpack.c.l.b16 %v2046
      %v2143 = vunpack.c.l.b16 %v2047
      %v2144 = vunpack.c.l.b16 %v2048
      %v2145 = vpack.c.b16 %v2098, %v2097
      %v2146 = vpack.c.b16 %v2100, %v2099
      %v2147 = vpack.c.b16 %v2102, %v2101
      %v2148 = vpack.c.b16 %v2104, %v2103
      %v2149 = vpack.c.b16 %v2106, %v2105
      %v2150 = vpack.c.b16 %v2108, %v2107
      %v2151 = vpack.c.b16 %v2110, %v2109
      %v2152 = vpack.c.b16 %v2112, %v2111
      %v2153 = vpack.c.b16 %v2114, %v2113
      %v2154 = vpack.c.b16 %v2116, %v2115
      %v2155 = vpack.c.b16 %v2118, %v2117
      %v2156 = vpack.c.b16 %v2120, %v2119
      %v2157 = vpack.c.b16 %v2122, %v2121
      %v2158 = vpack.c.b16 %v2124, %v2123
      %v2159 = vpack.c.b16 %v2126, %v2125
      %v2160 = vpack.c.b16 %v2128, %v2127
      %v2161 = vpack.c.b16 %v2130, %v2129
      %v2162 = vpack.c.b16 %v2132, %v2131
      %v2163 = vpack.c.b16 %v2134, %v2133
      %v2164 = vpack.c.b16 %v2136, %v2135
      %v2165 = vpack.c.b16 %v2138, %v2137
      %v2166 = vpack.c.b16 %v2140, %v2139
      %v2167 = vpack.c.b16 %v2142, %v2141
      %v2168 = vpack.c.b16 %v2144, %v2143
      %2193 = vmatpush.bf16.msra.mxu0 %v2152
      %2194 = vmatpush.bf16.msra.mxu0 %v2151
      %2195 = vmatpush.bf16.msra.mxu0 %v2150
      %2196 = vmatpush.bf16.msra.mxu0 %v2149
      %2197 = vmatpush.bf16.msra.mxu0 %v2148
      %2198 = vmatpush.bf16.msra.mxu0 %v2147
      %2199 = vmatpush.bf16.msra.mxu0 %v2146
      %2200 = vmatpush.bf16.msra.mxu0 %v2145
      %2201 = vmatmul.bf16.gmra.mxu0 %v1963
      %v2202 = vpop.f32.mrf.mxu0
      %v2203 = vadd.f32 0.0, %v2202
      %v2204 = vpop.f32.mrf.mxu0
      %v2205 = vadd.f32 0.0, %v2204
      %2206 = vmatmul.bf16.gmra.mxu0 %v1964
      %v2207 = vpop.f32.mrf.mxu0
      %v2208 = vadd.f32 0.0, %v2207
      %v2209 = vpop.f32.mrf.mxu0
      %v2210 = vadd.f32 0.0, %v2209
      %2211 = vmatmul.bf16.gmra.mxu0 %v1965
      %v2212 = vpop.f32.mrf.mxu0
      %v2213 = vadd.f32 0.0, %v2212
      %v2214 = vpop.f32.mrf.mxu0
      %v2215 = vadd.f32 0.0, %v2214
      %2216 = vmatmul.bf16.gmra.mxu0 %v1966
      %v2217 = vpop.f32.mrf.mxu0
      %v2218 = vadd.f32 0.0, %v2217
      %v2219 = vpop.f32.mrf.mxu0
      %v2220 = vadd.f32 0.0, %v2219
      %2221 = vdwg.mxu0
      %2222 = vmatpush.bf16.msra.mxu0 %v2160
      %2223 = vmatpush.bf16.msra.mxu0 %v2159
      %2224 = vmatpush.bf16.msra.mxu0 %v2158
      %2225 = vmatpush.bf16.msra.mxu0 %v2157
      %2226 = vmatpush.bf16.msra.mxu0 %v2156
      %2227 = vmatpush.bf16.msra.mxu0 %v2155
      %2228 = vmatpush.bf16.msra.mxu0 %v2154
      %2229 = vmatpush.bf16.msra.mxu0 %v2153
      %2230 = vmatmul.bf16.gmra.mxu0 %v1820
      %v2231 = vpop.f32.mrf.mxu0
      %v2232 = vadd.f32 %v2203, %v2231
      %v2233 = vpop.f32.mrf.mxu0
      %v2234 = vadd.f32 %v2205, %v2233
      %2235 = vmatmul.bf16.gmra.mxu0 %v1821
      %v2236 = vpop.f32.mrf.mxu0
      %v2237 = vadd.f32 %v2208, %v2236
      %v2238 = vpop.f32.mrf.mxu0
      %v2239 = vadd.f32 %v2210, %v2238
      %2240 = vmatmul.bf16.gmra.mxu0 %v1822
      %v2241 = vpop.f32.mrf.mxu0
      %v2242 = vadd.f32 %v2213, %v2241
      %v2243 = vpop.f32.mrf.mxu0
      %v2244 = vadd.f32 %v2215, %v2243
      %2245 = vmatmul.bf16.gmra.mxu0 %v1975
      %v2246 = vpop.f32.mrf.mxu0
      %v2247 = vadd.f32 %v2218, %v2246
      %v2248 = vpop.f32.mrf.mxu0
      %v2249 = vadd.f32 %v2220, %v2248
      %2250 = vdwg.mxu0
      %2251 = vmatpush.bf16.msra.mxu0 %v2168
      %2252 = vmatpush.bf16.msra.mxu0 %v2167
      %2253 = vmatpush.bf16.msra.mxu0 %v2166
      %2254 = vmatpush.bf16.msra.mxu0 %v2165
      %2255 = vmatpush.bf16.msra.mxu0 %v2164
      %2256 = vmatpush.bf16.msra.mxu0 %v2163
      %2257 = vmatpush.bf16.msra.mxu0 %v2162
      %2258 = vmatpush.bf16.msra.mxu0 %v2161
      %2259 = vmatmul.bf16.gmra.mxu0 %v1993
      %v2260 = vpop.f32.mrf.mxu0
      %v2261 = vadd.f32 %v2232, %v2260
      %v2262 = vpop.f32.mrf.mxu0
      %v2263 = vadd.f32 %v2234, %v2262
      %2264 = vmatmul.bf16.gmra.mxu0 %v1994
      %v2265 = vpop.f32.mrf.mxu0
      %v2266 = vadd.f32 %v2237, %v2265
      %v2267 = vpop.f32.mrf.mxu0
      %v2268 = vadd.f32 %v2239, %v2267
      %2269 = vmatmul.bf16.gmra.mxu0 %v1995
      %v2270 = vpop.f32.mrf.mxu0
      %v2271 = vadd.f32 %v2242, %v2270
      %v2272 = vpop.f32.mrf.mxu0
      %v2273 = vadd.f32 %v2244, %v2272
      %2274 = vmatmul.bf16.gmra.mxu0 %v1996
      %v2275 = vpop.f32.mrf.mxu0
      %v2276 = vadd.f32 %v2247, %v2275
      %v2277 = vpop.f32.mrf.mxu0
      %v2278 = vadd.f32 %v2249, %v2277
      %2279 = vdwg.mxu0
      %v2328 = vunpack.c.l.b16 %v1851
      %v2329 = vunpack.c.l.b16 %v1852
      %v2330 = vunpack.c.l.b16 %v1853
      %v2331 = vunpack.c.l.b16 %v1854
      %v2332 = vunpack.c.l.b16 %v1855
      %v2333 = vunpack.c.l.b16 %v1856
      %v2334 = vunpack.c.l.b16 %v1857
      %v2335 = vunpack.c.l.b16 %v1858
      %v2336 = vunpack.c.l.b16 %v1859
      %v2337 = vunpack.c.l.b16 %v1860
      %v2338 = vunpack.c.l.b16 %v1861
      %v2339 = vunpack.c.l.b16 %v1862
      %v2340 = vunpack.c.l.b16 %v1863
      %v2341 = vunpack.c.l.b16 %v1864
      %v2342 = vunpack.c.l.b16 %v1865
      %v2343 = vunpack.c.l.b16 %v1866
      %v2344 = vunpack.c.l.b16 %v1867
      %v2345 = vunpack.c.l.b16 %v1868
      %v2346 = vunpack.c.l.b16 %v1869
      %v2347 = vunpack.c.l.b16 %v1870
      %v2348 = vunpack.c.l.b16 %v1871
      %v2349 = vunpack.c.l.b16 %v1872
      %v2350 = vunpack.c.l.b16 %v1873
      %v2351 = vunpack.c.l.b16 %v1874
      %v2352 = vunpack.c.l.b16 %v1875
      %v2353 = vunpack.c.l.b16 %v1876
      %v2354 = vunpack.c.l.b16 %v1877
      %v2355 = vunpack.c.l.b16 %v1878
      %v2356 = vunpack.c.l.b16 %v1879
      %v2357 = vunpack.c.l.b16 %v1880
      %v2358 = vunpack.c.l.b16 %v1881
      %v2359 = vunpack.c.l.b16 %v1882
      %v2360 = vunpack.c.l.b16 %v1883
      %v2361 = vunpack.c.l.b16 %v1884
      %v2362 = vunpack.c.l.b16 %v1885
      %v2363 = vunpack.c.l.b16 %v1886
      %v2364 = vunpack.c.l.b16 %v1887
      %v2365 = vunpack.c.l.b16 %v1888
      %v2366 = vunpack.c.l.b16 %v1889
      %v2367 = vunpack.c.l.b16 %v1890
      %v2368 = vunpack.c.l.b16 %v1891
      %v2369 = vunpack.c.l.b16 %v1892
      %v2370 = vunpack.c.l.b16 %v1893
      %v2371 = vunpack.c.l.b16 %v1894
      %v2372 = vunpack.c.l.b16 %v1895
      %v2373 = vunpack.c.l.b16 %v1896
      %v2374 = vunpack.c.l.b16 %v1897
      %v2375 = vunpack.c.l.b16 %v1898
      %v2376 = vpack.c.b16 %v2329, %v2328
      %v2377 = vpack.c.b16 %v2331, %v2330
      %v2378 = vpack.c.b16 %v2333, %v2332
      %v2379 = vpack.c.b16 %v2335, %v2334
      %v2380 = vpack.c.b16 %v2337, %v2336
      %v2381 = vpack.c.b16 %v2339, %v2338
      %v2382 = vpack.c.b16 %v2341, %v2340
      %v2383 = vpack.c.b16 %v2343, %v2342
      %v2384 = vpack.c.b16 %v2345, %v2344
      %v2385 = vpack.c.b16 %v2347, %v2346
      %v2386 = vpack.c.b16 %v2349, %v2348
      %v2387 = vpack.c.b16 %v2351, %v2350
      %v2388 = vpack.c.b16 %v2353, %v2352
      %v2389 = vpack.c.b16 %v2355, %v2354
      %v2390 = vpack.c.b16 %v2357, %v2356
      %v2391 = vpack.c.b16 %v2359, %v2358
      %v2392 = vpack.c.b16 %v2361, %v2360
      %v2393 = vpack.c.b16 %v2363, %v2362
      %v2394 = vpack.c.b16 %v2365, %v2364
      %v2395 = vpack.c.b16 %v2367, %v2366
      %v2396 = vpack.c.b16 %v2369, %v2368
      %v2397 = vpack.c.b16 %v2371, %v2370
      %v2398 = vpack.c.b16 %v2373, %v2372
      %v2399 = vpack.c.b16 %v2375, %v2374
      %2424 = vmatpush.bf16.msra.mxu0 %v2383
      %2425 = vmatpush.bf16.msra.mxu0 %v2382
      %2426 = vmatpush.bf16.msra.mxu0 %v2381
      %2427 = vmatpush.bf16.msra.mxu0 %v2380
      %2428 = vmatpush.bf16.msra.mxu0 %v2379
      %2429 = vmatpush.bf16.msra.mxu0 %v2378
      %2430 = vmatpush.bf16.msra.mxu0 %v2377
      %2431 = vmatpush.bf16.msra.mxu0 %v2376
      %2432 = vmatmul.bf16.gmra.mxu0 %v1795
      %v2433 = vpop.f32.mrf.mxu0
      %v2434 = vadd.f32 %v2261, %v2433
      %v2435 = vpop.f32.mrf.mxu0
      %v2436 = vadd.f32 %v2263, %v2435
      %2437 = vmatmul.bf16.gmra.mxu0 %v1796
      %v2438 = vpop.f32.mrf.mxu0
      %v2439 = vadd.f32 %v2266, %v2438
      %v2440 = vpop.f32.mrf.mxu0
      %v2441 = vadd.f32 %v2268, %v2440
      %2442 = vmatmul.bf16.gmra.mxu0 %v1797
      %v2443 = vpop.f32.mrf.mxu0
      %v2444 = vadd.f32 %v2271, %v2443
      %v2445 = vpop.f32.mrf.mxu0
      %v2446 = vadd.f32 %v2273, %v2445
      %2447 = vmatmul.bf16.gmra.mxu0 %v1798
      %v2448 = vpop.f32.mrf.mxu0
      %v2449 = vadd.f32 %v2276, %v2448
      %v2450 = vpop.f32.mrf.mxu0
      %v2451 = vadd.f32 %v2278, %v2450
      %2452 = vdwg.mxu0
      %2453 = vmatpush.bf16.msra.mxu0 %v2391
      %2454 = vmatpush.bf16.msra.mxu0 %v2390
      %2455 = vmatpush.bf16.msra.mxu0 %v2389
      %2456 = vmatpush.bf16.msra.mxu0 %v2388
      %2457 = vmatpush.bf16.msra.mxu0 %v2387
      %2458 = vmatpush.bf16.msra.mxu0 %v2386
      %2459 = vmatpush.bf16.msra.mxu0 %v2385
      %2460 = vmatpush.bf16.msra.mxu0 %v2384
      %2461 = vmatmul.bf16.gmra.mxu0 %v1819
      %v2462 = vpop.f32.mrf.mxu0
      %v2463 = vadd.f32 %v2434, %v2462
      %v2464 = vpop.f32.mrf.mxu0
      %v2465 = vadd.f32 %v2436, %v2464
      %2466 = vmatmul.bf16.gmra.mxu0 %v1820
      %v2467 = vpop.f32.mrf.mxu0
      %v2468 = vadd.f32 %v2439, %v2467
      %v2469 = vpop.f32.mrf.mxu0
      %v2470 = vadd.f32 %v2441, %v2469
      %2471 = vmatmul.bf16.gmra.mxu0 %v1821
      %v2472 = vpop.f32.mrf.mxu0
      %v2473 = vadd.f32 %v2444, %v2472
      %v2474 = vpop.f32.mrf.mxu0
      %v2475 = vadd.f32 %v2446, %v2474
      %2476 = vmatmul.bf16.gmra.mxu0 %v1822
      %v2477 = vpop.f32.mrf.mxu0
      %v2478 = vadd.f32 %v2449, %v2477
      %v2479 = vpop.f32.mrf.mxu0
      %v2480 = vadd.f32 %v2451, %v2479
      %2481 = vdwg.mxu0
      %2482 = vmatpush.bf16.msra.mxu0 %v2399
      %2483 = vmatpush.bf16.msra.mxu0 %v2398
      %2484 = vmatpush.bf16.msra.mxu0 %v2397
      %2485 = vmatpush.bf16.msra.mxu0 %v2396
      %2486 = vmatpush.bf16.msra.mxu0 %v2395
      %2487 = vmatpush.bf16.msra.mxu0 %v2394
      %2488 = vmatpush.bf16.msra.mxu0 %v2393
      %2489 = vmatpush.bf16.msra.mxu0 %v2392
      %2490 = vmatmul.bf16.gmra.mxu0 %v1843
      %v2491 = vpop.f32.mrf.mxu0
      %v2492 = vadd.f32 %v2463, %v2491
      %v2493 = vpop.f32.mrf.mxu0
      %v2494 = vadd.f32 %v2465, %v2493
      %2495 = vmatmul.bf16.gmra.mxu0 %v1844
      %v2496 = vpop.f32.mrf.mxu0
      %v2497 = vadd.f32 %v2468, %v2496
      %v2498 = vpop.f32.mrf.mxu0
      %v2499 = vadd.f32 %v2470, %v2498
      %2500 = vmatmul.bf16.gmra.mxu0 %v1845
      %v2501 = vpop.f32.mrf.mxu0
      %v2502 = vadd.f32 %v2473, %v2501
      %v2503 = vpop.f32.mrf.mxu0
      %v2504 = vadd.f32 %v2475, %v2503
      %2505 = vmatmul.bf16.gmra.mxu0 %v1846
      %v2506 = vpop.f32.mrf.mxu0
      %v2507 = vadd.f32 %v2478, %v2506
      %v2508 = vpop.f32.mrf.mxu0
      %v2509 = vadd.f32 %v2480, %v2508
      %2510 = vdwg.mxu0
      %v2512 = vrot.slane %v1676, 7
      %v2513 = vsel %vm392, %v1902, %v2512
      %v2514 = vrot.slane %v1677, 7
      %v2515 = vsel %vm392, %v2512, %v2514
      %v2518 = vsel %vm331, %v1698, 0.0
      %v2519 = vsel %vm332, %v1700, 0.0
      %v2520 = vsel %vm333, %v1702, 0.0
      %v2521 = vsel %vm334, %v1704, 0.0
      %v2522 = vsel %vm335, %v1901, 0.0
      %v2523 = vsel %vm336, %v1903, 0.0
      %v2524 = vsel %vm337, %v2513, 0.0
      %v2525 = vsel %vm338, %v2515, 0.0
      %v2526 = vpack.c.bf16 %v2518, %v2518
      %v2527 = vpack.c.bf16 %v2519, %v2519
      %v2528 = vpack.c.bf16 %v2520, %v2520
      %v2529 = vpack.c.bf16 %v2521, %v2521
      %v2530 = vpack.c.bf16 %v2522, %v2522
      %v2531 = vpack.c.bf16 %v2523, %v2523
      %v2532 = vpack.c.bf16 %v2524, %v2524
      %v2533 = vpack.c.bf16 %v2525, %v2525
      %v2534 = vpack.c.bf16 %v1676, %v1676
      %v2535 = vpack.c.bf16 %v1677, %v1677
      %v2537 = vrot.slane %v1677, 1
      %v2538 = vsel %vm443, %v1927, %v2537
      %v2539 = vrot.slane %v1678, 1
      %v2540 = vsel %vm443, %v2537, %v2539
      %v2543 = vsel %vm339, %v1748, 0.0
      %v2544 = vsel %vm340, %v1750, 0.0
      %v2545 = vsel %vm341, %v1752, 0.0
      %v2546 = vsel %vm342, %v1754, 0.0
      %v2547 = vsel %vm343, %v1926, 0.0
      %v2548 = vsel %vm344, %v1928, 0.0
      %v2549 = vsel %vm345, %v2538, 0.0
      %v2550 = vsel %vm346, %v2540, 0.0
      %v2551 = vpack.c.bf16 %v2543, %v2543
      %v2552 = vpack.c.bf16 %v2544, %v2544
      %v2553 = vpack.c.bf16 %v2545, %v2545
      %v2554 = vpack.c.bf16 %v2546, %v2546
      %v2555 = vpack.c.bf16 %v2547, %v2547
      %v2556 = vpack.c.bf16 %v2548, %v2548
      %v2557 = vpack.c.bf16 %v2549, %v2549
      %v2558 = vpack.c.bf16 %v2550, %v2550
      %v2567 = vunpack.c.l.b16 %v2526
      %v2568 = vunpack.c.l.b16 %v2527
      %v2569 = vunpack.c.l.b16 %v2528
      %v2570 = vunpack.c.l.b16 %v2529
      %v2571 = vunpack.c.l.b16 %v2530
      %v2572 = vunpack.c.l.b16 %v2531
      %v2573 = vunpack.c.l.b16 %v2532
      %v2574 = vunpack.c.l.b16 %v2533
      %v2575 = vpack.c.b16 %v2568, %v2567
      %v2576 = vpack.c.b16 %v2570, %v2569
      %v2577 = vpack.c.b16 %v2572, %v2571
      %v2578 = vpack.c.b16 %v2574, %v2573
      %v2585 = vunpack.c.l.b16 %v2534
      %v2586 = vunpack.c.l.b16 %v2535
      %v2587 = vpack.c.b16 %v2586, %v2585
      %v2597 = vunpack.c.l.b16 %v2551
      %v2598 = vunpack.c.l.b16 %v2552
      %v2599 = vunpack.c.l.b16 %v2553
      %v2600 = vunpack.c.l.b16 %v2554
      %v2601 = vunpack.c.l.b16 %v2555
      %v2602 = vunpack.c.l.b16 %v2556
      %v2603 = vunpack.c.l.b16 %v2557
      %v2604 = vunpack.c.l.b16 %v2558
      %v2605 = vpack.c.b16 %v2598, %v2597
      %v2606 = vpack.c.b16 %v2600, %v2599
      %v2607 = vpack.c.b16 %v2602, %v2601
      %v2608 = vpack.c.b16 %v2604, %v2603
      %v2613 = vld [vmem:[%s1320] sm:$0xf]
      %v2614 = vld [vmem:[%s1320 + $0x4] sm:$0xf]
      %v2615 = vld [vmem:[%s1320 + $0x8] sm:$0xf]
      %v2616 = vld [vmem:[%s1320 + $0xc] sm:$0xf]
      %v2617 = vld [vmem:[%s1320 + $0x10] sm:$0xf]
      %v2618 = vld [vmem:[%s1320 + $0x14] sm:$0xf]
      %v2619 = vld [vmem:[%s1320 + $0x18] sm:$0xf]
      %v2620 = vld [vmem:[%s1320 + $0x1c] sm:$0xf]
      %v2621 = vld [vmem:[%s1320 + $0x20] sm:$0xf]
      %v2622 = vld [vmem:[%s1320 + $0x24] sm:$0xf]
      %v2623 = vld [vmem:[%s1320 + $0x28] sm:$0xf]
      %v2624 = vld [vmem:[%s1320 + $0x2c] sm:$0xf]
      %v2625 = vld [vmem:[%s1320 + $0x30] sm:$0xf]
      %v2626 = vld [vmem:[%s1320 + $0x34] sm:$0xf]
      %v2627 = vld [vmem:[%s1320 + $0x38] sm:$0xf]
      %v2628 = vld [vmem:[%s1320 + $0x3c] sm:$0xf]
      %v2629 = vld [vmem:[%s1320 + $0x40] sm:$0xf]
      %v2630 = vld [vmem:[%s1320 + $0x44] sm:$0xf]
      %v2631 = vld [vmem:[%s1320 + $0x48] sm:$0xf]
      %v2632 = vld [vmem:[%s1320 + $0x4c] sm:$0xf]
      %v2633 = vld [vmem:[%s1320 + $0x50] sm:$0xf]
      %v2634 = vld [vmem:[%s1320 + $0x54] sm:$0xf]
      %v2635 = vld [vmem:[%s1320 + $0x58] sm:$0xf]
      %v2636 = vld [vmem:[%s1320 + $0x5c] sm:$0xf]
      %v2637 = vld [vmem:[%s1320 + $0x60] sm:$0xf]
      %v2638 = vld [vmem:[%s1320 + $0x64] sm:$0xf]
      %v2639 = vld [vmem:[%s1320 + $0x68] sm:$0xf]
      %v2640 = vld [vmem:[%s1320 + $0x6c] sm:$0xf]
      %v2641 = vld [vmem:[%s1320 + $0x70] sm:$0xf]
      %v2642 = vld [vmem:[%s1320 + $0x74] sm:$0xf]
      %v2643 = vld [vmem:[%s1320 + $0x78] sm:$0xf]
      %v2644 = vld [vmem:[%s1320 + $0x7c] sm:$0xf]
      %v2645 = vld [vmem:[%s1320 + $0x80] sm:$0xf]
      %v2646 = vld [vmem:[%s1320 + $0x84] sm:$0xf]
      %v2647 = vld [vmem:[%s1320 + $0x88] sm:$0xf]
      %v2648 = vld [vmem:[%s1320 + $0x8c] sm:$0xf]
      %v2649 = vld [vmem:[%s1320 + $0x90] sm:$0xf]
      %v2650 = vld [vmem:[%s1320 + $0x94] sm:$0xf]
      %v2651 = vld [vmem:[%s1320 + $0x98] sm:$0xf]
      %v2652 = vld [vmem:[%s1320 + $0x9c] sm:$0xf]
      %v2653 = vld [vmem:[%s1320 + $0xa0] sm:$0xf]
      %v2654 = vld [vmem:[%s1320 + $0xa4] sm:$0xf]
      %v2655 = vld [vmem:[%s1320 + $0xa8] sm:$0xf]
      %v2656 = vld [vmem:[%s1320 + $0xac] sm:$0xf]
      %v2657 = vld [vmem:[%s1320 + $0xb0] sm:$0xf]
      %v2658 = vld [vmem:[%s1320 + $0xb4] sm:$0xf]
      %v2659 = vld [vmem:[%s1320 + $0xb8] sm:$0xf]
      %v2660 = vld [vmem:[%s1320 + $0xbc] sm:$0xf]
      %v2709 = vunpack.c.l.b16 %v2613
      %v2710 = vunpack.c.l.b16 %v2614
      %v2711 = vunpack.c.l.b16 %v2615
      %v2712 = vunpack.c.l.b16 %v2616
      %v2713 = vunpack.c.l.b16 %v2617
      %v2714 = vunpack.c.l.b16 %v2618
      %v2715 = vunpack.c.l.b16 %v2619
      %v2716 = vunpack.c.l.b16 %v2620
      %v2717 = vunpack.c.l.b16 %v2621
      %v2718 = vunpack.c.l.b16 %v2622
      %v2719 = vunpack.c.l.b16 %v2623
      %v2720 = vunpack.c.l.b16 %v2624
      %v2721 = vunpack.c.l.b16 %v2625
      %v2722 = vunpack.c.l.b16 %v2626
      %v2723 = vunpack.c.l.b16 %v2627
      %v2724 = vunpack.c.l.b16 %v2628
      %v2725 = vunpack.c.l.b16 %v2629
      %v2726 = vunpack.c.l.b16 %v2630
      %v2727 = vunpack.c.l.b16 %v2631
      %v2728 = vunpack.c.l.b16 %v2632
      %v2729 = vunpack.c.l.b16 %v2633
      %v2730 = vunpack.c.l.b16 %v2634
      %v2731 = vunpack.c.l.b16 %v2635
      %v2732 = vunpack.c.l.b16 %v2636
      %v2733 = vunpack.c.l.b16 %v2637
      %v2734 = vunpack.c.l.b16 %v2638
      %v2735 = vunpack.c.l.b16 %v2639
      %v2736 = vunpack.c.l.b16 %v2640
      %v2737 = vunpack.c.l.b16 %v2641
      %v2738 = vunpack.c.l.b16 %v2642
      %v2739 = vunpack.c.l.b16 %v2643
      %v2740 = vunpack.c.l.b16 %v2644
      %v2741 = vunpack.c.l.b16 %v2645
      %v2742 = vunpack.c.l.b16 %v2646
      %v2743 = vunpack.c.l.b16 %v2647
      %v2744 = vunpack.c.l.b16 %v2648
      %v2745 = vunpack.c.l.b16 %v2649
      %v2746 = vunpack.c.l.b16 %v2650
      %v2747 = vunpack.c.l.b16 %v2651
      %v2748 = vunpack.c.l.b16 %v2652
      %v2749 = vunpack.c.l.b16 %v2653
      %v2750 = vunpack.c.l.b16 %v2654
      %v2751 = vunpack.c.l.b16 %v2655
      %v2752 = vunpack.c.l.b16 %v2656
      %v2753 = vunpack.c.l.b16 %v2657
      %v2754 = vunpack.c.l.b16 %v2658
      %v2755 = vunpack.c.l.b16 %v2659
      %v2756 = vunpack.c.l.b16 %v2660
      %v2757 = vpack.c.b16 %v2710, %v2709
      %v2758 = vpack.c.b16 %v2712, %v2711
      %v2759 = vpack.c.b16 %v2714, %v2713
      %v2760 = vpack.c.b16 %v2716, %v2715
      %v2761 = vpack.c.b16 %v2718, %v2717
      %v2762 = vpack.c.b16 %v2720, %v2719
      %v2763 = vpack.c.b16 %v2722, %v2721
      %v2764 = vpack.c.b16 %v2724, %v2723
      %v2765 = vpack.c.b16 %v2726, %v2725
      %v2766 = vpack.c.b16 %v2728, %v2727
      %v2767 = vpack.c.b16 %v2730, %v2729
      %v2768 = vpack.c.b16 %v2732, %v2731
      %v2769 = vpack.c.b16 %v2734, %v2733
      %v2770 = vpack.c.b16 %v2736, %v2735
      %v2771 = vpack.c.b16 %v2738, %v2737
      %v2772 = vpack.c.b16 %v2740, %v2739
      %v2773 = vpack.c.b16 %v2742, %v2741
      %v2774 = vpack.c.b16 %v2744, %v2743
      %v2775 = vpack.c.b16 %v2746, %v2745
      %v2776 = vpack.c.b16 %v2748, %v2747
      %v2777 = vpack.c.b16 %v2750, %v2749
      %v2778 = vpack.c.b16 %v2752, %v2751
      %v2779 = vpack.c.b16 %v2754, %v2753
      %v2780 = vpack.c.b16 %v2756, %v2755
      %2805 = vmatpush.bf16.msra.mxu0 %v2764
      %2806 = vmatpush.bf16.msra.mxu0 %v2763
      %2807 = vmatpush.bf16.msra.mxu0 %v2762
      %2808 = vmatpush.bf16.msra.mxu0 %v2761
      %2809 = vmatpush.bf16.msra.mxu0 %v2760
      %2810 = vmatpush.bf16.msra.mxu0 %v2759
      %2811 = vmatpush.bf16.msra.mxu0 %v2758
      %2812 = vmatpush.bf16.msra.mxu0 %v2757
      %2813 = vmatmul.bf16.gmra.mxu0 %v2575
      %v2814 = vpop.f32.mrf.mxu0
      %v2815 = vadd.f32 0.0, %v2814
      %v2816 = vpop.f32.mrf.mxu0
      %v2817 = vadd.f32 0.0, %v2816
      %2818 = vmatmul.bf16.gmra.mxu0 %v2576
      %v2819 = vpop.f32.mrf.mxu0
      %v2820 = vadd.f32 0.0, %v2819
      %v2821 = vpop.f32.mrf.mxu0
      %v2822 = vadd.f32 0.0, %v2821
      %2823 = vmatmul.bf16.gmra.mxu0 %v2577
      %v2824 = vpop.f32.mrf.mxu0
      %v2825 = vadd.f32 0.0, %v2824
      %v2826 = vpop.f32.mrf.mxu0
      %v2827 = vadd.f32 0.0, %v2826
      %2828 = vmatmul.bf16.gmra.mxu0 %v2578
      %v2829 = vpop.f32.mrf.mxu0
      %v2830 = vadd.f32 0.0, %v2829
      %v2831 = vpop.f32.mrf.mxu0
      %v2832 = vadd.f32 0.0, %v2831
      %2833 = vdwg.mxu0
      %2834 = vmatpush.bf16.msra.mxu0 %v2772
      %2835 = vmatpush.bf16.msra.mxu0 %v2771
      %2836 = vmatpush.bf16.msra.mxu0 %v2770
      %2837 = vmatpush.bf16.msra.mxu0 %v2769
      %2838 = vmatpush.bf16.msra.mxu0 %v2768
      %2839 = vmatpush.bf16.msra.mxu0 %v2767
      %2840 = vmatpush.bf16.msra.mxu0 %v2766
      %2841 = vmatpush.bf16.msra.mxu0 %v2765
      %2842 = vmatmul.bf16.gmra.mxu0 %v1821
      %v2843 = vpop.f32.mrf.mxu0
      %v2844 = vadd.f32 %v2815, %v2843
      %v2845 = vpop.f32.mrf.mxu0
      %v2846 = vadd.f32 %v2817, %v2845
      %2847 = vmatmul.bf16.gmra.mxu0 %v1822
      %v2848 = vpop.f32.mrf.mxu0
      %v2849 = vadd.f32 %v2820, %v2848
      %v2850 = vpop.f32.mrf.mxu0
      %v2851 = vadd.f32 %v2822, %v2850
      %2852 = vmatmul.bf16.gmra.mxu0 %v1975
      %v2853 = vpop.f32.mrf.mxu0
      %v2854 = vadd.f32 %v2825, %v2853
      %v2855 = vpop.f32.mrf.mxu0
      %v2856 = vadd.f32 %v2827, %v2855
      %2857 = vmatmul.bf16.gmra.mxu0 %v2587
      %v2858 = vpop.f32.mrf.mxu0
      %v2859 = vadd.f32 %v2830, %v2858
      %v2860 = vpop.f32.mrf.mxu0
      %v2861 = vadd.f32 %v2832, %v2860
      %2862 = vdwg.mxu0
      %2863 = vmatpush.bf16.msra.mxu0 %v2780
      %2864 = vmatpush.bf16.msra.mxu0 %v2779
      %2865 = vmatpush.bf16.msra.mxu0 %v2778
      %2866 = vmatpush.bf16.msra.mxu0 %v2777
      %2867 = vmatpush.bf16.msra.mxu0 %v2776
      %2868 = vmatpush.bf16.msra.mxu0 %v2775
      %2869 = vmatpush.bf16.msra.mxu0 %v2774
      %2870 = vmatpush.bf16.msra.mxu0 %v2773
      %2871 = vmatmul.bf16.gmra.mxu0 %v2605
      %v2872 = vpop.f32.mrf.mxu0
      %v2873 = vadd.f32 %v2844, %v2872
      %v2874 = vpop.f32.mrf.mxu0
      %v2875 = vadd.f32 %v2846, %v2874
      %2876 = vmatmul.bf16.gmra.mxu0 %v2606
      %v2877 = vpop.f32.mrf.mxu0
      %v2878 = vadd.f32 %v2849, %v2877
      %v2879 = vpop.f32.mrf.mxu0
      %v2880 = vadd.f32 %v2851, %v2879
      %2881 = vmatmul.bf16.gmra.mxu0 %v2607
      %v2882 = vpop.f32.mrf.mxu0
      %v2883 = vadd.f32 %v2854, %v2882
      %v2884 = vpop.f32.mrf.mxu0
      %v2885 = vadd.f32 %v2856, %v2884
      %2886 = vmatmul.bf16.gmra.mxu0 %v2608
      %v2887 = vpop.f32.mrf.mxu0
      %v2888 = vadd.f32 %v2859, %v2887
      %v2889 = vpop.f32.mrf.mxu0
      %v2890 = vadd.f32 %v2861, %v2889
      %2891 = vdwg.mxu0
      %v2892 = vadd.f32 %v2492, %v2873
      %v2893 = vadd.f32 %v2494, %v2875
      %v2894 = vadd.f32 %v2497, %v2878
      %v2895 = vadd.f32 %v2499, %v2880
      %v2896 = vadd.f32 %v2502, %v2883
      %v2897 = vadd.f32 %v2504, %v2885
      %v2898 = vadd.f32 %v2507, %v2888
      %v2899 = vadd.f32 %v2509, %v2890
      %v2900 = vadd.f32 %v2892, %v1609
      %v2901 = vadd.f32 %v2893, %v1609
      %v2902 = vadd.f32 %v2894, %v1609
      %v2903 = vadd.f32 %v2895, %v1609
      %v2904 = vadd.f32 %v2896, %v1609
      %v2905 = vadd.f32 %v2897, %v1609
      %v2906 = vadd.f32 %v2898, %v1609
      %v2907 = vadd.f32 %v2899, %v1609
      %v2908 = vmax.f32 %v2900, 0.0
      %v2909 = vmax.f32 %v2901, 0.0
      %v2910 = vmax.f32 %v2902, 0.0
      %v2911 = vmax.f32 %v2903, 0.0
      %v2912 = vmax.f32 %v2904, 0.0
      %v2913 = vmax.f32 %v2905, 0.0
      %v2914 = vmax.f32 %v2906, 0.0
      %v2915 = vmax.f32 %v2907, 0.0
      %v2916 = vmin.f32 %v2908, 6.0
      %v2917 = vmin.f32 %v2909, 6.0
      %v2918 = vmin.f32 %v2910, 6.0
      %v2919 = vmin.f32 %v2911, 6.0
      %v2920 = vmin.f32 %v2912, 6.0
      %v2921 = vmin.f32 %v2913, 6.0
      %v2922 = vmin.f32 %v2914, 6.0
      %v2923 = vmin.f32 %v2915, 6.0
      %v2924 = vpack.c.bf16 %v2916, %v2916
      %v2925 = vpack.c.bf16 %v2917, %v2917
      %v2926 = vpack.c.bf16 %v2918, %v2918
      %v2927 = vpack.c.bf16 %v2919, %v2919
      %v2928 = vpack.c.bf16 %v2920, %v2920
      %v2929 = vpack.c.bf16 %v2921, %v2921
      %v2930 = vpack.c.bf16 %v2922, %v2922
      %v2931 = vpack.c.bf16 %v2923, %v2923
      %2932 = vst [vmem:[#allocation2 + $0x2c] sm:$0xf] %v2924
      %2933 = vst [vmem:[#allocation2 + $0x30] sm:$0xf] %v2925
      %2934 = vst [vmem:[#allocation2 + $0x34] sm:$0xf] %v2926
      %2935 = vst [vmem:[#allocation2 + $0x38] sm:$0xf] %v2927
      %2936 = vst [vmem:[#allocation2 + $0x3c] sm:$0xf] %v2928
      %2937 = vst [vmem:[#allocation2 + $0x40] sm:$0xf] %v2929
      %2938 = vst [vmem:[#allocation2 + $0x44] sm:$0xf] %v2930
      %2939 = vst [vmem:[#allocation2 + $0x48] sm:$0xf] %v2931
      %v2940 = vld [vmem:[%s219 + $0x40] sm:$0xf]
      %v2941 = vld [vmem:[%s219 + $0x44] sm:$0xf]
      %v2942 = vld [vmem:[%s219 + $0x48] sm:$0xf]
      %v2943 = vld [vmem:[%s219 + $0x4c] sm:$0xf]
      %v2944 = vld [vmem:[%s219 + $0x50] sm:$0xf]
      %v2945 = vld [vmem:[%s219 + $0x54] sm:$0xf]
      %v2946 = vld [vmem:[%s219 + $0x58] sm:$0xf]
      %v2947 = vld [vmem:[%s219 + $0x5c] sm:$0xf]
      %v2948 = vld [vmem:[%s219 + $0x60] sm:$0xf]
      %v2949 = vld [vmem:[%s219 + $0x64] sm:$0xf]
      %v2950 = vld [vmem:[%s219 + $0x68] sm:$0xf]
      %v2951 = vld [vmem:[%s219 + $0x6c] sm:$0xf]
      %v2952 = vld [vmem:[%s219 + $0x70] sm:$0xf]
      %v2953 = vld [vmem:[%s219 + $0x74] sm:$0xf]
      %v2954 = vunpack.c.l.bf16 %v2940
      %v2955 = vunpack.c.l.bf16 %v2941
      %v2956 = vunpack.c.l.bf16 %v2942
      %v2957 = vunpack.c.l.bf16 %v2943
      %v2958 = vunpack.c.l.bf16 %v2944
      %v2959 = vunpack.c.l.bf16 %v2945
      %v2960 = vunpack.c.l.bf16 %v2946
      %v2961 = vunpack.c.l.bf16 %v2947
      %v2962 = vunpack.c.l.bf16 %v2948
      %v2963 = vunpack.c.l.bf16 %v2949
      %v2964 = vunpack.c.l.bf16 %v2950
      %v2965 = vunpack.c.l.bf16 %v2951
      %v2966 = vunpack.c.l.bf16 %v2952
      %v2967 = vunpack.c.l.bf16 %v2953
      %v2977 = vrot.slane %v2954, 7
      %v2978 = vrot.slane %v2955, 7
      %v2979 = vsel %vm392, %v2977, %v2978
      %v2980 = vrot.slane %v2956, 7
      %v2981 = vsel %vm392, %v2978, %v2980
      %v2982 = vrot.slane %v2957, 7
      %v2983 = vsel %vm392, %v2980, %v2982
      %v2984 = vrot.slane %v2958, 7
      %v2985 = vsel %vm392, %v2982, %v2984
      %v2986 = vrot.slane %v2959, 7
      %v2987 = vsel %vm392, %v2984, %v2986
      %v2988 = vrot.slane %v2960, 7
      %v2989 = vsel %vm392, %v2986, %v2988
      %v2990 = vrot.slane %v2961, 7
      %v2991 = vsel %vm392, %v2988, %v2990
      %v2992 = vrot.slane %v2962, 7
      %v2993 = vsel %vm392, %v2990, %v2992
      %v3002 = vsel %vm331, %v2979, 0.0
      %v3003 = vsel %vm332, %v2981, 0.0
      %v3004 = vsel %vm333, %v2983, 0.0
      %v3005 = vsel %vm334, %v2985, 0.0
      %v3006 = vsel %vm335, %v2987, 0.0
      %v3007 = vsel %vm336, %v2989, 0.0
      %v3008 = vsel %vm337, %v2991, 0.0
      %v3009 = vsel %vm338, %v2993, 0.0
      %v3010 = vpack.c.bf16 %v3002, %v3002
      %v3011 = vpack.c.bf16 %v3003, %v3003
      %v3012 = vpack.c.bf16 %v3004, %v3004
      %v3013 = vpack.c.bf16 %v3005, %v3005
      %v3014 = vpack.c.bf16 %v3006, %v3006
      %v3015 = vpack.c.bf16 %v3007, %v3007
      %v3016 = vpack.c.bf16 %v3008, %v3008
      %v3017 = vpack.c.bf16 %v3009, %v3009
      %v3018 = vpack.c.bf16 %v2955, %v2955
      %v3019 = vpack.c.bf16 %v2956, %v2956
      %v3020 = vpack.c.bf16 %v2957, %v2957
      %v3021 = vpack.c.bf16 %v2958, %v2958
      %v3022 = vpack.c.bf16 %v2959, %v2959
      %v3023 = vpack.c.bf16 %v2960, %v2960
      %v3024 = vpack.c.bf16 %v2961, %v2961
      %v3025 = vpack.c.bf16 %v2962, %v2962
      %v3027 = vrot.slane %v2955, 1
      %v3028 = vrot.slane %v2956, 1
      %v3029 = vsel %vm443, %v3027, %v3028
      %v3030 = vrot.slane %v2957, 1
      %v3031 = vsel %vm443, %v3028, %v3030
      %v3032 = vrot.slane %v2958, 1
      %v3033 = vsel %vm443, %v3030, %v3032
      %v3034 = vrot.slane %v2959, 1
      %v3035 = vsel %vm443, %v3032, %v3034
      %v3036 = vrot.slane %v2960, 1
      %v3037 = vsel %vm443, %v3034, %v3036
      %v3038 = vrot.slane %v2961, 1
      %v3039 = vsel %vm443, %v3036, %v3038
      %v3040 = vrot.slane %v2962, 1
      %v3041 = vsel %vm443, %v3038, %v3040
      %v3042 = vrot.slane %v2963, 1
      %v3043 = vsel %vm443, %v3040, %v3042
      %v3052 = vsel %vm339, %v3029, 0.0
      %v3053 = vsel %vm340, %v3031, 0.0
      %v3054 = vsel %vm341, %v3033, 0.0
      %v3055 = vsel %vm342, %v3035, 0.0
      %v3056 = vsel %vm343, %v3037, 0.0
      %v3057 = vsel %vm344, %v3039, 0.0
      %v3058 = vsel %vm345, %v3041, 0.0
      %v3059 = vsel %vm346, %v3043, 0.0
      %v3060 = vpack.c.bf16 %v3052, %v3052
      %v3061 = vpack.c.bf16 %v3053, %v3053
      %v3062 = vpack.c.bf16 %v3054, %v3054
      %v3063 = vpack.c.bf16 %v3055, %v3055
      %v3064 = vpack.c.bf16 %v3056, %v3056
      %v3065 = vpack.c.bf16 %v3057, %v3057
      %v3066 = vpack.c.bf16 %v3058, %v3058
      %v3067 = vpack.c.bf16 %v3059, %v3059
      %v3076 = vunpack.c.l.b16 %v3010
      %v3077 = vunpack.c.l.b16 %v3011
      %v3078 = vunpack.c.l.b16 %v3012
      %v3079 = vunpack.c.l.b16 %v3013
      %v3080 = vunpack.c.l.b16 %v3014
      %v3081 = vunpack.c.l.b16 %v3015
      %v3082 = vunpack.c.l.b16 %v3016
      %v3083 = vunpack.c.l.b16 %v3017
      %v3084 = vpack.c.b16 %v3077, %v3076
      %v3085 = vpack.c.b16 %v3079, %v3078
      %v3086 = vpack.c.b16 %v3081, %v3080
      %v3087 = vpack.c.b16 %v3083, %v3082
      %v3100 = vunpack.c.l.b16 %v3018
      %v3101 = vunpack.c.l.b16 %v3019
      %v3102 = vunpack.c.l.b16 %v3020
      %v3103 = vunpack.c.l.b16 %v3021
      %v3104 = vunpack.c.l.b16 %v3022
      %v3105 = vunpack.c.l.b16 %v3023
      %v3106 = vunpack.c.l.b16 %v3024
      %v3107 = vunpack.c.l.b16 %v3025
      %v3108 = vpack.c.b16 %v3101, %v3100
      %v3109 = vpack.c.b16 %v3103, %v3102
      %v3110 = vpack.c.b16 %v3105, %v3104
      %v3111 = vpack.c.b16 %v3107, %v3106
      %v3124 = vunpack.c.l.b16 %v3060
      %v3125 = vunpack.c.l.b16 %v3061
      %v3126 = vunpack.c.l.b16 %v3062
      %v3127 = vunpack.c.l.b16 %v3063
      %v3128 = vunpack.c.l.b16 %v3064
      %v3129 = vunpack.c.l.b16 %v3065
      %v3130 = vunpack.c.l.b16 %v3066
      %v3131 = vunpack.c.l.b16 %v3067
      %v3132 = vpack.c.b16 %v3125, %v3124
      %v3133 = vpack.c.b16 %v3127, %v3126
      %v3134 = vpack.c.b16 %v3129, %v3128
      %v3135 = vpack.c.b16 %v3131, %v3130
      %v3140 = vld [vmem:[%s1] sm:$0xf]
      %v3141 = vld [vmem:[%s1 + $0x4] sm:$0xf]
      %v3142 = vld [vmem:[%s1 + $0x8] sm:$0xf]
      %v3143 = vld [vmem:[%s1 + $0xc] sm:$0xf]
      %v3144 = vld [vmem:[%s1 + $0x10] sm:$0xf]
      %v3145 = vld [vmem:[%s1 + $0x14] sm:$0xf]
      %v3146 = vld [vmem:[%s1 + $0x18] sm:$0xf]
      %v3147 = vld [vmem:[%s1 + $0x1c] sm:$0xf]
      %v3148 = vld [vmem:[%s1 + $0x20] sm:$0xf]
      %v3149 = vld [vmem:[%s1 + $0x24] sm:$0xf]
      %v3150 = vld [vmem:[%s1 + $0x28] sm:$0xf]
      %v3151 = vld [vmem:[%s1 + $0x2c] sm:$0xf]
      %v3152 = vld [vmem:[%s1 + $0x30] sm:$0xf]
      %v3153 = vld [vmem:[%s1 + $0x34] sm:$0xf]
      %v3154 = vld [vmem:[%s1 + $0x38] sm:$0xf]
      %v3155 = vld [vmem:[%s1 + $0x3c] sm:$0xf]
      %v3156 = vld [vmem:[%s1 + $0x40] sm:$0xf]
      %v3157 = vld [vmem:[%s1 + $0x44] sm:$0xf]
      %v3158 = vld [vmem:[%s1 + $0x48] sm:$0xf]
      %v3159 = vld [vmem:[%s1 + $0x4c] sm:$0xf]
      %v3160 = vld [vmem:[%s1 + $0x50] sm:$0xf]
      %v3161 = vld [vmem:[%s1 + $0x54] sm:$0xf]
      %v3162 = vld [vmem:[%s1 + $0x58] sm:$0xf]
      %v3163 = vld [vmem:[%s1 + $0x5c] sm:$0xf]
      %v3164 = vld [vmem:[%s1 + $0x60] sm:$0xf]
      %v3165 = vld [vmem:[%s1 + $0x64] sm:$0xf]
      %v3166 = vld [vmem:[%s1 + $0x68] sm:$0xf]
      %v3167 = vld [vmem:[%s1 + $0x6c] sm:$0xf]
      %v3168 = vld [vmem:[%s1 + $0x70] sm:$0xf]
      %v3169 = vld [vmem:[%s1 + $0x74] sm:$0xf]
      %v3170 = vld [vmem:[%s1 + $0x78] sm:$0xf]
      %v3171 = vld [vmem:[%s1 + $0x7c] sm:$0xf]
      %v3172 = vld [vmem:[%s1 + $0x80] sm:$0xf]
      %v3173 = vld [vmem:[%s1 + $0x84] sm:$0xf]
      %v3174 = vld [vmem:[%s1 + $0x88] sm:$0xf]
      %v3175 = vld [vmem:[%s1 + $0x8c] sm:$0xf]
      %v3176 = vld [vmem:[%s1 + $0x90] sm:$0xf]
      %v3177 = vld [vmem:[%s1 + $0x94] sm:$0xf]
      %v3178 = vld [vmem:[%s1 + $0x98] sm:$0xf]
      %v3179 = vld [vmem:[%s1 + $0x9c] sm:$0xf]
      %v3180 = vld [vmem:[%s1 + $0xa0] sm:$0xf]
      %v3181 = vld [vmem:[%s1 + $0xa4] sm:$0xf]
      %v3182 = vld [vmem:[%s1 + $0xa8] sm:$0xf]
      %v3183 = vld [vmem:[%s1 + $0xac] sm:$0xf]
      %v3184 = vld [vmem:[%s1 + $0xb0] sm:$0xf]
      %v3185 = vld [vmem:[%s1 + $0xb4] sm:$0xf]
      %v3186 = vld [vmem:[%s1 + $0xb8] sm:$0xf]
      %v3187 = vld [vmem:[%s1 + $0xbc] sm:$0xf]
      %v3189 = vrot.slane %v2963, 7
      %v3190 = vsel %vm392, %v2992, %v3189
      %v3191 = vrot.slane %v2964, 7
      %v3192 = vsel %vm392, %v3189, %v3191
      %v3195 = vsel %vm331, %v2983, 0.0
      %v3196 = vsel %vm332, %v2985, 0.0
      %v3197 = vsel %vm333, %v2987, 0.0
      %v3198 = vsel %vm334, %v2989, 0.0
      %v3199 = vsel %vm335, %v2991, 0.0
      %v3200 = vsel %vm336, %v2993, 0.0
      %v3201 = vsel %vm337, %v3190, 0.0
      %v3202 = vsel %vm338, %v3192, 0.0
      %v3203 = vpack.c.bf16 %v3195, %v3195
      %v3204 = vpack.c.bf16 %v3196, %v3196
      %v3205 = vpack.c.bf16 %v3197, %v3197
      %v3206 = vpack.c.bf16 %v3198, %v3198
      %v3207 = vpack.c.bf16 %v3199, %v3199
      %v3208 = vpack.c.bf16 %v3200, %v3200
      %v3209 = vpack.c.bf16 %v3201, %v3201
      %v3210 = vpack.c.bf16 %v3202, %v3202
      %v3211 = vpack.c.bf16 %v2963, %v2963
      %v3212 = vpack.c.bf16 %v2964, %v2964
      %v3214 = vrot.slane %v2964, 1
      %v3215 = vsel %vm443, %v3042, %v3214
      %v3216 = vrot.slane %v2965, 1
      %v3217 = vsel %vm443, %v3214, %v3216
      %v3220 = vsel %vm339, %v3033, 0.0
      %v3221 = vsel %vm340, %v3035, 0.0
      %v3222 = vsel %vm341, %v3037, 0.0
      %v3223 = vsel %vm342, %v3039, 0.0
      %v3224 = vsel %vm343, %v3041, 0.0
      %v3225 = vsel %vm344, %v3043, 0.0
      %v3226 = vsel %vm345, %v3215, 0.0
      %v3227 = vsel %vm346, %v3217, 0.0
      %v3228 = vpack.c.bf16 %v3220, %v3220
      %v3229 = vpack.c.bf16 %v3221, %v3221
      %v3230 = vpack.c.bf16 %v3222, %v3222
      %v3231 = vpack.c.bf16 %v3223, %v3223
      %v3232 = vpack.c.bf16 %v3224, %v3224
      %v3233 = vpack.c.bf16 %v3225, %v3225
      %v3234 = vpack.c.bf16 %v3226, %v3226
      %v3235 = vpack.c.bf16 %v3227, %v3227
      %v3244 = vunpack.c.l.b16 %v3203
      %v3245 = vunpack.c.l.b16 %v3204
      %v3246 = vunpack.c.l.b16 %v3205
      %v3247 = vunpack.c.l.b16 %v3206
      %v3248 = vunpack.c.l.b16 %v3207
      %v3249 = vunpack.c.l.b16 %v3208
      %v3250 = vunpack.c.l.b16 %v3209
      %v3251 = vunpack.c.l.b16 %v3210
      %v3252 = vpack.c.b16 %v3245, %v3244
      %v3253 = vpack.c.b16 %v3247, %v3246
      %v3254 = vpack.c.b16 %v3249, %v3248
      %v3255 = vpack.c.b16 %v3251, %v3250
      %v3262 = vunpack.c.l.b16 %v3211
      %v3263 = vunpack.c.l.b16 %v3212
      %v3264 = vpack.c.b16 %v3263, %v3262
      %v3274 = vunpack.c.l.b16 %v3228
      %v3275 = vunpack.c.l.b16 %v3229
      %v3276 = vunpack.c.l.b16 %v3230
      %v3277 = vunpack.c.l.b16 %v3231
      %v3278 = vunpack.c.l.b16 %v3232
      %v3279 = vunpack.c.l.b16 %v3233
      %v3280 = vunpack.c.l.b16 %v3234
      %v3281 = vunpack.c.l.b16 %v3235
      %v3282 = vpack.c.b16 %v3275, %v3274
      %v3283 = vpack.c.b16 %v3277, %v3276
      %v3284 = vpack.c.b16 %v3279, %v3278
      %v3285 = vpack.c.b16 %v3281, %v3280
      %v3290 = vld [vmem:[%s707] sm:$0xf]
      %v3291 = vld [vmem:[%s707 + $0x4] sm:$0xf]
      %v3292 = vld [vmem:[%s707 + $0x8] sm:$0xf]
      %v3293 = vld [vmem:[%s707 + $0xc] sm:$0xf]
      %v3294 = vld [vmem:[%s707 + $0x10] sm:$0xf]
      %v3295 = vld [vmem:[%s707 + $0x14] sm:$0xf]
      %v3296 = vld [vmem:[%s707 + $0x18] sm:$0xf]
      %v3297 = vld [vmem:[%s707 + $0x1c] sm:$0xf]
      %v3298 = vld [vmem:[%s707 + $0x20] sm:$0xf]
      %v3299 = vld [vmem:[%s707 + $0x24] sm:$0xf]
      %v3300 = vld [vmem:[%s707 + $0x28] sm:$0xf]
      %v3301 = vld [vmem:[%s707 + $0x2c] sm:$0xf]
      %v3302 = vld [vmem:[%s707 + $0x30] sm:$0xf]
      %v3303 = vld [vmem:[%s707 + $0x34] sm:$0xf]
      %v3304 = vld [vmem:[%s707 + $0x38] sm:$0xf]
      %v3305 = vld [vmem:[%s707 + $0x3c] sm:$0xf]
      %v3306 = vld [vmem:[%s707 + $0x40] sm:$0xf]
      %v3307 = vld [vmem:[%s707 + $0x44] sm:$0xf]
      %v3308 = vld [vmem:[%s707 + $0x48] sm:$0xf]
      %v3309 = vld [vmem:[%s707 + $0x4c] sm:$0xf]
      %v3310 = vld [vmem:[%s707 + $0x50] sm:$0xf]
      %v3311 = vld [vmem:[%s707 + $0x54] sm:$0xf]
      %v3312 = vld [vmem:[%s707 + $0x58] sm:$0xf]
      %v3313 = vld [vmem:[%s707 + $0x5c] sm:$0xf]
      %v3314 = vld [vmem:[%s707 + $0x60] sm:$0xf]
      %v3315 = vld [vmem:[%s707 + $0x64] sm:$0xf]
      %v3316 = vld [vmem:[%s707 + $0x68] sm:$0xf]
      %v3317 = vld [vmem:[%s707 + $0x6c] sm:$0xf]
      %v3318 = vld [vmem:[%s707 + $0x70] sm:$0xf]
      %v3319 = vld [vmem:[%s707 + $0x74] sm:$0xf]
      %v3320 = vld [vmem:[%s707 + $0x78] sm:$0xf]
      %v3321 = vld [vmem:[%s707 + $0x7c] sm:$0xf]
      %v3322 = vld [vmem:[%s707 + $0x80] sm:$0xf]
      %v3323 = vld [vmem:[%s707 + $0x84] sm:$0xf]
      %v3324 = vld [vmem:[%s707 + $0x88] sm:$0xf]
      %v3325 = vld [vmem:[%s707 + $0x8c] sm:$0xf]
      %v3326 = vld [vmem:[%s707 + $0x90] sm:$0xf]
      %v3327 = vld [vmem:[%s707 + $0x94] sm:$0xf]
      %v3328 = vld [vmem:[%s707 + $0x98] sm:$0xf]
      %v3329 = vld [vmem:[%s707 + $0x9c] sm:$0xf]
      %v3330 = vld [vmem:[%s707 + $0xa0] sm:$0xf]
      %v3331 = vld [vmem:[%s707 + $0xa4] sm:$0xf]
      %v3332 = vld [vmem:[%s707 + $0xa8] sm:$0xf]
      %v3333 = vld [vmem:[%s707 + $0xac] sm:$0xf]
      %v3334 = vld [vmem:[%s707 + $0xb0] sm:$0xf]
      %v3335 = vld [vmem:[%s707 + $0xb4] sm:$0xf]
      %v3336 = vld [vmem:[%s707 + $0xb8] sm:$0xf]
      %v3337 = vld [vmem:[%s707 + $0xbc] sm:$0xf]
      %v3386 = vunpack.c.l.b16 %v3290
      %v3387 = vunpack.c.l.b16 %v3291
      %v3388 = vunpack.c.l.b16 %v3292
      %v3389 = vunpack.c.l.b16 %v3293
      %v3390 = vunpack.c.l.b16 %v3294
      %v3391 = vunpack.c.l.b16 %v3295
      %v3392 = vunpack.c.l.b16 %v3296
      %v3393 = vunpack.c.l.b16 %v3297
      %v3394 = vunpack.c.l.b16 %v3298
      %v3395 = vunpack.c.l.b16 %v3299
      %v3396 = vunpack.c.l.b16 %v3300
      %v3397 = vunpack.c.l.b16 %v3301
      %v3398 = vunpack.c.l.b16 %v3302
      %v3399 = vunpack.c.l.b16 %v3303
      %v3400 = vunpack.c.l.b16 %v3304
      %v3401 = vunpack.c.l.b16 %v3305
      %v3402 = vunpack.c.l.b16 %v3306
      %v3403 = vunpack.c.l.b16 %v3307
      %v3404 = vunpack.c.l.b16 %v3308
      %v3405 = vunpack.c.l.b16 %v3309
      %v3406 = vunpack.c.l.b16 %v3310
      %v3407 = vunpack.c.l.b16 %v3311
      %v3408 = vunpack.c.l.b16 %v3312
      %v3409 = vunpack.c.l.b16 %v3313
      %v3410 = vunpack.c.l.b16 %v3314
      %v3411 = vunpack.c.l.b16 %v3315
      %v3412 = vunpack.c.l.b16 %v3316
      %v3413 = vunpack.c.l.b16 %v3317
      %v3414 = vunpack.c.l.b16 %v3318
      %v3415 = vunpack.c.l.b16 %v3319
      %v3416 = vunpack.c.l.b16 %v3320
      %v3417 = vunpack.c.l.b16 %v3321
      %v3418 = vunpack.c.l.b16 %v3322
      %v3419 = vunpack.c.l.b16 %v3323
      %v3420 = vunpack.c.l.b16 %v3324
      %v3421 = vunpack.c.l.b16 %v3325
      %v3422 = vunpack.c.l.b16 %v3326
      %v3423 = vunpack.c.l.b16 %v3327
      %v3424 = vunpack.c.l.b16 %v3328
      %v3425 = vunpack.c.l.b16 %v3329
      %v3426 = vunpack.c.l.b16 %v3330
      %v3427 = vunpack.c.l.b16 %v3331
      %v3428 = vunpack.c.l.b16 %v3332
      %v3429 = vunpack.c.l.b16 %v3333
      %v3430 = vunpack.c.l.b16 %v3334
      %v3431 = vunpack.c.l.b16 %v3335
      %v3432 = vunpack.c.l.b16 %v3336
      %v3433 = vunpack.c.l.b16 %v3337
      %v3434 = vpack.c.b16 %v3387, %v3386
      %v3435 = vpack.c.b16 %v3389, %v3388
      %v3436 = vpack.c.b16 %v3391, %v3390
      %v3437 = vpack.c.b16 %v3393, %v3392
      %v3438 = vpack.c.b16 %v3395, %v3394
      %v3439 = vpack.c.b16 %v3397, %v3396
      %v3440 = vpack.c.b16 %v3399, %v3398
      %v3441 = vpack.c.b16 %v3401, %v3400
      %v3442 = vpack.c.b16 %v3403, %v3402
      %v3443 = vpack.c.b16 %v3405, %v3404
      %v3444 = vpack.c.b16 %v3407, %v3406
      %v3445 = vpack.c.b16 %v3409, %v3408
      %v3446 = vpack.c.b16 %v3411, %v3410
      %v3447 = vpack.c.b16 %v3413, %v3412
      %v3448 = vpack.c.b16 %v3415, %v3414
      %v3449 = vpack.c.b16 %v3417, %v3416
      %v3450 = vpack.c.b16 %v3419, %v3418
      %v3451 = vpack.c.b16 %v3421, %v3420
      %v3452 = vpack.c.b16 %v3423, %v3422
      %v3453 = vpack.c.b16 %v3425, %v3424
      %v3454 = vpack.c.b16 %v3427, %v3426
      %v3455 = vpack.c.b16 %v3429, %v3428
      %v3456 = vpack.c.b16 %v3431, %v3430
      %v3457 = vpack.c.b16 %v3433, %v3432
      %3482 = vmatpush.bf16.msra.mxu0 %v3441
      %3483 = vmatpush.bf16.msra.mxu0 %v3440
      %3484 = vmatpush.bf16.msra.mxu0 %v3439
      %3485 = vmatpush.bf16.msra.mxu0 %v3438
      %3486 = vmatpush.bf16.msra.mxu0 %v3437
      %3487 = vmatpush.bf16.msra.mxu0 %v3436
      %3488 = vmatpush.bf16.msra.mxu0 %v3435
      %3489 = vmatpush.bf16.msra.mxu0 %v3434
      %3490 = vmatmul.bf16.gmra.mxu0 %v3252
      %v3491 = vpop.f32.mrf.mxu0
      %v3492 = vadd.f32 0.0, %v3491
      %v3493 = vpop.f32.mrf.mxu0
      %v3494 = vadd.f32 0.0, %v3493
      %3495 = vmatmul.bf16.gmra.mxu0 %v3253
      %v3496 = vpop.f32.mrf.mxu0
      %v3497 = vadd.f32 0.0, %v3496
      %v3498 = vpop.f32.mrf.mxu0
      %v3499 = vadd.f32 0.0, %v3498
      %3500 = vmatmul.bf16.gmra.mxu0 %v3254
      %v3501 = vpop.f32.mrf.mxu0
      %v3502 = vadd.f32 0.0, %v3501
      %v3503 = vpop.f32.mrf.mxu0
      %v3504 = vadd.f32 0.0, %v3503
      %3505 = vmatmul.bf16.gmra.mxu0 %v3255
      %v3506 = vpop.f32.mrf.mxu0
      %v3507 = vadd.f32 0.0, %v3506
      %v3508 = vpop.f32.mrf.mxu0
      %v3509 = vadd.f32 0.0, %v3508
      %3510 = vdwg.mxu0
      %3511 = vmatpush.bf16.msra.mxu0 %v3449
      %3512 = vmatpush.bf16.msra.mxu0 %v3448
      %3513 = vmatpush.bf16.msra.mxu0 %v3447
      %3514 = vmatpush.bf16.msra.mxu0 %v3446
      %3515 = vmatpush.bf16.msra.mxu0 %v3445
      %3516 = vmatpush.bf16.msra.mxu0 %v3444
      %3517 = vmatpush.bf16.msra.mxu0 %v3443
      %3518 = vmatpush.bf16.msra.mxu0 %v3442
      %3519 = vmatmul.bf16.gmra.mxu0 %v3109
      %v3520 = vpop.f32.mrf.mxu0
      %v3521 = vadd.f32 %v3492, %v3520
      %v3522 = vpop.f32.mrf.mxu0
      %v3523 = vadd.f32 %v3494, %v3522
      %3524 = vmatmul.bf16.gmra.mxu0 %v3110
      %v3525 = vpop.f32.mrf.mxu0
      %v3526 = vadd.f32 %v3497, %v3525
      %v3527 = vpop.f32.mrf.mxu0
      %v3528 = vadd.f32 %v3499, %v3527
      %3529 = vmatmul.bf16.gmra.mxu0 %v3111
      %v3530 = vpop.f32.mrf.mxu0
      %v3531 = vadd.f32 %v3502, %v3530
      %v3532 = vpop.f32.mrf.mxu0
      %v3533 = vadd.f32 %v3504, %v3532
      %3534 = vmatmul.bf16.gmra.mxu0 %v3264
      %v3535 = vpop.f32.mrf.mxu0
      %v3536 = vadd.f32 %v3507, %v3535
      %v3537 = vpop.f32.mrf.mxu0
      %v3538 = vadd.f32 %v3509, %v3537
      %3539 = vdwg.mxu0
      %3540 = vmatpush.bf16.msra.mxu0 %v3457
      %3541 = vmatpush.bf16.msra.mxu0 %v3456
      %3542 = vmatpush.bf16.msra.mxu0 %v3455
      %3543 = vmatpush.bf16.msra.mxu0 %v3454
      %3544 = vmatpush.bf16.msra.mxu0 %v3453
      %3545 = vmatpush.bf16.msra.mxu0 %v3452
      %3546 = vmatpush.bf16.msra.mxu0 %v3451
      %3547 = vmatpush.bf16.msra.mxu0 %v3450
      %3548 = vmatmul.bf16.gmra.mxu0 %v3282
      %v3549 = vpop.f32.mrf.mxu0
      %v3550 = vadd.f32 %v3521, %v3549
      %v3551 = vpop.f32.mrf.mxu0
      %v3552 = vadd.f32 %v3523, %v3551
      %3553 = vmatmul.bf16.gmra.mxu0 %v3283
      %v3554 = vpop.f32.mrf.mxu0
      %v3555 = vadd.f32 %v3526, %v3554
      %v3556 = vpop.f32.mrf.mxu0
      %v3557 = vadd.f32 %v3528, %v3556
      %3558 = vmatmul.bf16.gmra.mxu0 %v3284
      %v3559 = vpop.f32.mrf.mxu0
      %v3560 = vadd.f32 %v3531, %v3559
      %v3561 = vpop.f32.mrf.mxu0
      %v3562 = vadd.f32 %v3533, %v3561
      %3563 = vmatmul.bf16.gmra.mxu0 %v3285
      %v3564 = vpop.f32.mrf.mxu0
      %v3565 = vadd.f32 %v3536, %v3564
      %v3566 = vpop.f32.mrf.mxu0
      %v3567 = vadd.f32 %v3538, %v3566
      %3568 = vdwg.mxu0
      %v3617 = vunpack.c.l.b16 %v3140
      %v3618 = vunpack.c.l.b16 %v3141
      %v3619 = vunpack.c.l.b16 %v3142
      %v3620 = vunpack.c.l.b16 %v3143
      %v3621 = vunpack.c.l.b16 %v3144
      %v3622 = vunpack.c.l.b16 %v3145
      %v3623 = vunpack.c.l.b16 %v3146
      %v3624 = vunpack.c.l.b16 %v3147
      %v3625 = vunpack.c.l.b16 %v3148
      %v3626 = vunpack.c.l.b16 %v3149
      %v3627 = vunpack.c.l.b16 %v3150
      %v3628 = vunpack.c.l.b16 %v3151
      %v3629 = vunpack.c.l.b16 %v3152
      %v3630 = vunpack.c.l.b16 %v3153
      %v3631 = vunpack.c.l.b16 %v3154
      %v3632 = vunpack.c.l.b16 %v3155
      %v3633 = vunpack.c.l.b16 %v3156
      %v3634 = vunpack.c.l.b16 %v3157
      %v3635 = vunpack.c.l.b16 %v3158
      %v3636 = vunpack.c.l.b16 %v3159
      %v3637 = vunpack.c.l.b16 %v3160
      %v3638 = vunpack.c.l.b16 %v3161
      %v3639 = vunpack.c.l.b16 %v3162
      %v3640 = vunpack.c.l.b16 %v3163
      %v3641 = vunpack.c.l.b16 %v3164
      %v3642 = vunpack.c.l.b16 %v3165
      %v3643 = vunpack.c.l.b16 %v3166
      %v3644 = vunpack.c.l.b16 %v3167
      %v3645 = vunpack.c.l.b16 %v3168
      %v3646 = vunpack.c.l.b16 %v3169
      %v3647 = vunpack.c.l.b16 %v3170
      %v3648 = vunpack.c.l.b16 %v3171
      %v3649 = vunpack.c.l.b16 %v3172
      %v3650 = vunpack.c.l.b16 %v3173
      %v3651 = vunpack.c.l.b16 %v3174
      %v3652 = vunpack.c.l.b16 %v3175
      %v3653 = vunpack.c.l.b16 %v3176
      %v3654 = vunpack.c.l.b16 %v3177
      %v3655 = vunpack.c.l.b16 %v3178
      %v3656 = vunpack.c.l.b16 %v3179
      %v3657 = vunpack.c.l.b16 %v3180
      %v3658 = vunpack.c.l.b16 %v3181
      %v3659 = vunpack.c.l.b16 %v3182
      %v3660 = vunpack.c.l.b16 %v3183
      %v3661 = vunpack.c.l.b16 %v3184
      %v3662 = vunpack.c.l.b16 %v3185
      %v3663 = vunpack.c.l.b16 %v3186
      %v3664 = vunpack.c.l.b16 %v3187
      %v3665 = vpack.c.b16 %v3618, %v3617
      %v3666 = vpack.c.b16 %v3620, %v3619
      %v3667 = vpack.c.b16 %v3622, %v3621
      %v3668 = vpack.c.b16 %v3624, %v3623
      %v3669 = vpack.c.b16 %v3626, %v3625
      %v3670 = vpack.c.b16 %v3628, %v3627
      %v3671 = vpack.c.b16 %v3630, %v3629
      %v3672 = vpack.c.b16 %v3632, %v3631
      %v3673 = vpack.c.b16 %v3634, %v3633
      %v3674 = vpack.c.b16 %v3636, %v3635
      %v3675 = vpack.c.b16 %v3638, %v3637
      %v3676 = vpack.c.b16 %v3640, %v3639
      %v3677 = vpack.c.b16 %v3642, %v3641
      %v3678 = vpack.c.b16 %v3644, %v3643
      %v3679 = vpack.c.b16 %v3646, %v3645
      %v3680 = vpack.c.b16 %v3648, %v3647
      %v3681 = vpack.c.b16 %v3650, %v3649
      %v3682 = vpack.c.b16 %v3652, %v3651
      %v3683 = vpack.c.b16 %v3654, %v3653
      %v3684 = vpack.c.b16 %v3656, %v3655
      %v3685 = vpack.c.b16 %v3658, %v3657
      %v3686 = vpack.c.b16 %v3660, %v3659
      %v3687 = vpack.c.b16 %v3662, %v3661
      %v3688 = vpack.c.b16 %v3664, %v3663
      %3713 = vmatpush.bf16.msra.mxu0 %v3672
      %3714 = vmatpush.bf16.msra.mxu0 %v3671
      %3715 = vmatpush.bf16.msra.mxu0 %v3670
      %3716 = vmatpush.bf16.msra.mxu0 %v3669
      %3717 = vmatpush.bf16.msra.mxu0 %v3668
      %3718 = vmatpush.bf16.msra.mxu0 %v3667
      %3719 = vmatpush.bf16.msra.mxu0 %v3666
      %3720 = vmatpush.bf16.msra.mxu0 %v3665
      %3721 = vmatmul.bf16.gmra.mxu0 %v3084
      %v3722 = vpop.f32.mrf.mxu0
      %v3723 = vadd.f32 %v3550, %v3722
      %v3724 = vpop.f32.mrf.mxu0
      %v3725 = vadd.f32 %v3552, %v3724
      %3726 = vmatmul.bf16.gmra.mxu0 %v3085
      %v3727 = vpop.f32.mrf.mxu0
      %v3728 = vadd.f32 %v3555, %v3727
      %v3729 = vpop.f32.mrf.mxu0
      %v3730 = vadd.f32 %v3557, %v3729
      %3731 = vmatmul.bf16.gmra.mxu0 %v3086
      %v3732 = vpop.f32.mrf.mxu0
      %v3733 = vadd.f32 %v3560, %v3732
      %v3734 = vpop.f32.mrf.mxu0
      %v3735 = vadd.f32 %v3562, %v3734
      %3736 = vmatmul.bf16.gmra.mxu0 %v3087
      %v3737 = vpop.f32.mrf.mxu0
      %v3738 = vadd.f32 %v3565, %v3737
      %v3739 = vpop.f32.mrf.mxu0
      %v3740 = vadd.f32 %v3567, %v3739
      %3741 = vdwg.mxu0
      %3742 = vmatpush.bf16.msra.mxu0 %v3680
      %3743 = vmatpush.bf16.msra.mxu0 %v3679
      %3744 = vmatpush.bf16.msra.mxu0 %v3678
      %3745 = vmatpush.bf16.msra.mxu0 %v3677
      %3746 = vmatpush.bf16.msra.mxu0 %v3676
      %3747 = vmatpush.bf16.msra.mxu0 %v3675
      %3748 = vmatpush.bf16.msra.mxu0 %v3674
      %3749 = vmatpush.bf16.msra.mxu0 %v3673
      %3750 = vmatmul.bf16.gmra.mxu0 %v3108
      %v3751 = vpop.f32.mrf.mxu0
      %v3752 = vadd.f32 %v3723, %v3751
      %v3753 = vpop.f32.mrf.mxu0
      %v3754 = vadd.f32 %v3725, %v3753
      %3755 = vmatmul.bf16.gmra.mxu0 %v3109
      %v3756 = vpop.f32.mrf.mxu0
      %v3757 = vadd.f32 %v3728, %v3756
      %v3758 = vpop.f32.mrf.mxu0
      %v3759 = vadd.f32 %v3730, %v3758
      %3760 = vmatmul.bf16.gmra.mxu0 %v3110
      %v3761 = vpop.f32.mrf.mxu0
      %v3762 = vadd.f32 %v3733, %v3761
      %v3763 = vpop.f32.mrf.mxu0
      %v3764 = vadd.f32 %v3735, %v3763
      %3765 = vmatmul.bf16.gmra.mxu0 %v3111
      %v3766 = vpop.f32.mrf.mxu0
      %v3767 = vadd.f32 %v3738, %v3766
      %v3768 = vpop.f32.mrf.mxu0
      %v3769 = vadd.f32 %v3740, %v3768
      %3770 = vdwg.mxu0
      %3771 = vmatpush.bf16.msra.mxu0 %v3688
      %3772 = vmatpush.bf16.msra.mxu0 %v3687
      %3773 = vmatpush.bf16.msra.mxu0 %v3686
      %3774 = vmatpush.bf16.msra.mxu0 %v3685
      %3775 = vmatpush.bf16.msra.mxu0 %v3684
      %3776 = vmatpush.bf16.msra.mxu0 %v3683
      %3777 = vmatpush.bf16.msra.mxu0 %v3682
      %3778 = vmatpush.bf16.msra.mxu0 %v3681
      %3779 = vmatmul.bf16.gmra.mxu0 %v3132
      %v3780 = vpop.f32.mrf.mxu0
      %v3781 = vadd.f32 %v3752, %v3780
      %v3782 = vpop.f32.mrf.mxu0
      %v3783 = vadd.f32 %v3754, %v3782
      %3784 = vmatmul.bf16.gmra.mxu0 %v3133
      %v3785 = vpop.f32.mrf.mxu0
      %v3786 = vadd.f32 %v3757, %v3785
      %v3787 = vpop.f32.mrf.mxu0
      %v3788 = vadd.f32 %v3759, %v3787
      %3789 = vmatmul.bf16.gmra.mxu0 %v3134
      %v3790 = vpop.f32.mrf.mxu0
      %v3791 = vadd.f32 %v3762, %v3790
      %v3792 = vpop.f32.mrf.mxu0
      %v3793 = vadd.f32 %v3764, %v3792
      %3794 = vmatmul.bf16.gmra.mxu0 %v3135
      %v3795 = vpop.f32.mrf.mxu0
      %v3796 = vadd.f32 %v3767, %v3795
      %v3797 = vpop.f32.mrf.mxu0
      %v3798 = vadd.f32 %v3769, %v3797
      %3799 = vdwg.mxu0
      %v3801 = vrot.slane %v2965, 7
      %v3802 = vsel %vm392, %v3191, %v3801
      %v3803 = vrot.slane %v2966, 7
      %v3804 = vsel %vm392, %v3801, %v3803
      %v3807 = vsel %vm331, %v2987, 0.0
      %v3808 = vsel %vm332, %v2989, 0.0
      %v3809 = vsel %vm333, %v2991, 0.0
      %v3810 = vsel %vm334, %v2993, 0.0
      %v3811 = vsel %vm335, %v3190, 0.0
      %v3812 = vsel %vm336, %v3192, 0.0
      %v3813 = vsel %vm337, %v3802, 0.0
      %v3814 = vsel %vm338, %v3804, 0.0
      %v3815 = vpack.c.bf16 %v3807, %v3807
      %v3816 = vpack.c.bf16 %v3808, %v3808
      %v3817 = vpack.c.bf16 %v3809, %v3809
      %v3818 = vpack.c.bf16 %v3810, %v3810
      %v3819 = vpack.c.bf16 %v3811, %v3811
      %v3820 = vpack.c.bf16 %v3812, %v3812
      %v3821 = vpack.c.bf16 %v3813, %v3813
      %v3822 = vpack.c.bf16 %v3814, %v3814
      %v3823 = vpack.c.bf16 %v2965, %v2965
      %v3824 = vpack.c.bf16 %v2966, %v2966
      %v3826 = vrot.slane %v2966, 1
      %v3827 = vsel %vm443, %v3216, %v3826
      %v3828 = vrot.slane %v2967, 1
      %v3829 = vsel %vm443, %v3826, %v3828
      %v3832 = vsel %vm339, %v3037, 0.0
      %v3833 = vsel %vm340, %v3039, 0.0
      %v3834 = vsel %vm341, %v3041, 0.0
      %v3835 = vsel %vm342, %v3043, 0.0
      %v3836 = vsel %vm343, %v3215, 0.0
      %v3837 = vsel %vm344, %v3217, 0.0
      %v3838 = vsel %vm345, %v3827, 0.0
      %v3839 = vsel %vm346, %v3829, 0.0
      %v3840 = vpack.c.bf16 %v3832, %v3832
      %v3841 = vpack.c.bf16 %v3833, %v3833
      %v3842 = vpack.c.bf16 %v3834, %v3834
      %v3843 = vpack.c.bf16 %v3835, %v3835
      %v3844 = vpack.c.bf16 %v3836, %v3836
      %v3845 = vpack.c.bf16 %v3837, %v3837
      %v3846 = vpack.c.bf16 %v3838, %v3838
      %v3847 = vpack.c.bf16 %v3839, %v3839
      %v3856 = vunpack.c.l.b16 %v3815
      %v3857 = vunpack.c.l.b16 %v3816
      %v3858 = vunpack.c.l.b16 %v3817
      %v3859 = vunpack.c.l.b16 %v3818
      %v3860 = vunpack.c.l.b16 %v3819
      %v3861 = vunpack.c.l.b16 %v3820
      %v3862 = vunpack.c.l.b16 %v3821
      %v3863 = vunpack.c.l.b16 %v3822
      %v3864 = vpack.c.b16 %v3857, %v3856
      %v3865 = vpack.c.b16 %v3859, %v3858
      %v3866 = vpack.c.b16 %v3861, %v3860
      %v3867 = vpack.c.b16 %v3863, %v3862
      %v3874 = vunpack.c.l.b16 %v3823
      %v3875 = vunpack.c.l.b16 %v3824
      %v3876 = vpack.c.b16 %v3875, %v3874
      %v3886 = vunpack.c.l.b16 %v3840
      %v3887 = vunpack.c.l.b16 %v3841
      %v3888 = vunpack.c.l.b16 %v3842
      %v3889 = vunpack.c.l.b16 %v3843
      %v3890 = vunpack.c.l.b16 %v3844
      %v3891 = vunpack.c.l.b16 %v3845
      %v3892 = vunpack.c.l.b16 %v3846
      %v3893 = vunpack.c.l.b16 %v3847
      %v3894 = vpack.c.b16 %v3887, %v3886
      %v3895 = vpack.c.b16 %v3889, %v3888
      %v3896 = vpack.c.b16 %v3891, %v3890
      %v3897 = vpack.c.b16 %v3893, %v3892
      %v3902 = vld [vmem:[%s1320] sm:$0xf]
      %v3903 = vld [vmem:[%s1320 + $0x4] sm:$0xf]
      %v3904 = vld [vmem:[%s1320 + $0x8] sm:$0xf]
      %v3905 = vld [vmem:[%s1320 + $0xc] sm:$0xf]
      %v3906 = vld [vmem:[%s1320 + $0x10] sm:$0xf]
      %v3907 = vld [vmem:[%s1320 + $0x14] sm:$0xf]
      %v3908 = vld [vmem:[%s1320 + $0x18] sm:$0xf]
      %v3909 = vld [vmem:[%s1320 + $0x1c] sm:$0xf]
      %v3910 = vld [vmem:[%s1320 + $0x20] sm:$0xf]
      %v3911 = vld [vmem:[%s1320 + $0x24] sm:$0xf]
      %v3912 = vld [vmem:[%s1320 + $0x28] sm:$0xf]
      %v3913 = vld [vmem:[%s1320 + $0x2c] sm:$0xf]
      %v3914 = vld [vmem:[%s1320 + $0x30] sm:$0xf]
      %v3915 = vld [vmem:[%s1320 + $0x34] sm:$0xf]
      %v3916 = vld [vmem:[%s1320 + $0x38] sm:$0xf]
      %v3917 = vld [vmem:[%s1320 + $0x3c] sm:$0xf]
      %v3918 = vld [vmem:[%s1320 + $0x40] sm:$0xf]
      %v3919 = vld [vmem:[%s1320 + $0x44] sm:$0xf]
      %v3920 = vld [vmem:[%s1320 + $0x48] sm:$0xf]
      %v3921 = vld [vmem:[%s1320 + $0x4c] sm:$0xf]
      %v3922 = vld [vmem:[%s1320 + $0x50] sm:$0xf]
      %v3923 = vld [vmem:[%s1320 + $0x54] sm:$0xf]
      %v3924 = vld [vmem:[%s1320 + $0x58] sm:$0xf]
      %v3925 = vld [vmem:[%s1320 + $0x5c] sm:$0xf]
      %v3926 = vld [vmem:[%s1320 + $0x60] sm:$0xf]
      %v3927 = vld [vmem:[%s1320 + $0x64] sm:$0xf]
      %v3928 = vld [vmem:[%s1320 + $0x68] sm:$0xf]
      %v3929 = vld [vmem:[%s1320 + $0x6c] sm:$0xf]
      %v3930 = vld [vmem:[%s1320 + $0x70] sm:$0xf]
      %v3931 = vld [vmem:[%s1320 + $0x74] sm:$0xf]
      %v3932 = vld [vmem:[%s1320 + $0x78] sm:$0xf]
      %v3933 = vld [vmem:[%s1320 + $0x7c] sm:$0xf]
      %v3934 = vld [vmem:[%s1320 + $0x80] sm:$0xf]
      %v3935 = vld [vmem:[%s1320 + $0x84] sm:$0xf]
      %v3936 = vld [vmem:[%s1320 + $0x88] sm:$0xf]
      %v3937 = vld [vmem:[%s1320 + $0x8c] sm:$0xf]
      %v3938 = vld [vmem:[%s1320 + $0x90] sm:$0xf]
      %v3939 = vld [vmem:[%s1320 + $0x94] sm:$0xf]
      %v3940 = vld [vmem:[%s1320 + $0x98] sm:$0xf]
      %v3941 = vld [vmem:[%s1320 + $0x9c] sm:$0xf]
      %v3942 = vld [vmem:[%s1320 + $0xa0] sm:$0xf]
      %v3943 = vld [vmem:[%s1320 + $0xa4] sm:$0xf]
      %v3944 = vld [vmem:[%s1320 + $0xa8] sm:$0xf]
      %v3945 = vld [vmem:[%s1320 + $0xac] sm:$0xf]
      %v3946 = vld [vmem:[%s1320 + $0xb0] sm:$0xf]
      %v3947 = vld [vmem:[%s1320 + $0xb4] sm:$0xf]
      %v3948 = vld [vmem:[%s1320 + $0xb8] sm:$0xf]
      %v3949 = vld [vmem:[%s1320 + $0xbc] sm:$0xf]
      %v3998 = vunpack.c.l.b16 %v3902
      %v3999 = vunpack.c.l.b16 %v3903
      %v4000 = vunpack.c.l.b16 %v3904
      %v4001 = vunpack.c.l.b16 %v3905
      %v4002 = vunpack.c.l.b16 %v3906
      %v4003 = vunpack.c.l.b16 %v3907
      %v4004 = vunpack.c.l.b16 %v3908
      %v4005 = vunpack.c.l.b16 %v3909
      %v4006 = vunpack.c.l.b16 %v3910
      %v4007 = vunpack.c.l.b16 %v3911
      %v4008 = vunpack.c.l.b16 %v3912
      %v4009 = vunpack.c.l.b16 %v3913
      %v4010 = vunpack.c.l.b16 %v3914
      %v4011 = vunpack.c.l.b16 %v3915
      %v4012 = vunpack.c.l.b16 %v3916
      %v4013 = vunpack.c.l.b16 %v3917
      %v4014 = vunpack.c.l.b16 %v3918
      %v4015 = vunpack.c.l.b16 %v3919
      %v4016 = vunpack.c.l.b16 %v3920
      %v4017 = vunpack.c.l.b16 %v3921
      %v4018 = vunpack.c.l.b16 %v3922
      %v4019 = vunpack.c.l.b16 %v3923
      %v4020 = vunpack.c.l.b16 %v3924
      %v4021 = vunpack.c.l.b16 %v3925
      %v4022 = vunpack.c.l.b16 %v3926
      %v4023 = vunpack.c.l.b16 %v3927
      %v4024 = vunpack.c.l.b16 %v3928
      %v4025 = vunpack.c.l.b16 %v3929
      %v4026 = vunpack.c.l.b16 %v3930
      %v4027 = vunpack.c.l.b16 %v3931
      %v4028 = vunpack.c.l.b16 %v3932
      %v4029 = vunpack.c.l.b16 %v3933
      %v4030 = vunpack.c.l.b16 %v3934
      %v4031 = vunpack.c.l.b16 %v3935
      %v4032 = vunpack.c.l.b16 %v3936
      %v4033 = vunpack.c.l.b16 %v3937
      %v4034 = vunpack.c.l.b16 %v3938
      %v4035 = vunpack.c.l.b16 %v3939
      %v4036 = vunpack.c.l.b16 %v3940
      %v4037 = vunpack.c.l.b16 %v3941
      %v4038 = vunpack.c.l.b16 %v3942
      %v4039 = vunpack.c.l.b16 %v3943
      %v4040 = vunpack.c.l.b16 %v3944
      %v4041 = vunpack.c.l.b16 %v3945
      %v4042 = vunpack.c.l.b16 %v3946
      %v4043 = vunpack.c.l.b16 %v3947
      %v4044 = vunpack.c.l.b16 %v3948
      %v4045 = vunpack.c.l.b16 %v3949
      %v4046 = vpack.c.b16 %v3999, %v3998
      %v4047 = vpack.c.b16 %v4001, %v4000
      %v4048 = vpack.c.b16 %v4003, %v4002
      %v4049 = vpack.c.b16 %v4005, %v4004
      %v4050 = vpack.c.b16 %v4007, %v4006
      %v4051 = vpack.c.b16 %v4009, %v4008
      %v4052 = vpack.c.b16 %v4011, %v4010
      %v4053 = vpack.c.b16 %v4013, %v4012
      %v4054 = vpack.c.b16 %v4015, %v4014
      %v4055 = vpack.c.b16 %v4017, %v4016
      %v4056 = vpack.c.b16 %v4019, %v4018
      %v4057 = vpack.c.b16 %v4021, %v4020
      %v4058 = vpack.c.b16 %v4023, %v4022
      %v4059 = vpack.c.b16 %v4025, %v4024
      %v4060 = vpack.c.b16 %v4027, %v4026
      %v4061 = vpack.c.b16 %v4029, %v4028
      %v4062 = vpack.c.b16 %v4031, %v4030
      %v4063 = vpack.c.b16 %v4033, %v4032
      %v4064 = vpack.c.b16 %v4035, %v4034
      %v4065 = vpack.c.b16 %v4037, %v4036
      %v4066 = vpack.c.b16 %v4039, %v4038
      %v4067 = vpack.c.b16 %v4041, %v4040
      %v4068 = vpack.c.b16 %v4043, %v4042
      %v4069 = vpack.c.b16 %v4045, %v4044
      %4094 = vmatpush.bf16.msra.mxu0 %v4053
      %4095 = vmatpush.bf16.msra.mxu0 %v4052
      %4096 = vmatpush.bf16.msra.mxu0 %v4051
      %4097 = vmatpush.bf16.msra.mxu0 %v4050
      %4098 = vmatpush.bf16.msra.mxu0 %v4049
      %4099 = vmatpush.bf16.msra.mxu0 %v4048
      %4100 = vmatpush.bf16.msra.mxu0 %v4047
      %4101 = vmatpush.bf16.msra.mxu0 %v4046
      %4102 = vmatmul.bf16.gmra.mxu0 %v3864
      %v4103 = vpop.f32.mrf.mxu0
      %v4104 = vadd.f32 0.0, %v4103
      %v4105 = vpop.f32.mrf.mxu0
      %v4106 = vadd.f32 0.0, %v4105
      %4107 = vmatmul.bf16.gmra.mxu0 %v3865
      %v4108 = vpop.f32.mrf.mxu0
      %v4109 = vadd.f32 0.0, %v4108
      %v4110 = vpop.f32.mrf.mxu0
      %v4111 = vadd.f32 0.0, %v4110
      %4112 = vmatmul.bf16.gmra.mxu0 %v3866
      %v4113 = vpop.f32.mrf.mxu0
      %v4114 = vadd.f32 0.0, %v4113
      %v4115 = vpop.f32.mrf.mxu0
      %v4116 = vadd.f32 0.0, %v4115
      %4117 = vmatmul.bf16.gmra.mxu0 %v3867
      %v4118 = vpop.f32.mrf.mxu0
      %v4119 = vadd.f32 0.0, %v4118
      %v4120 = vpop.f32.mrf.mxu0
      %v4121 = vadd.f32 0.0, %v4120
      %4122 = vdwg.mxu0
      %4123 = vmatpush.bf16.msra.mxu0 %v4061
      %4124 = vmatpush.bf16.msra.mxu0 %v4060
      %4125 = vmatpush.bf16.msra.mxu0 %v4059
      %4126 = vmatpush.bf16.msra.mxu0 %v4058
      %4127 = vmatpush.bf16.msra.mxu0 %v4057
      %4128 = vmatpush.bf16.msra.mxu0 %v4056
      %4129 = vmatpush.bf16.msra.mxu0 %v4055
      %4130 = vmatpush.bf16.msra.mxu0 %v4054
      %4131 = vmatmul.bf16.gmra.mxu0 %v3110
      %v4132 = vpop.f32.mrf.mxu0
      %v4133 = vadd.f32 %v4104, %v4132
      %v4134 = vpop.f32.mrf.mxu0
      %v4135 = vadd.f32 %v4106, %v4134
      %4136 = vmatmul.bf16.gmra.mxu0 %v3111
      %v4137 = vpop.f32.mrf.mxu0
      %v4138 = vadd.f32 %v4109, %v4137
      %v4139 = vpop.f32.mrf.mxu0
      %v4140 = vadd.f32 %v4111, %v4139
      %4141 = vmatmul.bf16.gmra.mxu0 %v3264
      %v4142 = vpop.f32.mrf.mxu0
      %v4143 = vadd.f32 %v4114, %v4142
      %v4144 = vpop.f32.mrf.mxu0
      %v4145 = vadd.f32 %v4116, %v4144
      %4146 = vmatmul.bf16.gmra.mxu0 %v3876
      %v4147 = vpop.f32.mrf.mxu0
      %v4148 = vadd.f32 %v4119, %v4147
      %v4149 = vpop.f32.mrf.mxu0
      %v4150 = vadd.f32 %v4121, %v4149
      %4151 = vdwg.mxu0
      %4152 = vmatpush.bf16.msra.mxu0 %v4069
      %4153 = vmatpush.bf16.msra.mxu0 %v4068
      %4154 = vmatpush.bf16.msra.mxu0 %v4067
      %4155 = vmatpush.bf16.msra.mxu0 %v4066
      %4156 = vmatpush.bf16.msra.mxu0 %v4065
      %4157 = vmatpush.bf16.msra.mxu0 %v4064
      %4158 = vmatpush.bf16.msra.mxu0 %v4063
      %4159 = vmatpush.bf16.msra.mxu0 %v4062
      %4160 = vmatmul.bf16.gmra.mxu0 %v3894
      %v4161 = vpop.f32.mrf.mxu0
      %v4162 = vadd.f32 %v4133, %v4161
      %v4163 = vpop.f32.mrf.mxu0
      %v4164 = vadd.f32 %v4135, %v4163
      %4165 = vmatmul.bf16.gmra.mxu0 %v3895
      %v4166 = vpop.f32.mrf.mxu0
      %v4167 = vadd.f32 %v4138, %v4166
      %v4168 = vpop.f32.mrf.mxu0
      %v4169 = vadd.f32 %v4140, %v4168
      %4170 = vmatmul.bf16.gmra.mxu0 %v3896
      %v4171 = vpop.f32.mrf.mxu0
      %v4172 = vadd.f32 %v4143, %v4171
      %v4173 = vpop.f32.mrf.mxu0
      %v4174 = vadd.f32 %v4145, %v4173
      %4175 = vmatmul.bf16.gmra.mxu0 %v3897
      %v4176 = vpop.f32.mrf.mxu0
      %v4177 = vadd.f32 %v4148, %v4176
      %v4178 = vpop.f32.mrf.mxu0
      %v4179 = vadd.f32 %v4150, %v4178
      %4180 = vdwg.mxu0
      %v4181 = vadd.f32 %v3781, %v4162
      %v4182 = vadd.f32 %v3783, %v4164
      %v4183 = vadd.f32 %v3786, %v4167
      %v4184 = vadd.f32 %v3788, %v4169
      %v4185 = vadd.f32 %v3791, %v4172
      %v4186 = vadd.f32 %v3793, %v4174
      %v4187 = vadd.f32 %v3796, %v4177
      %v4188 = vadd.f32 %v3798, %v4179
      %v4189 = vadd.f32 %v4181, %v1609
      %v4190 = vadd.f32 %v4182, %v1609
      %v4191 = vadd.f32 %v4183, %v1609
      %v4192 = vadd.f32 %v4184, %v1609
      %v4193 = vadd.f32 %v4185, %v1609
      %v4194 = vadd.f32 %v4186, %v1609
      %v4195 = vadd.f32 %v4187, %v1609
      %v4196 = vadd.f32 %v4188, %v1609
      %v4197 = vmax.f32 %v4189, 0.0
      %v4198 = vmax.f32 %v4190, 0.0
      %v4199 = vmax.f32 %v4191, 0.0
      %v4200 = vmax.f32 %v4192, 0.0
      %v4201 = vmax.f32 %v4193, 0.0
      %v4202 = vmax.f32 %v4194, 0.0
      %v4203 = vmax.f32 %v4195, 0.0
      %v4204 = vmax.f32 %v4196, 0.0
      %v4205 = vmin.f32 %v4197, 6.0
      %v4206 = vmin.f32 %v4198, 6.0
      %v4207 = vmin.f32 %v4199, 6.0
      %v4208 = vmin.f32 %v4200, 6.0
      %v4209 = vmin.f32 %v4201, 6.0
      %v4210 = vmin.f32 %v4202, 6.0
      %v4211 = vmin.f32 %v4203, 6.0
      %v4212 = vmin.f32 %v4204, 6.0
      %v4213 = vpack.c.bf16 %v4205, %v4205
      %v4214 = vpack.c.bf16 %v4206, %v4206
      %v4215 = vpack.c.bf16 %v4207, %v4207
      %v4216 = vpack.c.bf16 %v4208, %v4208
      %v4217 = vpack.c.bf16 %v4209, %v4209
      %v4218 = vpack.c.bf16 %v4210, %v4210
      %v4219 = vpack.c.bf16 %v4211, %v4211
      %v4220 = vpack.c.bf16 %v4212, %v4212
      %4221 = vst [vmem:[#allocation2 + $0x4c] sm:$0xf] %v4213
      %4222 = vst [vmem:[#allocation2 + $0x50] sm:$0xf] %v4214
      %4223 = vst [vmem:[#allocation2 + $0x54] sm:$0xf] %v4215
      %4224 = vst [vmem:[#allocation2 + $0x58] sm:$0xf] %v4216
      %4225 = vst [vmem:[#allocation2 + $0x5c] sm:$0xf] %v4217
      %4226 = vst [vmem:[#allocation2 + $0x60] sm:$0xf] %v4218
      %4227 = vst [vmem:[#allocation2 + $0x64] sm:$0xf] %v4219
      %4228 = vst [vmem:[#allocation2 + $0x68] sm:$0xf] %v4220
      %v4229 = vld [vmem:[%s219 + $0x60] sm:$0xf]
      %v4230 = vld [vmem:[%s219 + $0x64] sm:$0xf]
      %v4231 = vld [vmem:[%s219 + $0x68] sm:$0xf]
      %v4232 = vld [vmem:[%s219 + $0x6c] sm:$0xf]
      %v4233 = vld [vmem:[%s219 + $0x70] sm:$0xf]
      %v4234 = vld [vmem:[%s219 + $0x74] sm:$0xf]
      %v4235 = vld [vmem:[%s219 + $0x78] sm:$0xf]
      %v4236 = vld [vmem:[%s219 + $0x7c] sm:$0xf]
      %v4237 = vld [vmem:[%s219 + $0x80] sm:$0xf]
      %v4238 = vld [vmem:[%s219 + $0x84] sm:$0xf]
      %v4239 = vld [vmem:[%s219 + $0x88] sm:$0xf]
      %v4240 = vld [vmem:[%s219 + $0x8c] sm:$0xf]
      %v4241 = vld [vmem:[%s219 + $0x90] sm:$0xf]
      %v4242 = vld [vmem:[%s219 + $0x94] sm:$0xf]
      %v4243 = vunpack.c.l.bf16 %v4229
      %v4244 = vunpack.c.l.bf16 %v4230
      %v4245 = vunpack.c.l.bf16 %v4231
      %v4246 = vunpack.c.l.bf16 %v4232
      %v4247 = vunpack.c.l.bf16 %v4233
      %v4248 = vunpack.c.l.bf16 %v4234
      %v4249 = vunpack.c.l.bf16 %v4235
      %v4250 = vunpack.c.l.bf16 %v4236
      %v4251 = vunpack.c.l.bf16 %v4237
      %v4252 = vunpack.c.l.bf16 %v4238
      %v4253 = vunpack.c.l.bf16 %v4239
      %v4254 = vunpack.c.l.bf16 %v4240
      %v4255 = vunpack.c.l.bf16 %v4241
      %v4256 = vunpack.c.l.bf16 %v4242
      %v4266 = vrot.slane %v4243, 7
      %v4267 = vrot.slane %v4244, 7
      %v4268 = vsel %vm392, %v4266, %v4267
      %v4269 = vrot.slane %v4245, 7
      %v4270 = vsel %vm392, %v4267, %v4269
      %v4271 = vrot.slane %v4246, 7
      %v4272 = vsel %vm392, %v4269, %v4271
      %v4273 = vrot.slane %v4247, 7
      %v4274 = vsel %vm392, %v4271, %v4273
      %v4275 = vrot.slane %v4248, 7
      %v4276 = vsel %vm392, %v4273, %v4275
      %v4277 = vrot.slane %v4249, 7
      %v4278 = vsel %vm392, %v4275, %v4277
      %v4279 = vrot.slane %v4250, 7
      %v4280 = vsel %vm392, %v4277, %v4279
      %v4281 = vrot.slane %v4251, 7
      %v4282 = vsel %vm392, %v4279, %v4281
      %v4291 = vsel %vm331, %v4268, 0.0
      %v4292 = vsel %vm332, %v4270, 0.0
      %v4293 = vsel %vm333, %v4272, 0.0
      %v4294 = vsel %vm334, %v4274, 0.0
      %v4295 = vsel %vm335, %v4276, 0.0
      %v4296 = vsel %vm336, %v4278, 0.0
      %v4297 = vsel %vm337, %v4280, 0.0
      %v4298 = vsel %vm338, %v4282, 0.0
      %v4299 = vpack.c.bf16 %v4291, %v4291
      %v4300 = vpack.c.bf16 %v4292, %v4292
      %v4301 = vpack.c.bf16 %v4293, %v4293
      %v4302 = vpack.c.bf16 %v4294, %v4294
      %v4303 = vpack.c.bf16 %v4295, %v4295
      %v4304 = vpack.c.bf16 %v4296, %v4296
      %v4305 = vpack.c.bf16 %v4297, %v4297
      %v4306 = vpack.c.bf16 %v4298, %v4298
      %v4307 = vpack.c.bf16 %v4244, %v4244
      %v4308 = vpack.c.bf16 %v4245, %v4245
      %v4309 = vpack.c.bf16 %v4246, %v4246
      %v4310 = vpack.c.bf16 %v4247, %v4247
      %v4311 = vpack.c.bf16 %v4248, %v4248
      %v4312 = vpack.c.bf16 %v4249, %v4249
      %v4313 = vpack.c.bf16 %v4250, %v4250
      %v4314 = vpack.c.bf16 %v4251, %v4251
      %v4316 = vrot.slane %v4244, 1
      %v4317 = vrot.slane %v4245, 1
      %v4318 = vsel %vm443, %v4316, %v4317
      %v4319 = vrot.slane %v4246, 1
      %v4320 = vsel %vm443, %v4317, %v4319
      %v4321 = vrot.slane %v4247, 1
      %v4322 = vsel %vm443, %v4319, %v4321
      %v4323 = vrot.slane %v4248, 1
      %v4324 = vsel %vm443, %v4321, %v4323
      %v4325 = vrot.slane %v4249, 1
      %v4326 = vsel %vm443, %v4323, %v4325
      %v4327 = vrot.slane %v4250, 1
      %v4328 = vsel %vm443, %v4325, %v4327
      %v4329 = vrot.slane %v4251, 1
      %v4330 = vsel %vm443, %v4327, %v4329
      %v4331 = vrot.slane %v4252, 1
      %v4332 = vsel %vm443, %v4329, %v4331
      %v4341 = vsel %vm339, %v4318, 0.0
      %v4342 = vsel %vm340, %v4320, 0.0
      %v4343 = vsel %vm341, %v4322, 0.0
      %v4344 = vsel %vm342, %v4324, 0.0
      %v4345 = vsel %vm343, %v4326, 0.0
      %v4346 = vsel %vm344, %v4328, 0.0
      %v4347 = vsel %vm345, %v4330, 0.0
      %v4348 = vsel %vm346, %v4332, 0.0
      %v4349 = vpack.c.bf16 %v4341, %v4341
      %v4350 = vpack.c.bf16 %v4342, %v4342
      %v4351 = vpack.c.bf16 %v4343, %v4343
      %v4352 = vpack.c.bf16 %v4344, %v4344
      %v4353 = vpack.c.bf16 %v4345, %v4345
      %v4354 = vpack.c.bf16 %v4346, %v4346
      %v4355 = vpack.c.bf16 %v4347, %v4347
      %v4356 = vpack.c.bf16 %v4348, %v4348
      %v4365 = vunpack.c.l.b16 %v4299
      %v4366 = vunpack.c.l.b16 %v4300
      %v4367 = vunpack.c.l.b16 %v4301
      %v4368 = vunpack.c.l.b16 %v4302
      %v4369 = vunpack.c.l.b16 %v4303
      %v4370 = vunpack.c.l.b16 %v4304
      %v4371 = vunpack.c.l.b16 %v4305
      %v4372 = vunpack.c.l.b16 %v4306
      %v4373 = vpack.c.b16 %v4366, %v4365
      %v4374 = vpack.c.b16 %v4368, %v4367
      %v4375 = vpack.c.b16 %v4370, %v4369
      %v4376 = vpack.c.b16 %v4372, %v4371
      %v4389 = vunpack.c.l.b16 %v4307
      %v4390 = vunpack.c.l.b16 %v4308
      %v4391 = vunpack.c.l.b16 %v4309
      %v4392 = vunpack.c.l.b16 %v4310
      %v4393 = vunpack.c.l.b16 %v4311
      %v4394 = vunpack.c.l.b16 %v4312
      %v4395 = vunpack.c.l.b16 %v4313
      %v4396 = vunpack.c.l.b16 %v4314
      %v4397 = vpack.c.b16 %v4390, %v4389
      %v4398 = vpack.c.b16 %v4392, %v4391
      %v4399 = vpack.c.b16 %v4394, %v4393
      %v4400 = vpack.c.b16 %v4396, %v4395
      %v4413 = vunpack.c.l.b16 %v4349
      %v4414 = vunpack.c.l.b16 %v4350
      %v4415 = vunpack.c.l.b16 %v4351
      %v4416 = vunpack.c.l.b16 %v4352
      %v4417 = vunpack.c.l.b16 %v4353
      %v4418 = vunpack.c.l.b16 %v4354
      %v4419 = vunpack.c.l.b16 %v4355
      %v4420 = vunpack.c.l.b16 %v4356
      %v4421 = vpack.c.b16 %v4414, %v4413
      %v4422 = vpack.c.b16 %v4416, %v4415
      %v4423 = vpack.c.b16 %v4418, %v4417
      %v4424 = vpack.c.b16 %v4420, %v4419
      %v4429 = vld [vmem:[%s1] sm:$0xf]
      %v4430 = vld [vmem:[%s1 + $0x4] sm:$0xf]
      %v4431 = vld [vmem:[%s1 + $0x8] sm:$0xf]
      %v4432 = vld [vmem:[%s1 + $0xc] sm:$0xf]
      %v4433 = vld [vmem:[%s1 + $0x10] sm:$0xf]
      %v4434 = vld [vmem:[%s1 + $0x14] sm:$0xf]
      %v4435 = vld [vmem:[%s1 + $0x18] sm:$0xf]
      %v4436 = vld [vmem:[%s1 + $0x1c] sm:$0xf]
      %v4437 = vld [vmem:[%s1 + $0x20] sm:$0xf]
      %v4438 = vld [vmem:[%s1 + $0x24] sm:$0xf]
      %v4439 = vld [vmem:[%s1 + $0x28] sm:$0xf]
      %v4440 = vld [vmem:[%s1 + $0x2c] sm:$0xf]
      %v4441 = vld [vmem:[%s1 + $0x30] sm:$0xf]
      %v4442 = vld [vmem:[%s1 + $0x34] sm:$0xf]
      %v4443 = vld [vmem:[%s1 + $0x38] sm:$0xf]
      %v4444 = vld [vmem:[%s1 + $0x3c] sm:$0xf]
      %v4445 = vld [vmem:[%s1 + $0x40] sm:$0xf]
      %v4446 = vld [vmem:[%s1 + $0x44] sm:$0xf]
      %v4447 = vld [vmem:[%s1 + $0x48] sm:$0xf]
      %v4448 = vld [vmem:[%s1 + $0x4c] sm:$0xf]
      %v4449 = vld [vmem:[%s1 + $0x50] sm:$0xf]
      %v4450 = vld [vmem:[%s1 + $0x54] sm:$0xf]
      %v4451 = vld [vmem:[%s1 + $0x58] sm:$0xf]
      %v4452 = vld [vmem:[%s1 + $0x5c] sm:$0xf]
      %v4453 = vld [vmem:[%s1 + $0x60] sm:$0xf]
      %v4454 = vld [vmem:[%s1 + $0x64] sm:$0xf]
      %v4455 = vld [vmem:[%s1 + $0x68] sm:$0xf]
      %v4456 = vld [vmem:[%s1 + $0x6c] sm:$0xf]
      %v4457 = vld [vmem:[%s1 + $0x70] sm:$0xf]
      %v4458 = vld [vmem:[%s1 + $0x74] sm:$0xf]
      %v4459 = vld [vmem:[%s1 + $0x78] sm:$0xf]
      %v4460 = vld [vmem:[%s1 + $0x7c] sm:$0xf]
      %v4461 = vld [vmem:[%s1 + $0x80] sm:$0xf]
      %v4462 = vld [vmem:[%s1 + $0x84] sm:$0xf]
      %v4463 = vld [vmem:[%s1 + $0x88] sm:$0xf]
      %v4464 = vld [vmem:[%s1 + $0x8c] sm:$0xf]
      %v4465 = vld [vmem:[%s1 + $0x90] sm:$0xf]
      %v4466 = vld [vmem:[%s1 + $0x94] sm:$0xf]
      %v4467 = vld [vmem:[%s1 + $0x98] sm:$0xf]
      %v4468 = vld [vmem:[%s1 + $0x9c] sm:$0xf]
      %v4469 = vld [vmem:[%s1 + $0xa0] sm:$0xf]
      %v4470 = vld [vmem:[%s1 + $0xa4] sm:$0xf]
      %v4471 = vld [vmem:[%s1 + $0xa8] sm:$0xf]
      %v4472 = vld [vmem:[%s1 + $0xac] sm:$0xf]
      %v4473 = vld [vmem:[%s1 + $0xb0] sm:$0xf]
      %v4474 = vld [vmem:[%s1 + $0xb4] sm:$0xf]
      %v4475 = vld [vmem:[%s1 + $0xb8] sm:$0xf]
      %v4476 = vld [vmem:[%s1 + $0xbc] sm:$0xf]
      %v4478 = vrot.slane %v4252, 7
      %v4479 = vsel %vm392, %v4281, %v4478
      %v4480 = vrot.slane %v4253, 7
      %v4481 = vsel %vm392, %v4478, %v4480
      %v4484 = vsel %vm331, %v4272, 0.0
      %v4485 = vsel %vm332, %v4274, 0.0
      %v4486 = vsel %vm333, %v4276, 0.0
      %v4487 = vsel %vm334, %v4278, 0.0
      %v4488 = vsel %vm335, %v4280, 0.0
      %v4489 = vsel %vm336, %v4282, 0.0
      %v4490 = vsel %vm337, %v4479, 0.0
      %v4491 = vsel %vm338, %v4481, 0.0
      %v4492 = vpack.c.bf16 %v4484, %v4484
      %v4493 = vpack.c.bf16 %v4485, %v4485
      %v4494 = vpack.c.bf16 %v4486, %v4486
      %v4495 = vpack.c.bf16 %v4487, %v4487
      %v4496 = vpack.c.bf16 %v4488, %v4488
      %v4497 = vpack.c.bf16 %v4489, %v4489
      %v4498 = vpack.c.bf16 %v4490, %v4490
      %v4499 = vpack.c.bf16 %v4491, %v4491
      %v4500 = vpack.c.bf16 %v4252, %v4252
      %v4501 = vpack.c.bf16 %v4253, %v4253
      %v4503 = vrot.slane %v4253, 1
      %v4504 = vsel %vm443, %v4331, %v4503
      %v4505 = vrot.slane %v4254, 1
      %v4506 = vsel %vm443, %v4503, %v4505
      %v4509 = vsel %vm339, %v4322, 0.0
      %v4510 = vsel %vm340, %v4324, 0.0
      %v4511 = vsel %vm341, %v4326, 0.0
      %v4512 = vsel %vm342, %v4328, 0.0
      %v4513 = vsel %vm343, %v4330, 0.0
      %v4514 = vsel %vm344, %v4332, 0.0
      %v4515 = vsel %vm345, %v4504, 0.0
      %v4516 = vsel %vm346, %v4506, 0.0
      %v4517 = vpack.c.bf16 %v4509, %v4509
      %v4518 = vpack.c.bf16 %v4510, %v4510
      %v4519 = vpack.c.bf16 %v4511, %v4511
      %v4520 = vpack.c.bf16 %v4512, %v4512
      %v4521 = vpack.c.bf16 %v4513, %v4513
      %v4522 = vpack.c.bf16 %v4514, %v4514
      %v4523 = vpack.c.bf16 %v4515, %v4515
      %v4524 = vpack.c.bf16 %v4516, %v4516
      %v4533 = vunpack.c.l.b16 %v4492
      %v4534 = vunpack.c.l.b16 %v4493
      %v4535 = vunpack.c.l.b16 %v4494
      %v4536 = vunpack.c.l.b16 %v4495
      %v4537 = vunpack.c.l.b16 %v4496
      %v4538 = vunpack.c.l.b16 %v4497
      %v4539 = vunpack.c.l.b16 %v4498
      %v4540 = vunpack.c.l.b16 %v4499
      %v4541 = vpack.c.b16 %v4534, %v4533
      %v4542 = vpack.c.b16 %v4536, %v4535
      %v4543 = vpack.c.b16 %v4538, %v4537
      %v4544 = vpack.c.b16 %v4540, %v4539
      %v4551 = vunpack.c.l.b16 %v4500
      %v4552 = vunpack.c.l.b16 %v4501
      %v4553 = vpack.c.b16 %v4552, %v4551
      %v4563 = vunpack.c.l.b16 %v4517
      %v4564 = vunpack.c.l.b16 %v4518
      %v4565 = vunpack.c.l.b16 %v4519
      %v4566 = vunpack.c.l.b16 %v4520
      %v4567 = vunpack.c.l.b16 %v4521
      %v4568 = vunpack.c.l.b16 %v4522
      %v4569 = vunpack.c.l.b16 %v4523
      %v4570 = vunpack.c.l.b16 %v4524
      %v4571 = vpack.c.b16 %v4564, %v4563
      %v4572 = vpack.c.b16 %v4566, %v4565
      %v4573 = vpack.c.b16 %v4568, %v4567
      %v4574 = vpack.c.b16 %v4570, %v4569
      %v4579 = vld [vmem:[%s707] sm:$0xf]
      %v4580 = vld [vmem:[%s707 + $0x4] sm:$0xf]
      %v4581 = vld [vmem:[%s707 + $0x8] sm:$0xf]
      %v4582 = vld [vmem:[%s707 + $0xc] sm:$0xf]
      %v4583 = vld [vmem:[%s707 + $0x10] sm:$0xf]
      %v4584 = vld [vmem:[%s707 + $0x14] sm:$0xf]
      %v4585 = vld [vmem:[%s707 + $0x18] sm:$0xf]
      %v4586 = vld [vmem:[%s707 + $0x1c] sm:$0xf]
      %v4587 = vld [vmem:[%s707 + $0x20] sm:$0xf]
      %v4588 = vld [vmem:[%s707 + $0x24] sm:$0xf]
      %v4589 = vld [vmem:[%s707 + $0x28] sm:$0xf]
      %v4590 = vld [vmem:[%s707 + $0x2c] sm:$0xf]
      %v4591 = vld [vmem:[%s707 + $0x30] sm:$0xf]
      %v4592 = vld [vmem:[%s707 + $0x34] sm:$0xf]
      %v4593 = vld [vmem:[%s707 + $0x38] sm:$0xf]
      %v4594 = vld [vmem:[%s707 + $0x3c] sm:$0xf]
      %v4595 = vld [vmem:[%s707 + $0x40] sm:$0xf]
      %v4596 = vld [vmem:[%s707 + $0x44] sm:$0xf]
      %v4597 = vld [vmem:[%s707 + $0x48] sm:$0xf]
      %v4598 = vld [vmem:[%s707 + $0x4c] sm:$0xf]
      %v4599 = vld [vmem:[%s707 + $0x50] sm:$0xf]
      %v4600 = vld [vmem:[%s707 + $0x54] sm:$0xf]
      %v4601 = vld [vmem:[%s707 + $0x58] sm:$0xf]
      %v4602 = vld [vmem:[%s707 + $0x5c] sm:$0xf]
      %v4603 = vld [vmem:[%s707 + $0x60] sm:$0xf]
      %v4604 = vld [vmem:[%s707 + $0x64] sm:$0xf]
      %v4605 = vld [vmem:[%s707 + $0x68] sm:$0xf]
      %v4606 = vld [vmem:[%s707 + $0x6c] sm:$0xf]
      %v4607 = vld [vmem:[%s707 + $0x70] sm:$0xf]
      %v4608 = vld [vmem:[%s707 + $0x74] sm:$0xf]
      %v4609 = vld [vmem:[%s707 + $0x78] sm:$0xf]
      %v4610 = vld [vmem:[%s707 + $0x7c] sm:$0xf]
      %v4611 = vld [vmem:[%s707 + $0x80] sm:$0xf]
      %v4612 = vld [vmem:[%s707 + $0x84] sm:$0xf]
      %v4613 = vld [vmem:[%s707 + $0x88] sm:$0xf]
      %v4614 = vld [vmem:[%s707 + $0x8c] sm:$0xf]
      %v4615 = vld [vmem:[%s707 + $0x90] sm:$0xf]
      %v4616 = vld [vmem:[%s707 + $0x94] sm:$0xf]
      %v4617 = vld [vmem:[%s707 + $0x98] sm:$0xf]
      %v4618 = vld [vmem:[%s707 + $0x9c] sm:$0xf]
      %v4619 = vld [vmem:[%s707 + $0xa0] sm:$0xf]
      %v4620 = vld [vmem:[%s707 + $0xa4] sm:$0xf]
      %v4621 = vld [vmem:[%s707 + $0xa8] sm:$0xf]
      %v4622 = vld [vmem:[%s707 + $0xac] sm:$0xf]
      %v4623 = vld [vmem:[%s707 + $0xb0] sm:$0xf]
      %v4624 = vld [vmem:[%s707 + $0xb4] sm:$0xf]
      %v4625 = vld [vmem:[%s707 + $0xb8] sm:$0xf]
      %v4626 = vld [vmem:[%s707 + $0xbc] sm:$0xf]
      %v4675 = vunpack.c.l.b16 %v4579
      %v4676 = vunpack.c.l.b16 %v4580
      %v4677 = vunpack.c.l.b16 %v4581
      %v4678 = vunpack.c.l.b16 %v4582
      %v4679 = vunpack.c.l.b16 %v4583
      %v4680 = vunpack.c.l.b16 %v4584
      %v4681 = vunpack.c.l.b16 %v4585
      %v4682 = vunpack.c.l.b16 %v4586
      %v4683 = vunpack.c.l.b16 %v4587
      %v4684 = vunpack.c.l.b16 %v4588
      %v4685 = vunpack.c.l.b16 %v4589
      %v4686 = vunpack.c.l.b16 %v4590
      %v4687 = vunpack.c.l.b16 %v4591
      %v4688 = vunpack.c.l.b16 %v4592
      %v4689 = vunpack.c.l.b16 %v4593
      %v4690 = vunpack.c.l.b16 %v4594
      %v4691 = vunpack.c.l.b16 %v4595
      %v4692 = vunpack.c.l.b16 %v4596
      %v4693 = vunpack.c.l.b16 %v4597
      %v4694 = vunpack.c.l.b16 %v4598
      %v4695 = vunpack.c.l.b16 %v4599
      %v4696 = vunpack.c.l.b16 %v4600
      %v4697 = vunpack.c.l.b16 %v4601
      %v4698 = vunpack.c.l.b16 %v4602
      %v4699 = vunpack.c.l.b16 %v4603
      %v4700 = vunpack.c.l.b16 %v4604
      %v4701 = vunpack.c.l.b16 %v4605
      %v4702 = vunpack.c.l.b16 %v4606
      %v4703 = vunpack.c.l.b16 %v4607
      %v4704 = vunpack.c.l.b16 %v4608
      %v4705 = vunpack.c.l.b16 %v4609
      %v4706 = vunpack.c.l.b16 %v4610
      %v4707 = vunpack.c.l.b16 %v4611
      %v4708 = vunpack.c.l.b16 %v4612
      %v4709 = vunpack.c.l.b16 %v4613
      %v4710 = vunpack.c.l.b16 %v4614
      %v4711 = vunpack.c.l.b16 %v4615
      %v4712 = vunpack.c.l.b16 %v4616
      %v4713 = vunpack.c.l.b16 %v4617
      %v4714 = vunpack.c.l.b16 %v4618
      %v4715 = vunpack.c.l.b16 %v4619
      %v4716 = vunpack.c.l.b16 %v4620
      %v4717 = vunpack.c.l.b16 %v4621
      %v4718 = vunpack.c.l.b16 %v4622
      %v4719 = vunpack.c.l.b16 %v4623
      %v4720 = vunpack.c.l.b16 %v4624
      %v4721 = vunpack.c.l.b16 %v4625
      %v4722 = vunpack.c.l.b16 %v4626
      %v4723 = vpack.c.b16 %v4676, %v4675
      %v4724 = vpack.c.b16 %v4678, %v4677
      %v4725 = vpack.c.b16 %v4680, %v4679
      %v4726 = vpack.c.b16 %v4682, %v4681
      %v4727 = vpack.c.b16 %v4684, %v4683
      %v4728 = vpack.c.b16 %v4686, %v4685
      %v4729 = vpack.c.b16 %v4688, %v4687
      %v4730 = vpack.c.b16 %v4690, %v4689
      %v4731 = vpack.c.b16 %v4692, %v4691
      %v4732 = vpack.c.b16 %v4694, %v4693
      %v4733 = vpack.c.b16 %v4696, %v4695
      %v4734 = vpack.c.b16 %v4698, %v4697
      %v4735 = vpack.c.b16 %v4700, %v4699
      %v4736 = vpack.c.b16 %v4702, %v4701
      %v4737 = vpack.c.b16 %v4704, %v4703
      %v4738 = vpack.c.b16 %v4706, %v4705
      %v4739 = vpack.c.b16 %v4708, %v4707
      %v4740 = vpack.c.b16 %v4710, %v4709
      %v4741 = vpack.c.b16 %v4712, %v4711
      %v4742 = vpack.c.b16 %v4714, %v4713
      %v4743 = vpack.c.b16 %v4716, %v4715
      %v4744 = vpack.c.b16 %v4718, %v4717
      %v4745 = vpack.c.b16 %v4720, %v4719
      %v4746 = vpack.c.b16 %v4722, %v4721
      %4771 = vmatpush.bf16.msra.mxu0 %v4730
      %4772 = vmatpush.bf16.msra.mxu0 %v4729
      %4773 = vmatpush.bf16.msra.mxu0 %v4728
      %4774 = vmatpush.bf16.msra.mxu0 %v4727
      %4775 = vmatpush.bf16.msra.mxu0 %v4726
      %4776 = vmatpush.bf16.msra.mxu0 %v4725
      %4777 = vmatpush.bf16.msra.mxu0 %v4724
      %4778 = vmatpush.bf16.msra.mxu0 %v4723
      %4779 = vmatmul.bf16.gmra.mxu0 %v4541
      %v4780 = vpop.f32.mrf.mxu0
      %v4781 = vadd.f32 0.0, %v4780
      %v4782 = vpop.f32.mrf.mxu0
      %v4783 = vadd.f32 0.0, %v4782
      %4784 = vmatmul.bf16.gmra.mxu0 %v4542
      %v4785 = vpop.f32.mrf.mxu0
      %v4786 = vadd.f32 0.0, %v4785
      %v4787 = vpop.f32.mrf.mxu0
      %v4788 = vadd.f32 0.0, %v4787
      %4789 = vmatmul.bf16.gmra.mxu0 %v4543
      %v4790 = vpop.f32.mrf.mxu0
      %v4791 = vadd.f32 0.0, %v4790
      %v4792 = vpop.f32.mrf.mxu0
      %v4793 = vadd.f32 0.0, %v4792
      %4794 = vmatmul.bf16.gmra.mxu0 %v4544
      %v4795 = vpop.f32.mrf.mxu0
      %v4796 = vadd.f32 0.0, %v4795
      %v4797 = vpop.f32.mrf.mxu0
      %v4798 = vadd.f32 0.0, %v4797
      %4799 = vdwg.mxu0
      %4800 = vmatpush.bf16.msra.mxu0 %v4738
      %4801 = vmatpush.bf16.msra.mxu0 %v4737
      %4802 = vmatpush.bf16.msra.mxu0 %v4736
      %4803 = vmatpush.bf16.msra.mxu0 %v4735
      %4804 = vmatpush.bf16.msra.mxu0 %v4734
      %4805 = vmatpush.bf16.msra.mxu0 %v4733
      %4806 = vmatpush.bf16.msra.mxu0 %v4732
      %4807 = vmatpush.bf16.msra.mxu0 %v4731
      %4808 = vmatmul.bf16.gmra.mxu0 %v4398
      %v4809 = vpop.f32.mrf.mxu0
      %v4810 = vadd.f32 %v4781, %v4809
      %v4811 = vpop.f32.mrf.mxu0
      %v4812 = vadd.f32 %v4783, %v4811
      %4813 = vmatmul.bf16.gmra.mxu0 %v4399
      %v4814 = vpop.f32.mrf.mxu0
      %v4815 = vadd.f32 %v4786, %v4814
      %v4816 = vpop.f32.mrf.mxu0
      %v4817 = vadd.f32 %v4788, %v4816
      %4818 = vmatmul.bf16.gmra.mxu0 %v4400
      %v4819 = vpop.f32.mrf.mxu0
      %v4820 = vadd.f32 %v4791, %v4819
      %v4821 = vpop.f32.mrf.mxu0
      %v4822 = vadd.f32 %v4793, %v4821
      %4823 = vmatmul.bf16.gmra.mxu0 %v4553
      %v4824 = vpop.f32.mrf.mxu0
      %v4825 = vadd.f32 %v4796, %v4824
      %v4826 = vpop.f32.mrf.mxu0
      %v4827 = vadd.f32 %v4798, %v4826
      %4828 = vdwg.mxu0
      %4829 = vmatpush.bf16.msra.mxu0 %v4746
      %4830 = vmatpush.bf16.msra.mxu0 %v4745
      %4831 = vmatpush.bf16.msra.mxu0 %v4744
      %4832 = vmatpush.bf16.msra.mxu0 %v4743
      %4833 = vmatpush.bf16.msra.mxu0 %v4742
      %4834 = vmatpush.bf16.msra.mxu0 %v4741
      %4835 = vmatpush.bf16.msra.mxu0 %v4740
      %4836 = vmatpush.bf16.msra.mxu0 %v4739
      %4837 = vmatmul.bf16.gmra.mxu0 %v4571
      %v4838 = vpop.f32.mrf.mxu0
      %v4839 = vadd.f32 %v4810, %v4838
      %v4840 = vpop.f32.mrf.mxu0
      %v4841 = vadd.f32 %v4812, %v4840
      %4842 = vmatmul.bf16.gmra.mxu0 %v4572
      %v4843 = vpop.f32.mrf.mxu0
      %v4844 = vadd.f32 %v4815, %v4843
      %v4845 = vpop.f32.mrf.mxu0
      %v4846 = vadd.f32 %v4817, %v4845
      %4847 = vmatmul.bf16.gmra.mxu0 %v4573
      %v4848 = vpop.f32.mrf.mxu0
      %v4849 = vadd.f32 %v4820, %v4848
      %v4850 = vpop.f32.mrf.mxu0
      %v4851 = vadd.f32 %v4822, %v4850
      %4852 = vmatmul.bf16.gmra.mxu0 %v4574
      %v4853 = vpop.f32.mrf.mxu0
      %v4854 = vadd.f32 %v4825, %v4853
      %v4855 = vpop.f32.mrf.mxu0
      %v4856 = vadd.f32 %v4827, %v4855
      %4857 = vdwg.mxu0
      %v4906 = vunpack.c.l.b16 %v4429
      %v4907 = vunpack.c.l.b16 %v4430
      %v4908 = vunpack.c.l.b16 %v4431
      %v4909 = vunpack.c.l.b16 %v4432
      %v4910 = vunpack.c.l.b16 %v4433
      %v4911 = vunpack.c.l.b16 %v4434
      %v4912 = vunpack.c.l.b16 %v4435
      %v4913 = vunpack.c.l.b16 %v4436
      %v4914 = vunpack.c.l.b16 %v4437
      %v4915 = vunpack.c.l.b16 %v4438
      %v4916 = vunpack.c.l.b16 %v4439
      %v4917 = vunpack.c.l.b16 %v4440
      %v4918 = vunpack.c.l.b16 %v4441
      %v4919 = vunpack.c.l.b16 %v4442
      %v4920 = vunpack.c.l.b16 %v4443
      %v4921 = vunpack.c.l.b16 %v4444
      %v4922 = vunpack.c.l.b16 %v4445
      %v4923 = vunpack.c.l.b16 %v4446
      %v4924 = vunpack.c.l.b16 %v4447
      %v4925 = vunpack.c.l.b16 %v4448
      %v4926 = vunpack.c.l.b16 %v4449
      %v4927 = vunpack.c.l.b16 %v4450
      %v4928 = vunpack.c.l.b16 %v4451
      %v4929 = vunpack.c.l.b16 %v4452
      %v4930 = vunpack.c.l.b16 %v4453
      %v4931 = vunpack.c.l.b16 %v4454
      %v4932 = vunpack.c.l.b16 %v4455
      %v4933 = vunpack.c.l.b16 %v4456
      %v4934 = vunpack.c.l.b16 %v4457
      %v4935 = vunpack.c.l.b16 %v4458
      %v4936 = vunpack.c.l.b16 %v4459
      %v4937 = vunpack.c.l.b16 %v4460
      %v4938 = vunpack.c.l.b16 %v4461
      %v4939 = vunpack.c.l.b16 %v4462
      %v4940 = vunpack.c.l.b16 %v4463
      %v4941 = vunpack.c.l.b16 %v4464
      %v4942 = vunpack.c.l.b16 %v4465
      %v4943 = vunpack.c.l.b16 %v4466
      %v4944 = vunpack.c.l.b16 %v4467
      %v4945 = vunpack.c.l.b16 %v4468
      %v4946 = vunpack.c.l.b16 %v4469
      %v4947 = vunpack.c.l.b16 %v4470
      %v4948 = vunpack.c.l.b16 %v4471
      %v4949 = vunpack.c.l.b16 %v4472
      %v4950 = vunpack.c.l.b16 %v4473
      %v4951 = vunpack.c.l.b16 %v4474
      %v4952 = vunpack.c.l.b16 %v4475
      %v4953 = vunpack.c.l.b16 %v4476
      %v4954 = vpack.c.b16 %v4907, %v4906
      %v4955 = vpack.c.b16 %v4909, %v4908
      %v4956 = vpack.c.b16 %v4911, %v4910
      %v4957 = vpack.c.b16 %v4913, %v4912
      %v4958 = vpack.c.b16 %v4915, %v4914
      %v4959 = vpack.c.b16 %v4917, %v4916
      %v4960 = vpack.c.b16 %v4919, %v4918
      %v4961 = vpack.c.b16 %v4921, %v4920
      %v4962 = vpack.c.b16 %v4923, %v4922
      %v4963 = vpack.c.b16 %v4925, %v4924
      %v4964 = vpack.c.b16 %v4927, %v4926
      %v4965 = vpack.c.b16 %v4929, %v4928
      %v4966 = vpack.c.b16 %v4931, %v4930
      %v4967 = vpack.c.b16 %v4933, %v4932
      %v4968 = vpack.c.b16 %v4935, %v4934
      %v4969 = vpack.c.b16 %v4937, %v4936
      %v4970 = vpack.c.b16 %v4939, %v4938
      %v4971 = vpack.c.b16 %v4941, %v4940
      %v4972 = vpack.c.b16 %v4943, %v4942
      %v4973 = vpack.c.b16 %v4945, %v4944
      %v4974 = vpack.c.b16 %v4947, %v4946
      %v4975 = vpack.c.b16 %v4949, %v4948
      %v4976 = vpack.c.b16 %v4951, %v4950
      %v4977 = vpack.c.b16 %v4953, %v4952
      %5002 = vmatpush.bf16.msra.mxu0 %v4961
      %5003 = vmatpush.bf16.msra.mxu0 %v4960
      %5004 = vmatpush.bf16.msra.mxu0 %v4959
      %5005 = vmatpush.bf16.msra.mxu0 %v4958
      %5006 = vmatpush.bf16.msra.mxu0 %v4957
      %5007 = vmatpush.bf16.msra.mxu0 %v4956
      %5008 = vmatpush.bf16.msra.mxu0 %v4955
      %5009 = vmatpush.bf16.msra.mxu0 %v4954
      %5010 = vmatmul.bf16.gmra.mxu0 %v4373
      %v5011 = vpop.f32.mrf.mxu0
      %v5012 = vadd.f32 %v4839, %v5011
      %v5013 = vpop.f32.mrf.mxu0
      %v5014 = vadd.f32 %v4841, %v5013
      %5015 = vmatmul.bf16.gmra.mxu0 %v4374
      %v5016 = vpop.f32.mrf.mxu0
      %v5017 = vadd.f32 %v4844, %v5016
      %v5018 = vpop.f32.mrf.mxu0
      %v5019 = vadd.f32 %v4846, %v5018
      %5020 = vmatmul.bf16.gmra.mxu0 %v4375
      %v5021 = vpop.f32.mrf.mxu0
      %v5022 = vadd.f32 %v4849, %v5021
      %v5023 = vpop.f32.mrf.mxu0
      %v5024 = vadd.f32 %v4851, %v5023
      %5025 = vmatmul.bf16.gmra.mxu0 %v4376
      %v5026 = vpop.f32.mrf.mxu0
      %v5027 = vadd.f32 %v4854, %v5026
      %v5028 = vpop.f32.mrf.mxu0
      %v5029 = vadd.f32 %v4856, %v5028
      %5030 = vdwg.mxu0
      %5031 = vmatpush.bf16.msra.mxu0 %v4969
      %5032 = vmatpush.bf16.msra.mxu0 %v4968
      %5033 = vmatpush.bf16.msra.mxu0 %v4967
      %5034 = vmatpush.bf16.msra.mxu0 %v4966
      %5035 = vmatpush.bf16.msra.mxu0 %v4965
      %5036 = vmatpush.bf16.msra.mxu0 %v4964
      %5037 = vmatpush.bf16.msra.mxu0 %v4963
      %5038 = vmatpush.bf16.msra.mxu0 %v4962
      %5039 = vmatmul.bf16.gmra.mxu0 %v4397
      %v5040 = vpop.f32.mrf.mxu0
      %v5041 = vadd.f32 %v5012, %v5040
      %v5042 = vpop.f32.mrf.mxu0
      %v5043 = vadd.f32 %v5014, %v5042
      %5044 = vmatmul.bf16.gmra.mxu0 %v4398
      %v5045 = vpop.f32.mrf.mxu0
      %v5046 = vadd.f32 %v5017, %v5045
      %v5047 = vpop.f32.mrf.mxu0
      %v5048 = vadd.f32 %v5019, %v5047
      %5049 = vmatmul.bf16.gmra.mxu0 %v4399
      %v5050 = vpop.f32.mrf.mxu0
      %v5051 = vadd.f32 %v5022, %v5050
      %v5052 = vpop.f32.mrf.mxu0
      %v5053 = vadd.f32 %v5024, %v5052
      %5054 = vmatmul.bf16.gmra.mxu0 %v4400
      %v5055 = vpop.f32.mrf.mxu0
      %v5056 = vadd.f32 %v5027, %v5055
      %v5057 = vpop.f32.mrf.mxu0
      %v5058 = vadd.f32 %v5029, %v5057
      %5059 = vdwg.mxu0
      %5060 = vmatpush.bf16.msra.mxu0 %v4977
      %5061 = vmatpush.bf16.msra.mxu0 %v4976
      %5062 = vmatpush.bf16.msra.mxu0 %v4975
      %5063 = vmatpush.bf16.msra.mxu0 %v4974
      %5064 = vmatpush.bf16.msra.mxu0 %v4973
      %5065 = vmatpush.bf16.msra.mxu0 %v4972
      %5066 = vmatpush.bf16.msra.mxu0 %v4971
      %5067 = vmatpush.bf16.msra.mxu0 %v4970
      %5068 = vmatmul.bf16.gmra.mxu0 %v4421
      %v5069 = vpop.f32.mrf.mxu0
      %v5070 = vadd.f32 %v5041, %v5069
      %v5071 = vpop.f32.mrf.mxu0
      %v5072 = vadd.f32 %v5043, %v5071
      %5073 = vmatmul.bf16.gmra.mxu0 %v4422
      %v5074 = vpop.f32.mrf.mxu0
      %v5075 = vadd.f32 %v5046, %v5074
      %v5076 = vpop.f32.mrf.mxu0
      %v5077 = vadd.f32 %v5048, %v5076
      %5078 = vmatmul.bf16.gmra.mxu0 %v4423
      %v5079 = vpop.f32.mrf.mxu0
      %v5080 = vadd.f32 %v5051, %v5079
      %v5081 = vpop.f32.mrf.mxu0
      %v5082 = vadd.f32 %v5053, %v5081
      %5083 = vmatmul.bf16.gmra.mxu0 %v4424
      %v5084 = vpop.f32.mrf.mxu0
      %v5085 = vadd.f32 %v5056, %v5084
      %v5086 = vpop.f32.mrf.mxu0
      %v5087 = vadd.f32 %v5058, %v5086
      %5088 = vdwg.mxu0
      %v5090 = vrot.slane %v4254, 7
      %v5091 = vsel %vm392, %v4480, %v5090
      %v5092 = vrot.slane %v4255, 7
      %v5093 = vsel %vm392, %v5090, %v5092
      %v5096 = vsel %vm331, %v4276, 0.0
      %v5097 = vsel %vm332, %v4278, 0.0
      %v5098 = vsel %vm333, %v4280, 0.0
      %v5099 = vsel %vm334, %v4282, 0.0
      %v5100 = vsel %vm335, %v4479, 0.0
      %v5101 = vsel %vm336, %v4481, 0.0
      %v5102 = vsel %vm337, %v5091, 0.0
      %v5103 = vsel %vm338, %v5093, 0.0
      %v5104 = vpack.c.bf16 %v5096, %v5096
      %v5105 = vpack.c.bf16 %v5097, %v5097
      %v5106 = vpack.c.bf16 %v5098, %v5098
      %v5107 = vpack.c.bf16 %v5099, %v5099
      %v5108 = vpack.c.bf16 %v5100, %v5100
      %v5109 = vpack.c.bf16 %v5101, %v5101
      %v5110 = vpack.c.bf16 %v5102, %v5102
      %v5111 = vpack.c.bf16 %v5103, %v5103
      %v5112 = vpack.c.bf16 %v4254, %v4254
      %v5113 = vpack.c.bf16 %v4255, %v4255
      %v5115 = vrot.slane %v4255, 1
      %v5116 = vsel %vm443, %v4505, %v5115
      %v5117 = vrot.slane %v4256, 1
      %v5118 = vsel %vm443, %v5115, %v5117
      %v5121 = vsel %vm339, %v4326, 0.0
      %v5122 = vsel %vm340, %v4328, 0.0
      %v5123 = vsel %vm341, %v4330, 0.0
      %v5124 = vsel %vm342, %v4332, 0.0
      %v5125 = vsel %vm343, %v4504, 0.0
      %v5126 = vsel %vm344, %v4506, 0.0
      %v5127 = vsel %vm345, %v5116, 0.0
      %v5128 = vsel %vm346, %v5118, 0.0
      %v5129 = vpack.c.bf16 %v5121, %v5121
      %v5130 = vpack.c.bf16 %v5122, %v5122
      %v5131 = vpack.c.bf16 %v5123, %v5123
      %v5132 = vpack.c.bf16 %v5124, %v5124
      %v5133 = vpack.c.bf16 %v5125, %v5125
      %v5134 = vpack.c.bf16 %v5126, %v5126
      %v5135 = vpack.c.bf16 %v5127, %v5127
      %v5136 = vpack.c.bf16 %v5128, %v5128
      %v5145 = vunpack.c.l.b16 %v5104
      %v5146 = vunpack.c.l.b16 %v5105
      %v5147 = vunpack.c.l.b16 %v5106
      %v5148 = vunpack.c.l.b16 %v5107
      %v5149 = vunpack.c.l.b16 %v5108
      %v5150 = vunpack.c.l.b16 %v5109
      %v5151 = vunpack.c.l.b16 %v5110
      %v5152 = vunpack.c.l.b16 %v5111
      %v5153 = vpack.c.b16 %v5146, %v5145
      %v5154 = vpack.c.b16 %v5148, %v5147
      %v5155 = vpack.c.b16 %v5150, %v5149
      %v5156 = vpack.c.b16 %v5152, %v5151
      %v5163 = vunpack.c.l.b16 %v5112
      %v5164 = vunpack.c.l.b16 %v5113
      %v5165 = vpack.c.b16 %v5164, %v5163
      %v5175 = vunpack.c.l.b16 %v5129
      %v5176 = vunpack.c.l.b16 %v5130
      %v5177 = vunpack.c.l.b16 %v5131
      %v5178 = vunpack.c.l.b16 %v5132
      %v5179 = vunpack.c.l.b16 %v5133
      %v5180 = vunpack.c.l.b16 %v5134
      %v5181 = vunpack.c.l.b16 %v5135
      %v5182 = vunpack.c.l.b16 %v5136
      %v5183 = vpack.c.b16 %v5176, %v5175
      %v5184 = vpack.c.b16 %v5178, %v5177
      %v5185 = vpack.c.b16 %v5180, %v5179
      %v5186 = vpack.c.b16 %v5182, %v5181
      %v5191 = vld [vmem:[%s1320] sm:$0xf]
      %v5192 = vld [vmem:[%s1320 + $0x4] sm:$0xf]
      %v5193 = vld [vmem:[%s1320 + $0x8] sm:$0xf]
      %v5194 = vld [vmem:[%s1320 + $0xc] sm:$0xf]
      %v5195 = vld [vmem:[%s1320 + $0x10] sm:$0xf]
      %v5196 = vld [vmem:[%s1320 + $0x14] sm:$0xf]
      %v5197 = vld [vmem:[%s1320 + $0x18] sm:$0xf]
      %v5198 = vld [vmem:[%s1320 + $0x1c] sm:$0xf]
      %v5199 = vld [vmem:[%s1320 + $0x20] sm:$0xf]
      %v5200 = vld [vmem:[%s1320 + $0x24] sm:$0xf]
      %v5201 = vld [vmem:[%s1320 + $0x28] sm:$0xf]
      %v5202 = vld [vmem:[%s1320 + $0x2c] sm:$0xf]
      %v5203 = vld [vmem:[%s1320 + $0x30] sm:$0xf]
      %v5204 = vld [vmem:[%s1320 + $0x34] sm:$0xf]
      %v5205 = vld [vmem:[%s1320 + $0x38] sm:$0xf]
      %v5206 = vld [vmem:[%s1320 + $0x3c] sm:$0xf]
      %v5207 = vld [vmem:[%s1320 + $0x40] sm:$0xf]
      %v5208 = vld [vmem:[%s1320 + $0x44] sm:$0xf]
      %v5209 = vld [vmem:[%s1320 + $0x48] sm:$0xf]
      %v5210 = vld [vmem:[%s1320 + $0x4c] sm:$0xf]
      %v5211 = vld [vmem:[%s1320 + $0x50] sm:$0xf]
      %v5212 = vld [vmem:[%s1320 + $0x54] sm:$0xf]
      %v5213 = vld [vmem:[%s1320 + $0x58] sm:$0xf]
      %v5214 = vld [vmem:[%s1320 + $0x5c] sm:$0xf]
      %v5215 = vld [vmem:[%s1320 + $0x60] sm:$0xf]
      %v5216 = vld [vmem:[%s1320 + $0x64] sm:$0xf]
      %v5217 = vld [vmem:[%s1320 + $0x68] sm:$0xf]
      %v5218 = vld [vmem:[%s1320 + $0x6c] sm:$0xf]
      %v5219 = vld [vmem:[%s1320 + $0x70] sm:$0xf]
      %v5220 = vld [vmem:[%s1320 + $0x74] sm:$0xf]
      %v5221 = vld [vmem:[%s1320 + $0x78] sm:$0xf]
      %v5222 = vld [vmem:[%s1320 + $0x7c] sm:$0xf]
      %v5223 = vld [vmem:[%s1320 + $0x80] sm:$0xf]
      %v5224 = vld [vmem:[%s1320 + $0x84] sm:$0xf]
      %v5225 = vld [vmem:[%s1320 + $0x88] sm:$0xf]
      %v5226 = vld [vmem:[%s1320 + $0x8c] sm:$0xf]
      %v5227 = vld [vmem:[%s1320 + $0x90] sm:$0xf]
      %v5228 = vld [vmem:[%s1320 + $0x94] sm:$0xf]
      %v5229 = vld [vmem:[%s1320 + $0x98] sm:$0xf]
      %v5230 = vld [vmem:[%s1320 + $0x9c] sm:$0xf]
      %v5231 = vld [vmem:[%s1320 + $0xa0] sm:$0xf]
      %v5232 = vld [vmem:[%s1320 + $0xa4] sm:$0xf]
      %v5233 = vld [vmem:[%s1320 + $0xa8] sm:$0xf]
      %v5234 = vld [vmem:[%s1320 + $0xac] sm:$0xf]
      %v5235 = vld [vmem:[%s1320 + $0xb0] sm:$0xf]
      %v5236 = vld [vmem:[%s1320 + $0xb4] sm:$0xf]
      %v5237 = vld [vmem:[%s1320 + $0xb8] sm:$0xf]
      %v5238 = vld [vmem:[%s1320 + $0xbc] sm:$0xf]
      %v5287 = vunpack.c.l.b16 %v5191
      %v5288 = vunpack.c.l.b16 %v5192
      %v5289 = vunpack.c.l.b16 %v5193
      %v5290 = vunpack.c.l.b16 %v5194
      %v5291 = vunpack.c.l.b16 %v5195
      %v5292 = vunpack.c.l.b16 %v5196
      %v5293 = vunpack.c.l.b16 %v5197
      %v5294 = vunpack.c.l.b16 %v5198
      %v5295 = vunpack.c.l.b16 %v5199
      %v5296 = vunpack.c.l.b16 %v5200
      %v5297 = vunpack.c.l.b16 %v5201
      %v5298 = vunpack.c.l.b16 %v5202
      %v5299 = vunpack.c.l.b16 %v5203
      %v5300 = vunpack.c.l.b16 %v5204
      %v5301 = vunpack.c.l.b16 %v5205
      %v5302 = vunpack.c.l.b16 %v5206
      %v5303 = vunpack.c.l.b16 %v5207
      %v5304 = vunpack.c.l.b16 %v5208
      %v5305 = vunpack.c.l.b16 %v5209
      %v5306 = vunpack.c.l.b16 %v5210
      %v5307 = vunpack.c.l.b16 %v5211
      %v5308 = vunpack.c.l.b16 %v5212
      %v5309 = vunpack.c.l.b16 %v5213
      %v5310 = vunpack.c.l.b16 %v5214
      %v5311 = vunpack.c.l.b16 %v5215
      %v5312 = vunpack.c.l.b16 %v5216
      %v5313 = vunpack.c.l.b16 %v5217
      %v5314 = vunpack.c.l.b16 %v5218
      %v5315 = vunpack.c.l.b16 %v5219
      %v5316 = vunpack.c.l.b16 %v5220
      %v5317 = vunpack.c.l.b16 %v5221
      %v5318 = vunpack.c.l.b16 %v5222
      %v5319 = vunpack.c.l.b16 %v5223
      %v5320 = vunpack.c.l.b16 %v5224
      %v5321 = vunpack.c.l.b16 %v5225
      %v5322 = vunpack.c.l.b16 %v5226
      %v5323 = vunpack.c.l.b16 %v5227
      %v5324 = vunpack.c.l.b16 %v5228
      %v5325 = vunpack.c.l.b16 %v5229
      %v5326 = vunpack.c.l.b16 %v5230
      %v5327 = vunpack.c.l.b16 %v5231
      %v5328 = vunpack.c.l.b16 %v5232
      %v5329 = vunpack.c.l.b16 %v5233
      %v5330 = vunpack.c.l.b16 %v5234
      %v5331 = vunpack.c.l.b16 %v5235
      %v5332 = vunpack.c.l.b16 %v5236
      %v5333 = vunpack.c.l.b16 %v5237
      %v5334 = vunpack.c.l.b16 %v5238
      %v5335 = vpack.c.b16 %v5288, %v5287
      %v5336 = vpack.c.b16 %v5290, %v5289
      %v5337 = vpack.c.b16 %v5292, %v5291
      %v5338 = vpack.c.b16 %v5294, %v5293
      %v5339 = vpack.c.b16 %v5296, %v5295
      %v5340 = vpack.c.b16 %v5298, %v5297
      %v5341 = vpack.c.b16 %v5300, %v5299
      %v5342 = vpack.c.b16 %v5302, %v5301
      %v5343 = vpack.c.b16 %v5304, %v5303
      %v5344 = vpack.c.b16 %v5306, %v5305
      %v5345 = vpack.c.b16 %v5308, %v5307
      %v5346 = vpack.c.b16 %v5310, %v5309
      %v5347 = vpack.c.b16 %v5312, %v5311
      %v5348 = vpack.c.b16 %v5314, %v5313
      %v5349 = vpack.c.b16 %v5316, %v5315
      %v5350 = vpack.c.b16 %v5318, %v5317
      %v5351 = vpack.c.b16 %v5320, %v5319
      %v5352 = vpack.c.b16 %v5322, %v5321
      %v5353 = vpack.c.b16 %v5324, %v5323
      %v5354 = vpack.c.b16 %v5326, %v5325
      %v5355 = vpack.c.b16 %v5328, %v5327
      %v5356 = vpack.c.b16 %v5330, %v5329
      %v5357 = vpack.c.b16 %v5332, %v5331
      %v5358 = vpack.c.b16 %v5334, %v5333
      %5383 = vmatpush.bf16.msra.mxu0 %v5342
      %5384 = vmatpush.bf16.msra.mxu0 %v5341
      %5385 = vmatpush.bf16.msra.mxu0 %v5340
      %5386 = vmatpush.bf16.msra.mxu0 %v5339
      %5387 = vmatpush.bf16.msra.mxu0 %v5338
      %5388 = vmatpush.bf16.msra.mxu0 %v5337
      %5389 = vmatpush.bf16.msra.mxu0 %v5336
      %5390 = vmatpush.bf16.msra.mxu0 %v5335
      %5391 = vmatmul.bf16.gmra.mxu0 %v5153
      %v5392 = vpop.f32.mrf.mxu0
      %v5393 = vadd.f32 0.0, %v5392
      %v5394 = vpop.f32.mrf.mxu0
      %v5395 = vadd.f32 0.0, %v5394
      %5396 = vmatmul.bf16.gmra.mxu0 %v5154
      %v5397 = vpop.f32.mrf.mxu0
      %v5398 = vadd.f32 0.0, %v5397
      %v5399 = vpop.f32.mrf.mxu0
      %v5400 = vadd.f32 0.0, %v5399
      %5401 = vmatmul.bf16.gmra.mxu0 %v5155
      %v5402 = vpop.f32.mrf.mxu0
      %v5403 = vadd.f32 0.0, %v5402
      %v5404 = vpop.f32.mrf.mxu0
      %v5405 = vadd.f32 0.0, %v5404
      %5406 = vmatmul.bf16.gmra.mxu0 %v5156
      %v5407 = vpop.f32.mrf.mxu0
      %v5408 = vadd.f32 0.0, %v5407
      %v5409 = vpop.f32.mrf.mxu0
      %v5410 = vadd.f32 0.0, %v5409
      %5411 = vdwg.mxu0
      %5412 = vmatpush.bf16.msra.mxu0 %v5350
      %5413 = vmatpush.bf16.msra.mxu0 %v5349
      %5414 = vmatpush.bf16.msra.mxu0 %v5348
      %5415 = vmatpush.bf16.msra.mxu0 %v5347
      %5416 = vmatpush.bf16.msra.mxu0 %v5346
      %5417 = vmatpush.bf16.msra.mxu0 %v5345
      %5418 = vmatpush.bf16.msra.mxu0 %v5344
      %5419 = vmatpush.bf16.msra.mxu0 %v5343
      %5420 = vmatmul.bf16.gmra.mxu0 %v4399
      %v5421 = vpop.f32.mrf.mxu0
      %v5422 = vadd.f32 %v5393, %v5421
      %v5423 = vpop.f32.mrf.mxu0
      %v5424 = vadd.f32 %v5395, %v5423
      %5425 = vmatmul.bf16.gmra.mxu0 %v4400
      %v5426 = vpop.f32.mrf.mxu0
      %v5427 = vadd.f32 %v5398, %v5426
      %v5428 = vpop.f32.mrf.mxu0
      %v5429 = vadd.f32 %v5400, %v5428
      %5430 = vmatmul.bf16.gmra.mxu0 %v4553
      %v5431 = vpop.f32.mrf.mxu0
      %v5432 = vadd.f32 %v5403, %v5431
      %v5433 = vpop.f32.mrf.mxu0
      %v5434 = vadd.f32 %v5405, %v5433
      %5435 = vmatmul.bf16.gmra.mxu0 %v5165
      %v5436 = vpop.f32.mrf.mxu0
      %v5437 = vadd.f32 %v5408, %v5436
      %v5438 = vpop.f32.mrf.mxu0
      %v5439 = vadd.f32 %v5410, %v5438
      %5440 = vdwg.mxu0
      %5441 = vmatpush.bf16.msra.mxu0 %v5358
      %5442 = vmatpush.bf16.msra.mxu0 %v5357
      %5443 = vmatpush.bf16.msra.mxu0 %v5356
      %5444 = vmatpush.bf16.msra.mxu0 %v5355
      %5445 = vmatpush.bf16.msra.mxu0 %v5354
      %5446 = vmatpush.bf16.msra.mxu0 %v5353
      %5447 = vmatpush.bf16.msra.mxu0 %v5352
      %5448 = vmatpush.bf16.msra.mxu0 %v5351
      %5449 = vmatmul.bf16.gmra.mxu0 %v5183
      %v5450 = vpop.f32.mrf.mxu0
      %v5451 = vadd.f32 %v5422, %v5450
      %v5452 = vpop.f32.mrf.mxu0
      %v5453 = vadd.f32 %v5424, %v5452
      %5454 = vmatmul.bf16.gmra.mxu0 %v5184
      %v5455 = vpop.f32.mrf.mxu0
      %v5456 = vadd.f32 %v5427, %v5455
      %v5457 = vpop.f32.mrf.mxu0
      %v5458 = vadd.f32 %v5429, %v5457
      %5459 = vmatmul.bf16.gmra.mxu0 %v5185
      %v5460 = vpop.f32.mrf.mxu0
      %v5461 = vadd.f32 %v5432, %v5460
      %v5462 = vpop.f32.mrf.mxu0
      %v5463 = vadd.f32 %v5434, %v5462
      %5464 = vmatmul.bf16.gmra.mxu0 %v5186
      %v5465 = vpop.f32.mrf.mxu0
      %v5466 = vadd.f32 %v5437, %v5465
      %v5467 = vpop.f32.mrf.mxu0
      %v5468 = vadd.f32 %v5439, %v5467
      %5469 = vdwg.mxu0
      %v5470 = vadd.f32 %v5070, %v5451
      %v5471 = vadd.f32 %v5072, %v5453
      %v5472 = vadd.f32 %v5075, %v5456
      %v5473 = vadd.f32 %v5077, %v5458
      %v5474 = vadd.f32 %v5080, %v5461
      %v5475 = vadd.f32 %v5082, %v5463
      %v5476 = vadd.f32 %v5085, %v5466
      %v5477 = vadd.f32 %v5087, %v5468
      %v5478 = vadd.f32 %v5470, %v1609
      %v5479 = vadd.f32 %v5471, %v1609
      %v5480 = vadd.f32 %v5472, %v1609
      %v5481 = vadd.f32 %v5473, %v1609
      %v5482 = vadd.f32 %v5474, %v1609
      %v5483 = vadd.f32 %v5475, %v1609
      %v5484 = vadd.f32 %v5476, %v1609
      %v5485 = vadd.f32 %v5477, %v1609
      %v5486 = vmax.f32 %v5478, 0.0
      %v5487 = vmax.f32 %v5479, 0.0
      %v5488 = vmax.f32 %v5480, 0.0
      %v5489 = vmax.f32 %v5481, 0.0
      %v5490 = vmax.f32 %v5482, 0.0
      %v5491 = vmax.f32 %v5483, 0.0
      %v5492 = vmax.f32 %v5484, 0.0
      %v5493 = vmax.f32 %v5485, 0.0
      %v5494 = vmin.f32 %v5486, 6.0
      %v5495 = vmin.f32 %v5487, 6.0
      %v5496 = vmin.f32 %v5488, 6.0
      %v5497 = vmin.f32 %v5489, 6.0
      %v5498 = vmin.f32 %v5490, 6.0
      %v5499 = vmin.f32 %v5491, 6.0
      %v5500 = vmin.f32 %v5492, 6.0
      %v5501 = vmin.f32 %v5493, 6.0
      %v5502 = vpack.c.bf16 %v5494, %v5494
      %v5503 = vpack.c.bf16 %v5495, %v5495
      %v5504 = vpack.c.bf16 %v5496, %v5496
      %v5505 = vpack.c.bf16 %v5497, %v5497
      %v5506 = vpack.c.bf16 %v5498, %v5498
      %v5507 = vpack.c.bf16 %v5499, %v5499
      %v5508 = vpack.c.bf16 %v5500, %v5500
      %v5509 = vpack.c.bf16 %v5501, %v5501
      %5510 = vst [vmem:[#allocation2 + $0x6c] sm:$0xf] %v5502
      %5511 = vst [vmem:[#allocation2 + $0x70] sm:$0xf] %v5503
      %5512 = vst [vmem:[#allocation2 + $0x74] sm:$0xf] %v5504
      %5513 = vst [vmem:[#allocation2 + $0x78] sm:$0xf] %v5505
      %5514 = vst [vmem:[#allocation2 + $0x7c] sm:$0xf] %v5506
      %5515 = vst [vmem:[#allocation2 + $0x80] sm:$0xf] %v5507
      %5516 = vst [vmem:[#allocation2 + $0x84] sm:$0xf] %v5508
      %5517 = vst [vmem:[#allocation2 + $0x88] sm:$0xf] %v5509
      %v5518 = vld [vmem:[#allocation2] sm:$0xf]
      %v5519 = vld [vmem:[#allocation2 + $0x4] sm:$0xf]
      %v5520 = vld [vmem:[#allocation2 + $0x8] sm:$0xf]
      %v5521 = vld [vmem:[#allocation2 + $0xc] sm:$0xf]
      %v5522 = vld [vmem:[#allocation2 + $0x10] sm:$0xf]
      %v5523 = vld [vmem:[#allocation2 + $0x14] sm:$0xf]
      %v5524 = vld [vmem:[#allocation2 + $0x18] sm:$0xf]
      %v5525 = vld [vmem:[#allocation2 + $0x1c] sm:$0xf]
      %v5526 = vld [vmem:[#allocation2 + $0x20] sm:$0xf]
      %v5527 = vld [vmem:[#allocation2 + $0x24] sm:$0xf]
      %v5528 = vld [vmem:[#allocation2 + $0x28] sm:$0xf]
      %v5529 = vld [vmem:[#allocation2 + $0x2c] sm:$0xf]
      %v5530 = vld [vmem:[#allocation2 + $0x30] sm:$0xf]
      %v5531 = vld [vmem:[#allocation2 + $0x34] sm:$0xf]
      %v5532 = vunpack.c.l.bf16 %v5518
      %v5533 = vunpack.c.l.bf16 %v5519
      %v5534 = vunpack.c.l.bf16 %v5520
      %v5535 = vunpack.c.l.bf16 %v5521
      %v5536 = vunpack.c.l.bf16 %v5522
      %v5537 = vunpack.c.l.bf16 %v5523
      %v5538 = vunpack.c.l.bf16 %v5524
      %v5539 = vunpack.c.l.bf16 %v5525
      %v5540 = vunpack.c.l.bf16 %v5526
      %v5541 = vunpack.c.l.bf16 %v5527
      %v5542 = vunpack.c.l.bf16 %v5528
      %v5543 = vunpack.c.l.bf16 %v5529
      %v5544 = vunpack.c.l.bf16 %v5530
      %v5545 = vunpack.c.l.bf16 %v5531
      %v5555 = vrot.slane %v5532, 7
      %v5556 = vrot.slane %v5533, 7
      %v5557 = vsel %vm392, %v5555, %v5556
      %v5558 = vrot.slane %v5534, 7
      %v5559 = vsel %vm392, %v5556, %v5558
      %v5560 = vrot.slane %v5535, 7
      %v5561 = vsel %vm392, %v5558, %v5560
      %v5562 = vrot.slane %v5536, 7
      %v5563 = vsel %vm392, %v5560, %v5562
      %v5564 = vrot.slane %v5537, 7
      %v5565 = vsel %vm392, %v5562, %v5564
      %v5566 = vrot.slane %v5538, 7
      %v5567 = vsel %vm392, %v5564, %v5566
      %v5568 = vrot.slane %v5539, 7
      %v5569 = vsel %vm392, %v5566, %v5568
      %v5570 = vrot.slane %v5540, 7
      %v5571 = vsel %vm392, %v5568, %v5570
      %v5580 = vsel %vm331, %v5557, 0.0
      %v5581 = vsel %vm332, %v5559, 0.0
      %v5582 = vsel %vm333, %v5561, 0.0
      %v5583 = vsel %vm334, %v5563, 0.0
      %v5584 = vsel %vm335, %v5565, 0.0
      %v5585 = vsel %vm336, %v5567, 0.0
      %v5586 = vsel %vm337, %v5569, 0.0
      %v5587 = vsel %vm338, %v5571, 0.0
      %v5588 = vpack.c.bf16 %v5580, %v5580
      %v5589 = vpack.c.bf16 %v5581, %v5581
      %v5590 = vpack.c.bf16 %v5582, %v5582
      %v5591 = vpack.c.bf16 %v5583, %v5583
      %v5592 = vpack.c.bf16 %v5584, %v5584
      %v5593 = vpack.c.bf16 %v5585, %v5585
      %v5594 = vpack.c.bf16 %v5586, %v5586
      %v5595 = vpack.c.bf16 %v5587, %v5587
      %v5596 = vpack.c.bf16 %v5533, %v5533
      %v5597 = vpack.c.bf16 %v5534, %v5534
      %v5598 = vpack.c.bf16 %v5535, %v5535
      %v5599 = vpack.c.bf16 %v5536, %v5536
      %v5600 = vpack.c.bf16 %v5537, %v5537
      %v5601 = vpack.c.bf16 %v5538, %v5538
      %v5602 = vpack.c.bf16 %v5539, %v5539
      %v5603 = vpack.c.bf16 %v5540, %v5540
      %v5605 = vrot.slane %v5533, 1
      %v5606 = vrot.slane %v5534, 1
      %v5607 = vsel %vm443, %v5605, %v5606
      %v5608 = vrot.slane %v5535, 1
      %v5609 = vsel %vm443, %v5606, %v5608
      %v5610 = vrot.slane %v5536, 1
      %v5611 = vsel %vm443, %v5608, %v5610
      %v5612 = vrot.slane %v5537, 1
      %v5613 = vsel %vm443, %v5610, %v5612
      %v5614 = vrot.slane %v5538, 1
      %v5615 = vsel %vm443, %v5612, %v5614
      %v5616 = vrot.slane %v5539, 1
      %v5617 = vsel %vm443, %v5614, %v5616
      %v5618 = vrot.slane %v5540, 1
      %v5619 = vsel %vm443, %v5616, %v5618
      %v5620 = vrot.slane %v5541, 1
      %v5621 = vsel %vm443, %v5618, %v5620
      %v5630 = vsel %vm339, %v5607, 0.0
      %v5631 = vsel %vm340, %v5609, 0.0
      %v5632 = vsel %vm341, %v5611, 0.0
      %v5633 = vsel %vm342, %v5613, 0.0
      %v5634 = vsel %vm343, %v5615, 0.0
      %v5635 = vsel %vm344, %v5617, 0.0
      %v5636 = vsel %vm345, %v5619, 0.0
      %v5637 = vsel %vm346, %v5621, 0.0
      %v5638 = vpack.c.bf16 %v5630, %v5630
      %v5639 = vpack.c.bf16 %v5631, %v5631
      %v5640 = vpack.c.bf16 %v5632, %v5632
      %v5641 = vpack.c.bf16 %v5633, %v5633
      %v5642 = vpack.c.bf16 %v5634, %v5634
      %v5643 = vpack.c.bf16 %v5635, %v5635
      %v5644 = vpack.c.bf16 %v5636, %v5636
      %v5645 = vpack.c.bf16 %v5637, %v5637
      %v5654 = vunpack.c.l.b16 %v5588
      %v5655 = vunpack.c.l.b16 %v5589
      %v5656 = vunpack.c.l.b16 %v5590
      %v5657 = vunpack.c.l.b16 %v5591
      %v5658 = vunpack.c.l.b16 %v5592
      %v5659 = vunpack.c.l.b16 %v5593
      %v5660 = vunpack.c.l.b16 %v5594
      %v5661 = vunpack.c.l.b16 %v5595
      %v5662 = vpack.c.b16 %v5655, %v5654
      %v5663 = vpack.c.b16 %v5657, %v5656
      %v5664 = vpack.c.b16 %v5659, %v5658
      %v5665 = vpack.c.b16 %v5661, %v5660
      %v5678 = vunpack.c.l.b16 %v5596
      %v5679 = vunpack.c.l.b16 %v5597
      %v5680 = vunpack.c.l.b16 %v5598
      %v5681 = vunpack.c.l.b16 %v5599
      %v5682 = vunpack.c.l.b16 %v5600
      %v5683 = vunpack.c.l.b16 %v5601
      %v5684 = vunpack.c.l.b16 %v5602
      %v5685 = vunpack.c.l.b16 %v5603
      %v5686 = vpack.c.b16 %v5679, %v5678
      %v5687 = vpack.c.b16 %v5681, %v5680
      %v5688 = vpack.c.b16 %v5683, %v5682
      %v5689 = vpack.c.b16 %v5685, %v5684
      %v5702 = vunpack.c.l.b16 %v5638
      %v5703 = vunpack.c.l.b16 %v5639
      %v5704 = vunpack.c.l.b16 %v5640
      %v5705 = vunpack.c.l.b16 %v5641
      %v5706 = vunpack.c.l.b16 %v5642
      %v5707 = vunpack.c.l.b16 %v5643
      %v5708 = vunpack.c.l.b16 %v5644
      %v5709 = vunpack.c.l.b16 %v5645
      %v5710 = vpack.c.b16 %v5703, %v5702
      %v5711 = vpack.c.b16 %v5705, %v5704
      %v5712 = vpack.c.b16 %v5707, %v5706
      %v5713 = vpack.c.b16 %v5709, %v5708
      %v5718 = vld [vmem:[%s3] sm:$0xf]
      %v5719 = vld [vmem:[%s3 + $0x4] sm:$0xf]
      %v5720 = vld [vmem:[%s3 + $0x8] sm:$0xf]
      %v5721 = vld [vmem:[%s3 + $0xc] sm:$0xf]
      %v5722 = vld [vmem:[%s3 + $0x10] sm:$0xf]
      %v5723 = vld [vmem:[%s3 + $0x14] sm:$0xf]
      %v5724 = vld [vmem:[%s3 + $0x18] sm:$0xf]
      %v5725 = vld [vmem:[%s3 + $0x1c] sm:$0xf]
      %v5726 = vld [vmem:[%s3 + $0x20] sm:$0xf]
      %v5727 = vld [vmem:[%s3 + $0x24] sm:$0xf]
      %v5728 = vld [vmem:[%s3 + $0x28] sm:$0xf]
      %v5729 = vld [vmem:[%s3 + $0x2c] sm:$0xf]
      %v5730 = vld [vmem:[%s3 + $0x30] sm:$0xf]
      %v5731 = vld [vmem:[%s3 + $0x34] sm:$0xf]
      %v5732 = vld [vmem:[%s3 + $0x38] sm:$0xf]
      %v5733 = vld [vmem:[%s3 + $0x3c] sm:$0xf]
      %v5734 = vld [vmem:[%s3 + $0x40] sm:$0xf]
      %v5735 = vld [vmem:[%s3 + $0x44] sm:$0xf]
      %v5736 = vld [vmem:[%s3 + $0x48] sm:$0xf]
      %v5737 = vld [vmem:[%s3 + $0x4c] sm:$0xf]
      %v5738 = vld [vmem:[%s3 + $0x50] sm:$0xf]
      %v5739 = vld [vmem:[%s3 + $0x54] sm:$0xf]
      %v5740 = vld [vmem:[%s3 + $0x58] sm:$0xf]
      %v5741 = vld [vmem:[%s3 + $0x5c] sm:$0xf]
      %v5742 = vld [vmem:[%s3 + $0x60] sm:$0xf]
      %v5743 = vld [vmem:[%s3 + $0x64] sm:$0xf]
      %v5744 = vld [vmem:[%s3 + $0x68] sm:$0xf]
      %v5745 = vld [vmem:[%s3 + $0x6c] sm:$0xf]
      %v5746 = vld [vmem:[%s3 + $0x70] sm:$0xf]
      %v5747 = vld [vmem:[%s3 + $0x74] sm:$0xf]
      %v5748 = vld [vmem:[%s3 + $0x78] sm:$0xf]
      %v5749 = vld [vmem:[%s3 + $0x7c] sm:$0xf]
      %v5750 = vld [vmem:[%s3 + $0x80] sm:$0xf]
      %v5751 = vld [vmem:[%s3 + $0x84] sm:$0xf]
      %v5752 = vld [vmem:[%s3 + $0x88] sm:$0xf]
      %v5753 = vld [vmem:[%s3 + $0x8c] sm:$0xf]
      %v5754 = vld [vmem:[%s3 + $0x90] sm:$0xf]
      %v5755 = vld [vmem:[%s3 + $0x94] sm:$0xf]
      %v5756 = vld [vmem:[%s3 + $0x98] sm:$0xf]
      %v5757 = vld [vmem:[%s3 + $0x9c] sm:$0xf]
      %v5758 = vld [vmem:[%s3 + $0xa0] sm:$0xf]
      %v5759 = vld [vmem:[%s3 + $0xa4] sm:$0xf]
      %v5760 = vld [vmem:[%s3 + $0xa8] sm:$0xf]
      %v5761 = vld [vmem:[%s3 + $0xac] sm:$0xf]
      %v5762 = vld [vmem:[%s3 + $0xb0] sm:$0xf]
      %v5763 = vld [vmem:[%s3 + $0xb4] sm:$0xf]
      %v5764 = vld [vmem:[%s3 + $0xb8] sm:$0xf]
      %v5765 = vld [vmem:[%s3 + $0xbc] sm:$0xf]
      %v5767 = vrot.slane %v5541, 7
      %v5768 = vsel %vm392, %v5570, %v5767
      %v5769 = vrot.slane %v5542, 7
      %v5770 = vsel %vm392, %v5767, %v5769
      %v5773 = vsel %vm331, %v5561, 0.0
      %v5774 = vsel %vm332, %v5563, 0.0
      %v5775 = vsel %vm333, %v5565, 0.0
      %v5776 = vsel %vm334, %v5567, 0.0
      %v5777 = vsel %vm335, %v5569, 0.0
      %v5778 = vsel %vm336, %v5571, 0.0
      %v5779 = vsel %vm337, %v5768, 0.0
      %v5780 = vsel %vm338, %v5770, 0.0
      %v5781 = vpack.c.bf16 %v5773, %v5773
      %v5782 = vpack.c.bf16 %v5774, %v5774
      %v5783 = vpack.c.bf16 %v5775, %v5775
      %v5784 = vpack.c.bf16 %v5776, %v5776
      %v5785 = vpack.c.bf16 %v5777, %v5777
      %v5786 = vpack.c.bf16 %v5778, %v5778
      %v5787 = vpack.c.bf16 %v5779, %v5779
      %v5788 = vpack.c.bf16 %v5780, %v5780
      %v5789 = vpack.c.bf16 %v5541, %v5541
      %v5790 = vpack.c.bf16 %v5542, %v5542
      %v5792 = vrot.slane %v5542, 1
      %v5793 = vsel %vm443, %v5620, %v5792
      %v5794 = vrot.slane %v5543, 1
      %v5795 = vsel %vm443, %v5792, %v5794
      %v5798 = vsel %vm339, %v5611, 0.0
      %v5799 = vsel %vm340, %v5613, 0.0
      %v5800 = vsel %vm341, %v5615, 0.0
      %v5801 = vsel %vm342, %v5617, 0.0
      %v5802 = vsel %vm343, %v5619, 0.0
      %v5803 = vsel %vm344, %v5621, 0.0
      %v5804 = vsel %vm345, %v5793, 0.0
      %v5805 = vsel %vm346, %v5795, 0.0
      %v5806 = vpack.c.bf16 %v5798, %v5798
      %v5807 = vpack.c.bf16 %v5799, %v5799
      %v5808 = vpack.c.bf16 %v5800, %v5800
      %v5809 = vpack.c.bf16 %v5801, %v5801
      %v5810 = vpack.c.bf16 %v5802, %v5802
      %v5811 = vpack.c.bf16 %v5803, %v5803
      %v5812 = vpack.c.bf16 %v5804, %v5804
      %v5813 = vpack.c.bf16 %v5805, %v5805
      %v5822 = vunpack.c.l.b16 %v5781
      %v5823 = vunpack.c.l.b16 %v5782
      %v5824 = vunpack.c.l.b16 %v5783
      %v5825 = vunpack.c.l.b16 %v5784
      %v5826 = vunpack.c.l.b16 %v5785
      %v5827 = vunpack.c.l.b16 %v5786
      %v5828 = vunpack.c.l.b16 %v5787
      %v5829 = vunpack.c.l.b16 %v5788
      %v5830 = vpack.c.b16 %v5823, %v5822
      %v5831 = vpack.c.b16 %v5825, %v5824
      %v5832 = vpack.c.b16 %v5827, %v5826
      %v5833 = vpack.c.b16 %v5829, %v5828
      %v5840 = vunpack.c.l.b16 %v5789
      %v5841 = vunpack.c.l.b16 %v5790
      %v5842 = vpack.c.b16 %v5841, %v5840
      %v5852 = vunpack.c.l.b16 %v5806
      %v5853 = vunpack.c.l.b16 %v5807
      %v5854 = vunpack.c.l.b16 %v5808
      %v5855 = vunpack.c.l.b16 %v5809
      %v5856 = vunpack.c.l.b16 %v5810
      %v5857 = vunpack.c.l.b16 %v5811
      %v5858 = vunpack.c.l.b16 %v5812
      %v5859 = vunpack.c.l.b16 %v5813
      %v5860 = vpack.c.b16 %v5853, %v5852
      %v5861 = vpack.c.b16 %v5855, %v5854
      %v5862 = vpack.c.b16 %v5857, %v5856
      %v5863 = vpack.c.b16 %v5859, %v5858
      %s5868 = scalar_lea.vmem %s3, 192
      %v5869 = vld [vmem:[%s5868] sm:$0xf]
      %v5870 = vld [vmem:[%s5868 + $0x4] sm:$0xf]
      %v5871 = vld [vmem:[%s5868 + $0x8] sm:$0xf]
      %v5872 = vld [vmem:[%s5868 + $0xc] sm:$0xf]
      %v5873 = vld [vmem:[%s5868 + $0x10] sm:$0xf]
      %v5874 = vld [vmem:[%s5868 + $0x14] sm:$0xf]
      %v5875 = vld [vmem:[%s5868 + $0x18] sm:$0xf]
      %v5876 = vld [vmem:[%s5868 + $0x1c] sm:$0xf]
      %v5877 = vld [vmem:[%s5868 + $0x20] sm:$0xf]
      %v5878 = vld [vmem:[%s5868 + $0x24] sm:$0xf]
      %v5879 = vld [vmem:[%s5868 + $0x28] sm:$0xf]
      %v5880 = vld [vmem:[%s5868 + $0x2c] sm:$0xf]
      %v5881 = vld [vmem:[%s5868 + $0x30] sm:$0xf]
      %v5882 = vld [vmem:[%s5868 + $0x34] sm:$0xf]
      %v5883 = vld [vmem:[%s5868 + $0x38] sm:$0xf]
      %v5884 = vld [vmem:[%s5868 + $0x3c] sm:$0xf]
      %v5885 = vld [vmem:[%s5868 + $0x40] sm:$0xf]
      %v5886 = vld [vmem:[%s5868 + $0x44] sm:$0xf]
      %v5887 = vld [vmem:[%s5868 + $0x48] sm:$0xf]
      %v5888 = vld [vmem:[%s5868 + $0x4c] sm:$0xf]
      %v5889 = vld [vmem:[%s5868 + $0x50] sm:$0xf]
      %v5890 = vld [vmem:[%s5868 + $0x54] sm:$0xf]
      %v5891 = vld [vmem:[%s5868 + $0x58] sm:$0xf]
      %v5892 = vld [vmem:[%s5868 + $0x5c] sm:$0xf]
      %v5893 = vld [vmem:[%s5868 + $0x60] sm:$0xf]
      %v5894 = vld [vmem:[%s5868 + $0x64] sm:$0xf]
      %v5895 = vld [vmem:[%s5868 + $0x68] sm:$0xf]
      %v5896 = vld [vmem:[%s5868 + $0x6c] sm:$0xf]
      %v5897 = vld [vmem:[%s5868 + $0x70] sm:$0xf]
      %v5898 = vld [vmem:[%s5868 + $0x74] sm:$0xf]
      %v5899 = vld [vmem:[%s5868 + $0x78] sm:$0xf]
      %v5900 = vld [vmem:[%s5868 + $0x7c] sm:$0xf]
      %v5901 = vld [vmem:[%s5868 + $0x80] sm:$0xf]
      %v5902 = vld [vmem:[%s5868 + $0x84] sm:$0xf]
      %v5903 = vld [vmem:[%s5868 + $0x88] sm:$0xf]
      %v5904 = vld [vmem:[%s5868 + $0x8c] sm:$0xf]
      %v5905 = vld [vmem:[%s5868 + $0x90] sm:$0xf]
      %v5906 = vld [vmem:[%s5868 + $0x94] sm:$0xf]
      %v5907 = vld [vmem:[%s5868 + $0x98] sm:$0xf]
      %v5908 = vld [vmem:[%s5868 + $0x9c] sm:$0xf]
      %v5909 = vld [vmem:[%s5868 + $0xa0] sm:$0xf]
      %v5910 = vld [vmem:[%s5868 + $0xa4] sm:$0xf]
      %v5911 = vld [vmem:[%s5868 + $0xa8] sm:$0xf]
      %v5912 = vld [vmem:[%s5868 + $0xac] sm:$0xf]
      %v5913 = vld [vmem:[%s5868 + $0xb0] sm:$0xf]
      %v5914 = vld [vmem:[%s5868 + $0xb4] sm:$0xf]
      %v5915 = vld [vmem:[%s5868 + $0xb8] sm:$0xf]
      %v5916 = vld [vmem:[%s5868 + $0xbc] sm:$0xf]
      %v5965 = vunpack.c.l.b16 %v5869
      %v5966 = vunpack.c.l.b16 %v5870
      %v5967 = vunpack.c.l.b16 %v5871
      %v5968 = vunpack.c.l.b16 %v5872
      %v5969 = vunpack.c.l.b16 %v5873
      %v5970 = vunpack.c.l.b16 %v5874
      %v5971 = vunpack.c.l.b16 %v5875
      %v5972 = vunpack.c.l.b16 %v5876
      %v5973 = vunpack.c.l.b16 %v5877
      %v5974 = vunpack.c.l.b16 %v5878
      %v5975 = vunpack.c.l.b16 %v5879
      %v5976 = vunpack.c.l.b16 %v5880
      %v5977 = vunpack.c.l.b16 %v5881
      %v5978 = vunpack.c.l.b16 %v5882
      %v5979 = vunpack.c.l.b16 %v5883
      %v5980 = vunpack.c.l.b16 %v5884
      %v5981 = vunpack.c.l.b16 %v5885
      %v5982 = vunpack.c.l.b16 %v5886
      %v5983 = vunpack.c.l.b16 %v5887
      %v5984 = vunpack.c.l.b16 %v5888
      %v5985 = vunpack.c.l.b16 %v5889
      %v5986 = vunpack.c.l.b16 %v5890
      %v5987 = vunpack.c.l.b16 %v5891
      %v5988 = vunpack.c.l.b16 %v5892
      %v5989 = vunpack.c.l.b16 %v5893
      %v5990 = vunpack.c.l.b16 %v5894
      %v5991 = vunpack.c.l.b16 %v5895
      %v5992 = vunpack.c.l.b16 %v5896
      %v5993 = vunpack.c.l.b16 %v5897
      %v5994 = vunpack.c.l.b16 %v5898
      %v5995 = vunpack.c.l.b16 %v5899
      %v5996 = vunpack.c.l.b16 %v5900
      %v5997 = vunpack.c.l.b16 %v5901
      %v5998 = vunpack.c.l.b16 %v5902
      %v5999 = vunpack.c.l.b16 %v5903
      %v6000 = vunpack.c.l.b16 %v5904
      %v6001 = vunpack.c.l.b16 %v5905
      %v6002 = vunpack.c.l.b16 %v5906
      %v6003 = vunpack.c.l.b16 %v5907
      %v6004 = vunpack.c.l.b16 %v5908
      %v6005 = vunpack.c.l.b16 %v5909
      %v6006 = vunpack.c.l.b16 %v5910
      %v6007 = vunpack.c.l.b16 %v5911
      %v6008 = vunpack.c.l.b16 %v5912
      %v6009 = vunpack.c.l.b16 %v5913
      %v6010 = vunpack.c.l.b16 %v5914
      %v6011 = vunpack.c.l.b16 %v5915
      %v6012 = vunpack.c.l.b16 %v5916
      %v6013 = vpack.c.b16 %v5966, %v5965
      %v6014 = vpack.c.b16 %v5968, %v5967
      %v6015 = vpack.c.b16 %v5970, %v5969
      %v6016 = vpack.c.b16 %v5972, %v5971
      %v6017 = vpack.c.b16 %v5974, %v5973
      %v6018 = vpack.c.b16 %v5976, %v5975
      %v6019 = vpack.c.b16 %v5978, %v5977
      %v6020 = vpack.c.b16 %v5980, %v5979
      %v6021 = vpack.c.b16 %v5982, %v5981
      %v6022 = vpack.c.b16 %v5984, %v5983
      %v6023 = vpack.c.b16 %v5986, %v5985
      %v6024 = vpack.c.b16 %v5988, %v5987
      %v6025 = vpack.c.b16 %v5990, %v5989
      %v6026 = vpack.c.b16 %v5992, %v5991
      %v6027 = vpack.c.b16 %v5994, %v5993
      %v6028 = vpack.c.b16 %v5996, %v5995
      %v6029 = vpack.c.b16 %v5998, %v5997
      %v6030 = vpack.c.b16 %v6000, %v5999
      %v6031 = vpack.c.b16 %v6002, %v6001
      %v6032 = vpack.c.b16 %v6004, %v6003
      %v6033 = vpack.c.b16 %v6006, %v6005
      %v6034 = vpack.c.b16 %v6008, %v6007
      %v6035 = vpack.c.b16 %v6010, %v6009
      %v6036 = vpack.c.b16 %v6012, %v6011
      %6061 = vmatpush.bf16.msra.mxu0 %v6020
      %6062 = vmatpush.bf16.msra.mxu0 %v6019
      %6063 = vmatpush.bf16.msra.mxu0 %v6018
      %6064 = vmatpush.bf16.msra.mxu0 %v6017
      %6065 = vmatpush.bf16.msra.mxu0 %v6016
      %6066 = vmatpush.bf16.msra.mxu0 %v6015
      %6067 = vmatpush.bf16.msra.mxu0 %v6014
      %6068 = vmatpush.bf16.msra.mxu0 %v6013
      %6069 = vmatmul.bf16.gmra.mxu0 %v5830
      %v6070 = vpop.f32.mrf.mxu0
      %v6071 = vadd.f32 0.0, %v6070
      %v6072 = vpop.f32.mrf.mxu0
      %v6073 = vadd.f32 0.0, %v6072
      %6074 = vmatmul.bf16.gmra.mxu0 %v5831
      %v6075 = vpop.f32.mrf.mxu0
      %v6076 = vadd.f32 0.0, %v6075
      %v6077 = vpop.f32.mrf.mxu0
      %v6078 = vadd.f32 0.0, %v6077
      %6079 = vmatmul.bf16.gmra.mxu0 %v5832
      %v6080 = vpop.f32.mrf.mxu0
      %v6081 = vadd.f32 0.0, %v6080
      %v6082 = vpop.f32.mrf.mxu0
      %v6083 = vadd.f32 0.0, %v6082
      %6084 = vmatmul.bf16.gmra.mxu0 %v5833
      %v6085 = vpop.f32.mrf.mxu0
      %v6086 = vadd.f32 0.0, %v6085
      %v6087 = vpop.f32.mrf.mxu0
      %v6088 = vadd.f32 0.0, %v6087
      %6089 = vdwg.mxu0
      %6090 = vmatpush.bf16.msra.mxu0 %v6028
      %6091 = vmatpush.bf16.msra.mxu0 %v6027
      %6092 = vmatpush.bf16.msra.mxu0 %v6026
      %6093 = vmatpush.bf16.msra.mxu0 %v6025
      %6094 = vmatpush.bf16.msra.mxu0 %v6024
      %6095 = vmatpush.bf16.msra.mxu0 %v6023
      %6096 = vmatpush.bf16.msra.mxu0 %v6022
      %6097 = vmatpush.bf16.msra.mxu0 %v6021
      %6098 = vmatmul.bf16.gmra.mxu0 %v5687
      %v6099 = vpop.f32.mrf.mxu0
      %v6100 = vadd.f32 %v6071, %v6099
      %v6101 = vpop.f32.mrf.mxu0
      %v6102 = vadd.f32 %v6073, %v6101
      %6103 = vmatmul.bf16.gmra.mxu0 %v5688
      %v6104 = vpop.f32.mrf.mxu0
      %v6105 = vadd.f32 %v6076, %v6104
      %v6106 = vpop.f32.mrf.mxu0
      %v6107 = vadd.f32 %v6078, %v6106
      %6108 = vmatmul.bf16.gmra.mxu0 %v5689
      %v6109 = vpop.f32.mrf.mxu0
      %v6110 = vadd.f32 %v6081, %v6109
      %v6111 = vpop.f32.mrf.mxu0
      %v6112 = vadd.f32 %v6083, %v6111
      %6113 = vmatmul.bf16.gmra.mxu0 %v5842
      %v6114 = vpop.f32.mrf.mxu0
      %v6115 = vadd.f32 %v6086, %v6114
      %v6116 = vpop.f32.mrf.mxu0
      %v6117 = vadd.f32 %v6088, %v6116
      %6118 = vdwg.mxu0
      %6119 = vmatpush.bf16.msra.mxu0 %v6036
      %6120 = vmatpush.bf16.msra.mxu0 %v6035
      %6121 = vmatpush.bf16.msra.mxu0 %v6034
      %6122 = vmatpush.bf16.msra.mxu0 %v6033
      %6123 = vmatpush.bf16.msra.mxu0 %v6032
      %6124 = vmatpush.bf16.msra.mxu0 %v6031
      %6125 = vmatpush.bf16.msra.mxu0 %v6030
      %6126 = vmatpush.bf16.msra.mxu0 %v6029
      %6127 = vmatmul.bf16.gmra.mxu0 %v5860
      %v6128 = vpop.f32.mrf.mxu0
      %v6129 = vadd.f32 %v6100, %v6128
      %v6130 = vpop.f32.mrf.mxu0
      %v6131 = vadd.f32 %v6102, %v6130
      %6132 = vmatmul.bf16.gmra.mxu0 %v5861
      %v6133 = vpop.f32.mrf.mxu0
      %v6134 = vadd.f32 %v6105, %v6133
      %v6135 = vpop.f32.mrf.mxu0
      %v6136 = vadd.f32 %v6107, %v6135
      %6137 = vmatmul.bf16.gmra.mxu0 %v5862
      %v6138 = vpop.f32.mrf.mxu0
      %v6139 = vadd.f32 %v6110, %v6138
      %v6140 = vpop.f32.mrf.mxu0
      %v6141 = vadd.f32 %v6112, %v6140
      %6142 = vmatmul.bf16.gmra.mxu0 %v5863
      %v6143 = vpop.f32.mrf.mxu0
      %v6144 = vadd.f32 %v6115, %v6143
      %v6145 = vpop.f32.mrf.mxu0
      %v6146 = vadd.f32 %v6117, %v6145
      %6147 = vdwg.mxu0
      %v6196 = vunpack.c.l.b16 %v5718
      %v6197 = vunpack.c.l.b16 %v5719
      %v6198 = vunpack.c.l.b16 %v5720
      %v6199 = vunpack.c.l.b16 %v5721
      %v6200 = vunpack.c.l.b16 %v5722
      %v6201 = vunpack.c.l.b16 %v5723
      %v6202 = vunpack.c.l.b16 %v5724
      %v6203 = vunpack.c.l.b16 %v5725
      %v6204 = vunpack.c.l.b16 %v5726
      %v6205 = vunpack.c.l.b16 %v5727
      %v6206 = vunpack.c.l.b16 %v5728
      %v6207 = vunpack.c.l.b16 %v5729
      %v6208 = vunpack.c.l.b16 %v5730
      %v6209 = vunpack.c.l.b16 %v5731
      %v6210 = vunpack.c.l.b16 %v5732
      %v6211 = vunpack.c.l.b16 %v5733
      %v6212 = vunpack.c.l.b16 %v5734
      %v6213 = vunpack.c.l.b16 %v5735
      %v6214 = vunpack.c.l.b16 %v5736
      %v6215 = vunpack.c.l.b16 %v5737
      %v6216 = vunpack.c.l.b16 %v5738
      %v6217 = vunpack.c.l.b16 %v5739
      %v6218 = vunpack.c.l.b16 %v5740
      %v6219 = vunpack.c.l.b16 %v5741
      %v6220 = vunpack.c.l.b16 %v5742
      %v6221 = vunpack.c.l.b16 %v5743
      %v6222 = vunpack.c.l.b16 %v5744
      %v6223 = vunpack.c.l.b16 %v5745
      %v6224 = vunpack.c.l.b16 %v5746
      %v6225 = vunpack.c.l.b16 %v5747
      %v6226 = vunpack.c.l.b16 %v5748
      %v6227 = vunpack.c.l.b16 %v5749
      %v6228 = vunpack.c.l.b16 %v5750
      %v6229 = vunpack.c.l.b16 %v5751
      %v6230 = vunpack.c.l.b16 %v5752
      %v6231 = vunpack.c.l.b16 %v5753
      %v6232 = vunpack.c.l.b16 %v5754
      %v6233 = vunpack.c.l.b16 %v5755
      %v6234 = vunpack.c.l.b16 %v5756
      %v6235 = vunpack.c.l.b16 %v5757
      %v6236 = vunpack.c.l.b16 %v5758
      %v6237 = vunpack.c.l.b16 %v5759
      %v6238 = vunpack.c.l.b16 %v5760
      %v6239 = vunpack.c.l.b16 %v5761
      %v6240 = vunpack.c.l.b16 %v5762
      %v6241 = vunpack.c.l.b16 %v5763
      %v6242 = vunpack.c.l.b16 %v5764
      %v6243 = vunpack.c.l.b16 %v5765
      %v6244 = vpack.c.b16 %v6197, %v6196
      %v6245 = vpack.c.b16 %v6199, %v6198
      %v6246 = vpack.c.b16 %v6201, %v6200
      %v6247 = vpack.c.b16 %v6203, %v6202
      %v6248 = vpack.c.b16 %v6205, %v6204
      %v6249 = vpack.c.b16 %v6207, %v6206
      %v6250 = vpack.c.b16 %v6209, %v6208
      %v6251 = vpack.c.b16 %v6211, %v6210
      %v6252 = vpack.c.b16 %v6213, %v6212
      %v6253 = vpack.c.b16 %v6215, %v6214
      %v6254 = vpack.c.b16 %v6217, %v6216
      %v6255 = vpack.c.b16 %v6219, %v6218
      %v6256 = vpack.c.b16 %v6221, %v6220
      %v6257 = vpack.c.b16 %v6223, %v6222
      %v6258 = vpack.c.b16 %v6225, %v6224
      %v6259 = vpack.c.b16 %v6227, %v6226
      %v6260 = vpack.c.b16 %v6229, %v6228
      %v6261 = vpack.c.b16 %v6231, %v6230
      %v6262 = vpack.c.b16 %v6233, %v6232
      %v6263 = vpack.c.b16 %v6235, %v6234
      %v6264 = vpack.c.b16 %v6237, %v6236
      %v6265 = vpack.c.b16 %v6239, %v6238
      %v6266 = vpack.c.b16 %v6241, %v6240
      %v6267 = vpack.c.b16 %v6243, %v6242
      %6292 = vmatpush.bf16.msra.mxu0 %v6251
      %6293 = vmatpush.bf16.msra.mxu0 %v6250
      %6294 = vmatpush.bf16.msra.mxu0 %v6249
      %6295 = vmatpush.bf16.msra.mxu0 %v6248
      %6296 = vmatpush.bf16.msra.mxu0 %v6247
      %6297 = vmatpush.bf16.msra.mxu0 %v6246
      %6298 = vmatpush.bf16.msra.mxu0 %v6245
      %6299 = vmatpush.bf16.msra.mxu0 %v6244
      %6300 = vmatmul.bf16.gmra.mxu0 %v5662
      %v6301 = vpop.f32.mrf.mxu0
      %v6302 = vadd.f32 %v6129, %v6301
      %v6303 = vpop.f32.mrf.mxu0
      %v6304 = vadd.f32 %v6131, %v6303
      %6305 = vmatmul.bf16.gmra.mxu0 %v5663
      %v6306 = vpop.f32.mrf.mxu0
      %v6307 = vadd.f32 %v6134, %v6306
      %v6308 = vpop.f32.mrf.mxu0
      %v6309 = vadd.f32 %v6136, %v6308
      %6310 = vmatmul.bf16.gmra.mxu0 %v5664
      %v6311 = vpop.f32.mrf.mxu0
      %v6312 = vadd.f32 %v6139, %v6311
      %v6313 = vpop.f32.mrf.mxu0
      %v6314 = vadd.f32 %v6141, %v6313
      %6315 = vmatmul.bf16.gmra.mxu0 %v5665
      %v6316 = vpop.f32.mrf.mxu0
      %v6317 = vadd.f32 %v6144, %v6316
      %v6318 = vpop.f32.mrf.mxu0
      %v6319 = vadd.f32 %v6146, %v6318
      %6320 = vdwg.mxu0
      %6321 = vmatpush.bf16.msra.mxu0 %v6259
      %6322 = vmatpush.bf16.msra.mxu0 %v6258
      %6323 = vmatpush.bf16.msra.mxu0 %v6257
      %6324 = vmatpush.bf16.msra.mxu0 %v6256
      %6325 = vmatpush.bf16.msra.mxu0 %v6255
      %6326 = vmatpush.bf16.msra.mxu0 %v6254
      %6327 = vmatpush.bf16.msra.mxu0 %v6253
      %6328 = vmatpush.bf16.msra.mxu0 %v6252
      %6329 = vmatmul.bf16.gmra.mxu0 %v5686
      %v6330 = vpop.f32.mrf.mxu0
      %v6331 = vadd.f32 %v6302, %v6330
      %v6332 = vpop.f32.mrf.mxu0
      %v6333 = vadd.f32 %v6304, %v6332
      %6334 = vmatmul.bf16.gmra.mxu0 %v5687
      %v6335 = vpop.f32.mrf.mxu0
      %v6336 = vadd.f32 %v6307, %v6335
      %v6337 = vpop.f32.mrf.mxu0
      %v6338 = vadd.f32 %v6309, %v6337
      %6339 = vmatmul.bf16.gmra.mxu0 %v5688
      %v6340 = vpop.f32.mrf.mxu0
      %v6341 = vadd.f32 %v6312, %v6340
      %v6342 = vpop.f32.mrf.mxu0
      %v6343 = vadd.f32 %v6314, %v6342
      %6344 = vmatmul.bf16.gmra.mxu0 %v5689
      %v6345 = vpop.f32.mrf.mxu0
      %v6346 = vadd.f32 %v6317, %v6345
      %v6347 = vpop.f32.mrf.mxu0
      %v6348 = vadd.f32 %v6319, %v6347
      %6349 = vdwg.mxu0
      %6350 = vmatpush.bf16.msra.mxu0 %v6267
      %6351 = vmatpush.bf16.msra.mxu0 %v6266
      %6352 = vmatpush.bf16.msra.mxu0 %v6265
      %6353 = vmatpush.bf16.msra.mxu0 %v6264
      %6354 = vmatpush.bf16.msra.mxu0 %v6263
      %6355 = vmatpush.bf16.msra.mxu0 %v6262
      %6356 = vmatpush.bf16.msra.mxu0 %v6261
      %6357 = vmatpush.bf16.msra.mxu0 %v6260
      %6358 = vmatmul.bf16.gmra.mxu0 %v5710
      %v6359 = vpop.f32.mrf.mxu0
      %v6360 = vadd.f32 %v6331, %v6359
      %v6361 = vpop.f32.mrf.mxu0
      %v6362 = vadd.f32 %v6333, %v6361
      %6363 = vmatmul.bf16.gmra.mxu0 %v5711
      %v6364 = vpop.f32.mrf.mxu0
      %v6365 = vadd.f32 %v6336, %v6364
      %v6366 = vpop.f32.mrf.mxu0
      %v6367 = vadd.f32 %v6338, %v6366
      %6368 = vmatmul.bf16.gmra.mxu0 %v5712
      %v6369 = vpop.f32.mrf.mxu0
      %v6370 = vadd.f32 %v6341, %v6369
      %v6371 = vpop.f32.mrf.mxu0
      %v6372 = vadd.f32 %v6343, %v6371
      %6373 = vmatmul.bf16.gmra.mxu0 %v5713
      %v6374 = vpop.f32.mrf.mxu0
      %v6375 = vadd.f32 %v6346, %v6374
      %v6376 = vpop.f32.mrf.mxu0
      %v6377 = vadd.f32 %v6348, %v6376
      %6378 = vdwg.mxu0
      %v6380 = vrot.slane %v5543, 7
      %v6381 = vsel %vm392, %v5769, %v6380
      %v6382 = vrot.slane %v5544, 7
      %v6383 = vsel %vm392, %v6380, %v6382
      %v6386 = vsel %vm331, %v5565, 0.0
      %v6387 = vsel %vm332, %v5567, 0.0
      %v6388 = vsel %vm333, %v5569, 0.0
      %v6389 = vsel %vm334, %v5571, 0.0
      %v6390 = vsel %vm335, %v5768, 0.0
      %v6391 = vsel %vm336, %v5770, 0.0
      %v6392 = vsel %vm337, %v6381, 0.0
      %v6393 = vsel %vm338, %v6383, 0.0
      %v6394 = vpack.c.bf16 %v6386, %v6386
      %v6395 = vpack.c.bf16 %v6387, %v6387
      %v6396 = vpack.c.bf16 %v6388, %v6388
      %v6397 = vpack.c.bf16 %v6389, %v6389
      %v6398 = vpack.c.bf16 %v6390, %v6390
      %v6399 = vpack.c.bf16 %v6391, %v6391
      %v6400 = vpack.c.bf16 %v6392, %v6392
      %v6401 = vpack.c.bf16 %v6393, %v6393
      %v6402 = vpack.c.bf16 %v5543, %v5543
      %v6403 = vpack.c.bf16 %v5544, %v5544
      %v6405 = vrot.slane %v5544, 1
      %v6406 = vsel %vm443, %v5794, %v6405
      %v6407 = vrot.slane %v5545, 1
      %v6408 = vsel %vm443, %v6405, %v6407
      %v6411 = vsel %vm339, %v5615, 0.0
      %v6412 = vsel %vm340, %v5617, 0.0
      %v6413 = vsel %vm341, %v5619, 0.0
      %v6414 = vsel %vm342, %v5621, 0.0
      %v6415 = vsel %vm343, %v5793, 0.0
      %v6416 = vsel %vm344, %v5795, 0.0
      %v6417 = vsel %vm345, %v6406, 0.0
      %v6418 = vsel %vm346, %v6408, 0.0
      %v6419 = vpack.c.bf16 %v6411, %v6411
      %v6420 = vpack.c.bf16 %v6412, %v6412
      %v6421 = vpack.c.bf16 %v6413, %v6413
      %v6422 = vpack.c.bf16 %v6414, %v6414
      %v6423 = vpack.c.bf16 %v6415, %v6415
      %v6424 = vpack.c.bf16 %v6416, %v6416
      %v6425 = vpack.c.bf16 %v6417, %v6417
      %v6426 = vpack.c.bf16 %v6418, %v6418
      %v6435 = vunpack.c.l.b16 %v6394
      %v6436 = vunpack.c.l.b16 %v6395
      %v6437 = vunpack.c.l.b16 %v6396
      %v6438 = vunpack.c.l.b16 %v6397
      %v6439 = vunpack.c.l.b16 %v6398
      %v6440 = vunpack.c.l.b16 %v6399
      %v6441 = vunpack.c.l.b16 %v6400
      %v6442 = vunpack.c.l.b16 %v6401
      %v6443 = vpack.c.b16 %v6436, %v6435
      %v6444 = vpack.c.b16 %v6438, %v6437
      %v6445 = vpack.c.b16 %v6440, %v6439
      %v6446 = vpack.c.b16 %v6442, %v6441
      %v6453 = vunpack.c.l.b16 %v6402
      %v6454 = vunpack.c.l.b16 %v6403
      %v6455 = vpack.c.b16 %v6454, %v6453
      %v6465 = vunpack.c.l.b16 %v6419
      %v6466 = vunpack.c.l.b16 %v6420
      %v6467 = vunpack.c.l.b16 %v6421
      %v6468 = vunpack.c.l.b16 %v6422
      %v6469 = vunpack.c.l.b16 %v6423
      %v6470 = vunpack.c.l.b16 %v6424
      %v6471 = vunpack.c.l.b16 %v6425
      %v6472 = vunpack.c.l.b16 %v6426
      %v6473 = vpack.c.b16 %v6466, %v6465
      %v6474 = vpack.c.b16 %v6468, %v6467
      %v6475 = vpack.c.b16 %v6470, %v6469
      %v6476 = vpack.c.b16 %v6472, %v6471
      %s6481 = scalar_lea.vmem %s3, 384
      %v6482 = vld [vmem:[%s6481] sm:$0xf]
      %v6483 = vld [vmem:[%s6481 + $0x4] sm:$0xf]
      %v6484 = vld [vmem:[%s6481 + $0x8] sm:$0xf]
      %v6485 = vld [vmem:[%s6481 + $0xc] sm:$0xf]
      %v6486 = vld [vmem:[%s6481 + $0x10] sm:$0xf]
      %v6487 = vld [vmem:[%s6481 + $0x14] sm:$0xf]
      %v6488 = vld [vmem:[%s6481 + $0x18] sm:$0xf]
      %v6489 = vld [vmem:[%s6481 + $0x1c] sm:$0xf]
      %v6490 = vld [vmem:[%s6481 + $0x20] sm:$0xf]
      %v6491 = vld [vmem:[%s6481 + $0x24] sm:$0xf]
      %v6492 = vld [vmem:[%s6481 + $0x28] sm:$0xf]
      %v6493 = vld [vmem:[%s6481 + $0x2c] sm:$0xf]
      %v6494 = vld [vmem:[%s6481 + $0x30] sm:$0xf]
      %v6495 = vld [vmem:[%s6481 + $0x34] sm:$0xf]
      %v6496 = vld [vmem:[%s6481 + $0x38] sm:$0xf]
      %v6497 = vld [vmem:[%s6481 + $0x3c] sm:$0xf]
      %v6498 = vld [vmem:[%s6481 + $0x40] sm:$0xf]
      %v6499 = vld [vmem:[%s6481 + $0x44] sm:$0xf]
      %v6500 = vld [vmem:[%s6481 + $0x48] sm:$0xf]
      %v6501 = vld [vmem:[%s6481 + $0x4c] sm:$0xf]
      %v6502 = vld [vmem:[%s6481 + $0x50] sm:$0xf]
      %v6503 = vld [vmem:[%s6481 + $0x54] sm:$0xf]
      %v6504 = vld [vmem:[%s6481 + $0x58] sm:$0xf]
      %v6505 = vld [vmem:[%s6481 + $0x5c] sm:$0xf]
      %v6506 = vld [vmem:[%s6481 + $0x60] sm:$0xf]
      %v6507 = vld [vmem:[%s6481 + $0x64] sm:$0xf]
      %v6508 = vld [vmem:[%s6481 + $0x68] sm:$0xf]
      %v6509 = vld [vmem:[%s6481 + $0x6c] sm:$0xf]
      %v6510 = vld [vmem:[%s6481 + $0x70] sm:$0xf]
      %v6511 = vld [vmem:[%s6481 + $0x74] sm:$0xf]
      %v6512 = vld [vmem:[%s6481 + $0x78] sm:$0xf]
      %v6513 = vld [vmem:[%s6481 + $0x7c] sm:$0xf]
      %v6514 = vld [vmem:[%s6481 + $0x80] sm:$0xf]
      %v6515 = vld [vmem:[%s6481 + $0x84] sm:$0xf]
      %v6516 = vld [vmem:[%s6481 + $0x88] sm:$0xf]
      %v6517 = vld [vmem:[%s6481 + $0x8c] sm:$0xf]
      %v6518 = vld [vmem:[%s6481 + $0x90] sm:$0xf]
      %v6519 = vld [vmem:[%s6481 + $0x94] sm:$0xf]
      %v6520 = vld [vmem:[%s6481 + $0x98] sm:$0xf]
      %v6521 = vld [vmem:[%s6481 + $0x9c] sm:$0xf]
      %v6522 = vld [vmem:[%s6481 + $0xa0] sm:$0xf]
      %v6523 = vld [vmem:[%s6481 + $0xa4] sm:$0xf]
      %v6524 = vld [vmem:[%s6481 + $0xa8] sm:$0xf]
      %v6525 = vld [vmem:[%s6481 + $0xac] sm:$0xf]
      %v6526 = vld [vmem:[%s6481 + $0xb0] sm:$0xf]
      %v6527 = vld [vmem:[%s6481 + $0xb4] sm:$0xf]
      %v6528 = vld [vmem:[%s6481 + $0xb8] sm:$0xf]
      %v6529 = vld [vmem:[%s6481 + $0xbc] sm:$0xf]
      %v6578 = vunpack.c.l.b16 %v6482
      %v6579 = vunpack.c.l.b16 %v6483
      %v6580 = vunpack.c.l.b16 %v6484
      %v6581 = vunpack.c.l.b16 %v6485
      %v6582 = vunpack.c.l.b16 %v6486
      %v6583 = vunpack.c.l.b16 %v6487
      %v6584 = vunpack.c.l.b16 %v6488
      %v6585 = vunpack.c.l.b16 %v6489
      %v6586 = vunpack.c.l.b16 %v6490
      %v6587 = vunpack.c.l.b16 %v6491
      %v6588 = vunpack.c.l.b16 %v6492
      %v6589 = vunpack.c.l.b16 %v6493
      %v6590 = vunpack.c.l.b16 %v6494
      %v6591 = vunpack.c.l.b16 %v6495
      %v6592 = vunpack.c.l.b16 %v6496
      %v6593 = vunpack.c.l.b16 %v6497
      %v6594 = vunpack.c.l.b16 %v6498
      %v6595 = vunpack.c.l.b16 %v6499
      %v6596 = vunpack.c.l.b16 %v6500
      %v6597 = vunpack.c.l.b16 %v6501
      %v6598 = vunpack.c.l.b16 %v6502
      %v6599 = vunpack.c.l.b16 %v6503
      %v6600 = vunpack.c.l.b16 %v6504
      %v6601 = vunpack.c.l.b16 %v6505
      %v6602 = vunpack.c.l.b16 %v6506
      %v6603 = vunpack.c.l.b16 %v6507
      %v6604 = vunpack.c.l.b16 %v6508
      %v6605 = vunpack.c.l.b16 %v6509
      %v6606 = vunpack.c.l.b16 %v6510
      %v6607 = vunpack.c.l.b16 %v6511
      %v6608 = vunpack.c.l.b16 %v6512
      %v6609 = vunpack.c.l.b16 %v6513
      %v6610 = vunpack.c.l.b16 %v6514
      %v6611 = vunpack.c.l.b16 %v6515
      %v6612 = vunpack.c.l.b16 %v6516
      %v6613 = vunpack.c.l.b16 %v6517
      %v6614 = vunpack.c.l.b16 %v6518
      %v6615 = vunpack.c.l.b16 %v6519
      %v6616 = vunpack.c.l.b16 %v6520
      %v6617 = vunpack.c.l.b16 %v6521
      %v6618 = vunpack.c.l.b16 %v6522
      %v6619 = vunpack.c.l.b16 %v6523
      %v6620 = vunpack.c.l.b16 %v6524
      %v6621 = vunpack.c.l.b16 %v6525
      %v6622 = vunpack.c.l.b16 %v6526
      %v6623 = vunpack.c.l.b16 %v6527
      %v6624 = vunpack.c.l.b16 %v6528
      %v6625 = vunpack.c.l.b16 %v6529
      %v6626 = vpack.c.b16 %v6579, %v6578
      %v6627 = vpack.c.b16 %v6581, %v6580
      %v6628 = vpack.c.b16 %v6583, %v6582
      %v6629 = vpack.c.b16 %v6585, %v6584
      %v6630 = vpack.c.b16 %v6587, %v6586
      %v6631 = vpack.c.b16 %v6589, %v6588
      %v6632 = vpack.c.b16 %v6591, %v6590
      %v6633 = vpack.c.b16 %v6593, %v6592
      %v6634 = vpack.c.b16 %v6595, %v6594
      %v6635 = vpack.c.b16 %v6597, %v6596
      %v6636 = vpack.c.b16 %v6599, %v6598
      %v6637 = vpack.c.b16 %v6601, %v6600
      %v6638 = vpack.c.b16 %v6603, %v6602
      %v6639 = vpack.c.b16 %v6605, %v6604
      %v6640 = vpack.c.b16 %v6607, %v6606
      %v6641 = vpack.c.b16 %v6609, %v6608
      %v6642 = vpack.c.b16 %v6611, %v6610
      %v6643 = vpack.c.b16 %v6613, %v6612
      %v6644 = vpack.c.b16 %v6615, %v6614
      %v6645 = vpack.c.b16 %v6617, %v6616
      %v6646 = vpack.c.b16 %v6619, %v6618
      %v6647 = vpack.c.b16 %v6621, %v6620
      %v6648 = vpack.c.b16 %v6623, %v6622
      %v6649 = vpack.c.b16 %v6625, %v6624
      %6674 = vmatpush.bf16.msra.mxu0 %v6633
      %6675 = vmatpush.bf16.msra.mxu0 %v6632
      %6676 = vmatpush.bf16.msra.mxu0 %v6631
      %6677 = vmatpush.bf16.msra.mxu0 %v6630
      %6678 = vmatpush.bf16.msra.mxu0 %v6629
      %6679 = vmatpush.bf16.msra.mxu0 %v6628
      %6680 = vmatpush.bf16.msra.mxu0 %v6627
      %6681 = vmatpush.bf16.msra.mxu0 %v6626
      %6682 = vmatmul.bf16.gmra.mxu0 %v6443
      %v6683 = vpop.f32.mrf.mxu0
      %v6684 = vadd.f32 0.0, %v6683
      %v6685 = vpop.f32.mrf.mxu0
      %v6686 = vadd.f32 0.0, %v6685
      %6687 = vmatmul.bf16.gmra.mxu0 %v6444
      %v6688 = vpop.f32.mrf.mxu0
      %v6689 = vadd.f32 0.0, %v6688
      %v6690 = vpop.f32.mrf.mxu0
      %v6691 = vadd.f32 0.0, %v6690
      %6692 = vmatmul.bf16.gmra.mxu0 %v6445
      %v6693 = vpop.f32.mrf.mxu0
      %v6694 = vadd.f32 0.0, %v6693
      %v6695 = vpop.f32.mrf.mxu0
      %v6696 = vadd.f32 0.0, %v6695
      %6697 = vmatmul.bf16.gmra.mxu0 %v6446
      %v6698 = vpop.f32.mrf.mxu0
      %v6699 = vadd.f32 0.0, %v6698
      %v6700 = vpop.f32.mrf.mxu0
      %v6701 = vadd.f32 0.0, %v6700
      %6702 = vdwg.mxu0
      %6703 = vmatpush.bf16.msra.mxu0 %v6641
      %6704 = vmatpush.bf16.msra.mxu0 %v6640
      %6705 = vmatpush.bf16.msra.mxu0 %v6639
      %6706 = vmatpush.bf16.msra.mxu0 %v6638
      %6707 = vmatpush.bf16.msra.mxu0 %v6637
      %6708 = vmatpush.bf16.msra.mxu0 %v6636
      %6709 = vmatpush.bf16.msra.mxu0 %v6635
      %6710 = vmatpush.bf16.msra.mxu0 %v6634
      %6711 = vmatmul.bf16.gmra.mxu0 %v5688
      %v6712 = vpop.f32.mrf.mxu0
      %v6713 = vadd.f32 %v6684, %v6712
      %v6714 = vpop.f32.mrf.mxu0
      %v6715 = vadd.f32 %v6686, %v6714
      %6716 = vmatmul.bf16.gmra.mxu0 %v5689
      %v6717 = vpop.f32.mrf.mxu0
      %v6718 = vadd.f32 %v6689, %v6717
      %v6719 = vpop.f32.mrf.mxu0
      %v6720 = vadd.f32 %v6691, %v6719
      %6721 = vmatmul.bf16.gmra.mxu0 %v5842
      %v6722 = vpop.f32.mrf.mxu0
      %v6723 = vadd.f32 %v6694, %v6722
      %v6724 = vpop.f32.mrf.mxu0
      %v6725 = vadd.f32 %v6696, %v6724
      %6726 = vmatmul.bf16.gmra.mxu0 %v6455
      %v6727 = vpop.f32.mrf.mxu0
      %v6728 = vadd.f32 %v6699, %v6727
      %v6729 = vpop.f32.mrf.mxu0
      %v6730 = vadd.f32 %v6701, %v6729
      %6731 = vdwg.mxu0
      %6732 = vmatpush.bf16.msra.mxu0 %v6649
      %6733 = vmatpush.bf16.msra.mxu0 %v6648
      %6734 = vmatpush.bf16.msra.mxu0 %v6647
      %6735 = vmatpush.bf16.msra.mxu0 %v6646
      %6736 = vmatpush.bf16.msra.mxu0 %v6645
      %6737 = vmatpush.bf16.msra.mxu0 %v6644
      %6738 = vmatpush.bf16.msra.mxu0 %v6643
      %6739 = vmatpush.bf16.msra.mxu0 %v6642
      %6740 = vmatmul.bf16.gmra.mxu0 %v6473
      %v6741 = vpop.f32.mrf.mxu0
      %v6742 = vadd.f32 %v6713, %v6741
      %v6743 = vpop.f32.mrf.mxu0
      %v6744 = vadd.f32 %v6715, %v6743
      %6745 = vmatmul.bf16.gmra.mxu0 %v6474
      %v6746 = vpop.f32.mrf.mxu0
      %v6747 = vadd.f32 %v6718, %v6746
      %v6748 = vpop.f32.mrf.mxu0
      %v6749 = vadd.f32 %v6720, %v6748
      %6750 = vmatmul.bf16.gmra.mxu0 %v6475
      %v6751 = vpop.f32.mrf.mxu0
      %v6752 = vadd.f32 %v6723, %v6751
      %v6753 = vpop.f32.mrf.mxu0
      %v6754 = vadd.f32 %v6725, %v6753
      %6755 = vmatmul.bf16.gmra.mxu0 %v6476
      %v6756 = vpop.f32.mrf.mxu0
      %v6757 = vadd.f32 %v6728, %v6756
      %v6758 = vpop.f32.mrf.mxu0
      %v6759 = vadd.f32 %v6730, %v6758
      %6760 = vdwg.mxu0
      %v6761 = vadd.f32 %v6360, %v6742
      %v6762 = vadd.f32 %v6362, %v6744
      %v6763 = vadd.f32 %v6365, %v6747
      %v6764 = vadd.f32 %v6367, %v6749
      %v6765 = vadd.f32 %v6370, %v6752
      %v6766 = vadd.f32 %v6372, %v6754
      %v6767 = vadd.f32 %v6375, %v6757
      %v6768 = vadd.f32 %v6377, %v6759
      %v6769 = vld [vmem:[%s219 + $0xc] sm:$0xf]
      %v6770 = vld [vmem:[%s219 + $0x10] sm:$0xf]
      %v6771 = vld [vmem:[%s219 + $0x14] sm:$0xf]
      %v6772 = vld [vmem:[%s219 + $0x18] sm:$0xf]
      %v6773 = vld [vmem:[%s219 + $0x1c] sm:$0xf]
      %v6774 = vld [vmem:[%s219 + $0x20] sm:$0xf]
      %v6775 = vld [vmem:[%s219 + $0x24] sm:$0xf]
      %v6776 = vld [vmem:[%s219 + $0x28] sm:$0xf]
      %v6777 = vunpack.c.l.bf16 %v6769
      %v6778 = vunpack.c.l.bf16 %v6770
      %v6779 = vunpack.c.l.bf16 %v6771
      %v6780 = vunpack.c.l.bf16 %v6772
      %v6781 = vunpack.c.l.bf16 %v6773
      %v6782 = vunpack.c.l.bf16 %v6774
      %v6783 = vunpack.c.l.bf16 %v6775
      %v6784 = vunpack.c.l.bf16 %v6776
      %v6786 = vperm.slane %v354, 0
      %v6788 = vadd.f32 %v6761, %v6786
      %v6789 = vadd.f32 %v6762, %v6786
      %v6790 = vadd.f32 %v6763, %v6786
      %v6791 = vadd.f32 %v6764, %v6786
      %v6792 = vadd.f32 %v6765, %v6786
      %v6793 = vadd.f32 %v6766, %v6786
      %v6794 = vadd.f32 %v6767, %v6786
      %v6795 = vadd.f32 %v6768, %v6786
      %v6796 = vadd.f32 %v6788, %v6777
      %v6797 = vadd.f32 %v6789, %v6778
      %v6798 = vadd.f32 %v6790, %v6779
      %v6799 = vadd.f32 %v6791, %v6780
      %v6800 = vadd.f32 %v6792, %v6781
      %v6801 = vadd.f32 %v6793, %v6782
      %v6802 = vadd.f32 %v6794, %v6783
      %v6803 = vadd.f32 %v6795, %v6784
      %v6804 = vmax.f32 %v6796, 0.0
      %v6805 = vmax.f32 %v6797, 0.0
      %v6806 = vmax.f32 %v6798, 0.0
      %v6807 = vmax.f32 %v6799, 0.0
      %v6808 = vmax.f32 %v6800, 0.0
      %v6809 = vmax.f32 %v6801, 0.0
      %v6810 = vmax.f32 %v6802, 0.0
      %v6811 = vmax.f32 %v6803, 0.0
      %v6812 = vmin.f32 %v6804, 6.0
      %v6813 = vmin.f32 %v6805, 6.0
      %v6814 = vmin.f32 %v6806, 6.0
      %v6815 = vmin.f32 %v6807, 6.0
      %v6816 = vmin.f32 %v6808, 6.0
      %v6817 = vmin.f32 %v6809, 6.0
      %v6818 = vmin.f32 %v6810, 6.0
      %v6819 = vmin.f32 %v6811, 6.0
      %v6820 = vpack.c.bf16 %v6812, %v6812
      %v6821 = vpack.c.bf16 %v6813, %v6813
      %v6822 = vpack.c.bf16 %v6814, %v6814
      %v6823 = vpack.c.bf16 %v6815, %v6815
      %v6824 = vpack.c.bf16 %v6816, %v6816
      %v6825 = vpack.c.bf16 %v6817, %v6817
      %v6826 = vpack.c.bf16 %v6818, %v6818
      %v6827 = vpack.c.bf16 %v6819, %v6819
      %6828 = vst [vmem:[%s224] sm:$0xf] %v6820
      %6829 = vst [vmem:[%s224 + $0x4] sm:$0xf] %v6821
      %6830 = vst [vmem:[%s224 + $0x8] sm:$0xf] %v6822
      %6831 = vst [vmem:[%s224 + $0xc] sm:$0xf] %v6823
      %6832 = vst [vmem:[%s224 + $0x10] sm:$0xf] %v6824
      %6833 = vst [vmem:[%s224 + $0x14] sm:$0xf] %v6825
      %6834 = vst [vmem:[%s224 + $0x18] sm:$0xf] %v6826
      %6835 = vst [vmem:[%s224 + $0x1c] sm:$0xf] %v6827
      %v6836 = vld [vmem:[#allocation2 + $0x20] sm:$0xf]
      %v6837 = vld [vmem:[#allocation2 + $0x24] sm:$0xf]
      %v6838 = vld [vmem:[#allocation2 + $0x28] sm:$0xf]
      %v6839 = vld [vmem:[#allocation2 + $0x2c] sm:$0xf]
      %v6840 = vld [vmem:[#allocation2 + $0x30] sm:$0xf]
      %v6841 = vld [vmem:[#allocation2 + $0x34] sm:$0xf]
      %v6842 = vld [vmem:[#allocation2 + $0x38] sm:$0xf]
      %v6843 = vld [vmem:[#allocation2 + $0x3c] sm:$0xf]
      %v6844 = vld [vmem:[#allocation2 + $0x40] sm:$0xf]
      %v6845 = vld [vmem:[#allocation2 + $0x44] sm:$0xf]
      %v6846 = vld [vmem:[#allocation2 + $0x48] sm:$0xf]
      %v6847 = vld [vmem:[#allocation2 + $0x4c] sm:$0xf]
      %v6848 = vld [vmem:[#allocation2 + $0x50] sm:$0xf]
      %v6849 = vld [vmem:[#allocation2 + $0x54] sm:$0xf]
      %v6850 = vunpack.c.l.bf16 %v6836
      %v6851 = vunpack.c.l.bf16 %v6837
      %v6852 = vunpack.c.l.bf16 %v6838
      %v6853 = vunpack.c.l.bf16 %v6839
      %v6854 = vunpack.c.l.bf16 %v6840
      %v6855 = vunpack.c.l.bf16 %v6841
      %v6856 = vunpack.c.l.bf16 %v6842
      %v6857 = vunpack.c.l.bf16 %v6843
      %v6858 = vunpack.c.l.bf16 %v6844
      %v6859 = vunpack.c.l.bf16 %v6845
      %v6860 = vunpack.c.l.bf16 %v6846
      %v6861 = vunpack.c.l.bf16 %v6847
      %v6862 = vunpack.c.l.bf16 %v6848
      %v6863 = vunpack.c.l.bf16 %v6849
      %v6873 = vrot.slane %v6850, 7
      %v6874 = vrot.slane %v6851, 7
      %v6875 = vsel %vm392, %v6873, %v6874
      %v6876 = vrot.slane %v6852, 7
      %v6877 = vsel %vm392, %v6874, %v6876
      %v6878 = vrot.slane %v6853, 7
      %v6879 = vsel %vm392, %v6876, %v6878
      %v6880 = vrot.slane %v6854, 7
      %v6881 = vsel %vm392, %v6878, %v6880
      %v6882 = vrot.slane %v6855, 7
      %v6883 = vsel %vm392, %v6880, %v6882
      %v6884 = vrot.slane %v6856, 7
      %v6885 = vsel %vm392, %v6882, %v6884
      %v6886 = vrot.slane %v6857, 7
      %v6887 = vsel %vm392, %v6884, %v6886
      %v6888 = vrot.slane %v6858, 7
      %v6889 = vsel %vm392, %v6886, %v6888
      %v6898 = vsel %vm331, %v6875, 0.0
      %v6899 = vsel %vm332, %v6877, 0.0
      %v6900 = vsel %vm333, %v6879, 0.0
      %v6901 = vsel %vm334, %v6881, 0.0
      %v6902 = vsel %vm335, %v6883, 0.0
      %v6903 = vsel %vm336, %v6885, 0.0
      %v6904 = vsel %vm337, %v6887, 0.0
      %v6905 = vsel %vm338, %v6889, 0.0
      %v6906 = vpack.c.bf16 %v6898, %v6898
      %v6907 = vpack.c.bf16 %v6899, %v6899
      %v6908 = vpack.c.bf16 %v6900, %v6900
      %v6909 = vpack.c.bf16 %v6901, %v6901
      %v6910 = vpack.c.bf16 %v6902, %v6902
      %v6911 = vpack.c.bf16 %v6903, %v6903
      %v6912 = vpack.c.bf16 %v6904, %v6904
      %v6913 = vpack.c.bf16 %v6905, %v6905
      %v6914 = vpack.c.bf16 %v6851, %v6851
      %v6915 = vpack.c.bf16 %v6852, %v6852
      %v6916 = vpack.c.bf16 %v6853, %v6853
      %v6917 = vpack.c.bf16 %v6854, %v6854
      %v6918 = vpack.c.bf16 %v6855, %v6855
      %v6919 = vpack.c.bf16 %v6856, %v6856
      %v6920 = vpack.c.bf16 %v6857, %v6857
      %v6921 = vpack.c.bf16 %v6858, %v6858
      %v6923 = vrot.slane %v6851, 1
      %v6924 = vrot.slane %v6852, 1
      %v6925 = vsel %vm443, %v6923, %v6924
      %v6926 = vrot.slane %v6853, 1
      %v6927 = vsel %vm443, %v6924, %v6926
      %v6928 = vrot.slane %v6854, 1
      %v6929 = vsel %vm443, %v6926, %v6928
      %v6930 = vrot.slane %v6855, 1
      %v6931 = vsel %vm443, %v6928, %v6930
      %v6932 = vrot.slane %v6856, 1
      %v6933 = vsel %vm443, %v6930, %v6932
      %v6934 = vrot.slane %v6857, 1
      %v6935 = vsel %vm443, %v6932, %v6934
      %v6936 = vrot.slane %v6858, 1
      %v6937 = vsel %vm443, %v6934, %v6936
      %v6938 = vrot.slane %v6859, 1
      %v6939 = vsel %vm443, %v6936, %v6938
      %v6948 = vsel %vm339, %v6925, 0.0
      %v6949 = vsel %vm340, %v6927, 0.0
      %v6950 = vsel %vm341, %v6929, 0.0
      %v6951 = vsel %vm342, %v6931, 0.0
      %v6952 = vsel %vm343, %v6933, 0.0
      %v6953 = vsel %vm344, %v6935, 0.0
      %v6954 = vsel %vm345, %v6937, 0.0
      %v6955 = vsel %vm346, %v6939, 0.0
      %v6956 = vpack.c.bf16 %v6948, %v6948
      %v6957 = vpack.c.bf16 %v6949, %v6949
      %v6958 = vpack.c.bf16 %v6950, %v6950
      %v6959 = vpack.c.bf16 %v6951, %v6951
      %v6960 = vpack.c.bf16 %v6952, %v6952
      %v6961 = vpack.c.bf16 %v6953, %v6953
      %v6962 = vpack.c.bf16 %v6954, %v6954
      %v6963 = vpack.c.bf16 %v6955, %v6955
      %v6972 = vunpack.c.l.b16 %v6906
      %v6973 = vunpack.c.l.b16 %v6907
      %v6974 = vunpack.c.l.b16 %v6908
      %v6975 = vunpack.c.l.b16 %v6909
      %v6976 = vunpack.c.l.b16 %v6910
      %v6977 = vunpack.c.l.b16 %v6911
      %v6978 = vunpack.c.l.b16 %v6912
      %v6979 = vunpack.c.l.b16 %v6913
      %v6980 = vpack.c.b16 %v6973, %v6972
      %v6981 = vpack.c.b16 %v6975, %v6974
      %v6982 = vpack.c.b16 %v6977, %v6976
      %v6983 = vpack.c.b16 %v6979, %v6978
      %v6996 = vunpack.c.l.b16 %v6914
      %v6997 = vunpack.c.l.b16 %v6915
      %v6998 = vunpack.c.l.b16 %v6916
      %v6999 = vunpack.c.l.b16 %v6917
      %v7000 = vunpack.c.l.b16 %v6918
      %v7001 = vunpack.c.l.b16 %v6919
      %v7002 = vunpack.c.l.b16 %v6920
      %v7003 = vunpack.c.l.b16 %v6921
      %v7004 = vpack.c.b16 %v6997, %v6996
      %v7005 = vpack.c.b16 %v6999, %v6998
      %v7006 = vpack.c.b16 %v7001, %v7000
      %v7007 = vpack.c.b16 %v7003, %v7002
      %v7020 = vunpack.c.l.b16 %v6956
      %v7021 = vunpack.c.l.b16 %v6957
      %v7022 = vunpack.c.l.b16 %v6958
      %v7023 = vunpack.c.l.b16 %v6959
      %v7024 = vunpack.c.l.b16 %v6960
      %v7025 = vunpack.c.l.b16 %v6961
      %v7026 = vunpack.c.l.b16 %v6962
      %v7027 = vunpack.c.l.b16 %v6963
      %v7028 = vpack.c.b16 %v7021, %v7020
      %v7029 = vpack.c.b16 %v7023, %v7022
      %v7030 = vpack.c.b16 %v7025, %v7024
      %v7031 = vpack.c.b16 %v7027, %v7026
      %v7036 = vld [vmem:[%s3] sm:$0xf]
      %v7037 = vld [vmem:[%s3 + $0x4] sm:$0xf]
      %v7038 = vld [vmem:[%s3 + $0x8] sm:$0xf]
      %v7039 = vld [vmem:[%s3 + $0xc] sm:$0xf]
      %v7040 = vld [vmem:[%s3 + $0x10] sm:$0xf]
      %v7041 = vld [vmem:[%s3 + $0x14] sm:$0xf]
      %v7042 = vld [vmem:[%s3 + $0x18] sm:$0xf]
      %v7043 = vld [vmem:[%s3 + $0x1c] sm:$0xf]
      %v7044 = vld [vmem:[%s3 + $0x20] sm:$0xf]
      %v7045 = vld [vmem:[%s3 + $0x24] sm:$0xf]
      %v7046 = vld [vmem:[%s3 + $0x28] sm:$0xf]
      %v7047 = vld [vmem:[%s3 + $0x2c] sm:$0xf]
      %v7048 = vld [vmem:[%s3 + $0x30] sm:$0xf]
      %v7049 = vld [vmem:[%s3 + $0x34] sm:$0xf]
      %v7050 = vld [vmem:[%s3 + $0x38] sm:$0xf]
      %v7051 = vld [vmem:[%s3 + $0x3c] sm:$0xf]
      %v7052 = vld [vmem:[%s3 + $0x40] sm:$0xf]
      %v7053 = vld [vmem:[%s3 + $0x44] sm:$0xf]
      %v7054 = vld [vmem:[%s3 + $0x48] sm:$0xf]
      %v7055 = vld [vmem:[%s3 + $0x4c] sm:$0xf]
      %v7056 = vld [vmem:[%s3 + $0x50] sm:$0xf]
      %v7057 = vld [vmem:[%s3 + $0x54] sm:$0xf]
      %v7058 = vld [vmem:[%s3 + $0x58] sm:$0xf]
      %v7059 = vld [vmem:[%s3 + $0x5c] sm:$0xf]
      %v7060 = vld [vmem:[%s3 + $0x60] sm:$0xf]
      %v7061 = vld [vmem:[%s3 + $0x64] sm:$0xf]
      %v7062 = vld [vmem:[%s3 + $0x68] sm:$0xf]
      %v7063 = vld [vmem:[%s3 + $0x6c] sm:$0xf]
      %v7064 = vld [vmem:[%s3 + $0x70] sm:$0xf]
      %v7065 = vld [vmem:[%s3 + $0x74] sm:$0xf]
      %v7066 = vld [vmem:[%s3 + $0x78] sm:$0xf]
      %v7067 = vld [vmem:[%s3 + $0x7c] sm:$0xf]
      %v7068 = vld [vmem:[%s3 + $0x80] sm:$0xf]
      %v7069 = vld [vmem:[%s3 + $0x84] sm:$0xf]
      %v7070 = vld [vmem:[%s3 + $0x88] sm:$0xf]
      %v7071 = vld [vmem:[%s3 + $0x8c] sm:$0xf]
      %v7072 = vld [vmem:[%s3 + $0x90] sm:$0xf]
      %v7073 = vld [vmem:[%s3 + $0x94] sm:$0xf]
      %v7074 = vld [vmem:[%s3 + $0x98] sm:$0xf]
      %v7075 = vld [vmem:[%s3 + $0x9c] sm:$0xf]
      %v7076 = vld [vmem:[%s3 + $0xa0] sm:$0xf]
      %v7077 = vld [vmem:[%s3 + $0xa4] sm:$0xf]
      %v7078 = vld [vmem:[%s3 + $0xa8] sm:$0xf]
      %v7079 = vld [vmem:[%s3 + $0xac] sm:$0xf]
      %v7080 = vld [vmem:[%s3 + $0xb0] sm:$0xf]
      %v7081 = vld [vmem:[%s3 + $0xb4] sm:$0xf]
      %v7082 = vld [vmem:[%s3 + $0xb8] sm:$0xf]
      %v7083 = vld [vmem:[%s3 + $0xbc] sm:$0xf]
      %v7085 = vrot.slane %v6859, 7
      %v7086 = vsel %vm392, %v6888, %v7085
      %v7087 = vrot.slane %v6860, 7
      %v7088 = vsel %vm392, %v7085, %v7087
      %v7091 = vsel %vm331, %v6879, 0.0
      %v7092 = vsel %vm332, %v6881, 0.0
      %v7093 = vsel %vm333, %v6883, 0.0
      %v7094 = vsel %vm334, %v6885, 0.0
      %v7095 = vsel %vm335, %v6887, 0.0
      %v7096 = vsel %vm336, %v6889, 0.0
      %v7097 = vsel %vm337, %v7086, 0.0
      %v7098 = vsel %vm338, %v7088, 0.0
      %v7099 = vpack.c.bf16 %v7091, %v7091
      %v7100 = vpack.c.bf16 %v7092, %v7092
      %v7101 = vpack.c.bf16 %v7093, %v7093
      %v7102 = vpack.c.bf16 %v7094, %v7094
      %v7103 = vpack.c.bf16 %v7095, %v7095
      %v7104 = vpack.c.bf16 %v7096, %v7096
      %v7105 = vpack.c.bf16 %v7097, %v7097
      %v7106 = vpack.c.bf16 %v7098, %v7098
      %v7107 = vpack.c.bf16 %v6859, %v6859
      %v7108 = vpack.c.bf16 %v6860, %v6860
      %v7110 = vrot.slane %v6860, 1
      %v7111 = vsel %vm443, %v6938, %v7110
      %v7112 = vrot.slane %v6861, 1
      %v7113 = vsel %vm443, %v7110, %v7112
      %v7116 = vsel %vm339, %v6929, 0.0
      %v7117 = vsel %vm340, %v6931, 0.0
      %v7118 = vsel %vm341, %v6933, 0.0
      %v7119 = vsel %vm342, %v6935, 0.0
      %v7120 = vsel %vm343, %v6937, 0.0
      %v7121 = vsel %vm344, %v6939, 0.0
      %v7122 = vsel %vm345, %v7111, 0.0
      %v7123 = vsel %vm346, %v7113, 0.0
      %v7124 = vpack.c.bf16 %v7116, %v7116
      %v7125 = vpack.c.bf16 %v7117, %v7117
      %v7126 = vpack.c.bf16 %v7118, %v7118
      %v7127 = vpack.c.bf16 %v7119, %v7119
      %v7128 = vpack.c.bf16 %v7120, %v7120
      %v7129 = vpack.c.bf16 %v7121, %v7121
      %v7130 = vpack.c.bf16 %v7122, %v7122
      %v7131 = vpack.c.bf16 %v7123, %v7123
      %v7140 = vunpack.c.l.b16 %v7099
      %v7141 = vunpack.c.l.b16 %v7100
      %v7142 = vunpack.c.l.b16 %v7101
      %v7143 = vunpack.c.l.b16 %v7102
      %v7144 = vunpack.c.l.b16 %v7103
      %v7145 = vunpack.c.l.b16 %v7104
      %v7146 = vunpack.c.l.b16 %v7105
      %v7147 = vunpack.c.l.b16 %v7106
      %v7148 = vpack.c.b16 %v7141, %v7140
      %v7149 = vpack.c.b16 %v7143, %v7142
      %v7150 = vpack.c.b16 %v7145, %v7144
      %v7151 = vpack.c.b16 %v7147, %v7146
      %v7158 = vunpack.c.l.b16 %v7107
      %v7159 = vunpack.c.l.b16 %v7108
      %v7160 = vpack.c.b16 %v7159, %v7158
      %v7170 = vunpack.c.l.b16 %v7124
      %v7171 = vunpack.c.l.b16 %v7125
      %v7172 = vunpack.c.l.b16 %v7126
      %v7173 = vunpack.c.l.b16 %v7127
      %v7174 = vunpack.c.l.b16 %v7128
      %v7175 = vunpack.c.l.b16 %v7129
      %v7176 = vunpack.c.l.b16 %v7130
      %v7177 = vunpack.c.l.b16 %v7131
      %v7178 = vpack.c.b16 %v7171, %v7170
      %v7179 = vpack.c.b16 %v7173, %v7172
      %v7180 = vpack.c.b16 %v7175, %v7174
      %v7181 = vpack.c.b16 %v7177, %v7176
      %v7186 = vld [vmem:[%s5868] sm:$0xf]
      %v7187 = vld [vmem:[%s5868 + $0x4] sm:$0xf]
      %v7188 = vld [vmem:[%s5868 + $0x8] sm:$0xf]
      %v7189 = vld [vmem:[%s5868 + $0xc] sm:$0xf]
      %v7190 = vld [vmem:[%s5868 + $0x10] sm:$0xf]
      %v7191 = vld [vmem:[%s5868 + $0x14] sm:$0xf]
      %v7192 = vld [vmem:[%s5868 + $0x18] sm:$0xf]
      %v7193 = vld [vmem:[%s5868 + $0x1c] sm:$0xf]
      %v7194 = vld [vmem:[%s5868 + $0x20] sm:$0xf]
      %v7195 = vld [vmem:[%s5868 + $0x24] sm:$0xf]
      %v7196 = vld [vmem:[%s5868 + $0x28] sm:$0xf]
      %v7197 = vld [vmem:[%s5868 + $0x2c] sm:$0xf]
      %v7198 = vld [vmem:[%s5868 + $0x30] sm:$0xf]
      %v7199 = vld [vmem:[%s5868 + $0x34] sm:$0xf]
      %v7200 = vld [vmem:[%s5868 + $0x38] sm:$0xf]
      %v7201 = vld [vmem:[%s5868 + $0x3c] sm:$0xf]
      %v7202 = vld [vmem:[%s5868 + $0x40] sm:$0xf]
      %v7203 = vld [vmem:[%s5868 + $0x44] sm:$0xf]
      %v7204 = vld [vmem:[%s5868 + $0x48] sm:$0xf]
      %v7205 = vld [vmem:[%s5868 + $0x4c] sm:$0xf]
      %v7206 = vld [vmem:[%s5868 + $0x50] sm:$0xf]
      %v7207 = vld [vmem:[%s5868 + $0x54] sm:$0xf]
      %v7208 = vld [vmem:[%s5868 + $0x58] sm:$0xf]
      %v7209 = vld [vmem:[%s5868 + $0x5c] sm:$0xf]
      %v7210 = vld [vmem:[%s5868 + $0x60] sm:$0xf]
      %v7211 = vld [vmem:[%s5868 + $0x64] sm:$0xf]
      %v7212 = vld [vmem:[%s5868 + $0x68] sm:$0xf]
      %v7213 = vld [vmem:[%s5868 + $0x6c] sm:$0xf]
      %v7214 = vld [vmem:[%s5868 + $0x70] sm:$0xf]
      %v7215 = vld [vmem:[%s5868 + $0x74] sm:$0xf]
      %v7216 = vld [vmem:[%s5868 + $0x78] sm:$0xf]
      %v7217 = vld [vmem:[%s5868 + $0x7c] sm:$0xf]
      %v7218 = vld [vmem:[%s5868 + $0x80] sm:$0xf]
      %v7219 = vld [vmem:[%s5868 + $0x84] sm:$0xf]
      %v7220 = vld [vmem:[%s5868 + $0x88] sm:$0xf]
      %v7221 = vld [vmem:[%s5868 + $0x8c] sm:$0xf]
      %v7222 = vld [vmem:[%s5868 + $0x90] sm:$0xf]
      %v7223 = vld [vmem:[%s5868 + $0x94] sm:$0xf]
      %v7224 = vld [vmem:[%s5868 + $0x98] sm:$0xf]
      %v7225 = vld [vmem:[%s5868 + $0x9c] sm:$0xf]
      %v7226 = vld [vmem:[%s5868 + $0xa0] sm:$0xf]
      %v7227 = vld [vmem:[%s5868 + $0xa4] sm:$0xf]
      %v7228 = vld [vmem:[%s5868 + $0xa8] sm:$0xf]
      %v7229 = vld [vmem:[%s5868 + $0xac] sm:$0xf]
      %v7230 = vld [vmem:[%s5868 + $0xb0] sm:$0xf]
      %v7231 = vld [vmem:[%s5868 + $0xb4] sm:$0xf]
      %v7232 = vld [vmem:[%s5868 + $0xb8] sm:$0xf]
      %v7233 = vld [vmem:[%s5868 + $0xbc] sm:$0xf]
      %v7282 = vunpack.c.l.b16 %v7186
      %v7283 = vunpack.c.l.b16 %v7187
      %v7284 = vunpack.c.l.b16 %v7188
      %v7285 = vunpack.c.l.b16 %v7189
      %v7286 = vunpack.c.l.b16 %v7190
      %v7287 = vunpack.c.l.b16 %v7191
      %v7288 = vunpack.c.l.b16 %v7192
      %v7289 = vunpack.c.l.b16 %v7193
      %v7290 = vunpack.c.l.b16 %v7194
      %v7291 = vunpack.c.l.b16 %v7195
      %v7292 = vunpack.c.l.b16 %v7196
      %v7293 = vunpack.c.l.b16 %v7197
      %v7294 = vunpack.c.l.b16 %v7198
      %v7295 = vunpack.c.l.b16 %v7199
      %v7296 = vunpack.c.l.b16 %v7200
      %v7297 = vunpack.c.l.b16 %v7201
      %v7298 = vunpack.c.l.b16 %v7202
      %v7299 = vunpack.c.l.b16 %v7203
      %v7300 = vunpack.c.l.b16 %v7204
      %v7301 = vunpack.c.l.b16 %v7205
      %v7302 = vunpack.c.l.b16 %v7206
      %v7303 = vunpack.c.l.b16 %v7207
      %v7304 = vunpack.c.l.b16 %v7208
      %v7305 = vunpack.c.l.b16 %v7209
      %v7306 = vunpack.c.l.b16 %v7210
      %v7307 = vunpack.c.l.b16 %v7211
      %v7308 = vunpack.c.l.b16 %v7212
      %v7309 = vunpack.c.l.b16 %v7213
      %v7310 = vunpack.c.l.b16 %v7214
      %v7311 = vunpack.c.l.b16 %v7215
      %v7312 = vunpack.c.l.b16 %v7216
      %v7313 = vunpack.c.l.b16 %v7217
      %v7314 = vunpack.c.l.b16 %v7218
      %v7315 = vunpack.c.l.b16 %v7219
      %v7316 = vunpack.c.l.b16 %v7220
      %v7317 = vunpack.c.l.b16 %v7221
      %v7318 = vunpack.c.l.b16 %v7222
      %v7319 = vunpack.c.l.b16 %v7223
      %v7320 = vunpack.c.l.b16 %v7224
      %v7321 = vunpack.c.l.b16 %v7225
      %v7322 = vunpack.c.l.b16 %v7226
      %v7323 = vunpack.c.l.b16 %v7227
      %v7324 = vunpack.c.l.b16 %v7228
      %v7325 = vunpack.c.l.b16 %v7229
      %v7326 = vunpack.c.l.b16 %v7230
      %v7327 = vunpack.c.l.b16 %v7231
      %v7328 = vunpack.c.l.b16 %v7232
      %v7329 = vunpack.c.l.b16 %v7233
      %v7330 = vpack.c.b16 %v7283, %v7282
      %v7331 = vpack.c.b16 %v7285, %v7284
      %v7332 = vpack.c.b16 %v7287, %v7286
      %v7333 = vpack.c.b16 %v7289, %v7288
      %v7334 = vpack.c.b16 %v7291, %v7290
      %v7335 = vpack.c.b16 %v7293, %v7292
      %v7336 = vpack.c.b16 %v7295, %v7294
      %v7337 = vpack.c.b16 %v7297, %v7296
      %v7338 = vpack.c.b16 %v7299, %v7298
      %v7339 = vpack.c.b16 %v7301, %v7300
      %v7340 = vpack.c.b16 %v7303, %v7302
      %v7341 = vpack.c.b16 %v7305, %v7304
      %v7342 = vpack.c.b16 %v7307, %v7306
      %v7343 = vpack.c.b16 %v7309, %v7308
      %v7344 = vpack.c.b16 %v7311, %v7310
      %v7345 = vpack.c.b16 %v7313, %v7312
      %v7346 = vpack.c.b16 %v7315, %v7314
      %v7347 = vpack.c.b16 %v7317, %v7316
      %v7348 = vpack.c.b16 %v7319, %v7318
      %v7349 = vpack.c.b16 %v7321, %v7320
      %v7350 = vpack.c.b16 %v7323, %v7322
      %v7351 = vpack.c.b16 %v7325, %v7324
      %v7352 = vpack.c.b16 %v7327, %v7326
      %v7353 = vpack.c.b16 %v7329, %v7328
      %7378 = vmatpush.bf16.msra.mxu0 %v7337
      %7379 = vmatpush.bf16.msra.mxu0 %v7336
      %7380 = vmatpush.bf16.msra.mxu0 %v7335
      %7381 = vmatpush.bf16.msra.mxu0 %v7334
      %7382 = vmatpush.bf16.msra.mxu0 %v7333
      %7383 = vmatpush.bf16.msra.mxu0 %v7332
      %7384 = vmatpush.bf16.msra.mxu0 %v7331
      %7385 = vmatpush.bf16.msra.mxu0 %v7330
      %7386 = vmatmul.bf16.gmra.mxu0 %v7148
      %v7387 = vpop.f32.mrf.mxu0
      %v7388 = vadd.f32 0.0, %v7387
      %v7389 = vpop.f32.mrf.mxu0
      %v7390 = vadd.f32 0.0, %v7389
      %7391 = vmatmul.bf16.gmra.mxu0 %v7149
      %v7392 = vpop.f32.mrf.mxu0
      %v7393 = vadd.f32 0.0, %v7392
      %v7394 = vpop.f32.mrf.mxu0
      %v7395 = vadd.f32 0.0, %v7394
      %7396 = vmatmul.bf16.gmra.mxu0 %v7150
      %v7397 = vpop.f32.mrf.mxu0
      %v7398 = vadd.f32 0.0, %v7397
      %v7399 = vpop.f32.mrf.mxu0
      %v7400 = vadd.f32 0.0, %v7399
      %7401 = vmatmul.bf16.gmra.mxu0 %v7151
      %v7402 = vpop.f32.mrf.mxu0
      %v7403 = vadd.f32 0.0, %v7402
      %v7404 = vpop.f32.mrf.mxu0
      %v7405 = vadd.f32 0.0, %v7404
      %7406 = vdwg.mxu0
      %7407 = vmatpush.bf16.msra.mxu0 %v7345
      %7408 = vmatpush.bf16.msra.mxu0 %v7344
      %7409 = vmatpush.bf16.msra.mxu0 %v7343
      %7410 = vmatpush.bf16.msra.mxu0 %v7342
      %7411 = vmatpush.bf16.msra.mxu0 %v7341
      %7412 = vmatpush.bf16.msra.mxu0 %v7340
      %7413 = vmatpush.bf16.msra.mxu0 %v7339
      %7414 = vmatpush.bf16.msra.mxu0 %v7338
      %7415 = vmatmul.bf16.gmra.mxu0 %v7005
      %v7416 = vpop.f32.mrf.mxu0
      %v7417 = vadd.f32 %v7388, %v7416
      %v7418 = vpop.f32.mrf.mxu0
      %v7419 = vadd.f32 %v7390, %v7418
      %7420 = vmatmul.bf16.gmra.mxu0 %v7006
      %v7421 = vpop.f32.mrf.mxu0
      %v7422 = vadd.f32 %v7393, %v7421
      %v7423 = vpop.f32.mrf.mxu0
      %v7424 = vadd.f32 %v7395, %v7423
      %7425 = vmatmul.bf16.gmra.mxu0 %v7007
      %v7426 = vpop.f32.mrf.mxu0
      %v7427 = vadd.f32 %v7398, %v7426
      %v7428 = vpop.f32.mrf.mxu0
      %v7429 = vadd.f32 %v7400, %v7428
      %7430 = vmatmul.bf16.gmra.mxu0 %v7160
      %v7431 = vpop.f32.mrf.mxu0
      %v7432 = vadd.f32 %v7403, %v7431
      %v7433 = vpop.f32.mrf.mxu0
      %v7434 = vadd.f32 %v7405, %v7433
      %7435 = vdwg.mxu0
      %7436 = vmatpush.bf16.msra.mxu0 %v7353
      %7437 = vmatpush.bf16.msra.mxu0 %v7352
      %7438 = vmatpush.bf16.msra.mxu0 %v7351
      %7439 = vmatpush.bf16.msra.mxu0 %v7350
      %7440 = vmatpush.bf16.msra.mxu0 %v7349
      %7441 = vmatpush.bf16.msra.mxu0 %v7348
      %7442 = vmatpush.bf16.msra.mxu0 %v7347
      %7443 = vmatpush.bf16.msra.mxu0 %v7346
      %7444 = vmatmul.bf16.gmra.mxu0 %v7178
      %v7445 = vpop.f32.mrf.mxu0
      %v7446 = vadd.f32 %v7417, %v7445
      %v7447 = vpop.f32.mrf.mxu0
      %v7448 = vadd.f32 %v7419, %v7447
      %7449 = vmatmul.bf16.gmra.mxu0 %v7179
      %v7450 = vpop.f32.mrf.mxu0
      %v7451 = vadd.f32 %v7422, %v7450
      %v7452 = vpop.f32.mrf.mxu0
      %v7453 = vadd.f32 %v7424, %v7452
      %7454 = vmatmul.bf16.gmra.mxu0 %v7180
      %v7455 = vpop.f32.mrf.mxu0
      %v7456 = vadd.f32 %v7427, %v7455
      %v7457 = vpop.f32.mrf.mxu0
      %v7458 = vadd.f32 %v7429, %v7457
      %7459 = vmatmul.bf16.gmra.mxu0 %v7181
      %v7460 = vpop.f32.mrf.mxu0
      %v7461 = vadd.f32 %v7432, %v7460
      %v7462 = vpop.f32.mrf.mxu0
      %v7463 = vadd.f32 %v7434, %v7462
      %7464 = vdwg.mxu0
      %v7513 = vunpack.c.l.b16 %v7036
      %v7514 = vunpack.c.l.b16 %v7037
      %v7515 = vunpack.c.l.b16 %v7038
      %v7516 = vunpack.c.l.b16 %v7039
      %v7517 = vunpack.c.l.b16 %v7040
      %v7518 = vunpack.c.l.b16 %v7041
      %v7519 = vunpack.c.l.b16 %v7042
      %v7520 = vunpack.c.l.b16 %v7043
      %v7521 = vunpack.c.l.b16 %v7044
      %v7522 = vunpack.c.l.b16 %v7045
      %v7523 = vunpack.c.l.b16 %v7046
      %v7524 = vunpack.c.l.b16 %v7047
      %v7525 = vunpack.c.l.b16 %v7048
      %v7526 = vunpack.c.l.b16 %v7049
      %v7527 = vunpack.c.l.b16 %v7050
      %v7528 = vunpack.c.l.b16 %v7051
      %v7529 = vunpack.c.l.b16 %v7052
      %v7530 = vunpack.c.l.b16 %v7053
      %v7531 = vunpack.c.l.b16 %v7054
      %v7532 = vunpack.c.l.b16 %v7055
      %v7533 = vunpack.c.l.b16 %v7056
      %v7534 = vunpack.c.l.b16 %v7057
      %v7535 = vunpack.c.l.b16 %v7058
      %v7536 = vunpack.c.l.b16 %v7059
      %v7537 = vunpack.c.l.b16 %v7060
      %v7538 = vunpack.c.l.b16 %v7061
      %v7539 = vunpack.c.l.b16 %v7062
      %v7540 = vunpack.c.l.b16 %v7063
      %v7541 = vunpack.c.l.b16 %v7064
      %v7542 = vunpack.c.l.b16 %v7065
      %v7543 = vunpack.c.l.b16 %v7066
      %v7544 = vunpack.c.l.b16 %v7067
      %v7545 = vunpack.c.l.b16 %v7068
      %v7546 = vunpack.c.l.b16 %v7069
      %v7547 = vunpack.c.l.b16 %v7070
      %v7548 = vunpack.c.l.b16 %v7071
      %v7549 = vunpack.c.l.b16 %v7072
      %v7550 = vunpack.c.l.b16 %v7073
      %v7551 = vunpack.c.l.b16 %v7074
      %v7552 = vunpack.c.l.b16 %v7075
      %v7553 = vunpack.c.l.b16 %v7076
      %v7554 = vunpack.c.l.b16 %v7077
      %v7555 = vunpack.c.l.b16 %v7078
      %v7556 = vunpack.c.l.b16 %v7079
      %v7557 = vunpack.c.l.b16 %v7080
      %v7558 = vunpack.c.l.b16 %v7081
      %v7559 = vunpack.c.l.b16 %v7082
      %v7560 = vunpack.c.l.b16 %v7083
      %v7561 = vpack.c.b16 %v7514, %v7513
      %v7562 = vpack.c.b16 %v7516, %v7515
      %v7563 = vpack.c.b16 %v7518, %v7517
      %v7564 = vpack.c.b16 %v7520, %v7519
      %v7565 = vpack.c.b16 %v7522, %v7521
      %v7566 = vpack.c.b16 %v7524, %v7523
      %v7567 = vpack.c.b16 %v7526, %v7525
      %v7568 = vpack.c.b16 %v7528, %v7527
      %v7569 = vpack.c.b16 %v7530, %v7529
      %v7570 = vpack.c.b16 %v7532, %v7531
      %v7571 = vpack.c.b16 %v7534, %v7533
      %v7572 = vpack.c.b16 %v7536, %v7535
      %v7573 = vpack.c.b16 %v7538, %v7537
      %v7574 = vpack.c.b16 %v7540, %v7539
      %v7575 = vpack.c.b16 %v7542, %v7541
      %v7576 = vpack.c.b16 %v7544, %v7543
      %v7577 = vpack.c.b16 %v7546, %v7545
      %v7578 = vpack.c.b16 %v7548, %v7547
      %v7579 = vpack.c.b16 %v7550, %v7549
      %v7580 = vpack.c.b16 %v7552, %v7551
      %v7581 = vpack.c.b16 %v7554, %v7553
      %v7582 = vpack.c.b16 %v7556, %v7555
      %v7583 = vpack.c.b16 %v7558, %v7557
      %v7584 = vpack.c.b16 %v7560, %v7559
      %7609 = vmatpush.bf16.msra.mxu0 %v7568
      %7610 = vmatpush.bf16.msra.mxu0 %v7567
      %7611 = vmatpush.bf16.msra.mxu0 %v7566
      %7612 = vmatpush.bf16.msra.mxu0 %v7565
      %7613 = vmatpush.bf16.msra.mxu0 %v7564
      %7614 = vmatpush.bf16.msra.mxu0 %v7563
      %7615 = vmatpush.bf16.msra.mxu0 %v7562
      %7616 = vmatpush.bf16.msra.mxu0 %v7561
      %7617 = vmatmul.bf16.gmra.mxu0 %v6980
      %v7618 = vpop.f32.mrf.mxu0
      %v7619 = vadd.f32 %v7446, %v7618
      %v7620 = vpop.f32.mrf.mxu0
      %v7621 = vadd.f32 %v7448, %v7620
      %7622 = vmatmul.bf16.gmra.mxu0 %v6981
      %v7623 = vpop.f32.mrf.mxu0
      %v7624 = vadd.f32 %v7451, %v7623
      %v7625 = vpop.f32.mrf.mxu0
      %v7626 = vadd.f32 %v7453, %v7625
      %7627 = vmatmul.bf16.gmra.mxu0 %v6982
      %v7628 = vpop.f32.mrf.mxu0
      %v7629 = vadd.f32 %v7456, %v7628
      %v7630 = vpop.f32.mrf.mxu0
      %v7631 = vadd.f32 %v7458, %v7630
      %7632 = vmatmul.bf16.gmra.mxu0 %v6983
      %v7633 = vpop.f32.mrf.mxu0
      %v7634 = vadd.f32 %v7461, %v7633
      %v7635 = vpop.f32.mrf.mxu0
      %v7636 = vadd.f32 %v7463, %v7635
      %7637 = vdwg.mxu0
      %7638 = vmatpush.bf16.msra.mxu0 %v7576
      %7639 = vmatpush.bf16.msra.mxu0 %v7575
      %7640 = vmatpush.bf16.msra.mxu0 %v7574
      %7641 = vmatpush.bf16.msra.mxu0 %v7573
      %7642 = vmatpush.bf16.msra.mxu0 %v7572
      %7643 = vmatpush.bf16.msra.mxu0 %v7571
      %7644 = vmatpush.bf16.msra.mxu0 %v7570
      %7645 = vmatpush.bf16.msra.mxu0 %v7569
      %7646 = vmatmul.bf16.gmra.mxu0 %v7004
      %v7647 = vpop.f32.mrf.mxu0
      %v7648 = vadd.f32 %v7619, %v7647
      %v7649 = vpop.f32.mrf.mxu0
      %v7650 = vadd.f32 %v7621, %v7649
      %7651 = vmatmul.bf16.gmra.mxu0 %v7005
      %v7652 = vpop.f32.mrf.mxu0
      %v7653 = vadd.f32 %v7624, %v7652
      %v7654 = vpop.f32.mrf.mxu0
      %v7655 = vadd.f32 %v7626, %v7654
      %7656 = vmatmul.bf16.gmra.mxu0 %v7006
      %v7657 = vpop.f32.mrf.mxu0
      %v7658 = vadd.f32 %v7629, %v7657
      %v7659 = vpop.f32.mrf.mxu0
      %v7660 = vadd.f32 %v7631, %v7659
      %7661 = vmatmul.bf16.gmra.mxu0 %v7007
      %v7662 = vpop.f32.mrf.mxu0
      %v7663 = vadd.f32 %v7634, %v7662
      %v7664 = vpop.f32.mrf.mxu0
      %v7665 = vadd.f32 %v7636, %v7664
      %7666 = vdwg.mxu0
      %7667 = vmatpush.bf16.msra.mxu0 %v7584
      %7668 = vmatpush.bf16.msra.mxu0 %v7583
      %7669 = vmatpush.bf16.msra.mxu0 %v7582
      %7670 = vmatpush.bf16.msra.mxu0 %v7581
      %7671 = vmatpush.bf16.msra.mxu0 %v7580
      %7672 = vmatpush.bf16.msra.mxu0 %v7579
      %7673 = vmatpush.bf16.msra.mxu0 %v7578
      %7674 = vmatpush.bf16.msra.mxu0 %v7577
      %7675 = vmatmul.bf16.gmra.mxu0 %v7028
      %v7676 = vpop.f32.mrf.mxu0
      %v7677 = vadd.f32 %v7648, %v7676
      %v7678 = vpop.f32.mrf.mxu0
      %v7679 = vadd.f32 %v7650, %v7678
      %7680 = vmatmul.bf16.gmra.mxu0 %v7029
      %v7681 = vpop.f32.mrf.mxu0
      %v7682 = vadd.f32 %v7653, %v7681
      %v7683 = vpop.f32.mrf.mxu0
      %v7684 = vadd.f32 %v7655, %v7683
      %7685 = vmatmul.bf16.gmra.mxu0 %v7030
      %v7686 = vpop.f32.mrf.mxu0
      %v7687 = vadd.f32 %v7658, %v7686
      %v7688 = vpop.f32.mrf.mxu0
      %v7689 = vadd.f32 %v7660, %v7688
      %7690 = vmatmul.bf16.gmra.mxu0 %v7031
      %v7691 = vpop.f32.mrf.mxu0
      %v7692 = vadd.f32 %v7663, %v7691
      %v7693 = vpop.f32.mrf.mxu0
      %v7694 = vadd.f32 %v7665, %v7693
      %7695 = vdwg.mxu0
      %v7697 = vrot.slane %v6861, 7
      %v7698 = vsel %vm392, %v7087, %v7697
      %v7699 = vrot.slane %v6862, 7
      %v7700 = vsel %vm392, %v7697, %v7699
      %v7703 = vsel %vm331, %v6883, 0.0
      %v7704 = vsel %vm332, %v6885, 0.0
      %v7705 = vsel %vm333, %v6887, 0.0
      %v7706 = vsel %vm334, %v6889, 0.0
      %v7707 = vsel %vm335, %v7086, 0.0
      %v7708 = vsel %vm336, %v7088, 0.0
      %v7709 = vsel %vm337, %v7698, 0.0
      %v7710 = vsel %vm338, %v7700, 0.0
      %v7711 = vpack.c.bf16 %v7703, %v7703
      %v7712 = vpack.c.bf16 %v7704, %v7704
      %v7713 = vpack.c.bf16 %v7705, %v7705
      %v7714 = vpack.c.bf16 %v7706, %v7706
      %v7715 = vpack.c.bf16 %v7707, %v7707
      %v7716 = vpack.c.bf16 %v7708, %v7708
      %v7717 = vpack.c.bf16 %v7709, %v7709
      %v7718 = vpack.c.bf16 %v7710, %v7710
      %v7719 = vpack.c.bf16 %v6861, %v6861
      %v7720 = vpack.c.bf16 %v6862, %v6862
      %v7722 = vrot.slane %v6862, 1
      %v7723 = vsel %vm443, %v7112, %v7722
      %v7724 = vrot.slane %v6863, 1
      %v7725 = vsel %vm443, %v7722, %v7724
      %v7728 = vsel %vm339, %v6933, 0.0
      %v7729 = vsel %vm340, %v6935, 0.0
      %v7730 = vsel %vm341, %v6937, 0.0
      %v7731 = vsel %vm342, %v6939, 0.0
      %v7732 = vsel %vm343, %v7111, 0.0
      %v7733 = vsel %vm344, %v7113, 0.0
      %v7734 = vsel %vm345, %v7723, 0.0
      %v7735 = vsel %vm346, %v7725, 0.0
      %v7736 = vpack.c.bf16 %v7728, %v7728
      %v7737 = vpack.c.bf16 %v7729, %v7729
      %v7738 = vpack.c.bf16 %v7730, %v7730
      %v7739 = vpack.c.bf16 %v7731, %v7731
      %v7740 = vpack.c.bf16 %v7732, %v7732
      %v7741 = vpack.c.bf16 %v7733, %v7733
      %v7742 = vpack.c.bf16 %v7734, %v7734
      %v7743 = vpack.c.bf16 %v7735, %v7735
      %v7752 = vunpack.c.l.b16 %v7711
      %v7753 = vunpack.c.l.b16 %v7712
      %v7754 = vunpack.c.l.b16 %v7713
      %v7755 = vunpack.c.l.b16 %v7714
      %v7756 = vunpack.c.l.b16 %v7715
      %v7757 = vunpack.c.l.b16 %v7716
      %v7758 = vunpack.c.l.b16 %v7717
      %v7759 = vunpack.c.l.b16 %v7718
      %v7760 = vpack.c.b16 %v7753, %v7752
      %v7761 = vpack.c.b16 %v7755, %v7754
      %v7762 = vpack.c.b16 %v7757, %v7756
      %v7763 = vpack.c.b16 %v7759, %v7758
      %v7770 = vunpack.c.l.b16 %v7719
      %v7771 = vunpack.c.l.b16 %v7720
      %v7772 = vpack.c.b16 %v7771, %v7770
      %v7782 = vunpack.c.l.b16 %v7736
      %v7783 = vunpack.c.l.b16 %v7737
      %v7784 = vunpack.c.l.b16 %v7738
      %v7785 = vunpack.c.l.b16 %v7739
      %v7786 = vunpack.c.l.b16 %v7740
      %v7787 = vunpack.c.l.b16 %v7741
      %v7788 = vunpack.c.l.b16 %v7742
      %v7789 = vunpack.c.l.b16 %v7743
      %v7790 = vpack.c.b16 %v7783, %v7782
      %v7791 = vpack.c.b16 %v7785, %v7784
      %v7792 = vpack.c.b16 %v7787, %v7786
      %v7793 = vpack.c.b16 %v7789, %v7788
      %v7798 = vld [vmem:[%s6481] sm:$0xf]
      %v7799 = vld [vmem:[%s6481 + $0x4] sm:$0xf]
      %v7800 = vld [vmem:[%s6481 + $0x8] sm:$0xf]
      %v7801 = vld [vmem:[%s6481 + $0xc] sm:$0xf]
      %v7802 = vld [vmem:[%s6481 + $0x10] sm:$0xf]
      %v7803 = vld [vmem:[%s6481 + $0x14] sm:$0xf]
      %v7804 = vld [vmem:[%s6481 + $0x18] sm:$0xf]
      %v7805 = vld [vmem:[%s6481 + $0x1c] sm:$0xf]
      %v7806 = vld [vmem:[%s6481 + $0x20] sm:$0xf]
      %v7807 = vld [vmem:[%s6481 + $0x24] sm:$0xf]
      %v7808 = vld [vmem:[%s6481 + $0x28] sm:$0xf]
      %v7809 = vld [vmem:[%s6481 + $0x2c] sm:$0xf]
      %v7810 = vld [vmem:[%s6481 + $0x30] sm:$0xf]
      %v7811 = vld [vmem:[%s6481 + $0x34] sm:$0xf]
      %v7812 = vld [vmem:[%s6481 + $0x38] sm:$0xf]
      %v7813 = vld [vmem:[%s6481 + $0x3c] sm:$0xf]
      %v7814 = vld [vmem:[%s6481 + $0x40] sm:$0xf]
      %v7815 = vld [vmem:[%s6481 + $0x44] sm:$0xf]
      %v7816 = vld [vmem:[%s6481 + $0x48] sm:$0xf]
      %v7817 = vld [vmem:[%s6481 + $0x4c] sm:$0xf]
      %v7818 = vld [vmem:[%s6481 + $0x50] sm:$0xf]
      %v7819 = vld [vmem:[%s6481 + $0x54] sm:$0xf]
      %v7820 = vld [vmem:[%s6481 + $0x58] sm:$0xf]
      %v7821 = vld [vmem:[%s6481 + $0x5c] sm:$0xf]
      %v7822 = vld [vmem:[%s6481 + $0x60] sm:$0xf]
      %v7823 = vld [vmem:[%s6481 + $0x64] sm:$0xf]
      %v7824 = vld [vmem:[%s6481 + $0x68] sm:$0xf]
      %v7825 = vld [vmem:[%s6481 + $0x6c] sm:$0xf]
      %v7826 = vld [vmem:[%s6481 + $0x70] sm:$0xf]
      %v7827 = vld [vmem:[%s6481 + $0x74] sm:$0xf]
      %v7828 = vld [vmem:[%s6481 + $0x78] sm:$0xf]
      %v7829 = vld [vmem:[%s6481 + $0x7c] sm:$0xf]
      %v7830 = vld [vmem:[%s6481 + $0x80] sm:$0xf]
      %v7831 = vld [vmem:[%s6481 + $0x84] sm:$0xf]
      %v7832 = vld [vmem:[%s6481 + $0x88] sm:$0xf]
      %v7833 = vld [vmem:[%s6481 + $0x8c] sm:$0xf]
      %v7834 = vld [vmem:[%s6481 + $0x90] sm:$0xf]
      %v7835 = vld [vmem:[%s6481 + $0x94] sm:$0xf]
      %v7836 = vld [vmem:[%s6481 + $0x98] sm:$0xf]
      %v7837 = vld [vmem:[%s6481 + $0x9c] sm:$0xf]
      %v7838 = vld [vmem:[%s6481 + $0xa0] sm:$0xf]
      %v7839 = vld [vmem:[%s6481 + $0xa4] sm:$0xf]
      %v7840 = vld [vmem:[%s6481 + $0xa8] sm:$0xf]
      %v7841 = vld [vmem:[%s6481 + $0xac] sm:$0xf]
      %v7842 = vld [vmem:[%s6481 + $0xb0] sm:$0xf]
      %v7843 = vld [vmem:[%s6481 + $0xb4] sm:$0xf]
      %v7844 = vld [vmem:[%s6481 + $0xb8] sm:$0xf]
      %v7845 = vld [vmem:[%s6481 + $0xbc] sm:$0xf]
      %v7894 = vunpack.c.l.b16 %v7798
      %v7895 = vunpack.c.l.b16 %v7799
      %v7896 = vunpack.c.l.b16 %v7800
      %v7897 = vunpack.c.l.b16 %v7801
      %v7898 = vunpack.c.l.b16 %v7802
      %v7899 = vunpack.c.l.b16 %v7803
      %v7900 = vunpack.c.l.b16 %v7804
      %v7901 = vunpack.c.l.b16 %v7805
      %v7902 = vunpack.c.l.b16 %v7806
      %v7903 = vunpack.c.l.b16 %v7807
      %v7904 = vunpack.c.l.b16 %v7808
      %v7905 = vunpack.c.l.b16 %v7809
      %v7906 = vunpack.c.l.b16 %v7810
      %v7907 = vunpack.c.l.b16 %v7811
      %v7908 = vunpack.c.l.b16 %v7812
      %v7909 = vunpack.c.l.b16 %v7813
      %v7910 = vunpack.c.l.b16 %v7814
      %v7911 = vunpack.c.l.b16 %v7815
      %v7912 = vunpack.c.l.b16 %v7816
      %v7913 = vunpack.c.l.b16 %v7817
      %v7914 = vunpack.c.l.b16 %v7818
      %v7915 = vunpack.c.l.b16 %v7819
      %v7916 = vunpack.c.l.b16 %v7820
      %v7917 = vunpack.c.l.b16 %v7821
      %v7918 = vunpack.c.l.b16 %v7822
      %v7919 = vunpack.c.l.b16 %v7823
      %v7920 = vunpack.c.l.b16 %v7824
      %v7921 = vunpack.c.l.b16 %v7825
      %v7922 = vunpack.c.l.b16 %v7826
      %v7923 = vunpack.c.l.b16 %v7827
      %v7924 = vunpack.c.l.b16 %v7828
      %v7925 = vunpack.c.l.b16 %v7829
      %v7926 = vunpack.c.l.b16 %v7830
      %v7927 = vunpack.c.l.b16 %v7831
      %v7928 = vunpack.c.l.b16 %v7832
      %v7929 = vunpack.c.l.b16 %v7833
      %v7930 = vunpack.c.l.b16 %v7834
      %v7931 = vunpack.c.l.b16 %v7835
      %v7932 = vunpack.c.l.b16 %v7836
      %v7933 = vunpack.c.l.b16 %v7837
      %v7934 = vunpack.c.l.b16 %v7838
      %v7935 = vunpack.c.l.b16 %v7839
      %v7936 = vunpack.c.l.b16 %v7840
      %v7937 = vunpack.c.l.b16 %v7841
      %v7938 = vunpack.c.l.b16 %v7842
      %v7939 = vunpack.c.l.b16 %v7843
      %v7940 = vunpack.c.l.b16 %v7844
      %v7941 = vunpack.c.l.b16 %v7845
      %v7942 = vpack.c.b16 %v7895, %v7894
      %v7943 = vpack.c.b16 %v7897, %v7896
      %v7944 = vpack.c.b16 %v7899, %v7898
      %v7945 = vpack.c.b16 %v7901, %v7900
      %v7946 = vpack.c.b16 %v7903, %v7902
      %v7947 = vpack.c.b16 %v7905, %v7904
      %v7948 = vpack.c.b16 %v7907, %v7906
      %v7949 = vpack.c.b16 %v7909, %v7908
      %v7950 = vpack.c.b16 %v7911, %v7910
      %v7951 = vpack.c.b16 %v7913, %v7912
      %v7952 = vpack.c.b16 %v7915, %v7914
      %v7953 = vpack.c.b16 %v7917, %v7916
      %v7954 = vpack.c.b16 %v7919, %v7918
      %v7955 = vpack.c.b16 %v7921, %v7920
      %v7956 = vpack.c.b16 %v7923, %v7922
      %v7957 = vpack.c.b16 %v7925, %v7924
      %v7958 = vpack.c.b16 %v7927, %v7926
      %v7959 = vpack.c.b16 %v7929, %v7928
      %v7960 = vpack.c.b16 %v7931, %v7930
      %v7961 = vpack.c.b16 %v7933, %v7932
      %v7962 = vpack.c.b16 %v7935, %v7934
      %v7963 = vpack.c.b16 %v7937, %v7936
      %v7964 = vpack.c.b16 %v7939, %v7938
      %v7965 = vpack.c.b16 %v7941, %v7940
      %7990 = vmatpush.bf16.msra.mxu0 %v7949
      %7991 = vmatpush.bf16.msra.mxu0 %v7948
      %7992 = vmatpush.bf16.msra.mxu0 %v7947
      %7993 = vmatpush.bf16.msra.mxu0 %v7946
      %7994 = vmatpush.bf16.msra.mxu0 %v7945
      %7995 = vmatpush.bf16.msra.mxu0 %v7944
      %7996 = vmatpush.bf16.msra.mxu0 %v7943
      %7997 = vmatpush.bf16.msra.mxu0 %v7942
      %7998 = vmatmul.bf16.gmra.mxu0 %v7760
      %v7999 = vpop.f32.mrf.mxu0
      %v8000 = vadd.f32 0.0, %v7999
      %v8001 = vpop.f32.mrf.mxu0
      %v8002 = vadd.f32 0.0, %v8001
      %8003 = vmatmul.bf16.gmra.mxu0 %v7761
      %v8004 = vpop.f32.mrf.mxu0
      %v8005 = vadd.f32 0.0, %v8004
      %v8006 = vpop.f32.mrf.mxu0
      %v8007 = vadd.f32 0.0, %v8006
      %8008 = vmatmul.bf16.gmra.mxu0 %v7762
      %v8009 = vpop.f32.mrf.mxu0
      %v8010 = vadd.f32 0.0, %v8009
      %v8011 = vpop.f32.mrf.mxu0
      %v8012 = vadd.f32 0.0, %v8011
      %8013 = vmatmul.bf16.gmra.mxu0 %v7763
      %v8014 = vpop.f32.mrf.mxu0
      %v8015 = vadd.f32 0.0, %v8014
      %v8016 = vpop.f32.mrf.mxu0
      %v8017 = vadd.f32 0.0, %v8016
      %8018 = vdwg.mxu0
      %8019 = vmatpush.bf16.msra.mxu0 %v7957
      %8020 = vmatpush.bf16.msra.mxu0 %v7956
      %8021 = vmatpush.bf16.msra.mxu0 %v7955
      %8022 = vmatpush.bf16.msra.mxu0 %v7954
      %8023 = vmatpush.bf16.msra.mxu0 %v7953
      %8024 = vmatpush.bf16.msra.mxu0 %v7952
      %8025 = vmatpush.bf16.msra.mxu0 %v7951
      %8026 = vmatpush.bf16.msra.mxu0 %v7950
      %8027 = vmatmul.bf16.gmra.mxu0 %v7006
      %v8028 = vpop.f32.mrf.mxu0
      %v8029 = vadd.f32 %v8000, %v8028
      %v8030 = vpop.f32.mrf.mxu0
      %v8031 = vadd.f32 %v8002, %v8030
      %8032 = vmatmul.bf16.gmra.mxu0 %v7007
      %v8033 = vpop.f32.mrf.mxu0
      %v8034 = vadd.f32 %v8005, %v8033
      %v8035 = vpop.f32.mrf.mxu0
      %v8036 = vadd.f32 %v8007, %v8035
      %8037 = vmatmul.bf16.gmra.mxu0 %v7160
      %v8038 = vpop.f32.mrf.mxu0
      %v8039 = vadd.f32 %v8010, %v8038
      %v8040 = vpop.f32.mrf.mxu0
      %v8041 = vadd.f32 %v8012, %v8040
      %8042 = vmatmul.bf16.gmra.mxu0 %v7772
      %v8043 = vpop.f32.mrf.mxu0
      %v8044 = vadd.f32 %v8015, %v8043
      %v8045 = vpop.f32.mrf.mxu0
      %v8046 = vadd.f32 %v8017, %v8045
      %8047 = vdwg.mxu0
      %8048 = vmatpush.bf16.msra.mxu0 %v7965
      %8049 = vmatpush.bf16.msra.mxu0 %v7964
      %8050 = vmatpush.bf16.msra.mxu0 %v7963
      %8051 = vmatpush.bf16.msra.mxu0 %v7962
      %8052 = vmatpush.bf16.msra.mxu0 %v7961
      %8053 = vmatpush.bf16.msra.mxu0 %v7960
      %8054 = vmatpush.bf16.msra.mxu0 %v7959
      %8055 = vmatpush.bf16.msra.mxu0 %v7958
      %8056 = vmatmul.bf16.gmra.mxu0 %v7790
      %v8057 = vpop.f32.mrf.mxu0
      %v8058 = vadd.f32 %v8029, %v8057
      %v8059 = vpop.f32.mrf.mxu0
      %v8060 = vadd.f32 %v8031, %v8059
      %8061 = vmatmul.bf16.gmra.mxu0 %v7791
      %v8062 = vpop.f32.mrf.mxu0
      %v8063 = vadd.f32 %v8034, %v8062
      %v8064 = vpop.f32.mrf.mxu0
      %v8065 = vadd.f32 %v8036, %v8064
      %8066 = vmatmul.bf16.gmra.mxu0 %v7792
      %v8067 = vpop.f32.mrf.mxu0
      %v8068 = vadd.f32 %v8039, %v8067
      %v8069 = vpop.f32.mrf.mxu0
      %v8070 = vadd.f32 %v8041, %v8069
      %8071 = vmatmul.bf16.gmra.mxu0 %v7793
      %v8072 = vpop.f32.mrf.mxu0
      %v8073 = vadd.f32 %v8044, %v8072
      %v8074 = vpop.f32.mrf.mxu0
      %v8075 = vadd.f32 %v8046, %v8074
      %8076 = vdwg.mxu0
      %v8077 = vadd.f32 %v7677, %v8058
      %v8078 = vadd.f32 %v7679, %v8060
      %v8079 = vadd.f32 %v7682, %v8063
      %v8080 = vadd.f32 %v7684, %v8065
      %v8081 = vadd.f32 %v7687, %v8068
      %v8082 = vadd.f32 %v7689, %v8070
      %v8083 = vadd.f32 %v7692, %v8073
      %v8084 = vadd.f32 %v7694, %v8075
      %v8085 = vld [vmem:[%s219 + $0x2c] sm:$0xf]
      %v8086 = vld [vmem:[%s219 + $0x30] sm:$0xf]
      %v8087 = vld [vmem:[%s219 + $0x34] sm:$0xf]
      %v8088 = vld [vmem:[%s219 + $0x38] sm:$0xf]
      %v8089 = vld [vmem:[%s219 + $0x3c] sm:$0xf]
      %v8090 = vld [vmem:[%s219 + $0x40] sm:$0xf]
      %v8091 = vld [vmem:[%s219 + $0x44] sm:$0xf]
      %v8092 = vld [vmem:[%s219 + $0x48] sm:$0xf]
      %v8093 = vunpack.c.l.bf16 %v8085
      %v8094 = vunpack.c.l.bf16 %v8086
      %v8095 = vunpack.c.l.bf16 %v8087
      %v8096 = vunpack.c.l.bf16 %v8088
      %v8097 = vunpack.c.l.bf16 %v8089
      %v8098 = vunpack.c.l.bf16 %v8090
      %v8099 = vunpack.c.l.bf16 %v8091
      %v8100 = vunpack.c.l.bf16 %v8092
      %v8101 = vadd.f32 %v8077, %v6786
      %v8102 = vadd.f32 %v8078, %v6786
      %v8103 = vadd.f32 %v8079, %v6786
      %v8104 = vadd.f32 %v8080, %v6786
      %v8105 = vadd.f32 %v8081, %v6786
      %v8106 = vadd.f32 %v8082, %v6786
      %v8107 = vadd.f32 %v8083, %v6786
      %v8108 = vadd.f32 %v8084, %v6786
      %v8109 = vadd.f32 %v8101, %v8093
      %v8110 = vadd.f32 %v8102, %v8094
      %v8111 = vadd.f32 %v8103, %v8095
      %v8112 = vadd.f32 %v8104, %v8096
      %v8113 = vadd.f32 %v8105, %v8097
      %v8114 = vadd.f32 %v8106, %v8098
      %v8115 = vadd.f32 %v8107, %v8099
      %v8116 = vadd.f32 %v8108, %v8100
      %v8117 = vmax.f32 %v8109, 0.0
      %v8118 = vmax.f32 %v8110, 0.0
      %v8119 = vmax.f32 %v8111, 0.0
      %v8120 = vmax.f32 %v8112, 0.0
      %v8121 = vmax.f32 %v8113, 0.0
      %v8122 = vmax.f32 %v8114, 0.0
      %v8123 = vmax.f32 %v8115, 0.0
      %v8124 = vmax.f32 %v8116, 0.0
      %v8125 = vmin.f32 %v8117, 6.0
      %v8126 = vmin.f32 %v8118, 6.0
      %v8127 = vmin.f32 %v8119, 6.0
      %v8128 = vmin.f32 %v8120, 6.0
      %v8129 = vmin.f32 %v8121, 6.0
      %v8130 = vmin.f32 %v8122, 6.0
      %v8131 = vmin.f32 %v8123, 6.0
      %v8132 = vmin.f32 %v8124, 6.0
      %v8133 = vpack.c.bf16 %v8125, %v8125
      %v8134 = vpack.c.bf16 %v8126, %v8126
      %v8135 = vpack.c.bf16 %v8127, %v8127
      %v8136 = vpack.c.bf16 %v8128, %v8128
      %v8137 = vpack.c.bf16 %v8129, %v8129
      %v8138 = vpack.c.bf16 %v8130, %v8130
      %v8139 = vpack.c.bf16 %v8131, %v8131
      %v8140 = vpack.c.bf16 %v8132, %v8132
      %8141 = vst [vmem:[%s224 + $0x20] sm:$0xf] %v8133
      %8142 = vst [vmem:[%s224 + $0x24] sm:$0xf] %v8134
      %8143 = vst [vmem:[%s224 + $0x28] sm:$0xf] %v8135
      %8144 = vst [vmem:[%s224 + $0x2c] sm:$0xf] %v8136
      %8145 = vst [vmem:[%s224 + $0x30] sm:$0xf] %v8137
      %8146 = vst [vmem:[%s224 + $0x34] sm:$0xf] %v8138
      %8147 = vst [vmem:[%s224 + $0x38] sm:$0xf] %v8139
      %8148 = vst [vmem:[%s224 + $0x3c] sm:$0xf] %v8140
      %v8149 = vld [vmem:[#allocation2 + $0x40] sm:$0xf]
      %v8150 = vld [vmem:[#allocation2 + $0x44] sm:$0xf]
      %v8151 = vld [vmem:[#allocation2 + $0x48] sm:$0xf]
      %v8152 = vld [vmem:[#allocation2 + $0x4c] sm:$0xf]
      %v8153 = vld [vmem:[#allocation2 + $0x50] sm:$0xf]
      %v8154 = vld [vmem:[#allocation2 + $0x54] sm:$0xf]
      %v8155 = vld [vmem:[#allocation2 + $0x58] sm:$0xf]
      %v8156 = vld [vmem:[#allocation2 + $0x5c] sm:$0xf]
      %v8157 = vld [vmem:[#allocation2 + $0x60] sm:$0xf]
      %v8158 = vld [vmem:[#allocation2 + $0x64] sm:$0xf]
      %v8159 = vld [vmem:[#allocation2 + $0x68] sm:$0xf]
      %v8160 = vld [vmem:[#allocation2 + $0x6c] sm:$0xf]
      %v8161 = vld [vmem:[#allocation2 + $0x70] sm:$0xf]
      %v8162 = vld [vmem:[#allocation2 + $0x74] sm:$0xf]
      %v8163 = vunpack.c.l.bf16 %v8149
      %v8164 = vunpack.c.l.bf16 %v8150
      %v8165 = vunpack.c.l.bf16 %v8151
      %v8166 = vunpack.c.l.bf16 %v8152
      %v8167 = vunpack.c.l.bf16 %v8153
      %v8168 = vunpack.c.l.bf16 %v8154
      %v8169 = vunpack.c.l.bf16 %v8155
      %v8170 = vunpack.c.l.bf16 %v8156
      %v8171 = vunpack.c.l.bf16 %v8157
      %v8172 = vunpack.c.l.bf16 %v8158
      %v8173 = vunpack.c.l.bf16 %v8159
      %v8174 = vunpack.c.l.bf16 %v8160
      %v8175 = vunpack.c.l.bf16 %v8161
      %v8176 = vunpack.c.l.bf16 %v8162
      %v8186 = vrot.slane %v8163, 7
      %v8187 = vrot.slane %v8164, 7
      %v8188 = vsel %vm392, %v8186, %v8187
      %v8189 = vrot.slane %v8165, 7
      %v8190 = vsel %vm392, %v8187, %v8189
      %v8191 = vrot.slane %v8166, 7
      %v8192 = vsel %vm392, %v8189, %v8191
      %v8193 = vrot.slane %v8167, 7
      %v8194 = vsel %vm392, %v8191, %v8193
      %v8195 = vrot.slane %v8168, 7
      %v8196 = vsel %vm392, %v8193, %v8195
      %v8197 = vrot.slane %v8169, 7
      %v8198 = vsel %vm392, %v8195, %v8197
      %v8199 = vrot.slane %v8170, 7
      %v8200 = vsel %vm392, %v8197, %v8199
      %v8201 = vrot.slane %v8171, 7
      %v8202 = vsel %vm392, %v8199, %v8201
      %v8211 = vsel %vm331, %v8188, 0.0
      %v8212 = vsel %vm332, %v8190, 0.0
      %v8213 = vsel %vm333, %v8192, 0.0
      %v8214 = vsel %vm334, %v8194, 0.0
      %v8215 = vsel %vm335, %v8196, 0.0
      %v8216 = vsel %vm336, %v8198, 0.0
      %v8217 = vsel %vm337, %v8200, 0.0
      %v8218 = vsel %vm338, %v8202, 0.0
      %v8219 = vpack.c.bf16 %v8211, %v8211
      %v8220 = vpack.c.bf16 %v8212, %v8212
      %v8221 = vpack.c.bf16 %v8213, %v8213
      %v8222 = vpack.c.bf16 %v8214, %v8214
      %v8223 = vpack.c.bf16 %v8215, %v8215
      %v8224 = vpack.c.bf16 %v8216, %v8216
      %v8225 = vpack.c.bf16 %v8217, %v8217
      %v8226 = vpack.c.bf16 %v8218, %v8218
      %v8227 = vpack.c.bf16 %v8164, %v8164
      %v8228 = vpack.c.bf16 %v8165, %v8165
      %v8229 = vpack.c.bf16 %v8166, %v8166
      %v8230 = vpack.c.bf16 %v8167, %v8167
      %v8231 = vpack.c.bf16 %v8168, %v8168
      %v8232 = vpack.c.bf16 %v8169, %v8169
      %v8233 = vpack.c.bf16 %v8170, %v8170
      %v8234 = vpack.c.bf16 %v8171, %v8171
      %v8236 = vrot.slane %v8164, 1
      %v8237 = vrot.slane %v8165, 1
      %v8238 = vsel %vm443, %v8236, %v8237
      %v8239 = vrot.slane %v8166, 1
      %v8240 = vsel %vm443, %v8237, %v8239
      %v8241 = vrot.slane %v8167, 1
      %v8242 = vsel %vm443, %v8239, %v8241
      %v8243 = vrot.slane %v8168, 1
      %v8244 = vsel %vm443, %v8241, %v8243
      %v8245 = vrot.slane %v8169, 1
      %v8246 = vsel %vm443, %v8243, %v8245
      %v8247 = vrot.slane %v8170, 1
      %v8248 = vsel %vm443, %v8245, %v8247
      %v8249 = vrot.slane %v8171, 1
      %v8250 = vsel %vm443, %v8247, %v8249
      %v8251 = vrot.slane %v8172, 1
      %v8252 = vsel %vm443, %v8249, %v8251
      %v8261 = vsel %vm339, %v8238, 0.0
      %v8262 = vsel %vm340, %v8240, 0.0
      %v8263 = vsel %vm341, %v8242, 0.0
      %v8264 = vsel %vm342, %v8244, 0.0
      %v8265 = vsel %vm343, %v8246, 0.0
      %v8266 = vsel %vm344, %v8248, 0.0
      %v8267 = vsel %vm345, %v8250, 0.0
      %v8268 = vsel %vm346, %v8252, 0.0
      %v8269 = vpack.c.bf16 %v8261, %v8261
      %v8270 = vpack.c.bf16 %v8262, %v8262
      %v8271 = vpack.c.bf16 %v8263, %v8263
      %v8272 = vpack.c.bf16 %v8264, %v8264
      %v8273 = vpack.c.bf16 %v8265, %v8265
      %v8274 = vpack.c.bf16 %v8266, %v8266
      %v8275 = vpack.c.bf16 %v8267, %v8267
      %v8276 = vpack.c.bf16 %v8268, %v8268
      %v8285 = vunpack.c.l.b16 %v8219
      %v8286 = vunpack.c.l.b16 %v8220
      %v8287 = vunpack.c.l.b16 %v8221
      %v8288 = vunpack.c.l.b16 %v8222
      %v8289 = vunpack.c.l.b16 %v8223
      %v8290 = vunpack.c.l.b16 %v8224
      %v8291 = vunpack.c.l.b16 %v8225
      %v8292 = vunpack.c.l.b16 %v8226
      %v8293 = vpack.c.b16 %v8286, %v8285
      %v8294 = vpack.c.b16 %v8288, %v8287
      %v8295 = vpack.c.b16 %v8290, %v8289
      %v8296 = vpack.c.b16 %v8292, %v8291
      %v8309 = vunpack.c.l.b16 %v8227
      %v8310 = vunpack.c.l.b16 %v8228
      %v8311 = vunpack.c.l.b16 %v8229
      %v8312 = vunpack.c.l.b16 %v8230
      %v8313 = vunpack.c.l.b16 %v8231
      %v8314 = vunpack.c.l.b16 %v8232
      %v8315 = vunpack.c.l.b16 %v8233
      %v8316 = vunpack.c.l.b16 %v8234
      %v8317 = vpack.c.b16 %v8310, %v8309
      %v8318 = vpack.c.b16 %v8312, %v8311
      %v8319 = vpack.c.b16 %v8314, %v8313
      %v8320 = vpack.c.b16 %v8316, %v8315
      %v8333 = vunpack.c.l.b16 %v8269
      %v8334 = vunpack.c.l.b16 %v8270
      %v8335 = vunpack.c.l.b16 %v8271
      %v8336 = vunpack.c.l.b16 %v8272
      %v8337 = vunpack.c.l.b16 %v8273
      %v8338 = vunpack.c.l.b16 %v8274
      %v8339 = vunpack.c.l.b16 %v8275
      %v8340 = vunpack.c.l.b16 %v8276
      %v8341 = vpack.c.b16 %v8334, %v8333
      %v8342 = vpack.c.b16 %v8336, %v8335
      %v8343 = vpack.c.b16 %v8338, %v8337
      %v8344 = vpack.c.b16 %v8340, %v8339
      %v8349 = vld [vmem:[%s3] sm:$0xf]
      %v8350 = vld [vmem:[%s3 + $0x4] sm:$0xf]
      %v8351 = vld [vmem:[%s3 + $0x8] sm:$0xf]
      %v8352 = vld [vmem:[%s3 + $0xc] sm:$0xf]
      %v8353 = vld [vmem:[%s3 + $0x10] sm:$0xf]
      %v8354 = vld [vmem:[%s3 + $0x14] sm:$0xf]
      %v8355 = vld [vmem:[%s3 + $0x18] sm:$0xf]
      %v8356 = vld [vmem:[%s3 + $0x1c] sm:$0xf]
      %v8357 = vld [vmem:[%s3 + $0x20] sm:$0xf]
      %v8358 = vld [vmem:[%s3 + $0x24] sm:$0xf]
      %v8359 = vld [vmem:[%s3 + $0x28] sm:$0xf]
      %v8360 = vld [vmem:[%s3 + $0x2c] sm:$0xf]
      %v8361 = vld [vmem:[%s3 + $0x30] sm:$0xf]
      %v8362 = vld [vmem:[%s3 + $0x34] sm:$0xf]
      %v8363 = vld [vmem:[%s3 + $0x38] sm:$0xf]
      %v8364 = vld [vmem:[%s3 + $0x3c] sm:$0xf]
      %v8365 = vld [vmem:[%s3 + $0x40] sm:$0xf]
      %v8366 = vld [vmem:[%s3 + $0x44] sm:$0xf]
      %v8367 = vld [vmem:[%s3 + $0x48] sm:$0xf]
      %v8368 = vld [vmem:[%s3 + $0x4c] sm:$0xf]
      %v8369 = vld [vmem:[%s3 + $0x50] sm:$0xf]
      %v8370 = vld [vmem:[%s3 + $0x54] sm:$0xf]
      %v8371 = vld [vmem:[%s3 + $0x58] sm:$0xf]
      %v8372 = vld [vmem:[%s3 + $0x5c] sm:$0xf]
      %v8373 = vld [vmem:[%s3 + $0x60] sm:$0xf]
      %v8374 = vld [vmem:[%s3 + $0x64] sm:$0xf]
      %v8375 = vld [vmem:[%s3 + $0x68] sm:$0xf]
      %v8376 = vld [vmem:[%s3 + $0x6c] sm:$0xf]
      %v8377 = vld [vmem:[%s3 + $0x70] sm:$0xf]
      %v8378 = vld [vmem:[%s3 + $0x74] sm:$0xf]
      %v8379 = vld [vmem:[%s3 + $0x78] sm:$0xf]
      %v8380 = vld [vmem:[%s3 + $0x7c] sm:$0xf]
      %v8381 = vld [vmem:[%s3 + $0x80] sm:$0xf]
      %v8382 = vld [vmem:[%s3 + $0x84] sm:$0xf]
      %v8383 = vld [vmem:[%s3 + $0x88] sm:$0xf]
      %v8384 = vld [vmem:[%s3 + $0x8c] sm:$0xf]
      %v8385 = vld [vmem:[%s3 + $0x90] sm:$0xf]
      %v8386 = vld [vmem:[%s3 + $0x94] sm:$0xf]
      %v8387 = vld [vmem:[%s3 + $0x98] sm:$0xf]
      %v8388 = vld [vmem:[%s3 + $0x9c] sm:$0xf]
      %v8389 = vld [vmem:[%s3 + $0xa0] sm:$0xf]
      %v8390 = vld [vmem:[%s3 + $0xa4] sm:$0xf]
      %v8391 = vld [vmem:[%s3 + $0xa8] sm:$0xf]
      %v8392 = vld [vmem:[%s3 + $0xac] sm:$0xf]
      %v8393 = vld [vmem:[%s3 + $0xb0] sm:$0xf]
      %v8394 = vld [vmem:[%s3 + $0xb4] sm:$0xf]
      %v8395 = vld [vmem:[%s3 + $0xb8] sm:$0xf]
      %v8396 = vld [vmem:[%s3 + $0xbc] sm:$0xf]
      %v8398 = vrot.slane %v8172, 7
      %v8399 = vsel %vm392, %v8201, %v8398
      %v8400 = vrot.slane %v8173, 7
      %v8401 = vsel %vm392, %v8398, %v8400
      %v8404 = vsel %vm331, %v8192, 0.0
      %v8405 = vsel %vm332, %v8194, 0.0
      %v8406 = vsel %vm333, %v8196, 0.0
      %v8407 = vsel %vm334, %v8198, 0.0
      %v8408 = vsel %vm335, %v8200, 0.0
      %v8409 = vsel %vm336, %v8202, 0.0
      %v8410 = vsel %vm337, %v8399, 0.0
      %v8411 = vsel %vm338, %v8401, 0.0
      %v8412 = vpack.c.bf16 %v8404, %v8404
      %v8413 = vpack.c.bf16 %v8405, %v8405
      %v8414 = vpack.c.bf16 %v8406, %v8406
      %v8415 = vpack.c.bf16 %v8407, %v8407
      %v8416 = vpack.c.bf16 %v8408, %v8408
      %v8417 = vpack.c.bf16 %v8409, %v8409
      %v8418 = vpack.c.bf16 %v8410, %v8410
      %v8419 = vpack.c.bf16 %v8411, %v8411
      %v8420 = vpack.c.bf16 %v8172, %v8172
      %v8421 = vpack.c.bf16 %v8173, %v8173
      %v8423 = vrot.slane %v8173, 1
      %v8424 = vsel %vm443, %v8251, %v8423
      %v8425 = vrot.slane %v8174, 1
      %v8426 = vsel %vm443, %v8423, %v8425
      %v8429 = vsel %vm339, %v8242, 0.0
      %v8430 = vsel %vm340, %v8244, 0.0
      %v8431 = vsel %vm341, %v8246, 0.0
      %v8432 = vsel %vm342, %v8248, 0.0
      %v8433 = vsel %vm343, %v8250, 0.0
      %v8434 = vsel %vm344, %v8252, 0.0
      %v8435 = vsel %vm345, %v8424, 0.0
      %v8436 = vsel %vm346, %v8426, 0.0
      %v8437 = vpack.c.bf16 %v8429, %v8429
      %v8438 = vpack.c.bf16 %v8430, %v8430
      %v8439 = vpack.c.bf16 %v8431, %v8431
      %v8440 = vpack.c.bf16 %v8432, %v8432
      %v8441 = vpack.c.bf16 %v8433, %v8433
      %v8442 = vpack.c.bf16 %v8434, %v8434
      %v8443 = vpack.c.bf16 %v8435, %v8435
      %v8444 = vpack.c.bf16 %v8436, %v8436
      %v8453 = vunpack.c.l.b16 %v8412
      %v8454 = vunpack.c.l.b16 %v8413
      %v8455 = vunpack.c.l.b16 %v8414
      %v8456 = vunpack.c.l.b16 %v8415
      %v8457 = vunpack.c.l.b16 %v8416
      %v8458 = vunpack.c.l.b16 %v8417
      %v8459 = vunpack.c.l.b16 %v8418
      %v8460 = vunpack.c.l.b16 %v8419
      %v8461 = vpack.c.b16 %v8454, %v8453
      %v8462 = vpack.c.b16 %v8456, %v8455
      %v8463 = vpack.c.b16 %v8458, %v8457
      %v8464 = vpack.c.b16 %v8460, %v8459
      %v8471 = vunpack.c.l.b16 %v8420
      %v8472 = vunpack.c.l.b16 %v8421
      %v8473 = vpack.c.b16 %v8472, %v8471
      %v8483 = vunpack.c.l.b16 %v8437
      %v8484 = vunpack.c.l.b16 %v8438
      %v8485 = vunpack.c.l.b16 %v8439
      %v8486 = vunpack.c.l.b16 %v8440
      %v8487 = vunpack.c.l.b16 %v8441
      %v8488 = vunpack.c.l.b16 %v8442
      %v8489 = vunpack.c.l.b16 %v8443
      %v8490 = vunpack.c.l.b16 %v8444
      %v8491 = vpack.c.b16 %v8484, %v8483
      %v8492 = vpack.c.b16 %v8486, %v8485
      %v8493 = vpack.c.b16 %v8488, %v8487
      %v8494 = vpack.c.b16 %v8490, %v8489
      %v8499 = vld [vmem:[%s5868] sm:$0xf]
      %v8500 = vld [vmem:[%s5868 + $0x4] sm:$0xf]
      %v8501 = vld [vmem:[%s5868 + $0x8] sm:$0xf]
      %v8502 = vld [vmem:[%s5868 + $0xc] sm:$0xf]
      %v8503 = vld [vmem:[%s5868 + $0x10] sm:$0xf]
      %v8504 = vld [vmem:[%s5868 + $0x14] sm:$0xf]
      %v8505 = vld [vmem:[%s5868 + $0x18] sm:$0xf]
      %v8506 = vld [vmem:[%s5868 + $0x1c] sm:$0xf]
      %v8507 = vld [vmem:[%s5868 + $0x20] sm:$0xf]
      %v8508 = vld [vmem:[%s5868 + $0x24] sm:$0xf]
      %v8509 = vld [vmem:[%s5868 + $0x28] sm:$0xf]
      %v8510 = vld [vmem:[%s5868 + $0x2c] sm:$0xf]
      %v8511 = vld [vmem:[%s5868 + $0x30] sm:$0xf]
      %v8512 = vld [vmem:[%s5868 + $0x34] sm:$0xf]
      %v8513 = vld [vmem:[%s5868 + $0x38] sm:$0xf]
      %v8514 = vld [vmem:[%s5868 + $0x3c] sm:$0xf]
      %v8515 = vld [vmem:[%s5868 + $0x40] sm:$0xf]
      %v8516 = vld [vmem:[%s5868 + $0x44] sm:$0xf]
      %v8517 = vld [vmem:[%s5868 + $0x48] sm:$0xf]
      %v8518 = vld [vmem:[%s5868 + $0x4c] sm:$0xf]
      %v8519 = vld [vmem:[%s5868 + $0x50] sm:$0xf]
      %v8520 = vld [vmem:[%s5868 + $0x54] sm:$0xf]
      %v8521 = vld [vmem:[%s5868 + $0x58] sm:$0xf]
      %v8522 = vld [vmem:[%s5868 + $0x5c] sm:$0xf]
      %v8523 = vld [vmem:[%s5868 + $0x60] sm:$0xf]
      %v8524 = vld [vmem:[%s5868 + $0x64] sm:$0xf]
      %v8525 = vld [vmem:[%s5868 + $0x68] sm:$0xf]
      %v8526 = vld [vmem:[%s5868 + $0x6c] sm:$0xf]
      %v8527 = vld [vmem:[%s5868 + $0x70] sm:$0xf]
      %v8528 = vld [vmem:[%s5868 + $0x74] sm:$0xf]
      %v8529 = vld [vmem:[%s5868 + $0x78] sm:$0xf]
      %v8530 = vld [vmem:[%s5868 + $0x7c] sm:$0xf]
      %v8531 = vld [vmem:[%s5868 + $0x80] sm:$0xf]
      %v8532 = vld [vmem:[%s5868 + $0x84] sm:$0xf]
      %v8533 = vld [vmem:[%s5868 + $0x88] sm:$0xf]
      %v8534 = vld [vmem:[%s5868 + $0x8c] sm:$0xf]
      %v8535 = vld [vmem:[%s5868 + $0x90] sm:$0xf]
      %v8536 = vld [vmem:[%s5868 + $0x94] sm:$0xf]
      %v8537 = vld [vmem:[%s5868 + $0x98] sm:$0xf]
      %v8538 = vld [vmem:[%s5868 + $0x9c] sm:$0xf]
      %v8539 = vld [vmem:[%s5868 + $0xa0] sm:$0xf]
      %v8540 = vld [vmem:[%s5868 + $0xa4] sm:$0xf]
      %v8541 = vld [vmem:[%s5868 + $0xa8] sm:$0xf]
      %v8542 = vld [vmem:[%s5868 + $0xac] sm:$0xf]
      %v8543 = vld [vmem:[%s5868 + $0xb0] sm:$0xf]
      %v8544 = vld [vmem:[%s5868 + $0xb4] sm:$0xf]
      %v8545 = vld [vmem:[%s5868 + $0xb8] sm:$0xf]
      %v8546 = vld [vmem:[%s5868 + $0xbc] sm:$0xf]
      %v8595 = vunpack.c.l.b16 %v8499
      %v8596 = vunpack.c.l.b16 %v8500
      %v8597 = vunpack.c.l.b16 %v8501
      %v8598 = vunpack.c.l.b16 %v8502
      %v8599 = vunpack.c.l.b16 %v8503
      %v8600 = vunpack.c.l.b16 %v8504
      %v8601 = vunpack.c.l.b16 %v8505
      %v8602 = vunpack.c.l.b16 %v8506
      %v8603 = vunpack.c.l.b16 %v8507
      %v8604 = vunpack.c.l.b16 %v8508
      %v8605 = vunpack.c.l.b16 %v8509
      %v8606 = vunpack.c.l.b16 %v8510
      %v8607 = vunpack.c.l.b16 %v8511
      %v8608 = vunpack.c.l.b16 %v8512
      %v8609 = vunpack.c.l.b16 %v8513
      %v8610 = vunpack.c.l.b16 %v8514
      %v8611 = vunpack.c.l.b16 %v8515
      %v8612 = vunpack.c.l.b16 %v8516
      %v8613 = vunpack.c.l.b16 %v8517
      %v8614 = vunpack.c.l.b16 %v8518
      %v8615 = vunpack.c.l.b16 %v8519
      %v8616 = vunpack.c.l.b16 %v8520
      %v8617 = vunpack.c.l.b16 %v8521
      %v8618 = vunpack.c.l.b16 %v8522
      %v8619 = vunpack.c.l.b16 %v8523
      %v8620 = vunpack.c.l.b16 %v8524
      %v8621 = vunpack.c.l.b16 %v8525
      %v8622 = vunpack.c.l.b16 %v8526
      %v8623 = vunpack.c.l.b16 %v8527
      %v8624 = vunpack.c.l.b16 %v8528
      %v8625 = vunpack.c.l.b16 %v8529
      %v8626 = vunpack.c.l.b16 %v8530
      %v8627 = vunpack.c.l.b16 %v8531
      %v8628 = vunpack.c.l.b16 %v8532
      %v8629 = vunpack.c.l.b16 %v8533
      %v8630 = vunpack.c.l.b16 %v8534
      %v8631 = vunpack.c.l.b16 %v8535
      %v8632 = vunpack.c.l.b16 %v8536
      %v8633 = vunpack.c.l.b16 %v8537
      %v8634 = vunpack.c.l.b16 %v8538
      %v8635 = vunpack.c.l.b16 %v8539
      %v8636 = vunpack.c.l.b16 %v8540
      %v8637 = vunpack.c.l.b16 %v8541
      %v8638 = vunpack.c.l.b16 %v8542
      %v8639 = vunpack.c.l.b16 %v8543
      %v8640 = vunpack.c.l.b16 %v8544
      %v8641 = vunpack.c.l.b16 %v8545
      %v8642 = vunpack.c.l.b16 %v8546
      %v8643 = vpack.c.b16 %v8596, %v8595
      %v8644 = vpack.c.b16 %v8598, %v8597
      %v8645 = vpack.c.b16 %v8600, %v8599
      %v8646 = vpack.c.b16 %v8602, %v8601
      %v8647 = vpack.c.b16 %v8604, %v8603
      %v8648 = vpack.c.b16 %v8606, %v8605
      %v8649 = vpack.c.b16 %v8608, %v8607
      %v8650 = vpack.c.b16 %v8610, %v8609
      %v8651 = vpack.c.b16 %v8612, %v8611
      %v8652 = vpack.c.b16 %v8614, %v8613
      %v8653 = vpack.c.b16 %v8616, %v8615
      %v8654 = vpack.c.b16 %v8618, %v8617
      %v8655 = vpack.c.b16 %v8620, %v8619
      %v8656 = vpack.c.b16 %v8622, %v8621
      %v8657 = vpack.c.b16 %v8624, %v8623
      %v8658 = vpack.c.b16 %v8626, %v8625
      %v8659 = vpack.c.b16 %v8628, %v8627
      %v8660 = vpack.c.b16 %v8630, %v8629
      %v8661 = vpack.c.b16 %v8632, %v8631
      %v8662 = vpack.c.b16 %v8634, %v8633
      %v8663 = vpack.c.b16 %v8636, %v8635
      %v8664 = vpack.c.b16 %v8638, %v8637
      %v8665 = vpack.c.b16 %v8640, %v8639
      %v8666 = vpack.c.b16 %v8642, %v8641
      %8691 = vmatpush.bf16.msra.mxu0 %v8650
      %8692 = vmatpush.bf16.msra.mxu0 %v8649
      %8693 = vmatpush.bf16.msra.mxu0 %v8648
      %8694 = vmatpush.bf16.msra.mxu0 %v8647
      %8695 = vmatpush.bf16.msra.mxu0 %v8646
      %8696 = vmatpush.bf16.msra.mxu0 %v8645
      %8697 = vmatpush.bf16.msra.mxu0 %v8644
      %8698 = vmatpush.bf16.msra.mxu0 %v8643
      %8699 = vmatmul.bf16.gmra.mxu0 %v8461
      %v8700 = vpop.f32.mrf.mxu0
      %v8701 = vadd.f32 0.0, %v8700
      %v8702 = vpop.f32.mrf.mxu0
      %v8703 = vadd.f32 0.0, %v8702
      %8704 = vmatmul.bf16.gmra.mxu0 %v8462
      %v8705 = vpop.f32.mrf.mxu0
      %v8706 = vadd.f32 0.0, %v8705
      %v8707 = vpop.f32.mrf.mxu0
      %v8708 = vadd.f32 0.0, %v8707
      %8709 = vmatmul.bf16.gmra.mxu0 %v8463
      %v8710 = vpop.f32.mrf.mxu0
      %v8711 = vadd.f32 0.0, %v8710
      %v8712 = vpop.f32.mrf.mxu0
      %v8713 = vadd.f32 0.0, %v8712
      %8714 = vmatmul.bf16.gmra.mxu0 %v8464
      %v8715 = vpop.f32.mrf.mxu0
      %v8716 = vadd.f32 0.0, %v8715
      %v8717 = vpop.f32.mrf.mxu0
      %v8718 = vadd.f32 0.0, %v8717
      %8719 = vdwg.mxu0
      %8720 = vmatpush.bf16.msra.mxu0 %v8658
      %8721 = vmatpush.bf16.msra.mxu0 %v8657
      %8722 = vmatpush.bf16.msra.mxu0 %v8656
      %8723 = vmatpush.bf16.msra.mxu0 %v8655
      %8724 = vmatpush.bf16.msra.mxu0 %v8654
      %8725 = vmatpush.bf16.msra.mxu0 %v8653
      %8726 = vmatpush.bf16.msra.mxu0 %v8652
      %8727 = vmatpush.bf16.msra.mxu0 %v8651
      %8728 = vmatmul.bf16.gmra.mxu0 %v8318
      %v8729 = vpop.f32.mrf.mxu0
      %v8730 = vadd.f32 %v8701, %v8729
      %v8731 = vpop.f32.mrf.mxu0
      %v8732 = vadd.f32 %v8703, %v8731
      %8733 = vmatmul.bf16.gmra.mxu0 %v8319
      %v8734 = vpop.f32.mrf.mxu0
      %v8735 = vadd.f32 %v8706, %v8734
      %v8736 = vpop.f32.mrf.mxu0
      %v8737 = vadd.f32 %v8708, %v8736
      %8738 = vmatmul.bf16.gmra.mxu0 %v8320
      %v8739 = vpop.f32.mrf.mxu0
      %v8740 = vadd.f32 %v8711, %v8739
      %v8741 = vpop.f32.mrf.mxu0
      %v8742 = vadd.f32 %v8713, %v8741
      %8743 = vmatmul.bf16.gmra.mxu0 %v8473
      %v8744 = vpop.f32.mrf.mxu0
      %v8745 = vadd.f32 %v8716, %v8744
      %v8746 = vpop.f32.mrf.mxu0
      %v8747 = vadd.f32 %v8718, %v8746
      %8748 = vdwg.mxu0
      %8749 = vmatpush.bf16.msra.mxu0 %v8666
      %8750 = vmatpush.bf16.msra.mxu0 %v8665
      %8751 = vmatpush.bf16.msra.mxu0 %v8664
      %8752 = vmatpush.bf16.msra.mxu0 %v8663
      %8753 = vmatpush.bf16.msra.mxu0 %v8662
      %8754 = vmatpush.bf16.msra.mxu0 %v8661
      %8755 = vmatpush.bf16.msra.mxu0 %v8660
      %8756 = vmatpush.bf16.msra.mxu0 %v8659
      %8757 = vmatmul.bf16.gmra.mxu0 %v8491
      %v8758 = vpop.f32.mrf.mxu0
      %v8759 = vadd.f32 %v8730, %v8758
      %v8760 = vpop.f32.mrf.mxu0
      %v8761 = vadd.f32 %v8732, %v8760
      %8762 = vmatmul.bf16.gmra.mxu0 %v8492
      %v8763 = vpop.f32.mrf.mxu0
      %v8764 = vadd.f32 %v8735, %v8763
      %v8765 = vpop.f32.mrf.mxu0
      %v8766 = vadd.f32 %v8737, %v8765
      %8767 = vmatmul.bf16.gmra.mxu0 %v8493
      %v8768 = vpop.f32.mrf.mxu0
      %v8769 = vadd.f32 %v8740, %v8768
      %v8770 = vpop.f32.mrf.mxu0
      %v8771 = vadd.f32 %v8742, %v8770
      %8772 = vmatmul.bf16.gmra.mxu0 %v8494
      %v8773 = vpop.f32.mrf.mxu0
      %v8774 = vadd.f32 %v8745, %v8773
      %v8775 = vpop.f32.mrf.mxu0
      %v8776 = vadd.f32 %v8747, %v8775
      %8777 = vdwg.mxu0
      %v8826 = vunpack.c.l.b16 %v8349
      %v8827 = vunpack.c.l.b16 %v8350
      %v8828 = vunpack.c.l.b16 %v8351
      %v8829 = vunpack.c.l.b16 %v8352
      %v8830 = vunpack.c.l.b16 %v8353
      %v8831 = vunpack.c.l.b16 %v8354
      %v8832 = vunpack.c.l.b16 %v8355
      %v8833 = vunpack.c.l.b16 %v8356
      %v8834 = vunpack.c.l.b16 %v8357
      %v8835 = vunpack.c.l.b16 %v8358
      %v8836 = vunpack.c.l.b16 %v8359
      %v8837 = vunpack.c.l.b16 %v8360
      %v8838 = vunpack.c.l.b16 %v8361
      %v8839 = vunpack.c.l.b16 %v8362
      %v8840 = vunpack.c.l.b16 %v8363
      %v8841 = vunpack.c.l.b16 %v8364
      %v8842 = vunpack.c.l.b16 %v8365
      %v8843 = vunpack.c.l.b16 %v8366
      %v8844 = vunpack.c.l.b16 %v8367
      %v8845 = vunpack.c.l.b16 %v8368
      %v8846 = vunpack.c.l.b16 %v8369
      %v8847 = vunpack.c.l.b16 %v8370
      %v8848 = vunpack.c.l.b16 %v8371
      %v8849 = vunpack.c.l.b16 %v8372
      %v8850 = vunpack.c.l.b16 %v8373
      %v8851 = vunpack.c.l.b16 %v8374
      %v8852 = vunpack.c.l.b16 %v8375
      %v8853 = vunpack.c.l.b16 %v8376
      %v8854 = vunpack.c.l.b16 %v8377
      %v8855 = vunpack.c.l.b16 %v8378
      %v8856 = vunpack.c.l.b16 %v8379
      %v8857 = vunpack.c.l.b16 %v8380
      %v8858 = vunpack.c.l.b16 %v8381
      %v8859 = vunpack.c.l.b16 %v8382
      %v8860 = vunpack.c.l.b16 %v8383
      %v8861 = vunpack.c.l.b16 %v8384
      %v8862 = vunpack.c.l.b16 %v8385
      %v8863 = vunpack.c.l.b16 %v8386
      %v8864 = vunpack.c.l.b16 %v8387
      %v8865 = vunpack.c.l.b16 %v8388
      %v8866 = vunpack.c.l.b16 %v8389
      %v8867 = vunpack.c.l.b16 %v8390
      %v8868 = vunpack.c.l.b16 %v8391
      %v8869 = vunpack.c.l.b16 %v8392
      %v8870 = vunpack.c.l.b16 %v8393
      %v8871 = vunpack.c.l.b16 %v8394
      %v8872 = vunpack.c.l.b16 %v8395
      %v8873 = vunpack.c.l.b16 %v8396
      %v8874 = vpack.c.b16 %v8827, %v8826
      %v8875 = vpack.c.b16 %v8829, %v8828
      %v8876 = vpack.c.b16 %v8831, %v8830
      %v8877 = vpack.c.b16 %v8833, %v8832
      %v8878 = vpack.c.b16 %v8835, %v8834
      %v8879 = vpack.c.b16 %v8837, %v8836
      %v8880 = vpack.c.b16 %v8839, %v8838
      %v8881 = vpack.c.b16 %v8841, %v8840
      %v8882 = vpack.c.b16 %v8843, %v8842
      %v8883 = vpack.c.b16 %v8845, %v8844
      %v8884 = vpack.c.b16 %v8847, %v8846
      %v8885 = vpack.c.b16 %v8849, %v8848
      %v8886 = vpack.c.b16 %v8851, %v8850
      %v8887 = vpack.c.b16 %v8853, %v8852
      %v8888 = vpack.c.b16 %v8855, %v8854
      %v8889 = vpack.c.b16 %v8857, %v8856
      %v8890 = vpack.c.b16 %v8859, %v8858
      %v8891 = vpack.c.b16 %v8861, %v8860
      %v8892 = vpack.c.b16 %v8863, %v8862
      %v8893 = vpack.c.b16 %v8865, %v8864
      %v8894 = vpack.c.b16 %v8867, %v8866
      %v8895 = vpack.c.b16 %v8869, %v8868
      %v8896 = vpack.c.b16 %v8871, %v8870
      %v8897 = vpack.c.b16 %v8873, %v8872
      %8922 = vmatpush.bf16.msra.mxu0 %v8881
      %8923 = vmatpush.bf16.msra.mxu0 %v8880
      %8924 = vmatpush.bf16.msra.mxu0 %v8879
      %8925 = vmatpush.bf16.msra.mxu0 %v8878
      %8926 = vmatpush.bf16.msra.mxu0 %v8877
      %8927 = vmatpush.bf16.msra.mxu0 %v8876
      %8928 = vmatpush.bf16.msra.mxu0 %v8875
      %8929 = vmatpush.bf16.msra.mxu0 %v8874
      %8930 = vmatmul.bf16.gmra.mxu0 %v8293
      %v8931 = vpop.f32.mrf.mxu0
      %v8932 = vadd.f32 %v8759, %v8931
      %v8933 = vpop.f32.mrf.mxu0
      %v8934 = vadd.f32 %v8761, %v8933
      %8935 = vmatmul.bf16.gmra.mxu0 %v8294
      %v8936 = vpop.f32.mrf.mxu0
      %v8937 = vadd.f32 %v8764, %v8936
      %v8938 = vpop.f32.mrf.mxu0
      %v8939 = vadd.f32 %v8766, %v8938
      %8940 = vmatmul.bf16.gmra.mxu0 %v8295
      %v8941 = vpop.f32.mrf.mxu0
      %v8942 = vadd.f32 %v8769, %v8941
      %v8943 = vpop.f32.mrf.mxu0
      %v8944 = vadd.f32 %v8771, %v8943
      %8945 = vmatmul.bf16.gmra.mxu0 %v8296
      %v8946 = vpop.f32.mrf.mxu0
      %v8947 = vadd.f32 %v8774, %v8946
      %v8948 = vpop.f32.mrf.mxu0
      %v8949 = vadd.f32 %v8776, %v8948
      %8950 = vdwg.mxu0
      %8951 = vmatpush.bf16.msra.mxu0 %v8889
      %8952 = vmatpush.bf16.msra.mxu0 %v8888
      %8953 = vmatpush.bf16.msra.mxu0 %v8887
      %8954 = vmatpush.bf16.msra.mxu0 %v8886
      %8955 = vmatpush.bf16.msra.mxu0 %v8885
      %8956 = vmatpush.bf16.msra.mxu0 %v8884
      %8957 = vmatpush.bf16.msra.mxu0 %v8883
      %8958 = vmatpush.bf16.msra.mxu0 %v8882
      %8959 = vmatmul.bf16.gmra.mxu0 %v8317
      %v8960 = vpop.f32.mrf.mxu0
      %v8961 = vadd.f32 %v8932, %v8960
      %v8962 = vpop.f32.mrf.mxu0
      %v8963 = vadd.f32 %v8934, %v8962
      %8964 = vmatmul.bf16.gmra.mxu0 %v8318
      %v8965 = vpop.f32.mrf.mxu0
      %v8966 = vadd.f32 %v8937, %v8965
      %v8967 = vpop.f32.mrf.mxu0
      %v8968 = vadd.f32 %v8939, %v8967
      %8969 = vmatmul.bf16.gmra.mxu0 %v8319
      %v8970 = vpop.f32.mrf.mxu0
      %v8971 = vadd.f32 %v8942, %v8970
      %v8972 = vpop.f32.mrf.mxu0
      %v8973 = vadd.f32 %v8944, %v8972
      %8974 = vmatmul.bf16.gmra.mxu0 %v8320
      %v8975 = vpop.f32.mrf.mxu0
      %v8976 = vadd.f32 %v8947, %v8975
      %v8977 = vpop.f32.mrf.mxu0
      %v8978 = vadd.f32 %v8949, %v8977
      %8979 = vdwg.mxu0
      %8980 = vmatpush.bf16.msra.mxu0 %v8897
      %8981 = vmatpush.bf16.msra.mxu0 %v8896
      %8982 = vmatpush.bf16.msra.mxu0 %v8895
      %8983 = vmatpush.bf16.msra.mxu0 %v8894
      %8984 = vmatpush.bf16.msra.mxu0 %v8893
      %8985 = vmatpush.bf16.msra.mxu0 %v8892
      %8986 = vmatpush.bf16.msra.mxu0 %v8891
      %8987 = vmatpush.bf16.msra.mxu0 %v8890
      %8988 = vmatmul.bf16.gmra.mxu0 %v8341
      %v8989 = vpop.f32.mrf.mxu0
      %v8990 = vadd.f32 %v8961, %v8989
      %v8991 = vpop.f32.mrf.mxu0
      %v8992 = vadd.f32 %v8963, %v8991
      %8993 = vmatmul.bf16.gmra.mxu0 %v8342
      %v8994 = vpop.f32.mrf.mxu0
      %v8995 = vadd.f32 %v8966, %v8994
      %v8996 = vpop.f32.mrf.mxu0
      %v8997 = vadd.f32 %v8968, %v8996
      %8998 = vmatmul.bf16.gmra.mxu0 %v8343
      %v8999 = vpop.f32.mrf.mxu0
      %v9000 = vadd.f32 %v8971, %v8999
      %v9001 = vpop.f32.mrf.mxu0
      %v9002 = vadd.f32 %v8973, %v9001
      %9003 = vmatmul.bf16.gmra.mxu0 %v8344
      %v9004 = vpop.f32.mrf.mxu0
      %v9005 = vadd.f32 %v8976, %v9004
      %v9006 = vpop.f32.mrf.mxu0
      %v9007 = vadd.f32 %v8978, %v9006
      %9008 = vdwg.mxu0
      %v9010 = vrot.slane %v8174, 7
      %v9011 = vsel %vm392, %v8400, %v9010
      %v9012 = vrot.slane %v8175, 7
      %v9013 = vsel %vm392, %v9010, %v9012
      %v9016 = vsel %vm331, %v8196, 0.0
      %v9017 = vsel %vm332, %v8198, 0.0
      %v9018 = vsel %vm333, %v8200, 0.0
      %v9019 = vsel %vm334, %v8202, 0.0
      %v9020 = vsel %vm335, %v8399, 0.0
      %v9021 = vsel %vm336, %v8401, 0.0
      %v9022 = vsel %vm337, %v9011, 0.0
      %v9023 = vsel %vm338, %v9013, 0.0
      %v9024 = vpack.c.bf16 %v9016, %v9016
      %v9025 = vpack.c.bf16 %v9017, %v9017
      %v9026 = vpack.c.bf16 %v9018, %v9018
      %v9027 = vpack.c.bf16 %v9019, %v9019
      %v9028 = vpack.c.bf16 %v9020, %v9020
      %v9029 = vpack.c.bf16 %v9021, %v9021
      %v9030 = vpack.c.bf16 %v9022, %v9022
      %v9031 = vpack.c.bf16 %v9023, %v9023
      %v9032 = vpack.c.bf16 %v8174, %v8174
      %v9033 = vpack.c.bf16 %v8175, %v8175
      %v9035 = vrot.slane %v8175, 1
      %v9036 = vsel %vm443, %v8425, %v9035
      %v9037 = vrot.slane %v8176, 1
      %v9038 = vsel %vm443, %v9035, %v9037
      %v9041 = vsel %vm339, %v8246, 0.0
      %v9042 = vsel %vm340, %v8248, 0.0
      %v9043 = vsel %vm341, %v8250, 0.0
      %v9044 = vsel %vm342, %v8252, 0.0
      %v9045 = vsel %vm343, %v8424, 0.0
      %v9046 = vsel %vm344, %v8426, 0.0
      %v9047 = vsel %vm345, %v9036, 0.0
      %v9048 = vsel %vm346, %v9038, 0.0
      %v9049 = vpack.c.bf16 %v9041, %v9041
      %v9050 = vpack.c.bf16 %v9042, %v9042
      %v9051 = vpack.c.bf16 %v9043, %v9043
      %v9052 = vpack.c.bf16 %v9044, %v9044
      %v9053 = vpack.c.bf16 %v9045, %v9045
      %v9054 = vpack.c.bf16 %v9046, %v9046
      %v9055 = vpack.c.bf16 %v9047, %v9047
      %v9056 = vpack.c.bf16 %v9048, %v9048
      %v9065 = vunpack.c.l.b16 %v9024
      %v9066 = vunpack.c.l.b16 %v9025
      %v9067 = vunpack.c.l.b16 %v9026
      %v9068 = vunpack.c.l.b16 %v9027
      %v9069 = vunpack.c.l.b16 %v9028
      %v9070 = vunpack.c.l.b16 %v9029
      %v9071 = vunpack.c.l.b16 %v9030
      %v9072 = vunpack.c.l.b16 %v9031
      %v9073 = vpack.c.b16 %v9066, %v9065
      %v9074 = vpack.c.b16 %v9068, %v9067
      %v9075 = vpack.c.b16 %v9070, %v9069
      %v9076 = vpack.c.b16 %v9072, %v9071
      %v9083 = vunpack.c.l.b16 %v9032
      %v9084 = vunpack.c.l.b16 %v9033
      %v9085 = vpack.c.b16 %v9084, %v9083
      %v9095 = vunpack.c.l.b16 %v9049
      %v9096 = vunpack.c.l.b16 %v9050
      %v9097 = vunpack.c.l.b16 %v9051
      %v9098 = vunpack.c.l.b16 %v9052
      %v9099 = vunpack.c.l.b16 %v9053
      %v9100 = vunpack.c.l.b16 %v9054
      %v9101 = vunpack.c.l.b16 %v9055
      %v9102 = vunpack.c.l.b16 %v9056
      %v9103 = vpack.c.b16 %v9096, %v9095
      %v9104 = vpack.c.b16 %v9098, %v9097
      %v9105 = vpack.c.b16 %v9100, %v9099
      %v9106 = vpack.c.b16 %v9102, %v9101
      %v9111 = vld [vmem:[%s6481] sm:$0xf]
      %v9112 = vld [vmem:[%s6481 + $0x4] sm:$0xf]
      %v9113 = vld [vmem:[%s6481 + $0x8] sm:$0xf]
      %v9114 = vld [vmem:[%s6481 + $0xc] sm:$0xf]
      %v9115 = vld [vmem:[%s6481 + $0x10] sm:$0xf]
      %v9116 = vld [vmem:[%s6481 + $0x14] sm:$0xf]
      %v9117 = vld [vmem:[%s6481 + $0x18] sm:$0xf]
      %v9118 = vld [vmem:[%s6481 + $0x1c] sm:$0xf]
      %v9119 = vld [vmem:[%s6481 + $0x20] sm:$0xf]
      %v9120 = vld [vmem:[%s6481 + $0x24] sm:$0xf]
      %v9121 = vld [vmem:[%s6481 + $0x28] sm:$0xf]
      %v9122 = vld [vmem:[%s6481 + $0x2c] sm:$0xf]
      %v9123 = vld [vmem:[%s6481 + $0x30] sm:$0xf]
      %v9124 = vld [vmem:[%s6481 + $0x34] sm:$0xf]
      %v9125 = vld [vmem:[%s6481 + $0x38] sm:$0xf]
      %v9126 = vld [vmem:[%s6481 + $0x3c] sm:$0xf]
      %v9127 = vld [vmem:[%s6481 + $0x40] sm:$0xf]
      %v9128 = vld [vmem:[%s6481 + $0x44] sm:$0xf]
      %v9129 = vld [vmem:[%s6481 + $0x48] sm:$0xf]
      %v9130 = vld [vmem:[%s6481 + $0x4c] sm:$0xf]
      %v9131 = vld [vmem:[%s6481 + $0x50] sm:$0xf]
      %v9132 = vld [vmem:[%s6481 + $0x54] sm:$0xf]
      %v9133 = vld [vmem:[%s6481 + $0x58] sm:$0xf]
      %v9134 = vld [vmem:[%s6481 + $0x5c] sm:$0xf]
      %v9135 = vld [vmem:[%s6481 + $0x60] sm:$0xf]
      %v9136 = vld [vmem:[%s6481 + $0x64] sm:$0xf]
      %v9137 = vld [vmem:[%s6481 + $0x68] sm:$0xf]
      %v9138 = vld [vmem:[%s6481 + $0x6c] sm:$0xf]
      %v9139 = vld [vmem:[%s6481 + $0x70] sm:$0xf]
      %v9140 = vld [vmem:[%s6481 + $0x74] sm:$0xf]
      %v9141 = vld [vmem:[%s6481 + $0x78] sm:$0xf]
      %v9142 = vld [vmem:[%s6481 + $0x7c] sm:$0xf]
      %v9143 = vld [vmem:[%s6481 + $0x80] sm:$0xf]
      %v9144 = vld [vmem:[%s6481 + $0x84] sm:$0xf]
      %v9145 = vld [vmem:[%s6481 + $0x88] sm:$0xf]
      %v9146 = vld [vmem:[%s6481 + $0x8c] sm:$0xf]
      %v9147 = vld [vmem:[%s6481 + $0x90] sm:$0xf]
      %v9148 = vld [vmem:[%s6481 + $0x94] sm:$0xf]
      %v9149 = vld [vmem:[%s6481 + $0x98] sm:$0xf]
      %v9150 = vld [vmem:[%s6481 + $0x9c] sm:$0xf]
      %v9151 = vld [vmem:[%s6481 + $0xa0] sm:$0xf]
      %v9152 = vld [vmem:[%s6481 + $0xa4] sm:$0xf]
      %v9153 = vld [vmem:[%s6481 + $0xa8] sm:$0xf]
      %v9154 = vld [vmem:[%s6481 + $0xac] sm:$0xf]
      %v9155 = vld [vmem:[%s6481 + $0xb0] sm:$0xf]
      %v9156 = vld [vmem:[%s6481 + $0xb4] sm:$0xf]
      %v9157 = vld [vmem:[%s6481 + $0xb8] sm:$0xf]
      %v9158 = vld [vmem:[%s6481 + $0xbc] sm:$0xf]
      %v9207 = vunpack.c.l.b16 %v9111
      %v9208 = vunpack.c.l.b16 %v9112
      %v9209 = vunpack.c.l.b16 %v9113
      %v9210 = vunpack.c.l.b16 %v9114
      %v9211 = vunpack.c.l.b16 %v9115
      %v9212 = vunpack.c.l.b16 %v9116
      %v9213 = vunpack.c.l.b16 %v9117
      %v9214 = vunpack.c.l.b16 %v9118
      %v9215 = vunpack.c.l.b16 %v9119
      %v9216 = vunpack.c.l.b16 %v9120
      %v9217 = vunpack.c.l.b16 %v9121
      %v9218 = vunpack.c.l.b16 %v9122
      %v9219 = vunpack.c.l.b16 %v9123
      %v9220 = vunpack.c.l.b16 %v9124
      %v9221 = vunpack.c.l.b16 %v9125
      %v9222 = vunpack.c.l.b16 %v9126
      %v9223 = vunpack.c.l.b16 %v9127
      %v9224 = vunpack.c.l.b16 %v9128
      %v9225 = vunpack.c.l.b16 %v9129
      %v9226 = vunpack.c.l.b16 %v9130
      %v9227 = vunpack.c.l.b16 %v9131
      %v9228 = vunpack.c.l.b16 %v9132
      %v9229 = vunpack.c.l.b16 %v9133
      %v9230 = vunpack.c.l.b16 %v9134
      %v9231 = vunpack.c.l.b16 %v9135
      %v9232 = vunpack.c.l.b16 %v9136
      %v9233 = vunpack.c.l.b16 %v9137
      %v9234 = vunpack.c.l.b16 %v9138
      %v9235 = vunpack.c.l.b16 %v9139
      %v9236 = vunpack.c.l.b16 %v9140
      %v9237 = vunpack.c.l.b16 %v9141
      %v9238 = vunpack.c.l.b16 %v9142
      %v9239 = vunpack.c.l.b16 %v9143
      %v9240 = vunpack.c.l.b16 %v9144
      %v9241 = vunpack.c.l.b16 %v9145
      %v9242 = vunpack.c.l.b16 %v9146
      %v9243 = vunpack.c.l.b16 %v9147
      %v9244 = vunpack.c.l.b16 %v9148
      %v9245 = vunpack.c.l.b16 %v9149
      %v9246 = vunpack.c.l.b16 %v9150
      %v9247 = vunpack.c.l.b16 %v9151
      %v9248 = vunpack.c.l.b16 %v9152
      %v9249 = vunpack.c.l.b16 %v9153
      %v9250 = vunpack.c.l.b16 %v9154
      %v9251 = vunpack.c.l.b16 %v9155
      %v9252 = vunpack.c.l.b16 %v9156
      %v9253 = vunpack.c.l.b16 %v9157
      %v9254 = vunpack.c.l.b16 %v9158
      %v9255 = vpack.c.b16 %v9208, %v9207
      %v9256 = vpack.c.b16 %v9210, %v9209
      %v9257 = vpack.c.b16 %v9212, %v9211
      %v9258 = vpack.c.b16 %v9214, %v9213
      %v9259 = vpack.c.b16 %v9216, %v9215
      %v9260 = vpack.c.b16 %v9218, %v9217
      %v9261 = vpack.c.b16 %v9220, %v9219
      %v9262 = vpack.c.b16 %v9222, %v9221
      %v9263 = vpack.c.b16 %v9224, %v9223
      %v9264 = vpack.c.b16 %v9226, %v9225
      %v9265 = vpack.c.b16 %v9228, %v9227
      %v9266 = vpack.c.b16 %v9230, %v9229
      %v9267 = vpack.c.b16 %v9232, %v9231
      %v9268 = vpack.c.b16 %v9234, %v9233
      %v9269 = vpack.c.b16 %v9236, %v9235
      %v9270 = vpack.c.b16 %v9238, %v9237
      %v9271 = vpack.c.b16 %v9240, %v9239
      %v9272 = vpack.c.b16 %v9242, %v9241
      %v9273 = vpack.c.b16 %v9244, %v9243
      %v9274 = vpack.c.b16 %v9246, %v9245
      %v9275 = vpack.c.b16 %v9248, %v9247
      %v9276 = vpack.c.b16 %v9250, %v9249
      %v9277 = vpack.c.b16 %v9252, %v9251
      %v9278 = vpack.c.b16 %v9254, %v9253
      %9303 = vmatpush.bf16.msra.mxu0 %v9262
      %9304 = vmatpush.bf16.msra.mxu0 %v9261
      %9305 = vmatpush.bf16.msra.mxu0 %v9260
      %9306 = vmatpush.bf16.msra.mxu0 %v9259
      %9307 = vmatpush.bf16.msra.mxu0 %v9258
      %9308 = vmatpush.bf16.msra.mxu0 %v9257
      %9309 = vmatpush.bf16.msra.mxu0 %v9256
      %9310 = vmatpush.bf16.msra.mxu0 %v9255
      %9311 = vmatmul.bf16.gmra.mxu0 %v9073
      %v9312 = vpop.f32.mrf.mxu0
      %v9313 = vadd.f32 0.0, %v9312
      %v9314 = vpop.f32.mrf.mxu0
      %v9315 = vadd.f32 0.0, %v9314
      %9316 = vmatmul.bf16.gmra.mxu0 %v9074
      %v9317 = vpop.f32.mrf.mxu0
      %v9318 = vadd.f32 0.0, %v9317
      %v9319 = vpop.f32.mrf.mxu0
      %v9320 = vadd.f32 0.0, %v9319
      %9321 = vmatmul.bf16.gmra.mxu0 %v9075
      %v9322 = vpop.f32.mrf.mxu0
      %v9323 = vadd.f32 0.0, %v9322
      %v9324 = vpop.f32.mrf.mxu0
      %v9325 = vadd.f32 0.0, %v9324
      %9326 = vmatmul.bf16.gmra.mxu0 %v9076
      %v9327 = vpop.f32.mrf.mxu0
      %v9328 = vadd.f32 0.0, %v9327
      %v9329 = vpop.f32.mrf.mxu0
      %v9330 = vadd.f32 0.0, %v9329
      %9331 = vdwg.mxu0
      %9332 = vmatpush.bf16.msra.mxu0 %v9270
      %9333 = vmatpush.bf16.msra.mxu0 %v9269
      %9334 = vmatpush.bf16.msra.mxu0 %v9268
      %9335 = vmatpush.bf16.msra.mxu0 %v9267
      %9336 = vmatpush.bf16.msra.mxu0 %v9266
      %9337 = vmatpush.bf16.msra.mxu0 %v9265
      %9338 = vmatpush.bf16.msra.mxu0 %v9264
      %9339 = vmatpush.bf16.msra.mxu0 %v9263
      %9340 = vmatmul.bf16.gmra.mxu0 %v8319
      %v9341 = vpop.f32.mrf.mxu0
      %v9342 = vadd.f32 %v9313, %v9341
      %v9343 = vpop.f32.mrf.mxu0
      %v9344 = vadd.f32 %v9315, %v9343
      %9345 = vmatmul.bf16.gmra.mxu0 %v8320
      %v9346 = vpop.f32.mrf.mxu0
      %v9347 = vadd.f32 %v9318, %v9346
      %v9348 = vpop.f32.mrf.mxu0
      %v9349 = vadd.f32 %v9320, %v9348
      %9350 = vmatmul.bf16.gmra.mxu0 %v8473
      %v9351 = vpop.f32.mrf.mxu0
      %v9352 = vadd.f32 %v9323, %v9351
      %v9353 = vpop.f32.mrf.mxu0
      %v9354 = vadd.f32 %v9325, %v9353
      %9355 = vmatmul.bf16.gmra.mxu0 %v9085
      %v9356 = vpop.f32.mrf.mxu0
      %v9357 = vadd.f32 %v9328, %v9356
      %v9358 = vpop.f32.mrf.mxu0
      %v9359 = vadd.f32 %v9330, %v9358
      %9360 = vdwg.mxu0
      %9361 = vmatpush.bf16.msra.mxu0 %v9278
      %9362 = vmatpush.bf16.msra.mxu0 %v9277
      %9363 = vmatpush.bf16.msra.mxu0 %v9276
      %9364 = vmatpush.bf16.msra.mxu0 %v9275
      %9365 = vmatpush.bf16.msra.mxu0 %v9274
      %9366 = vmatpush.bf16.msra.mxu0 %v9273
      %9367 = vmatpush.bf16.msra.mxu0 %v9272
      %9368 = vmatpush.bf16.msra.mxu0 %v9271
      %9369 = vmatmul.bf16.gmra.mxu0 %v9103
      %v9370 = vpop.f32.mrf.mxu0
      %v9371 = vadd.f32 %v9342, %v9370
      %v9372 = vpop.f32.mrf.mxu0
      %v9373 = vadd.f32 %v9344, %v9372
      %9374 = vmatmul.bf16.gmra.mxu0 %v9104
      %v9375 = vpop.f32.mrf.mxu0
      %v9376 = vadd.f32 %v9347, %v9375
      %v9377 = vpop.f32.mrf.mxu0
      %v9378 = vadd.f32 %v9349, %v9377
      %9379 = vmatmul.bf16.gmra.mxu0 %v9105
      %v9380 = vpop.f32.mrf.mxu0
      %v9381 = vadd.f32 %v9352, %v9380
      %v9382 = vpop.f32.mrf.mxu0
      %v9383 = vadd.f32 %v9354, %v9382
      %9384 = vmatmul.bf16.gmra.mxu0 %v9106
      %v9385 = vpop.f32.mrf.mxu0
      %v9386 = vadd.f32 %v9357, %v9385
      %v9387 = vpop.f32.mrf.mxu0
      %v9388 = vadd.f32 %v9359, %v9387
      %9389 = vdwg.mxu0
      %v9390 = vadd.f32 %v8990, %v9371
      %v9391 = vadd.f32 %v8992, %v9373
      %v9392 = vadd.f32 %v8995, %v9376
      %v9393 = vadd.f32 %v8997, %v9378
      %v9394 = vadd.f32 %v9000, %v9381
      %v9395 = vadd.f32 %v9002, %v9383
      %v9396 = vadd.f32 %v9005, %v9386
      %v9397 = vadd.f32 %v9007, %v9388
      %v9398 = vld [vmem:[%s219 + $0x4c] sm:$0xf]
      %v9399 = vld [vmem:[%s219 + $0x50] sm:$0xf]
      %v9400 = vld [vmem:[%s219 + $0x54] sm:$0xf]
      %v9401 = vld [vmem:[%s219 + $0x58] sm:$0xf]
      %v9402 = vld [vmem:[%s219 + $0x5c] sm:$0xf]
      %v9403 = vld [vmem:[%s219 + $0x60] sm:$0xf]
      %v9404 = vld [vmem:[%s219 + $0x64] sm:$0xf]
      %v9405 = vld [vmem:[%s219 + $0x68] sm:$0xf]
      %v9406 = vunpack.c.l.bf16 %v9398
      %v9407 = vunpack.c.l.bf16 %v9399
      %v9408 = vunpack.c.l.bf16 %v9400
      %v9409 = vunpack.c.l.bf16 %v9401
      %v9410 = vunpack.c.l.bf16 %v9402
      %v9411 = vunpack.c.l.bf16 %v9403
      %v9412 = vunpack.c.l.bf16 %v9404
      %v9413 = vunpack.c.l.bf16 %v9405
      %v9414 = vadd.f32 %v9390, %v6786
      %v9415 = vadd.f32 %v9391, %v6786
      %v9416 = vadd.f32 %v9392, %v6786
      %v9417 = vadd.f32 %v9393, %v6786
      %v9418 = vadd.f32 %v9394, %v6786
      %v9419 = vadd.f32 %v9395, %v6786
      %v9420 = vadd.f32 %v9396, %v6786
      %v9421 = vadd.f32 %v9397, %v6786
      %v9422 = vadd.f32 %v9414, %v9406
      %v9423 = vadd.f32 %v9415, %v9407
      %v9424 = vadd.f32 %v9416, %v9408
      %v9425 = vadd.f32 %v9417, %v9409
      %v9426 = vadd.f32 %v9418, %v9410
      %v9427 = vadd.f32 %v9419, %v9411
      %v9428 = vadd.f32 %v9420, %v9412
      %v9429 = vadd.f32 %v9421, %v9413
      %v9430 = vmax.f32 %v9422, 0.0
      %v9431 = vmax.f32 %v9423, 0.0
      %v9432 = vmax.f32 %v9424, 0.0
      %v9433 = vmax.f32 %v9425, 0.0
      %v9434 = vmax.f32 %v9426, 0.0
      %v9435 = vmax.f32 %v9427, 0.0
      %v9436 = vmax.f32 %v9428, 0.0
      %v9437 = vmax.f32 %v9429, 0.0
      %v9438 = vmin.f32 %v9430, 6.0
      %v9439 = vmin.f32 %v9431, 6.0
      %v9440 = vmin.f32 %v9432, 6.0
      %v9441 = vmin.f32 %v9433, 6.0
      %v9442 = vmin.f32 %v9434, 6.0
      %v9443 = vmin.f32 %v9435, 6.0
      %v9444 = vmin.f32 %v9436, 6.0
      %v9445 = vmin.f32 %v9437, 6.0
      %v9446 = vpack.c.bf16 %v9438, %v9438
      %v9447 = vpack.c.bf16 %v9439, %v9439
      %v9448 = vpack.c.bf16 %v9440, %v9440
      %v9449 = vpack.c.bf16 %v9441, %v9441
      %v9450 = vpack.c.bf16 %v9442, %v9442
      %v9451 = vpack.c.bf16 %v9443, %v9443
      %v9452 = vpack.c.bf16 %v9444, %v9444
      %v9453 = vpack.c.bf16 %v9445, %v9445
      %9454 = vst [vmem:[%s224 + $0x40] sm:$0xf] %v9446
      %9455 = vst [vmem:[%s224 + $0x44] sm:$0xf] %v9447
      %9456 = vst [vmem:[%s224 + $0x48] sm:$0xf] %v9448
      %9457 = vst [vmem:[%s224 + $0x4c] sm:$0xf] %v9449
      %9458 = vst [vmem:[%s224 + $0x50] sm:$0xf] %v9450
      %9459 = vst [vmem:[%s224 + $0x54] sm:$0xf] %v9451
      %9460 = vst [vmem:[%s224 + $0x58] sm:$0xf] %v9452
      %9461 = vst [vmem:[%s224 + $0x5c] sm:$0xf] %v9453
      %v9462 = vld [vmem:[#allocation2 + $0x60] sm:$0xf]
      %v9463 = vld [vmem:[#allocation2 + $0x64] sm:$0xf]
      %v9464 = vld [vmem:[#allocation2 + $0x68] sm:$0xf]
      %v9465 = vld [vmem:[#allocation2 + $0x6c] sm:$0xf]
      %v9466 = vld [vmem:[#allocation2 + $0x70] sm:$0xf]
      %v9467 = vld [vmem:[#allocation2 + $0x74] sm:$0xf]
      %v9468 = vld [vmem:[#allocation2 + $0x78] sm:$0xf]
      %v9469 = vld [vmem:[#allocation2 + $0x7c] sm:$0xf]
      %v9470 = vld [vmem:[#allocation2 + $0x80] sm:$0xf]
      %v9471 = vld [vmem:[#allocation2 + $0x84] sm:$0xf]
      %v9472 = vld [vmem:[#allocation2 + $0x88] sm:$0xf]
      %v9473 = vld [vmem:[#allocation2 + $0x8c] sm:$0xf]
      %v9474 = vld [vmem:[#allocation2 + $0x90] sm:$0xf]
      %v9475 = vld [vmem:[#allocation2 + $0x94] sm:$0xf]
      %v9476 = vunpack.c.l.bf16 %v9462
      %v9477 = vunpack.c.l.bf16 %v9463
      %v9478 = vunpack.c.l.bf16 %v9464
      %v9479 = vunpack.c.l.bf16 %v9465
      %v9480 = vunpack.c.l.bf16 %v9466
      %v9481 = vunpack.c.l.bf16 %v9467
      %v9482 = vunpack.c.l.bf16 %v9468
      %v9483 = vunpack.c.l.bf16 %v9469
      %v9484 = vunpack.c.l.bf16 %v9470
      %v9485 = vunpack.c.l.bf16 %v9471
      %v9486 = vunpack.c.l.bf16 %v9472
      %v9487 = vunpack.c.l.bf16 %v9473
      %v9488 = vunpack.c.l.bf16 %v9474
      %v9489 = vunpack.c.l.bf16 %v9475
      %v9499 = vrot.slane %v9476, 7
      %v9500 = vrot.slane %v9477, 7
      %v9501 = vsel %vm392, %v9499, %v9500
      %v9502 = vrot.slane %v9478, 7
      %v9503 = vsel %vm392, %v9500, %v9502
      %v9504 = vrot.slane %v9479, 7
      %v9505 = vsel %vm392, %v9502, %v9504
      %v9506 = vrot.slane %v9480, 7
      %v9507 = vsel %vm392, %v9504, %v9506
      %v9508 = vrot.slane %v9481, 7
      %v9509 = vsel %vm392, %v9506, %v9508
      %v9510 = vrot.slane %v9482, 7
      %v9511 = vsel %vm392, %v9508, %v9510
      %v9512 = vrot.slane %v9483, 7
      %v9513 = vsel %vm392, %v9510, %v9512
      %v9514 = vrot.slane %v9484, 7
      %v9515 = vsel %vm392, %v9512, %v9514
      %v9524 = vsel %vm331, %v9501, 0.0
      %v9525 = vsel %vm332, %v9503, 0.0
      %v9526 = vsel %vm333, %v9505, 0.0
      %v9527 = vsel %vm334, %v9507, 0.0
      %v9528 = vsel %vm335, %v9509, 0.0
      %v9529 = vsel %vm336, %v9511, 0.0
      %v9530 = vsel %vm337, %v9513, 0.0
      %v9531 = vsel %vm338, %v9515, 0.0
      %v9532 = vpack.c.bf16 %v9524, %v9524
      %v9533 = vpack.c.bf16 %v9525, %v9525
      %v9534 = vpack.c.bf16 %v9526, %v9526
      %v9535 = vpack.c.bf16 %v9527, %v9527
      %v9536 = vpack.c.bf16 %v9528, %v9528
      %v9537 = vpack.c.bf16 %v9529, %v9529
      %v9538 = vpack.c.bf16 %v9530, %v9530
      %v9539 = vpack.c.bf16 %v9531, %v9531
      %v9540 = vpack.c.bf16 %v9477, %v9477
      %v9541 = vpack.c.bf16 %v9478, %v9478
      %v9542 = vpack.c.bf16 %v9479, %v9479
      %v9543 = vpack.c.bf16 %v9480, %v9480
      %v9544 = vpack.c.bf16 %v9481, %v9481
      %v9545 = vpack.c.bf16 %v9482, %v9482
      %v9546 = vpack.c.bf16 %v9483, %v9483
      %v9547 = vpack.c.bf16 %v9484, %v9484
      %v9549 = vrot.slane %v9477, 1
      %v9550 = vrot.slane %v9478, 1
      %v9551 = vsel %vm443, %v9549, %v9550
      %v9552 = vrot.slane %v9479, 1
      %v9553 = vsel %vm443, %v9550, %v9552
      %v9554 = vrot.slane %v9480, 1
      %v9555 = vsel %vm443, %v9552, %v9554
      %v9556 = vrot.slane %v9481, 1
      %v9557 = vsel %vm443, %v9554, %v9556
      %v9558 = vrot.slane %v9482, 1
      %v9559 = vsel %vm443, %v9556, %v9558
      %v9560 = vrot.slane %v9483, 1
      %v9561 = vsel %vm443, %v9558, %v9560
      %v9562 = vrot.slane %v9484, 1
      %v9563 = vsel %vm443, %v9560, %v9562
      %v9564 = vrot.slane %v9485, 1
      %v9565 = vsel %vm443, %v9562, %v9564
      %v9574 = vsel %vm339, %v9551, 0.0
      %v9575 = vsel %vm340, %v9553, 0.0
      %v9576 = vsel %vm341, %v9555, 0.0
      %v9577 = vsel %vm342, %v9557, 0.0
      %v9578 = vsel %vm343, %v9559, 0.0
      %v9579 = vsel %vm344, %v9561, 0.0
      %v9580 = vsel %vm345, %v9563, 0.0
      %v9581 = vsel %vm346, %v9565, 0.0
      %v9582 = vpack.c.bf16 %v9574, %v9574
      %v9583 = vpack.c.bf16 %v9575, %v9575
      %v9584 = vpack.c.bf16 %v9576, %v9576
      %v9585 = vpack.c.bf16 %v9577, %v9577
      %v9586 = vpack.c.bf16 %v9578, %v9578
      %v9587 = vpack.c.bf16 %v9579, %v9579
      %v9588 = vpack.c.bf16 %v9580, %v9580
      %v9589 = vpack.c.bf16 %v9581, %v9581
      %v9598 = vunpack.c.l.b16 %v9532
      %v9599 = vunpack.c.l.b16 %v9533
      %v9600 = vunpack.c.l.b16 %v9534
      %v9601 = vunpack.c.l.b16 %v9535
      %v9602 = vunpack.c.l.b16 %v9536
      %v9603 = vunpack.c.l.b16 %v9537
      %v9604 = vunpack.c.l.b16 %v9538
      %v9605 = vunpack.c.l.b16 %v9539
      %v9606 = vpack.c.b16 %v9599, %v9598
      %v9607 = vpack.c.b16 %v9601, %v9600
      %v9608 = vpack.c.b16 %v9603, %v9602
      %v9609 = vpack.c.b16 %v9605, %v9604
      %v9622 = vunpack.c.l.b16 %v9540
      %v9623 = vunpack.c.l.b16 %v9541
      %v9624 = vunpack.c.l.b16 %v9542
      %v9625 = vunpack.c.l.b16 %v9543
      %v9626 = vunpack.c.l.b16 %v9544
      %v9627 = vunpack.c.l.b16 %v9545
      %v9628 = vunpack.c.l.b16 %v9546
      %v9629 = vunpack.c.l.b16 %v9547
      %v9630 = vpack.c.b16 %v9623, %v9622
      %v9631 = vpack.c.b16 %v9625, %v9624
      %v9632 = vpack.c.b16 %v9627, %v9626
      %v9633 = vpack.c.b16 %v9629, %v9628
      %v9646 = vunpack.c.l.b16 %v9582
      %v9647 = vunpack.c.l.b16 %v9583
      %v9648 = vunpack.c.l.b16 %v9584
      %v9649 = vunpack.c.l.b16 %v9585
      %v9650 = vunpack.c.l.b16 %v9586
      %v9651 = vunpack.c.l.b16 %v9587
      %v9652 = vunpack.c.l.b16 %v9588
      %v9653 = vunpack.c.l.b16 %v9589
      %v9654 = vpack.c.b16 %v9647, %v9646
      %v9655 = vpack.c.b16 %v9649, %v9648
      %v9656 = vpack.c.b16 %v9651, %v9650
      %v9657 = vpack.c.b16 %v9653, %v9652
      %v9662 = vld [vmem:[%s3] sm:$0xf]
      %v9663 = vld [vmem:[%s3 + $0x4] sm:$0xf]
      %v9664 = vld [vmem:[%s3 + $0x8] sm:$0xf]
      %v9665 = vld [vmem:[%s3 + $0xc] sm:$0xf]
      %v9666 = vld [vmem:[%s3 + $0x10] sm:$0xf]
      %v9667 = vld [vmem:[%s3 + $0x14] sm:$0xf]
      %v9668 = vld [vmem:[%s3 + $0x18] sm:$0xf]
      %v9669 = vld [vmem:[%s3 + $0x1c] sm:$0xf]
      %v9670 = vld [vmem:[%s3 + $0x20] sm:$0xf]
      %v9671 = vld [vmem:[%s3 + $0x24] sm:$0xf]
      %v9672 = vld [vmem:[%s3 + $0x28] sm:$0xf]
      %v9673 = vld [vmem:[%s3 + $0x2c] sm:$0xf]
      %v9674 = vld [vmem:[%s3 + $0x30] sm:$0xf]
      %v9675 = vld [vmem:[%s3 + $0x34] sm:$0xf]
      %v9676 = vld [vmem:[%s3 + $0x38] sm:$0xf]
      %v9677 = vld [vmem:[%s3 + $0x3c] sm:$0xf]
      %v9678 = vld [vmem:[%s3 + $0x40] sm:$0xf]
      %v9679 = vld [vmem:[%s3 + $0x44] sm:$0xf]
      %v9680 = vld [vmem:[%s3 + $0x48] sm:$0xf]
      %v9681 = vld [vmem:[%s3 + $0x4c] sm:$0xf]
      %v9682 = vld [vmem:[%s3 + $0x50] sm:$0xf]
      %v9683 = vld [vmem:[%s3 + $0x54] sm:$0xf]
      %v9684 = vld [vmem:[%s3 + $0x58] sm:$0xf]
      %v9685 = vld [vmem:[%s3 + $0x5c] sm:$0xf]
      %v9686 = vld [vmem:[%s3 + $0x60] sm:$0xf]
      %v9687 = vld [vmem:[%s3 + $0x64] sm:$0xf]
      %v9688 = vld [vmem:[%s3 + $0x68] sm:$0xf]
      %v9689 = vld [vmem:[%s3 + $0x6c] sm:$0xf]
      %v9690 = vld [vmem:[%s3 + $0x70] sm:$0xf]
      %v9691 = vld [vmem:[%s3 + $0x74] sm:$0xf]
      %v9692 = vld [vmem:[%s3 + $0x78] sm:$0xf]
      %v9693 = vld [vmem:[%s3 + $0x7c] sm:$0xf]
      %v9694 = vld [vmem:[%s3 + $0x80] sm:$0xf]
      %v9695 = vld [vmem:[%s3 + $0x84] sm:$0xf]
      %v9696 = vld [vmem:[%s3 + $0x88] sm:$0xf]
      %v9697 = vld [vmem:[%s3 + $0x8c] sm:$0xf]
      %v9698 = vld [vmem:[%s3 + $0x90] sm:$0xf]
      %v9699 = vld [vmem:[%s3 + $0x94] sm:$0xf]
      %v9700 = vld [vmem:[%s3 + $0x98] sm:$0xf]
      %v9701 = vld [vmem:[%s3 + $0x9c] sm:$0xf]
      %v9702 = vld [vmem:[%s3 + $0xa0] sm:$0xf]
      %v9703 = vld [vmem:[%s3 + $0xa4] sm:$0xf]
      %v9704 = vld [vmem:[%s3 + $0xa8] sm:$0xf]
      %v9705 = vld [vmem:[%s3 + $0xac] sm:$0xf]
      %v9706 = vld [vmem:[%s3 + $0xb0] sm:$0xf]
      %v9707 = vld [vmem:[%s3 + $0xb4] sm:$0xf]
      %v9708 = vld [vmem:[%s3 + $0xb8] sm:$0xf]
      %v9709 = vld [vmem:[%s3 + $0xbc] sm:$0xf]
      %v9711 = vrot.slane %v9485, 7
      %v9712 = vsel %vm392, %v9514, %v9711
      %v9713 = vrot.slane %v9486, 7
      %v9714 = vsel %vm392, %v9711, %v9713
      %v9717 = vsel %vm331, %v9505, 0.0
      %v9718 = vsel %vm332, %v9507, 0.0
      %v9719 = vsel %vm333, %v9509, 0.0
      %v9720 = vsel %vm334, %v9511, 0.0
      %v9721 = vsel %vm335, %v9513, 0.0
      %v9722 = vsel %vm336, %v9515, 0.0
      %v9723 = vsel %vm337, %v9712, 0.0
      %v9724 = vsel %vm338, %v9714, 0.0
      %v9725 = vpack.c.bf16 %v9717, %v9717
      %v9726 = vpack.c.bf16 %v9718, %v9718
      %v9727 = vpack.c.bf16 %v9719, %v9719
      %v9728 = vpack.c.bf16 %v9720, %v9720
      %v9729 = vpack.c.bf16 %v9721, %v9721
      %v9730 = vpack.c.bf16 %v9722, %v9722
      %v9731 = vpack.c.bf16 %v9723, %v9723
      %v9732 = vpack.c.bf16 %v9724, %v9724
      %v9733 = vpack.c.bf16 %v9485, %v9485
      %v9734 = vpack.c.bf16 %v9486, %v9486
      %v9736 = vrot.slane %v9486, 1
      %v9737 = vsel %vm443, %v9564, %v9736
      %v9738 = vrot.slane %v9487, 1
      %v9739 = vsel %vm443, %v9736, %v9738
      %v9742 = vsel %vm339, %v9555, 0.0
      %v9743 = vsel %vm340, %v9557, 0.0
      %v9744 = vsel %vm341, %v9559, 0.0
      %v9745 = vsel %vm342, %v9561, 0.0
      %v9746 = vsel %vm343, %v9563, 0.0
      %v9747 = vsel %vm344, %v9565, 0.0
      %v9748 = vsel %vm345, %v9737, 0.0
      %v9749 = vsel %vm346, %v9739, 0.0
      %v9750 = vpack.c.bf16 %v9742, %v9742
      %v9751 = vpack.c.bf16 %v9743, %v9743
      %v9752 = vpack.c.bf16 %v9744, %v9744
      %v9753 = vpack.c.bf16 %v9745, %v9745
      %v9754 = vpack.c.bf16 %v9746, %v9746
      %v9755 = vpack.c.bf16 %v9747, %v9747
      %v9756 = vpack.c.bf16 %v9748, %v9748
      %v9757 = vpack.c.bf16 %v9749, %v9749
      %v9766 = vunpack.c.l.b16 %v9725
      %v9767 = vunpack.c.l.b16 %v9726
      %v9768 = vunpack.c.l.b16 %v9727
      %v9769 = vunpack.c.l.b16 %v9728
      %v9770 = vunpack.c.l.b16 %v9729
      %v9771 = vunpack.c.l.b16 %v9730
      %v9772 = vunpack.c.l.b16 %v9731
      %v9773 = vunpack.c.l.b16 %v9732
      %v9774 = vpack.c.b16 %v9767, %v9766
      %v9775 = vpack.c.b16 %v9769, %v9768
      %v9776 = vpack.c.b16 %v9771, %v9770
      %v9777 = vpack.c.b16 %v9773, %v9772
      %v9784 = vunpack.c.l.b16 %v9733
      %v9785 = vunpack.c.l.b16 %v9734
      %v9786 = vpack.c.b16 %v9785, %v9784
      %v9796 = vunpack.c.l.b16 %v9750
      %v9797 = vunpack.c.l.b16 %v9751
      %v9798 = vunpack.c.l.b16 %v9752
      %v9799 = vunpack.c.l.b16 %v9753
      %v9800 = vunpack.c.l.b16 %v9754
      %v9801 = vunpack.c.l.b16 %v9755
      %v9802 = vunpack.c.l.b16 %v9756
      %v9803 = vunpack.c.l.b16 %v9757
      %v9804 = vpack.c.b16 %v9797, %v9796
      %v9805 = vpack.c.b16 %v9799, %v9798
      %v9806 = vpack.c.b16 %v9801, %v9800
      %v9807 = vpack.c.b16 %v9803, %v9802
      %v9812 = vld [vmem:[%s5868] sm:$0xf]
      %v9813 = vld [vmem:[%s5868 + $0x4] sm:$0xf]
      %v9814 = vld [vmem:[%s5868 + $0x8] sm:$0xf]
      %v9815 = vld [vmem:[%s5868 + $0xc] sm:$0xf]
      %v9816 = vld [vmem:[%s5868 + $0x10] sm:$0xf]
      %v9817 = vld [vmem:[%s5868 + $0x14] sm:$0xf]
      %v9818 = vld [vmem:[%s5868 + $0x18] sm:$0xf]
      %v9819 = vld [vmem:[%s5868 + $0x1c] sm:$0xf]
      %v9820 = vld [vmem:[%s5868 + $0x20] sm:$0xf]
      %v9821 = vld [vmem:[%s5868 + $0x24] sm:$0xf]
      %v9822 = vld [vmem:[%s5868 + $0x28] sm:$0xf]
      %v9823 = vld [vmem:[%s5868 + $0x2c] sm:$0xf]
      %v9824 = vld [vmem:[%s5868 + $0x30] sm:$0xf]
      %v9825 = vld [vmem:[%s5868 + $0x34] sm:$0xf]
      %v9826 = vld [vmem:[%s5868 + $0x38] sm:$0xf]
      %v9827 = vld [vmem:[%s5868 + $0x3c] sm:$0xf]
      %v9828 = vld [vmem:[%s5868 + $0x40] sm:$0xf]
      %v9829 = vld [vmem:[%s5868 + $0x44] sm:$0xf]
      %v9830 = vld [vmem:[%s5868 + $0x48] sm:$0xf]
      %v9831 = vld [vmem:[%s5868 + $0x4c] sm:$0xf]
      %v9832 = vld [vmem:[%s5868 + $0x50] sm:$0xf]
      %v9833 = vld [vmem:[%s5868 + $0x54] sm:$0xf]
      %v9834 = vld [vmem:[%s5868 + $0x58] sm:$0xf]
      %v9835 = vld [vmem:[%s5868 + $0x5c] sm:$0xf]
      %v9836 = vld [vmem:[%s5868 + $0x60] sm:$0xf]
      %v9837 = vld [vmem:[%s5868 + $0x64] sm:$0xf]
      %v9838 = vld [vmem:[%s5868 + $0x68] sm:$0xf]
      %v9839 = vld [vmem:[%s5868 + $0x6c] sm:$0xf]
      %v9840 = vld [vmem:[%s5868 + $0x70] sm:$0xf]
      %v9841 = vld [vmem:[%s5868 + $0x74] sm:$0xf]
      %v9842 = vld [vmem:[%s5868 + $0x78] sm:$0xf]
      %v9843 = vld [vmem:[%s5868 + $0x7c] sm:$0xf]
      %v9844 = vld [vmem:[%s5868 + $0x80] sm:$0xf]
      %v9845 = vld [vmem:[%s5868 + $0x84] sm:$0xf]
      %v9846 = vld [vmem:[%s5868 + $0x88] sm:$0xf]
      %v9847 = vld [vmem:[%s5868 + $0x8c] sm:$0xf]
      %v9848 = vld [vmem:[%s5868 + $0x90] sm:$0xf]
      %v9849 = vld [vmem:[%s5868 + $0x94] sm:$0xf]
      %v9850 = vld [vmem:[%s5868 + $0x98] sm:$0xf]
      %v9851 = vld [vmem:[%s5868 + $0x9c] sm:$0xf]
      %v9852 = vld [vmem:[%s5868 + $0xa0] sm:$0xf]
      %v9853 = vld [vmem:[%s5868 + $0xa4] sm:$0xf]
      %v9854 = vld [vmem:[%s5868 + $0xa8] sm:$0xf]
      %v9855 = vld [vmem:[%s5868 + $0xac] sm:$0xf]
      %v9856 = vld [vmem:[%s5868 + $0xb0] sm:$0xf]
      %v9857 = vld [vmem:[%s5868 + $0xb4] sm:$0xf]
      %v9858 = vld [vmem:[%s5868 + $0xb8] sm:$0xf]
      %v9859 = vld [vmem:[%s5868 + $0xbc] sm:$0xf]
      %v9908 = vunpack.c.l.b16 %v9812
      %v9909 = vunpack.c.l.b16 %v9813
      %v9910 = vunpack.c.l.b16 %v9814
      %v9911 = vunpack.c.l.b16 %v9815
      %v9912 = vunpack.c.l.b16 %v9816
      %v9913 = vunpack.c.l.b16 %v9817
      %v9914 = vunpack.c.l.b16 %v9818
      %v9915 = vunpack.c.l.b16 %v9819
      %v9916 = vunpack.c.l.b16 %v9820
      %v9917 = vunpack.c.l.b16 %v9821
      %v9918 = vunpack.c.l.b16 %v9822
      %v9919 = vunpack.c.l.b16 %v9823
      %v9920 = vunpack.c.l.b16 %v9824
      %v9921 = vunpack.c.l.b16 %v9825
      %v9922 = vunpack.c.l.b16 %v9826
      %v9923 = vunpack.c.l.b16 %v9827
      %v9924 = vunpack.c.l.b16 %v9828
      %v9925 = vunpack.c.l.b16 %v9829
      %v9926 = vunpack.c.l.b16 %v9830
      %v9927 = vunpack.c.l.b16 %v9831
      %v9928 = vunpack.c.l.b16 %v9832
      %v9929 = vunpack.c.l.b16 %v9833
      %v9930 = vunpack.c.l.b16 %v9834
      %v9931 = vunpack.c.l.b16 %v9835
      %v9932 = vunpack.c.l.b16 %v9836
      %v9933 = vunpack.c.l.b16 %v9837
      %v9934 = vunpack.c.l.b16 %v9838
      %v9935 = vunpack.c.l.b16 %v9839
      %v9936 = vunpack.c.l.b16 %v9840
      %v9937 = vunpack.c.l.b16 %v9841
      %v9938 = vunpack.c.l.b16 %v9842
      %v9939 = vunpack.c.l.b16 %v9843
      %v9940 = vunpack.c.l.b16 %v9844
      %v9941 = vunpack.c.l.b16 %v9845
      %v9942 = vunpack.c.l.b16 %v9846
      %v9943 = vunpack.c.l.b16 %v9847
      %v9944 = vunpack.c.l.b16 %v9848
      %v9945 = vunpack.c.l.b16 %v9849
      %v9946 = vunpack.c.l.b16 %v9850
      %v9947 = vunpack.c.l.b16 %v9851
      %v9948 = vunpack.c.l.b16 %v9852
      %v9949 = vunpack.c.l.b16 %v9853
      %v9950 = vunpack.c.l.b16 %v9854
      %v9951 = vunpack.c.l.b16 %v9855
      %v9952 = vunpack.c.l.b16 %v9856
      %v9953 = vunpack.c.l.b16 %v9857
      %v9954 = vunpack.c.l.b16 %v9858
      %v9955 = vunpack.c.l.b16 %v9859
      %v9956 = vpack.c.b16 %v9909, %v9908
      %v9957 = vpack.c.b16 %v9911, %v9910
      %v9958 = vpack.c.b16 %v9913, %v9912
      %v9959 = vpack.c.b16 %v9915, %v9914
      %v9960 = vpack.c.b16 %v9917, %v9916
      %v9961 = vpack.c.b16 %v9919, %v9918
      %v9962 = vpack.c.b16 %v9921, %v9920
      %v9963 = vpack.c.b16 %v9923, %v9922
      %v9964 = vpack.c.b16 %v9925, %v9924
      %v9965 = vpack.c.b16 %v9927, %v9926
      %v9966 = vpack.c.b16 %v9929, %v9928
      %v9967 = vpack.c.b16 %v9931, %v9930
      %v9968 = vpack.c.b16 %v9933, %v9932
      %v9969 = vpack.c.b16 %v9935, %v9934
      %v9970 = vpack.c.b16 %v9937, %v9936
      %v9971 = vpack.c.b16 %v9939, %v9938
      %v9972 = vpack.c.b16 %v9941, %v9940
      %v9973 = vpack.c.b16 %v9943, %v9942
      %v9974 = vpack.c.b16 %v9945, %v9944
      %v9975 = vpack.c.b16 %v9947, %v9946
      %v9976 = vpack.c.b16 %v9949, %v9948
      %v9977 = vpack.c.b16 %v9951, %v9950
      %v9978 = vpack.c.b16 %v9953, %v9952
      %v9979 = vpack.c.b16 %v9955, %v9954
      %10004 = vmatpush.bf16.msra.mxu0 %v9963
      %10005 = vmatpush.bf16.msra.mxu0 %v9962
      %10006 = vmatpush.bf16.msra.mxu0 %v9961
      %10007 = vmatpush.bf16.msra.mxu0 %v9960
      %10008 = vmatpush.bf16.msra.mxu0 %v9959
      %10009 = vmatpush.bf16.msra.mxu0 %v9958
      %10010 = vmatpush.bf16.msra.mxu0 %v9957
      %10011 = vmatpush.bf16.msra.mxu0 %v9956
      %10012 = vmatmul.bf16.gmra.mxu0 %v9774
      %v10013 = vpop.f32.mrf.mxu0
      %v10014 = vadd.f32 0.0, %v10013
      %v10015 = vpop.f32.mrf.mxu0
      %v10016 = vadd.f32 0.0, %v10015
      %10017 = vmatmul.bf16.gmra.mxu0 %v9775
      %v10018 = vpop.f32.mrf.mxu0
      %v10019 = vadd.f32 0.0, %v10018
      %v10020 = vpop.f32.mrf.mxu0
      %v10021 = vadd.f32 0.0, %v10020
      %10022 = vmatmul.bf16.gmra.mxu0 %v9776
      %v10023 = vpop.f32.mrf.mxu0
      %v10024 = vadd.f32 0.0, %v10023
      %v10025 = vpop.f32.mrf.mxu0
      %v10026 = vadd.f32 0.0, %v10025
      %10027 = vmatmul.bf16.gmra.mxu0 %v9777
      %v10028 = vpop.f32.mrf.mxu0
      %v10029 = vadd.f32 0.0, %v10028
      %v10030 = vpop.f32.mrf.mxu0
      %v10031 = vadd.f32 0.0, %v10030
      %10032 = vdwg.mxu0
      %10033 = vmatpush.bf16.msra.mxu0 %v9971
      %10034 = vmatpush.bf16.msra.mxu0 %v9970
      %10035 = vmatpush.bf16.msra.mxu0 %v9969
      %10036 = vmatpush.bf16.msra.mxu0 %v9968
      %10037 = vmatpush.bf16.msra.mxu0 %v9967
      %10038 = vmatpush.bf16.msra.mxu0 %v9966
      %10039 = vmatpush.bf16.msra.mxu0 %v9965
      %10040 = vmatpush.bf16.msra.mxu0 %v9964
      %10041 = vmatmul.bf16.gmra.mxu0 %v9631
      %v10042 = vpop.f32.mrf.mxu0
      %v10043 = vadd.f32 %v10014, %v10042
      %v10044 = vpop.f32.mrf.mxu0
      %v10045 = vadd.f32 %v10016, %v10044
      %10046 = vmatmul.bf16.gmra.mxu0 %v9632
      %v10047 = vpop.f32.mrf.mxu0
      %v10048 = vadd.f32 %v10019, %v10047
      %v10049 = vpop.f32.mrf.mxu0
      %v10050 = vadd.f32 %v10021, %v10049
      %10051 = vmatmul.bf16.gmra.mxu0 %v9633
      %v10052 = vpop.f32.mrf.mxu0
      %v10053 = vadd.f32 %v10024, %v10052
      %v10054 = vpop.f32.mrf.mxu0
      %v10055 = vadd.f32 %v10026, %v10054
      %10056 = vmatmul.bf16.gmra.mxu0 %v9786
      %v10057 = vpop.f32.mrf.mxu0
      %v10058 = vadd.f32 %v10029, %v10057
      %v10059 = vpop.f32.mrf.mxu0
      %v10060 = vadd.f32 %v10031, %v10059
      %10061 = vdwg.mxu0
      %10062 = vmatpush.bf16.msra.mxu0 %v9979
      %10063 = vmatpush.bf16.msra.mxu0 %v9978
      %10064 = vmatpush.bf16.msra.mxu0 %v9977
      %10065 = vmatpush.bf16.msra.mxu0 %v9976
      %10066 = vmatpush.bf16.msra.mxu0 %v9975
      %10067 = vmatpush.bf16.msra.mxu0 %v9974
      %10068 = vmatpush.bf16.msra.mxu0 %v9973
      %10069 = vmatpush.bf16.msra.mxu0 %v9972
      %10070 = vmatmul.bf16.gmra.mxu0 %v9804
      %v10071 = vpop.f32.mrf.mxu0
      %v10072 = vadd.f32 %v10043, %v10071
      %v10073 = vpop.f32.mrf.mxu0
      %v10074 = vadd.f32 %v10045, %v10073
      %10075 = vmatmul.bf16.gmra.mxu0 %v9805
      %v10076 = vpop.f32.mrf.mxu0
      %v10077 = vadd.f32 %v10048, %v10076
      %v10078 = vpop.f32.mrf.mxu0
      %v10079 = vadd.f32 %v10050, %v10078
      %10080 = vmatmul.bf16.gmra.mxu0 %v9806
      %v10081 = vpop.f32.mrf.mxu0
      %v10082 = vadd.f32 %v10053, %v10081
      %v10083 = vpop.f32.mrf.mxu0
      %v10084 = vadd.f32 %v10055, %v10083
      %10085 = vmatmul.bf16.gmra.mxu0 %v9807
      %v10086 = vpop.f32.mrf.mxu0
      %v10087 = vadd.f32 %v10058, %v10086
      %v10088 = vpop.f32.mrf.mxu0
      %v10089 = vadd.f32 %v10060, %v10088
      %10090 = vdwg.mxu0
      %v10139 = vunpack.c.l.b16 %v9662
      %v10140 = vunpack.c.l.b16 %v9663
      %v10141 = vunpack.c.l.b16 %v9664
      %v10142 = vunpack.c.l.b16 %v9665
      %v10143 = vunpack.c.l.b16 %v9666
      %v10144 = vunpack.c.l.b16 %v9667
      %v10145 = vunpack.c.l.b16 %v9668
      %v10146 = vunpack.c.l.b16 %v9669
      %v10147 = vunpack.c.l.b16 %v9670
      %v10148 = vunpack.c.l.b16 %v9671
      %v10149 = vunpack.c.l.b16 %v9672
      %v10150 = vunpack.c.l.b16 %v9673
      %v10151 = vunpack.c.l.b16 %v9674
      %v10152 = vunpack.c.l.b16 %v9675
      %v10153 = vunpack.c.l.b16 %v9676
      %v10154 = vunpack.c.l.b16 %v9677
      %v10155 = vunpack.c.l.b16 %v9678
      %v10156 = vunpack.c.l.b16 %v9679
      %v10157 = vunpack.c.l.b16 %v9680
      %v10158 = vunpack.c.l.b16 %v9681
      %v10159 = vunpack.c.l.b16 %v9682
      %v10160 = vunpack.c.l.b16 %v9683
      %v10161 = vunpack.c.l.b16 %v9684
      %v10162 = vunpack.c.l.b16 %v9685
      %v10163 = vunpack.c.l.b16 %v9686
      %v10164 = vunpack.c.l.b16 %v9687
      %v10165 = vunpack.c.l.b16 %v9688
      %v10166 = vunpack.c.l.b16 %v9689
      %v10167 = vunpack.c.l.b16 %v9690
      %v10168 = vunpack.c.l.b16 %v9691
      %v10169 = vunpack.c.l.b16 %v9692
      %v10170 = vunpack.c.l.b16 %v9693
      %v10171 = vunpack.c.l.b16 %v9694
      %v10172 = vunpack.c.l.b16 %v9695
      %v10173 = vunpack.c.l.b16 %v9696
      %v10174 = vunpack.c.l.b16 %v9697
      %v10175 = vunpack.c.l.b16 %v9698
      %v10176 = vunpack.c.l.b16 %v9699
      %v10177 = vunpack.c.l.b16 %v9700
      %v10178 = vunpack.c.l.b16 %v9701
      %v10179 = vunpack.c.l.b16 %v9702
      %v10180 = vunpack.c.l.b16 %v9703
      %v10181 = vunpack.c.l.b16 %v9704
      %v10182 = vunpack.c.l.b16 %v9705
      %v10183 = vunpack.c.l.b16 %v9706
      %v10184 = vunpack.c.l.b16 %v9707
      %v10185 = vunpack.c.l.b16 %v9708
      %v10186 = vunpack.c.l.b16 %v9709
      %v10187 = vpack.c.b16 %v10140, %v10139
      %v10188 = vpack.c.b16 %v10142, %v10141
      %v10189 = vpack.c.b16 %v10144, %v10143
      %v10190 = vpack.c.b16 %v10146, %v10145
      %v10191 = vpack.c.b16 %v10148, %v10147
      %v10192 = vpack.c.b16 %v10150, %v10149
      %v10193 = vpack.c.b16 %v10152, %v10151
      %v10194 = vpack.c.b16 %v10154, %v10153
      %v10195 = vpack.c.b16 %v10156, %v10155
      %v10196 = vpack.c.b16 %v10158, %v10157
      %v10197 = vpack.c.b16 %v10160, %v10159
      %v10198 = vpack.c.b16 %v10162, %v10161
      %v10199 = vpack.c.b16 %v10164, %v10163
      %v10200 = vpack.c.b16 %v10166, %v10165
      %v10201 = vpack.c.b16 %v10168, %v10167
      %v10202 = vpack.c.b16 %v10170, %v10169
      %v10203 = vpack.c.b16 %v10172, %v10171
      %v10204 = vpack.c.b16 %v10174, %v10173
      %v10205 = vpack.c.b16 %v10176, %v10175
      %v10206 = vpack.c.b16 %v10178, %v10177
      %v10207 = vpack.c.b16 %v10180, %v10179
      %v10208 = vpack.c.b16 %v10182, %v10181
      %v10209 = vpack.c.b16 %v10184, %v10183
      %v10210 = vpack.c.b16 %v10186, %v10185
      %10235 = vmatpush.bf16.msra.mxu0 %v10194
      %10236 = vmatpush.bf16.msra.mxu0 %v10193
      %10237 = vmatpush.bf16.msra.mxu0 %v10192
      %10238 = vmatpush.bf16.msra.mxu0 %v10191
      %10239 = vmatpush.bf16.msra.mxu0 %v10190
      %10240 = vmatpush.bf16.msra.mxu0 %v10189
      %10241 = vmatpush.bf16.msra.mxu0 %v10188
      %10242 = vmatpush.bf16.msra.mxu0 %v10187
      %10243 = vmatmul.bf16.gmra.mxu0 %v9606
      %v10244 = vpop.f32.mrf.mxu0
      %v10245 = vadd.f32 %v10072, %v10244
      %v10246 = vpop.f32.mrf.mxu0
      %v10247 = vadd.f32 %v10074, %v10246
      %10248 = vmatmul.bf16.gmra.mxu0 %v9607
      %v10249 = vpop.f32.mrf.mxu0
      %v10250 = vadd.f32 %v10077, %v10249
      %v10251 = vpop.f32.mrf.mxu0
      %v10252 = vadd.f32 %v10079, %v10251
      %10253 = vmatmul.bf16.gmra.mxu0 %v9608
      %v10254 = vpop.f32.mrf.mxu0
      %v10255 = vadd.f32 %v10082, %v10254
      %v10256 = vpop.f32.mrf.mxu0
      %v10257 = vadd.f32 %v10084, %v10256
      %10258 = vmatmul.bf16.gmra.mxu0 %v9609
      %v10259 = vpop.f32.mrf.mxu0
      %v10260 = vadd.f32 %v10087, %v10259
      %v10261 = vpop.f32.mrf.mxu0
      %v10262 = vadd.f32 %v10089, %v10261
      %10263 = vdwg.mxu0
      %10264 = vmatpush.bf16.msra.mxu0 %v10202
      %10265 = vmatpush.bf16.msra.mxu0 %v10201
      %10266 = vmatpush.bf16.msra.mxu0 %v10200
      %10267 = vmatpush.bf16.msra.mxu0 %v10199
      %10268 = vmatpush.bf16.msra.mxu0 %v10198
      %10269 = vmatpush.bf16.msra.mxu0 %v10197
      %10270 = vmatpush.bf16.msra.mxu0 %v10196
      %10271 = vmatpush.bf16.msra.mxu0 %v10195
      %10272 = vmatmul.bf16.gmra.mxu0 %v9630
      %v10273 = vpop.f32.mrf.mxu0
      %v10274 = vadd.f32 %v10245, %v10273
      %v10275 = vpop.f32.mrf.mxu0
      %v10276 = vadd.f32 %v10247, %v10275
      %10277 = vmatmul.bf16.gmra.mxu0 %v9631
      %v10278 = vpop.f32.mrf.mxu0
      %v10279 = vadd.f32 %v10250, %v10278
      %v10280 = vpop.f32.mrf.mxu0
      %v10281 = vadd.f32 %v10252, %v10280
      %10282 = vmatmul.bf16.gmra.mxu0 %v9632
      %v10283 = vpop.f32.mrf.mxu0
      %v10284 = vadd.f32 %v10255, %v10283
      %v10285 = vpop.f32.mrf.mxu0
      %v10286 = vadd.f32 %v10257, %v10285
      %10287 = vmatmul.bf16.gmra.mxu0 %v9633
      %v10288 = vpop.f32.mrf.mxu0
      %v10289 = vadd.f32 %v10260, %v10288
      %v10290 = vpop.f32.mrf.mxu0
      %v10291 = vadd.f32 %v10262, %v10290
      %10292 = vdwg.mxu0
      %10293 = vmatpush.bf16.msra.mxu0 %v10210
      %10294 = vmatpush.bf16.msra.mxu0 %v10209
      %10295 = vmatpush.bf16.msra.mxu0 %v10208
      %10296 = vmatpush.bf16.msra.mxu0 %v10207
      %10297 = vmatpush.bf16.msra.mxu0 %v10206
      %10298 = vmatpush.bf16.msra.mxu0 %v10205
      %10299 = vmatpush.bf16.msra.mxu0 %v10204
      %10300 = vmatpush.bf16.msra.mxu0 %v10203
      %10301 = vmatmul.bf16.gmra.mxu0 %v9654
      %v10302 = vpop.f32.mrf.mxu0
      %v10303 = vadd.f32 %v10274, %v10302
      %v10304 = vpop.f32.mrf.mxu0
      %v10305 = vadd.f32 %v10276, %v10304
      %10306 = vmatmul.bf16.gmra.mxu0 %v9655
      %v10307 = vpop.f32.mrf.mxu0
      %v10308 = vadd.f32 %v10279, %v10307
      %v10309 = vpop.f32.mrf.mxu0
      %v10310 = vadd.f32 %v10281, %v10309
      %10311 = vmatmul.bf16.gmra.mxu0 %v9656
      %v10312 = vpop.f32.mrf.mxu0
      %v10313 = vadd.f32 %v10284, %v10312
      %v10314 = vpop.f32.mrf.mxu0
      %v10315 = vadd.f32 %v10286, %v10314
      %10316 = vmatmul.bf16.gmra.mxu0 %v9657
      %v10317 = vpop.f32.mrf.mxu0
      %v10318 = vadd.f32 %v10289, %v10317
      %v10319 = vpop.f32.mrf.mxu0
      %v10320 = vadd.f32 %v10291, %v10319
      %10321 = vdwg.mxu0
      %v10323 = vrot.slane %v9487, 7
      %v10324 = vsel %vm392, %v9713, %v10323
      %v10325 = vrot.slane %v9488, 7
      %v10326 = vsel %vm392, %v10323, %v10325
      %v10329 = vsel %vm331, %v9509, 0.0
      %v10330 = vsel %vm332, %v9511, 0.0
      %v10331 = vsel %vm333, %v9513, 0.0
      %v10332 = vsel %vm334, %v9515, 0.0
      %v10333 = vsel %vm335, %v9712, 0.0
      %v10334 = vsel %vm336, %v9714, 0.0
      %v10335 = vsel %vm337, %v10324, 0.0
      %v10336 = vsel %vm338, %v10326, 0.0
      %v10337 = vpack.c.bf16 %v10329, %v10329
      %v10338 = vpack.c.bf16 %v10330, %v10330
      %v10339 = vpack.c.bf16 %v10331, %v10331
      %v10340 = vpack.c.bf16 %v10332, %v10332
      %v10341 = vpack.c.bf16 %v10333, %v10333
      %v10342 = vpack.c.bf16 %v10334, %v10334
      %v10343 = vpack.c.bf16 %v10335, %v10335
      %v10344 = vpack.c.bf16 %v10336, %v10336
      %v10345 = vpack.c.bf16 %v9487, %v9487
      %v10346 = vpack.c.bf16 %v9488, %v9488
      %v10348 = vrot.slane %v9488, 1
      %v10349 = vsel %vm443, %v9738, %v10348
      %v10350 = vrot.slane %v9489, 1
      %v10351 = vsel %vm443, %v10348, %v10350
      %v10354 = vsel %vm339, %v9559, 0.0
      %v10355 = vsel %vm340, %v9561, 0.0
      %v10356 = vsel %vm341, %v9563, 0.0
      %v10357 = vsel %vm342, %v9565, 0.0
      %v10358 = vsel %vm343, %v9737, 0.0
      %v10359 = vsel %vm344, %v9739, 0.0
      %v10360 = vsel %vm345, %v10349, 0.0
      %v10361 = vsel %vm346, %v10351, 0.0
      %v10362 = vpack.c.bf16 %v10354, %v10354
      %v10363 = vpack.c.bf16 %v10355, %v10355
      %v10364 = vpack.c.bf16 %v10356, %v10356
      %v10365 = vpack.c.bf16 %v10357, %v10357
      %v10366 = vpack.c.bf16 %v10358, %v10358
      %v10367 = vpack.c.bf16 %v10359, %v10359
      %v10368 = vpack.c.bf16 %v10360, %v10360
      %v10369 = vpack.c.bf16 %v10361, %v10361
      %v10378 = vunpack.c.l.b16 %v10337
      %v10379 = vunpack.c.l.b16 %v10338
      %v10380 = vunpack.c.l.b16 %v10339
      %v10381 = vunpack.c.l.b16 %v10340
      %v10382 = vunpack.c.l.b16 %v10341
      %v10383 = vunpack.c.l.b16 %v10342
      %v10384 = vunpack.c.l.b16 %v10343
      %v10385 = vunpack.c.l.b16 %v10344
      %v10386 = vpack.c.b16 %v10379, %v10378
      %v10387 = vpack.c.b16 %v10381, %v10380
      %v10388 = vpack.c.b16 %v10383, %v10382
      %v10389 = vpack.c.b16 %v10385, %v10384
      %v10396 = vunpack.c.l.b16 %v10345
      %v10397 = vunpack.c.l.b16 %v10346
      %v10398 = vpack.c.b16 %v10397, %v10396
      %v10408 = vunpack.c.l.b16 %v10362
      %v10409 = vunpack.c.l.b16 %v10363
      %v10410 = vunpack.c.l.b16 %v10364
      %v10411 = vunpack.c.l.b16 %v10365
      %v10412 = vunpack.c.l.b16 %v10366
      %v10413 = vunpack.c.l.b16 %v10367
      %v10414 = vunpack.c.l.b16 %v10368
      %v10415 = vunpack.c.l.b16 %v10369
      %v10416 = vpack.c.b16 %v10409, %v10408
      %v10417 = vpack.c.b16 %v10411, %v10410
      %v10418 = vpack.c.b16 %v10413, %v10412
      %v10419 = vpack.c.b16 %v10415, %v10414
      %v10424 = vld [vmem:[%s6481] sm:$0xf]
      %v10425 = vld [vmem:[%s6481 + $0x4] sm:$0xf]
      %v10426 = vld [vmem:[%s6481 + $0x8] sm:$0xf]
      %v10427 = vld [vmem:[%s6481 + $0xc] sm:$0xf]
      %v10428 = vld [vmem:[%s6481 + $0x10] sm:$0xf]
      %v10429 = vld [vmem:[%s6481 + $0x14] sm:$0xf]
      %v10430 = vld [vmem:[%s6481 + $0x18] sm:$0xf]
      %v10431 = vld [vmem:[%s6481 + $0x1c] sm:$0xf]
      %v10432 = vld [vmem:[%s6481 + $0x20] sm:$0xf]
      %v10433 = vld [vmem:[%s6481 + $0x24] sm:$0xf]
      %v10434 = vld [vmem:[%s6481 + $0x28] sm:$0xf]
      %v10435 = vld [vmem:[%s6481 + $0x2c] sm:$0xf]
      %v10436 = vld [vmem:[%s6481 + $0x30] sm:$0xf]
      %v10437 = vld [vmem:[%s6481 + $0x34] sm:$0xf]
      %v10438 = vld [vmem:[%s6481 + $0x38] sm:$0xf]
      %v10439 = vld [vmem:[%s6481 + $0x3c] sm:$0xf]
      %v10440 = vld [vmem:[%s6481 + $0x40] sm:$0xf]
      %v10441 = vld [vmem:[%s6481 + $0x44] sm:$0xf]
      %v10442 = vld [vmem:[%s6481 + $0x48] sm:$0xf]
      %v10443 = vld [vmem:[%s6481 + $0x4c] sm:$0xf]
      %v10444 = vld [vmem:[%s6481 + $0x50] sm:$0xf]
      %v10445 = vld [vmem:[%s6481 + $0x54] sm:$0xf]
      %v10446 = vld [vmem:[%s6481 + $0x58] sm:$0xf]
      %v10447 = vld [vmem:[%s6481 + $0x5c] sm:$0xf]
      %v10448 = vld [vmem:[%s6481 + $0x60] sm:$0xf]
      %v10449 = vld [vmem:[%s6481 + $0x64] sm:$0xf]
      %v10450 = vld [vmem:[%s6481 + $0x68] sm:$0xf]
      %v10451 = vld [vmem:[%s6481 + $0x6c] sm:$0xf]
      %v10452 = vld [vmem:[%s6481 + $0x70] sm:$0xf]
      %v10453 = vld [vmem:[%s6481 + $0x74] sm:$0xf]
      %v10454 = vld [vmem:[%s6481 + $0x78] sm:$0xf]
      %v10455 = vld [vmem:[%s6481 + $0x7c] sm:$0xf]
      %v10456 = vld [vmem:[%s6481 + $0x80] sm:$0xf]
      %v10457 = vld [vmem:[%s6481 + $0x84] sm:$0xf]
      %v10458 = vld [vmem:[%s6481 + $0x88] sm:$0xf]
      %v10459 = vld [vmem:[%s6481 + $0x8c] sm:$0xf]
      %v10460 = vld [vmem:[%s6481 + $0x90] sm:$0xf]
      %v10461 = vld [vmem:[%s6481 + $0x94] sm:$0xf]
      %v10462 = vld [vmem:[%s6481 + $0x98] sm:$0xf]
      %v10463 = vld [vmem:[%s6481 + $0x9c] sm:$0xf]
      %v10464 = vld [vmem:[%s6481 + $0xa0] sm:$0xf]
      %v10465 = vld [vmem:[%s6481 + $0xa4] sm:$0xf]
      %v10466 = vld [vmem:[%s6481 + $0xa8] sm:$0xf]
      %v10467 = vld [vmem:[%s6481 + $0xac] sm:$0xf]
      %v10468 = vld [vmem:[%s6481 + $0xb0] sm:$0xf]
      %v10469 = vld [vmem:[%s6481 + $0xb4] sm:$0xf]
      %v10470 = vld [vmem:[%s6481 + $0xb8] sm:$0xf]
      %v10471 = vld [vmem:[%s6481 + $0xbc] sm:$0xf]
      %v10520 = vunpack.c.l.b16 %v10424
      %v10521 = vunpack.c.l.b16 %v10425
      %v10522 = vunpack.c.l.b16 %v10426
      %v10523 = vunpack.c.l.b16 %v10427
      %v10524 = vunpack.c.l.b16 %v10428
      %v10525 = vunpack.c.l.b16 %v10429
      %v10526 = vunpack.c.l.b16 %v10430
      %v10527 = vunpack.c.l.b16 %v10431
      %v10528 = vunpack.c.l.b16 %v10432
      %v10529 = vunpack.c.l.b16 %v10433
      %v10530 = vunpack.c.l.b16 %v10434
      %v10531 = vunpack.c.l.b16 %v10435
      %v10532 = vunpack.c.l.b16 %v10436
      %v10533 = vunpack.c.l.b16 %v10437
      %v10534 = vunpack.c.l.b16 %v10438
      %v10535 = vunpack.c.l.b16 %v10439
      %v10536 = vunpack.c.l.b16 %v10440
      %v10537 = vunpack.c.l.b16 %v10441
      %v10538 = vunpack.c.l.b16 %v10442
      %v10539 = vunpack.c.l.b16 %v10443
      %v10540 = vunpack.c.l.b16 %v10444
      %v10541 = vunpack.c.l.b16 %v10445
      %v10542 = vunpack.c.l.b16 %v10446
      %v10543 = vunpack.c.l.b16 %v10447
      %v10544 = vunpack.c.l.b16 %v10448
      %v10545 = vunpack.c.l.b16 %v10449
      %v10546 = vunpack.c.l.b16 %v10450
      %v10547 = vunpack.c.l.b16 %v10451
      %v10548 = vunpack.c.l.b16 %v10452
      %v10549 = vunpack.c.l.b16 %v10453
      %v10550 = vunpack.c.l.b16 %v10454
      %v10551 = vunpack.c.l.b16 %v10455
      %v10552 = vunpack.c.l.b16 %v10456
      %v10553 = vunpack.c.l.b16 %v10457
      %v10554 = vunpack.c.l.b16 %v10458
      %v10555 = vunpack.c.l.b16 %v10459
      %v10556 = vunpack.c.l.b16 %v10460
      %v10557 = vunpack.c.l.b16 %v10461
      %v10558 = vunpack.c.l.b16 %v10462
      %v10559 = vunpack.c.l.b16 %v10463
      %v10560 = vunpack.c.l.b16 %v10464
      %v10561 = vunpack.c.l.b16 %v10465
      %v10562 = vunpack.c.l.b16 %v10466
      %v10563 = vunpack.c.l.b16 %v10467
      %v10564 = vunpack.c.l.b16 %v10468
      %v10565 = vunpack.c.l.b16 %v10469
      %v10566 = vunpack.c.l.b16 %v10470
      %v10567 = vunpack.c.l.b16 %v10471
      %v10568 = vpack.c.b16 %v10521, %v10520
      %v10569 = vpack.c.b16 %v10523, %v10522
      %v10570 = vpack.c.b16 %v10525, %v10524
      %v10571 = vpack.c.b16 %v10527, %v10526
      %v10572 = vpack.c.b16 %v10529, %v10528
      %v10573 = vpack.c.b16 %v10531, %v10530
      %v10574 = vpack.c.b16 %v10533, %v10532
      %v10575 = vpack.c.b16 %v10535, %v10534
      %v10576 = vpack.c.b16 %v10537, %v10536
      %v10577 = vpack.c.b16 %v10539, %v10538
      %v10578 = vpack.c.b16 %v10541, %v10540
      %v10579 = vpack.c.b16 %v10543, %v10542
      %v10580 = vpack.c.b16 %v10545, %v10544
      %v10581 = vpack.c.b16 %v10547, %v10546
      %v10582 = vpack.c.b16 %v10549, %v10548
      %v10583 = vpack.c.b16 %v10551, %v10550
      %v10584 = vpack.c.b16 %v10553, %v10552
      %v10585 = vpack.c.b16 %v10555, %v10554
      %v10586 = vpack.c.b16 %v10557, %v10556
      %v10587 = vpack.c.b16 %v10559, %v10558
      %v10588 = vpack.c.b16 %v10561, %v10560
      %v10589 = vpack.c.b16 %v10563, %v10562
      %v10590 = vpack.c.b16 %v10565, %v10564
      %v10591 = vpack.c.b16 %v10567, %v10566
      %10616 = vmatpush.bf16.msra.mxu0 %v10575
      %10617 = vmatpush.bf16.msra.mxu0 %v10574
      %10618 = vmatpush.bf16.msra.mxu0 %v10573
      %10619 = vmatpush.bf16.msra.mxu0 %v10572
      %10620 = vmatpush.bf16.msra.mxu0 %v10571
      %10621 = vmatpush.bf16.msra.mxu0 %v10570
      %10622 = vmatpush.bf16.msra.mxu0 %v10569
      %10623 = vmatpush.bf16.msra.mxu0 %v10568
      %10624 = vmatmul.bf16.gmra.mxu0 %v10386
      %v10625 = vpop.f32.mrf.mxu0
      %v10626 = vadd.f32 0.0, %v10625
      %v10627 = vpop.f32.mrf.mxu0
      %v10628 = vadd.f32 0.0, %v10627
      %10629 = vmatmul.bf16.gmra.mxu0 %v10387
      %v10630 = vpop.f32.mrf.mxu0
      %v10631 = vadd.f32 0.0, %v10630
      %v10632 = vpop.f32.mrf.mxu0
      %v10633 = vadd.f32 0.0, %v10632
      %10634 = vmatmul.bf16.gmra.mxu0 %v10388
      %v10635 = vpop.f32.mrf.mxu0
      %v10636 = vadd.f32 0.0, %v10635
      %v10637 = vpop.f32.mrf.mxu0
      %v10638 = vadd.f32 0.0, %v10637
      %10639 = vmatmul.bf16.gmra.mxu0 %v10389
      %v10640 = vpop.f32.mrf.mxu0
      %v10641 = vadd.f32 0.0, %v10640
      %v10642 = vpop.f32.mrf.mxu0
      %v10643 = vadd.f32 0.0, %v10642
      %10644 = vdwg.mxu0
      %10645 = vmatpush.bf16.msra.mxu0 %v10583
      %10646 = vmatpush.bf16.msra.mxu0 %v10582
      %10647 = vmatpush.bf16.msra.mxu0 %v10581
      %10648 = vmatpush.bf16.msra.mxu0 %v10580
      %10649 = vmatpush.bf16.msra.mxu0 %v10579
      %10650 = vmatpush.bf16.msra.mxu0 %v10578
      %10651 = vmatpush.bf16.msra.mxu0 %v10577
      %10652 = vmatpush.bf16.msra.mxu0 %v10576
      %10653 = vmatmul.bf16.gmra.mxu0 %v9632
      %v10654 = vpop.f32.mrf.mxu0
      %v10655 = vadd.f32 %v10626, %v10654
      %v10656 = vpop.f32.mrf.mxu0
      %v10657 = vadd.f32 %v10628, %v10656
      %10658 = vmatmul.bf16.gmra.mxu0 %v9633
      %v10659 = vpop.f32.mrf.mxu0
      %v10660 = vadd.f32 %v10631, %v10659
      %v10661 = vpop.f32.mrf.mxu0
      %v10662 = vadd.f32 %v10633, %v10661
      %10663 = vmatmul.bf16.gmra.mxu0 %v9786
      %v10664 = vpop.f32.mrf.mxu0
      %v10665 = vadd.f32 %v10636, %v10664
      %v10666 = vpop.f32.mrf.mxu0
      %v10667 = vadd.f32 %v10638, %v10666
      %10668 = vmatmul.bf16.gmra.mxu0 %v10398
      %v10669 = vpop.f32.mrf.mxu0
      %v10670 = vadd.f32 %v10641, %v10669
      %v10671 = vpop.f32.mrf.mxu0
      %v10672 = vadd.f32 %v10643, %v10671
      %10673 = vdwg.mxu0
      %10674 = vmatpush.bf16.msra.mxu0 %v10591
      %10675 = vmatpush.bf16.msra.mxu0 %v10590
      %10676 = vmatpush.bf16.msra.mxu0 %v10589
      %10677 = vmatpush.bf16.msra.mxu0 %v10588
      %10678 = vmatpush.bf16.msra.mxu0 %v10587
      %10679 = vmatpush.bf16.msra.mxu0 %v10586
      %10680 = vmatpush.bf16.msra.mxu0 %v10585
      %10681 = vmatpush.bf16.msra.mxu0 %v10584
      %10682 = vmatmul.bf16.gmra.mxu0 %v10416
      %v10683 = vpop.f32.mrf.mxu0
      %v10684 = vadd.f32 %v10655, %v10683
      %v10685 = vpop.f32.mrf.mxu0
      %v10686 = vadd.f32 %v10657, %v10685
      %10687 = vmatmul.bf16.gmra.mxu0 %v10417
      %v10688 = vpop.f32.mrf.mxu0
      %v10689 = vadd.f32 %v10660, %v10688
      %v10690 = vpop.f32.mrf.mxu0
      %v10691 = vadd.f32 %v10662, %v10690
      %10692 = vmatmul.bf16.gmra.mxu0 %v10418
      %v10693 = vpop.f32.mrf.mxu0
      %v10694 = vadd.f32 %v10665, %v10693
      %v10695 = vpop.f32.mrf.mxu0
      %v10696 = vadd.f32 %v10667, %v10695
      %10697 = vmatmul.bf16.gmra.mxu0 %v10419
      %v10698 = vpop.f32.mrf.mxu0
      %v10699 = vadd.f32 %v10670, %v10698
      %v10700 = vpop.f32.mrf.mxu0
      %v10701 = vadd.f32 %v10672, %v10700
      %10702 = vdwg.mxu0
      %v10703 = vadd.f32 %v10303, %v10684
      %v10704 = vadd.f32 %v10305, %v10686
      %v10705 = vadd.f32 %v10308, %v10689
      %v10706 = vadd.f32 %v10310, %v10691
      %v10707 = vadd.f32 %v10313, %v10694
      %v10708 = vadd.f32 %v10315, %v10696
      %v10709 = vadd.f32 %v10318, %v10699
      %v10710 = vadd.f32 %v10320, %v10701
      %v10711 = vld [vmem:[%s219 + $0x6c] sm:$0xf]
      %v10712 = vld [vmem:[%s219 + $0x70] sm:$0xf]
      %v10713 = vld [vmem:[%s219 + $0x74] sm:$0xf]
      %v10714 = vld [vmem:[%s219 + $0x78] sm:$0xf]
      %v10715 = vld [vmem:[%s219 + $0x7c] sm:$0xf]
      %v10716 = vld [vmem:[%s219 + $0x80] sm:$0xf]
      %v10717 = vld [vmem:[%s219 + $0x84] sm:$0xf]
      %v10718 = vld [vmem:[%s219 + $0x88] sm:$0xf]
      %v10719 = vunpack.c.l.bf16 %v10711
      %v10720 = vunpack.c.l.bf16 %v10712
      %v10721 = vunpack.c.l.bf16 %v10713
      %v10722 = vunpack.c.l.bf16 %v10714
      %v10723 = vunpack.c.l.bf16 %v10715
      %v10724 = vunpack.c.l.bf16 %v10716
      %v10725 = vunpack.c.l.bf16 %v10717
      %v10726 = vunpack.c.l.bf16 %v10718
      %v10727 = vadd.f32 %v10703, %v6786
      %v10728 = vadd.f32 %v10704, %v6786
      %v10729 = vadd.f32 %v10705, %v6786
      %v10730 = vadd.f32 %v10706, %v6786
      %v10731 = vadd.f32 %v10707, %v6786
      %v10732 = vadd.f32 %v10708, %v6786
      %v10733 = vadd.f32 %v10709, %v6786
      %v10734 = vadd.f32 %v10710, %v6786
      %v10735 = vadd.f32 %v10727, %v10719
      %v10736 = vadd.f32 %v10728, %v10720
      %v10737 = vadd.f32 %v10729, %v10721
      %v10738 = vadd.f32 %v10730, %v10722
      %v10739 = vadd.f32 %v10731, %v10723
      %v10740 = vadd.f32 %v10732, %v10724
      %v10741 = vadd.f32 %v10733, %v10725
      %v10742 = vadd.f32 %v10734, %v10726
      %v10743 = vmax.f32 %v10735, 0.0
      %v10744 = vmax.f32 %v10736, 0.0
      %v10745 = vmax.f32 %v10737, 0.0
      %v10746 = vmax.f32 %v10738, 0.0
      %v10747 = vmax.f32 %v10739, 0.0
      %v10748 = vmax.f32 %v10740, 0.0
      %v10749 = vmax.f32 %v10741, 0.0
      %v10750 = vmax.f32 %v10742, 0.0
      %v10751 = vmin.f32 %v10743, 6.0
      %v10752 = vmin.f32 %v10744, 6.0
      %v10753 = vmin.f32 %v10745, 6.0
      %v10754 = vmin.f32 %v10746, 6.0
      %v10755 = vmin.f32 %v10747, 6.0
      %v10756 = vmin.f32 %v10748, 6.0
      %v10757 = vmin.f32 %v10749, 6.0
      %v10758 = vmin.f32 %v10750, 6.0
      %v10759 = vpack.c.bf16 %v10751, %v10751
      %v10760 = vpack.c.bf16 %v10752, %v10752
      %v10761 = vpack.c.bf16 %v10753, %v10753
      %v10762 = vpack.c.bf16 %v10754, %v10754
      %v10763 = vpack.c.bf16 %v10755, %v10755
      %v10764 = vpack.c.bf16 %v10756, %v10756
      %v10765 = vpack.c.bf16 %v10757, %v10757
      %v10766 = vpack.c.bf16 %v10758, %v10758
      %10767 = vst [vmem:[%s224 + $0x60] sm:$0xf] %v10759
      %10768 = vst [vmem:[%s224 + $0x64] sm:$0xf] %v10760
      %10769 = vst [vmem:[%s224 + $0x68] sm:$0xf] %v10761
      %10770 = vst [vmem:[%s224 + $0x6c] sm:$0xf] %v10762
      %10771 = vst [vmem:[%s224 + $0x70] sm:$0xf] %v10763
      %10772 = vst [vmem:[%s224 + $0x74] sm:$0xf] %v10764
      %10773 = vst [vmem:[%s224 + $0x78] sm:$0xf] %v10765
      %10774 = vst [vmem:[%s224 + $0x7c] sm:$0xf] %v10766
      %p10775 = scmp.lt.s32.totalorder %s16, 1
      %s10776 = scalar_select %p10775, %s16, 1
      %s10777 = smul.addr %s10776, 32
      %s10778 = smul.addr %s10777, 4
      %s10779 = scalar_lea.vmem %s5, %s10778
      // Predicated region
      $region41: #{basic_block_forward.1} parent=39 // pred_check
        %p10780 = pneg %p144
      $region42: #{basic_block_forward.1} parent=39 // pred_check_branch
        %10782 = sbr.rel (%p10780) target = $region44
      $region43: #{basic_block_forward.1} parent=39 // pred_region
        _
      $region44: #{basic_block_forward.1} parent=39 // pred_fallthru
        _
    $region40: #{basic_block_forward.1} parent=5 // pred_fallthru
      _
    %p10783 = scmp.le.s32.totalorder 2, %s11
    // Predicated region
    $region45: #{basic_block_forward.1} parent=5 // pred_check
      %p10784 = pneg %p10783
    $region46: #{basic_block_forward.1} parent=5 // pred_check_branch
      %10786 = sbr.rel (%p10784) target = $region48
    $region47: #{basic_block_forward.1} parent=5 // pred_region
      %s10787 = ssub.s32 %s11, 2
      // Predicated region
      $region49: #{basic_block_forward.1} parent=47 // pred_check
        %p10788 = pneg %p150
      $region50: #{basic_block_forward.1} parent=47 // pred_check_branch
        %10790 = sbr.rel (%p10788) target = $region52
      $region51: #{basic_block_forward.1} parent=47 // pred_region
        %p10791 = scmp.lt.s32.totalorder %s17, 1
        %s10792 = scalar_select %p10791, %s17, 1
        %s10793 = smul.addr %s10792, 32
        %s10794 = smul.addr %s10793, 4
        %s10795 = scalar_lea.vmem %s5, %s10794
      $region52: #{basic_block_forward.1} parent=47 // pred_fallthru
        _
    $region48: #{basic_block_forward.1} parent=5 // pred_fallthru
      _
  $region6: #{basic_block_forward.1} parent=0 // loop_footer
    %s15 = sadd.s32 1, %s11
  $region7: #{basic_block_forward.1} parent=0 // loop_footer_branch
    %10 = sbr.rel target = $region3
  $region8: #{basic_block_forward.1} parent=0 // loop_exit
    _

</llo_original>
